<compile_context>
chip_gen: v7x
topology: tpu7x:2x2x1
jax: 0.10.0
libtpu: 0.0.40
codegen_flags: <defaults>
</compile_context>

<pallas_src>
import jax
import jax.numpy as jnp
from jax.experimental import pallas as pl
from jax.experimental.pallas import tpu as pltpu

PAD_L = 8   # sublane-aligned column offset of the image inside the scratch


# ------------------------------------------------------------- fused kernel
def conv_block_kernel(x_ref, w1_ref, b1_ref, w2_ref, b2_ref, g_ref, bt_ref,
                      o_ref, xp_ref):
    # x_ref : (N, H, W, C)            input, channels zero-padded to C
    # w*_ref: (9*C, C)                3x3 weights, tap-major, channel-padded
    # b*/g/bt_ref: (1, C)
    # o_ref : (N, H, W, C)
    # xp_ref: (N, H+2, PAD_L+W+PAD_L, C)  VMEM staging buffer (zero halo)
    N, H, W, C = x_ref.shape
    NHW = N * H * W

    # Zero the staging buffer once; only the interior is rewritten below, so
    # the 1-pixel halo stays zero for both convolutions.
    xp_ref[...] = jnp.zeros_like(xp_ref)

    def conv3x3_relu(x_nhwc, w_ref, b_ref):
        # Stage activation at row offset 1, column offset PAD_L (aligned).
        xp_ref[:, 1:H + 1, PAD_L:PAD_L + W, :] = x_nhwc
        # im2col: gather the 9 shifted windows, then ONE K=9*C MXU matmul.
        taps = [
            xp_ref[:, dy:dy + H, PAD_L - 1 + dx:PAD_L - 1 + dx + W, :]
            .reshape(NHW, C)
            for dy in range(3) for dx in range(3)
        ]
        patches = jnp.concatenate(taps, axis=1)                 # (NHW, 9*C)
        y = jnp.dot(patches, w_ref[...],
                    preferred_element_type=jnp.float32)         # (NHW, C)
        return jnp.maximum(y + b_ref[...], 0.0)

    def batchnorm(y):
        # training-mode BatchNorm2d: biased batch variance, eps=1e-5,
        # single pass over the data.
        cnt = float(NHW)
        mean = jnp.sum(y, axis=0, keepdims=True) / cnt          # (1, C)
        ex2 = jnp.sum(y * y, axis=0, keepdims=True) / cnt
        var = ex2 - mean * mean
        inv = jax.lax.rsqrt(var + 1e-5)
        return (y - mean) * (inv * g_ref[...]) + bt_ref[...]

    y = conv3x3_relu(x_ref[...], w1_ref, b1_ref)                # relu(conv1)
    y = batchnorm(y)                                            # BN
    y = conv3x3_relu(y.reshape(N, H, W, C), w2_ref, b2_ref)     # relu(conv2)
    y = batchnorm(y)                                            # BN
    o_ref[...] = y.reshape(N, H, W, C)


# ---------------------------------------------------------------- wrapper
def conv_block(x_nchw, params):
    N, Cin, H, W = x_nchw.shape
    Cout = params["w1"].shape[-1]
    C = max(Cin, Cout)                        # shared channel width in-kernel

    # NCHW -> NHWC, zero-pad channels to C (padded channels are inert: their
    # weights/bias/beta are zero-padded, so they stay exactly zero throughout).
    x = jnp.transpose(x_nchw, (0, 2, 3, 1)).astype(jnp.float32)
    x = jnp.pad(x, ((0, 0), (0, 0), (0, 0), (0, C - Cin)))

    def prep_w(w):                            # (3,3,ci,co) -> (9*C, C)
        ci, co = w.shape[2], w.shape[3]
        w = jnp.pad(w, ((0, 0), (0, 0), (0, C - ci), (0, C - co)))
        return w.reshape(9 * C, C).astype(jnp.float32)

    def prep_v(v):                            # (co,) -> (1, C)
        return jnp.pad(v, (0, C - v.shape[0])).reshape(1, C).astype(jnp.float32)

    w1, w2 = prep_w(params["w1"]), prep_w(params["w2"])
    b1, b2 = prep_v(params["b1"]), prep_v(params["b2"])
    g, bt = prep_v(params["gamma"]), prep_v(params["beta"])

    w_buf = PAD_L + W + PAD_L                 # room for aligned offset + halo

    out = pl.pallas_call(
        conv_block_kernel,
        out_shape=jax.ShapeDtypeStruct((N, H, W, C), jnp.float32),
        grid=(1,),
        in_specs=[
            pl.BlockSpec((N, H, W, C), lambda i: (0, 0, 0, 0)),
            pl.BlockSpec((9 * C, C), lambda i: (0, 0)),
            pl.BlockSpec((1, C), lambda i: (0, 0)),
            pl.BlockSpec((9 * C, C), lambda i: (0, 0)),
            pl.BlockSpec((1, C), lambda i: (0, 0)),
            pl.BlockSpec((1, C), lambda i: (0, 0)),
            pl.BlockSpec((1, C), lambda i: (0, 0)),
        ],
        out_specs=pl.BlockSpec((N, H, W, C), lambda i: (0, 0, 0, 0)),
        scratch_shapes=[pltpu.VMEM((N, H + 2, w_buf, C), jnp.float32)],
    )(x, w1, b1, w2, b2, g, bt)

    out = out[..., :Cout]                     # drop channel padding
    return jnp.transpose(out, (0, 3, 1, 2))   # NHWC -> NCHW


# ---------------------------------------------------------------- reference
def conv_block_ref(x_nchw, params):
    x = jnp.transpose(x_nchw, (0, 2, 3, 1))

    def conv(x, w, b):
        y = jax.lax.conv_general_dilated(
            x, w, (1, 1), "SAME",
            dimension_numbers=("NHWC", "HWIO", "NHWC"),
            precision=jax.lax.Precision.HIGHEST)
        return jax.nn.relu(y + b)

    def bn(x, g, bta):
        m = jnp.mean(x, axis=(0, 1, 2), keepdims=True)
        v = jnp.mean((x - m) ** 2, axis=(0, 1, 2), keepdims=True)
        return (x - m) * jax.lax.rsqrt(v + 1e-5) * g + bta

    x = bn(conv(x, params["w1"], params["b1"]), params["gamma"], params["beta"])
    x = bn(conv(x, params["w2"], params["b2"]), params["gamma"], params["beta"])
    return jnp.transpose(x, (0, 3, 1, 2))


if __name__ == "__main__":
    N, Cin, Cout, H, W = 2, 4, 8, 16, 16

    key = jax.random.PRNGKey(0)
    kx, kw1, kb1, kw2, kb2 = jax.random.split(key, 5)

    x = jax.random.normal(kx, (N, Cin, H, W), jnp.float32)  # NCHW like PyTorch

    params = {
        "w1": jax.random.normal(kw1, (3, 3, Cin, Cout), jnp.float32) * 0.1,
        "b1": jax.random.normal(kb1, (Cout,), jnp.float32) * 0.1,
        "w2": jax.random.normal(kw2, (3, 3, Cout, Cout), jnp.float32) * 0.1,
        "b2": jax.random.normal(kb2, (Cout,), jnp.float32) * 0.1,
        "gamma": jnp.ones((Cout,), jnp.float32),   # BatchNorm2d default weight
        "beta": jnp.zeros((Cout,), jnp.float32),   # BatchNorm2d default bias
    }

    out = jax.block_until_ready(conv_block(x, params))
    ref = jax.block_until_ready(conv_block_ref(x, params))

    assert out.shape == (N, Cout, H, W), out.shape
    max_err = float(jnp.max(jnp.abs(out - ref)))
    assert jnp.allclose(out, ref, atol=5e-4, rtol=5e-4), max_err
    print("KERNEL_OK")
</pallas_src>

<mosaic_0001>
module attributes {stable_mosaic.version = 11 : i64} {
  func.func @conv_block_kernel(%arg0: i32, %arg1: memref<2x16x16x8xf32, #tpu.memory_space<vmem>>, %arg2: memref<72x8xf32, #tpu.memory_space<vmem>>, %arg3: memref<1x8xf32, #tpu.memory_space<vmem>>, %arg4: memref<72x8xf32, #tpu.memory_space<vmem>>, %arg5: memref<1x8xf32, #tpu.memory_space<vmem>>, %arg6: memref<1x8xf32, #tpu.memory_space<vmem>>, %arg7: memref<1x8xf32, #tpu.memory_space<vmem>>, %arg8: memref<2x16x16x8xf32, #tpu.memory_space<vmem>>, %arg9: memref<2x18x32x8xf32, #tpu.memory_space<vmem>>) attributes {dimension_semantics = [#tpu.dimension_semantics<arbitrary>], iteration_bounds = array<i64: 1>, scalar_prefetch = 0 : i64, scratch_operands = 1 : i64, tpu.core_type = #tpu.core_type<tc>, window_params = [{pipeline_mode = #tpu.pipeline_mode<synchronous>, transform_indices = @transform_0, window_bounds = array<i64: 2, 16, 16, 8>}, {pipeline_mode = #tpu.pipeline_mode<synchronous>, transform_indices = @transform_1, window_bounds = array<i64: 72, 8>}, {pipeline_mode = #tpu.pipeline_mode<synchronous>, transform_indices = @transform_2, window_bounds = array<i64: 1, 8>}, {pipeline_mode = #tpu.pipeline_mode<synchronous>, transform_indices = @transform_3, window_bounds = array<i64: 72, 8>}, {pipeline_mode = #tpu.pipeline_mode<synchronous>, transform_indices = @transform_4, window_bounds = array<i64: 1, 8>}, {pipeline_mode = #tpu.pipeline_mode<synchronous>, transform_indices = @transform_5, window_bounds = array<i64: 1, 8>}, {pipeline_mode = #tpu.pipeline_mode<synchronous>, transform_indices = @transform_6, window_bounds = array<i64: 1, 8>}, {pipeline_mode = #tpu.pipeline_mode<synchronous>, transform_indices = @transform_7, window_bounds = array<i64: 2, 16, 16, 8>}]} {
    %cst = arith.constant 0.000000e+00 : f32
    %0 = vector.broadcast %cst : f32 to vector<2x18x32x8xf32>
    %c0 = arith.constant 0 : index
    %c0_0 = arith.constant 0 : index
    %c0_1 = arith.constant 0 : index
    %c0_2 = arith.constant 0 : index
    %1 = vector.load %arg9[%c0, %c0_0, %c0_1, %c0_2] : memref<2x18x32x8xf32, #tpu.memory_space<vmem>>, vector<2x18x32x8xf32>
    tpu.vector_store %arg9[%c0, %c0_0, %c0_1, %c0_2], %0 {strides = array<i32>} : memref<2x18x32x8xf32, #tpu.memory_space<vmem>>, vector<2x18x32x8xf32>,
    %c0_3 = arith.constant 0 : index
    %c0_4 = arith.constant 0 : index
    %c0_5 = arith.constant 0 : index
    %c0_6 = arith.constant 0 : index
    %2 = vector.load %arg1[%c0_3, %c0_4, %c0_5, %c0_6] : memref<2x16x16x8xf32, #tpu.memory_space<vmem>>, vector<2x16x16x8xf32>
    %c0_7 = arith.constant 0 : index
    %c1 = arith.constant 1 : index
    %c8 = arith.constant 8 : index
    %c0_8 = arith.constant 0 : index
    %3 = vector.load %arg9[%c0_7, %c1, %c8, %c0_8] : memref<2x18x32x8xf32, #tpu.memory_space<vmem>>, vector<2x16x16x8xf32>
    tpu.vector_store %arg9[%c0_7, %c1, %c8, %c0_8], %2 {strides = array<i32>} : memref<2x18x32x8xf32, #tpu.memory_space<vmem>>, vector<2x16x16x8xf32>,
    %c0_9 = arith.constant 0 : index
    %c0_10 = arith.constant 0 : index
    %c7 = arith.constant 7 : index
    %c0_11 = arith.constant 0 : index
    %4 = vector.load %arg9[%c0_9, %c0_10, %c7, %c0_11] : memref<2x18x32x8xf32, #tpu.memory_space<vmem>>, vector<2x16x16x8xf32>
    %5 = vector.shape_cast %4 : vector<2x16x16x8xf32> to vector<512x8xf32>
    %c0_12 = arith.constant 0 : index
    %c0_13 = arith.constant 0 : index
    %c8_14 = arith.constant 8 : index
    %c0_15 = arith.constant 0 : index
    %6 = vector.load %arg9[%c0_12, %c0_13, %c8_14, %c0_15] : memref<2x18x32x8xf32, #tpu.memory_space<vmem>>, vector<2x16x16x8xf32>
    %7 = vector.shape_cast %6 : vector<2x16x16x8xf32> to vector<512x8xf32>
    %c0_16 = arith.constant 0 : index
    %c0_17 = arith.constant 0 : index
    %c9 = arith.constant 9 : index
    %c0_18 = arith.constant 0 : index
    %8 = vector.load %arg9[%c0_16, %c0_17, %c9, %c0_18] : memref<2x18x32x8xf32, #tpu.memory_space<vmem>>, vector<2x16x16x8xf32>
    %9 = vector.shape_cast %8 : vector<2x16x16x8xf32> to vector<512x8xf32>
    %c0_19 = arith.constant 0 : index
    %c1_20 = arith.constant 1 : index
    %c7_21 = arith.constant 7 : index
    %c0_22 = arith.constant 0 : index
    %10 = vector.load %arg9[%c0_19, %c1_20, %c7_21, %c0_22] : memref<2x18x32x8xf32, #tpu.memory_space<vmem>>, vector<2x16x16x8xf32>
    %11 = vector.shape_cast %10 : vector<2x16x16x8xf32> to vector<512x8xf32>
    %c0_23 = arith.constant 0 : index
    %c1_24 = arith.constant 1 : index
    %c8_25 = arith.constant 8 : index
    %c0_26 = arith.constant 0 : index
    %12 = vector.load %arg9[%c0_23, %c1_24, %c8_25, %c0_26] : memref<2x18x32x8xf32, #tpu.memory_space<vmem>>, vector<2x16x16x8xf32>
    %13 = vector.shape_cast %12 : vector<2x16x16x8xf32> to vector<512x8xf32>
    %c0_27 = arith.constant 0 : index
    %c1_28 = arith.constant 1 : index
    %c9_29 = arith.constant 9 : index
    %c0_30 = arith.constant 0 : index
    %14 = vector.load %arg9[%c0_27, %c1_28, %c9_29, %c0_30] : memref<2x18x32x8xf32, #tpu.memory_space<vmem>>, vector<2x16x16x8xf32>
    %15 = vector.shape_cast %14 : vector<2x16x16x8xf32> to vector<512x8xf32>
    %c0_31 = arith.constant 0 : index
    %c2 = arith.constant 2 : index
    %c7_32 = arith.constant 7 : index
    %c0_33 = arith.constant 0 : index
    %16 = vector.load %arg9[%c0_31, %c2, %c7_32, %c0_33] : memref<2x18x32x8xf32, #tpu.memory_space<vmem>>, vector<2x16x16x8xf32>
    %17 = vector.shape_cast %16 : vector<2x16x16x8xf32> to vector<512x8xf32>
    %c0_34 = arith.constant 0 : index
    %c2_35 = arith.constant 2 : index
    %c8_36 = arith.constant 8 : index
    %c0_37 = arith.constant 0 : index
    %18 = vector.load %arg9[%c0_34, %c2_35, %c8_36, %c0_37] : memref<2x18x32x8xf32, #tpu.memory_space<vmem>>, vector<2x16x16x8xf32>
    %19 = vector.shape_cast %18 : vector<2x16x16x8xf32> to vector<512x8xf32>
    %c0_38 = arith.constant 0 : index
    %c2_39 = arith.constant 2 : index
    %c9_40 = arith.constant 9 : index
    %c0_41 = arith.constant 0 : index
    %20 = vector.load %arg9[%c0_38, %c2_39, %c9_40, %c0_41] : memref<2x18x32x8xf32, #tpu.memory_space<vmem>>, vector<2x16x16x8xf32>
    %21 = vector.shape_cast %20 : vector<2x16x16x8xf32> to vector<512x8xf32>
    %22 = tpu.concatenate %5, %7, %9, %11, %13, %15, %17, %19, %21 in 1 : vector<512x8xf32>, vector<512x8xf32>, vector<512x8xf32>, vector<512x8xf32>, vector<512x8xf32>, vector<512x8xf32>, vector<512x8xf32>, vector<512x8xf32>, vector<512x8xf32> -> vector<512x72xf32>
    %c0_42 = arith.constant 0 : index
    %c0_43 = arith.constant 0 : index
    %23 = vector.load %arg2[%c0_42, %c0_43] : memref<72x8xf32, #tpu.memory_space<vmem>>, vector<72x8xf32>
    %cst_44 = arith.constant dense<0.000000e+00> : vector<512x8xf32>
    %24 = tpu.matmul %22, %23, %cst_44 {dimension_numbers = #tpu.dot_dimension_numbers<[1], [0], [0], [1], [0, 0, 1, 1], [], []>} : vector<512x72xf32>, vector<72x8xf32>, vector<512x8xf32> -> vector<512x8xf32>
    %c0_45 = arith.constant 0 : index
    %c0_46 = arith.constant 0 : index
    %25 = vector.load %arg3[%c0_45, %c0_46] : memref<1x8xf32, #tpu.memory_space<vmem>>, vector<1x8xf32>
    %26 = vector.broadcast %25 : vector<1x8xf32> to vector<512x8xf32>
    %27 = arith.addf %24, %26 : vector<512x8xf32>
    %cst_47 = arith.constant 0.000000e+00 : f32
    %28 = vector.broadcast %cst_47 : f32 to vector<512x8xf32>
    %29 = arith.maximumf %27, %28 : vector<512x8xf32>
    %cst_48 = arith.constant dense<0.000000e+00> : vector<8xf32>
    %30 = vector.multi_reduction <add>, %29, %cst_48 [0] : vector<512x8xf32> to vector<8xf32>
    %31 = vector.shape_cast %30 : vector<8xf32> to vector<1x8xf32>
    %cst_49 = arith.constant 5.120000e+02 : f32
    %32 = vector.broadcast %cst_49 : f32 to vector<1x8xf32>
    %33 = arith.divf %31, %32 : vector<1x8xf32>
    %34 = arith.mulf %29, %29 : vector<512x8xf32>
    %cst_50 = arith.constant dense<0.000000e+00> : vector<8xf32>
    %35 = vector.multi_reduction <add>, %34, %cst_50 [0] : vector<512x8xf32> to vector<8xf32>
    %36 = vector.shape_cast %35 : vector<8xf32> to vector<1x8xf32>
    %cst_51 = arith.constant 5.120000e+02 : f32
    %37 = vector.broadcast %cst_51 : f32 to vector<1x8xf32>
    %38 = arith.divf %36, %37 : vector<1x8xf32>
    %39 = arith.mulf %33, %33 : vector<1x8xf32>
    %40 = arith.subf %38, %39 : vector<1x8xf32>
    %cst_52 = arith.constant 9.99999974E-6 : f32
    %41 = vector.broadcast %cst_52 : f32 to vector<1x8xf32>
    %42 = arith.addf %40, %41 : vector<1x8xf32>
    %43 = math.rsqrt %42 : vector<1x8xf32>
    %44 = vector.broadcast %33 : vector<1x8xf32> to vector<512x8xf32>
    %45 = arith.subf %29, %44 : vector<512x8xf32>
    %c0_53 = arith.constant 0 : index
    %c0_54 = arith.constant 0 : index
    %46 = vector.load %arg6[%c0_53, %c0_54] : memref<1x8xf32, #tpu.memory_space<vmem>>, vector<1x8xf32>
    %47 = arith.mulf %43, %46 : vector<1x8xf32>
    %48 = vector.broadcast %47 : vector<1x8xf32> to vector<512x8xf32>
    %49 = arith.mulf %45, %48 : vector<512x8xf32>
    %c0_55 = arith.constant 0 : index
    %c0_56 = arith.constant 0 : index
    %50 = vector.load %arg7[%c0_55, %c0_56] : memref<1x8xf32, #tpu.memory_space<vmem>>, vector<1x8xf32>
    %51 = vector.broadcast %50 : vector<1x8xf32> to vector<512x8xf32>
    %52 = arith.addf %49, %51 : vector<512x8xf32>
    %53 = vector.shape_cast %52 : vector<512x8xf32> to vector<2x16x16x8xf32>
    %c0_57 = arith.constant 0 : index
    %c1_58 = arith.constant 1 : index
    %c8_59 = arith.constant 8 : index
    %c0_60 = arith.constant 0 : index
    %54 = vector.load %arg9[%c0_57, %c1_58, %c8_59, %c0_60] : memref<2x18x32x8xf32, #tpu.memory_space<vmem>>, vector<2x16x16x8xf32>
    tpu.vector_store %arg9[%c0_57, %c1_58, %c8_59, %c0_60], %53 {strides = array<i32>} : memref<2x18x32x8xf32, #tpu.memory_space<vmem>>, vector<2x16x16x8xf32>,
    %c0_61 = arith.constant 0 : index
    %c0_62 = arith.constant 0 : index
    %c7_63 = arith.constant 7 : index
    %c0_64 = arith.constant 0 : index
    %55 = vector.load %arg9[%c0_61, %c0_62, %c7_63, %c0_64] : memref<2x18x32x8xf32, #tpu.memory_space<vmem>>, vector<2x16x16x8xf32>
    %56 = vector.shape_cast %55 : vector<2x16x16x8xf32> to vector<512x8xf32>
    %c0_65 = arith.constant 0 : index
    %c0_66 = arith.constant 0 : index
    %c8_67 = arith.constant 8 : index
    %c0_68 = arith.constant 0 : index
    %57 = vector.load %arg9[%c0_65, %c0_66, %c8_67, %c0_68] : memref<2x18x32x8xf32, #tpu.memory_space<vmem>>, vector<2x16x16x8xf32>
    %58 = vector.shape_cast %57 : vector<2x16x16x8xf32> to vector<512x8xf32>
    %c0_69 = arith.constant 0 : index
    %c0_70 = arith.constant 0 : index
    %c9_71 = arith.constant 9 : index
    %c0_72 = arith.constant 0 : index
    %59 = vector.load %arg9[%c0_69, %c0_70, %c9_71, %c0_72] : memref<2x18x32x8xf32, #tpu.memory_space<vmem>>, vector<2x16x16x8xf32>
    %60 = vector.shape_cast %59 : vector<2x16x16x8xf32> to vector<512x8xf32>
    %c0_73 = arith.constant 0 : index
    %c1_74 = arith.constant 1 : index
    %c7_75 = arith.constant 7 : index
    %c0_76 = arith.constant 0 : index
    %61 = vector.load %arg9[%c0_73, %c1_74, %c7_75, %c0_76] : memref<2x18x32x8xf32, #tpu.memory_space<vmem>>, vector<2x16x16x8xf32>
    %62 = vector.shape_cast %61 : vector<2x16x16x8xf32> to vector<512x8xf32>
    %c0_77 = arith.constant 0 : index
    %c1_78 = arith.constant 1 : index
    %c8_79 = arith.constant 8 : index
    %c0_80 = arith.constant 0 : index
    %63 = vector.load %arg9[%c0_77, %c1_78, %c8_79, %c0_80] : memref<2x18x32x8xf32, #tpu.memory_space<vmem>>, vector<2x16x16x8xf32>
    %64 = vector.shape_cast %63 : vector<2x16x16x8xf32> to vector<512x8xf32>
    %c0_81 = arith.constant 0 : index
    %c1_82 = arith.constant 1 : index
    %c9_83 = arith.constant 9 : index
    %c0_84 = arith.constant 0 : index
    %65 = vector.load %arg9[%c0_81, %c1_82, %c9_83, %c0_84] : memref<2x18x32x8xf32, #tpu.memory_space<vmem>>, vector<2x16x16x8xf32>
    %66 = vector.shape_cast %65 : vector<2x16x16x8xf32> to vector<512x8xf32>
    %c0_85 = arith.constant 0 : index
    %c2_86 = arith.constant 2 : index
    %c7_87 = arith.constant 7 : index
    %c0_88 = arith.constant 0 : index
    %67 = vector.load %arg9[%c0_85, %c2_86, %c7_87, %c0_88] : memref<2x18x32x8xf32, #tpu.memory_space<vmem>>, vector<2x16x16x8xf32>
    %68 = vector.shape_cast %67 : vector<2x16x16x8xf32> to vector<512x8xf32>
    %c0_89 = arith.constant 0 : index
    %c2_90 = arith.constant 2 : index
    %c8_91 = arith.constant 8 : index
    %c0_92 = arith.constant 0 : index
    %69 = vector.load %arg9[%c0_89, %c2_90, %c8_91, %c0_92] : memref<2x18x32x8xf32, #tpu.memory_space<vmem>>, vector<2x16x16x8xf32>
    %70 = vector.shape_cast %69 : vector<2x16x16x8xf32> to vector<512x8xf32>
    %c0_93 = arith.constant 0 : index
    %c2_94 = arith.constant 2 : index
    %c9_95 = arith.constant 9 : index
    %c0_96 = arith.constant 0 : index
    %71 = vector.load %arg9[%c0_93, %c2_94, %c9_95, %c0_96] : memref<2x18x32x8xf32, #tpu.memory_space<vmem>>, vector<2x16x16x8xf32>
    %72 = vector.shape_cast %71 : vector<2x16x16x8xf32> to vector<512x8xf32>
    %73 = tpu.concatenate %56, %58, %60, %62, %64, %66, %68, %70, %72 in 1 : vector<512x8xf32>, vector<512x8xf32>, vector<512x8xf32>, vector<512x8xf32>, vector<512x8xf32>, vector<512x8xf32>, vector<512x8xf32>, vector<512x8xf32>, vector<512x8xf32> -> vector<512x72xf32>
    %c0_97 = arith.constant 0 : index
    %c0_98 = arith.constant 0 : index
    %74 = vector.load %arg4[%c0_97, %c0_98] : memref<72x8xf32, #tpu.memory_space<vmem>>, vector<72x8xf32>
    %cst_99 = arith.constant dense<0.000000e+00> : vector<512x8xf32>
    %75 = tpu.matmul %73, %74, %cst_99 {dimension_numbers = #tpu.dot_dimension_numbers<[1], [0], [0], [1], [0, 0, 1, 1], [], []>} : vector<512x72xf32>, vector<72x8xf32>, vector<512x8xf32> -> vector<512x8xf32>
    %c0_100 = arith.constant 0 : index
    %c0_101 = arith.constant 0 : index
    %76 = vector.load %arg5[%c0_100, %c0_101] : memref<1x8xf32, #tpu.memory_space<vmem>>, vector<1x8xf32>
    %77 = vector.broadcast %76 : vector<1x8xf32> to vector<512x8xf32>
    %78 = arith.addf %75, %77 : vector<512x8xf32>
    %cst_102 = arith.constant 0.000000e+00 : f32
    %79 = vector.broadcast %cst_102 : f32 to vector<512x8xf32>
    %80 = arith.maximumf %78, %79 : vector<512x8xf32>
    %cst_103 = arith.constant dense<0.000000e+00> : vector<8xf32>
    %81 = vector.multi_reduction <add>, %80, %cst_103 [0] : vector<512x8xf32> to vector<8xf32>
    %82 = vector.shape_cast %81 : vector<8xf32> to vector<1x8xf32>
    %cst_104 = arith.constant 5.120000e+02 : f32
    %83 = vector.broadcast %cst_104 : f32 to vector<1x8xf32>
    %84 = arith.divf %82, %83 : vector<1x8xf32>
    %85 = arith.mulf %80, %80 : vector<512x8xf32>
    %cst_105 = arith.constant dense<0.000000e+00> : vector<8xf32>
    %86 = vector.multi_reduction <add>, %85, %cst_105 [0] : vector<512x8xf32> to vector<8xf32>
    %87 = vector.shape_cast %86 : vector<8xf32> to vector<1x8xf32>
    %cst_106 = arith.constant 5.120000e+02 : f32
    %88 = vector.broadcast %cst_106 : f32 to vector<1x8xf32>
    %89 = arith.divf %87, %88 : vector<1x8xf32>
    %90 = arith.mulf %84, %84 : vector<1x8xf32>
    %91 = arith.subf %89, %90 : vector<1x8xf32>
    %cst_107 = arith.constant 9.99999974E-6 : f32
    %92 = vector.broadcast %cst_107 : f32 to vector<1x8xf32>
    %93 = arith.addf %91, %92 : vector<1x8xf32>
    %94 = math.rsqrt %93 : vector<1x8xf32>
    %95 = vector.broadcast %84 : vector<1x8xf32> to vector<512x8xf32>
    %96 = arith.subf %80, %95 : vector<512x8xf32>
    %c0_108 = arith.constant 0 : index
    %c0_109 = arith.constant 0 : index
    %97 = vector.load %arg6[%c0_108, %c0_109] : memref<1x8xf32, #tpu.memory_space<vmem>>, vector<1x8xf32>
    %98 = arith.mulf %94, %97 : vector<1x8xf32>
    %99 = vector.broadcast %98 : vector<1x8xf32> to vector<512x8xf32>
    %100 = arith.mulf %96, %99 : vector<512x8xf32>
    %c0_110 = arith.constant 0 : index
    %c0_111 = arith.constant 0 : index
    %101 = vector.load %arg7[%c0_110, %c0_111] : memref<1x8xf32, #tpu.memory_space<vmem>>, vector<1x8xf32>
    %102 = vector.broadcast %101 : vector<1x8xf32> to vector<512x8xf32>
    %103 = arith.addf %100, %102 : vector<512x8xf32>
    %104 = vector.shape_cast %103 : vector<512x8xf32> to vector<2x16x16x8xf32>
    %c0_112 = arith.constant 0 : index
    %c0_113 = arith.constant 0 : index
    %c0_114 = arith.constant 0 : index
    %c0_115 = arith.constant 0 : index
    %105 = vector.load %arg8[%c0_112, %c0_113, %c0_114, %c0_115] : memref<2x16x16x8xf32, #tpu.memory_space<vmem>>, vector<2x16x16x8xf32>
    tpu.vector_store %arg8[%c0_112, %c0_113, %c0_114, %c0_115], %104 {strides = array<i32>} : memref<2x16x16x8xf32, #tpu.memory_space<vmem>>, vector<2x16x16x8xf32>,
    return
  }
  func.func @transform_0(%arg0: i32) -> (i32, i32, i32, i32) {
    %c0_i32 = arith.constant 0 : i32
    %c0_i32_0 = arith.constant 0 : i32
    %c0_i32_1 = arith.constant 0 : i32
    %c0_i32_2 = arith.constant 0 : i32
    %c0_i32_3 = arith.constant 0 : i32
    return %c0_i32, %c0_i32_0, %c0_i32_1, %c0_i32_2 : i32, i32, i32, i32
  }
  func.func @transform_1(%arg0: i32) -> (i32, i32) {
    %c0_i32 = arith.constant 0 : i32
    %c0_i32_0 = arith.constant 0 : i32
    %c0_i32_1 = arith.constant 0 : i32
    return %c0_i32, %c0_i32_0 : i32, i32
  }
  func.func @transform_2(%arg0: i32) -> (i32, i32) {
    %c0_i32 = arith.constant 0 : i32
    %c0_i32_0 = arith.constant 0 : i32
    %c0_i32_1 = arith.constant 0 : i32
    return %c0_i32, %c0_i32_0 : i32, i32
  }
  func.func @transform_3(%arg0: i32) -> (i32, i32) {
    %c0_i32 = arith.constant 0 : i32
    %c0_i32_0 = arith.constant 0 : i32
    %c0_i32_1 = arith.constant 0 : i32
    return %c0_i32, %c0_i32_0 : i32, i32
  }
  func.func @transform_4(%arg0: i32) -> (i32, i32) {
    %c0_i32 = arith.constant 0 : i32
    %c0_i32_0 = arith.constant 0 : i32
    %c0_i32_1 = arith.constant 0 : i32
    return %c0_i32, %c0_i32_0 : i32, i32
  }
  func.func @transform_5(%arg0: i32) -> (i32, i32) {
    %c0_i32 = arith.constant 0 : i32
    %c0_i32_0 = arith.constant 0 : i32
    %c0_i32_1 = arith.constant 0 : i32
    return %c0_i32, %c0_i32_0 : i32, i32
  }
  func.func @transform_6(%arg0: i32) -> (i32, i32) {
    %c0_i32 = arith.constant 0 : i32
    %c0_i32_0 = arith.constant 0 : i32
    %c0_i32_1 = arith.constant 0 : i32
    return %c0_i32, %c0_i32_0 : i32, i32
  }
  func.func @transform_7(%arg0: i32) -> (i32, i32, i32, i32) {
    %c0_i32 = arith.constant 0 : i32
    %c0_i32_0 = arith.constant 0 : i32
    %c0_i32_1 = arith.constant 0 : i32
    %c0_i32_2 = arith.constant 0 : i32
    %c0_i32_3 = arith.constant 0 : i32
    return %c0_i32, %c0_i32_0, %c0_i32_1, %c0_i32_2 : i32, i32, i32, i32
  }
}

</mosaic_0001>

<llo_original>
// kernel: tpu_custom_call.1
$region0: #{tpu_custom_call.1}
  #allocation0 [shape = 'u32[]', space=smem, size = 0x4, offset = 0x4, fixed_abs, tag = 'smem constant byte address 0x4 - core index']
  #allocation1 [shape = 'u32[144,128]{1,0:T(1,128)}', space=vmem, size = 0x12000, scoped, tag = 'internal scratch']
  #allocation2 [shape = 'f32[2,18,32,8]{3,2,1,0:T(8,128)}', space=vmem, size = 0x90000, scoped, tag = 'scratch operand']
  %s0 = inlined_call_operand.vmem [shape: f32[2,16,16,8], index: 0, kind: input, shape index: {}]
  %s1 = inlined_call_operand.vmem [shape: f32[72,8], index: 1, kind: input, shape index: {}]
  %s2 = inlined_call_operand.vmem [shape: f32[1,8], index: 2, kind: input, shape index: {}]
  %s3 = inlined_call_operand.vmem [shape: f32[72,8], index: 3, kind: input, shape index: {}]
  %s4 = inlined_call_operand.vmem [shape: f32[1,8], index: 4, kind: input, shape index: {}]
  %s5 = inlined_call_operand.vmem [shape: f32[1,8], index: 5, kind: input, shape index: {}]
  %s6 = inlined_call_operand.vmem [shape: f32[1,8], index: 6, kind: input, shape index: {}]
  %s7 = inlined_call_operand.vmem [shape: f32[2,16,16,8], index: 7, kind: output, shape index: {}]
  %s8 = sld [smem:[#allocation0]]
  $region38: #{tpu_custom_call.1} parent=0
    _
  %s10 = ssub.s32 1, %s8
  %s11 = scalar_select 0, %s10, %s8
  // Predicated region
  $region2: #{tpu_custom_call.1} parent=0 // pred_check
    _
  $region3: #{tpu_custom_call.1} parent=0 // pred_check_branch
    %13 = sbr.rel (0) target = $region5
  $region4: #{tpu_custom_call.1} parent=0 // pred_region
    _
  $region5: #{tpu_custom_call.1} parent=0 // pred_fallthru
    _
  // Predicated region
  $region6: #{tpu_custom_call.1} parent=0 // pred_check
    _
  $region7: #{tpu_custom_call.1} parent=0 // pred_check_branch
    %15 = sbr.rel (0) target = $region9
  $region8: #{tpu_custom_call.1} parent=0 // pred_region
    _
  $region9: #{tpu_custom_call.1} parent=0 // pred_fallthru
    _
  // Predicated region
  $region10: #{tpu_custom_call.1} parent=0 // pred_check
    _
  $region11: #{tpu_custom_call.1} parent=0 // pred_check_branch
    %17 = sbr.rel (0) target = $region13
  $region12: #{tpu_custom_call.1} parent=0 // pred_region
    _
  $region13: #{tpu_custom_call.1} parent=0 // pred_fallthru
    _
  // Predicated region
  $region14: #{tpu_custom_call.1} parent=0 // pred_check
    _
  $region15: #{tpu_custom_call.1} parent=0 // pred_check_branch
    %19 = sbr.rel (0) target = $region17
  $region16: #{tpu_custom_call.1} parent=0 // pred_region
    _
  $region17: #{tpu_custom_call.1} parent=0 // pred_fallthru
    _
  // Predicated region
  $region18: #{tpu_custom_call.1} parent=0 // pred_check
    _
  $region19: #{tpu_custom_call.1} parent=0 // pred_check_branch
    %21 = sbr.rel (0) target = $region21
  $region20: #{tpu_custom_call.1} parent=0 // pred_region
    _
  $region21: #{tpu_custom_call.1} parent=0 // pred_fallthru
    _
  // Predicated region
  $region22: #{tpu_custom_call.1} parent=0 // pred_check
    _
  $region23: #{tpu_custom_call.1} parent=0 // pred_check_branch
    %23 = sbr.rel (0) target = $region25
  $region24: #{tpu_custom_call.1} parent=0 // pred_region
    _
  $region25: #{tpu_custom_call.1} parent=0 // pred_fallthru
    _
  // Predicated region
  $region26: #{tpu_custom_call.1} parent=0 // pred_check
    _
  $region27: #{tpu_custom_call.1} parent=0 // pred_check_branch
    %25 = sbr.rel (0) target = $region29
  $region28: #{tpu_custom_call.1} parent=0 // pred_region
    _
  $region29: #{tpu_custom_call.1} parent=0 // pred_fallthru
    _
  %vm26 = vcmask 64512
  %27 = vst.msk [vmem:[#allocation2] sm:$0xff] %vm26, 0.0
  %28 = vst.msk [vmem:[#allocation2 + $0x8] sm:$0xff] %vm26, 0.0
  %29 = vst.msk [vmem:[#allocation2 + $0x10] sm:$0xff] %vm26, 0.0
  %30 = vst.msk [vmem:[#allocation2 + $0x18] sm:$0xff] %vm26, 0.0
  %31 = vst.msk [vmem:[#allocation2 + $0x20] sm:$0xff] %vm26, 0.0
  %32 = vst.msk [vmem:[#allocation2 + $0x28] sm:$0xff] %vm26, 0.0
  %33 = vst.msk [vmem:[#allocation2 + $0x30] sm:$0xff] %vm26, 0.0
  %34 = vst.msk [vmem:[#allocation2 + $0x38] sm:$0xff] %vm26, 0.0
  %35 = vst.msk [vmem:[#allocation2 + $0x40] sm:$0xff] %vm26, 0.0
  %36 = vst.msk [vmem:[#allocation2 + $0x48] sm:$0xff] %vm26, 0.0
  %37 = vst.msk [vmem:[#allocation2 + $0x50] sm:$0xff] %vm26, 0.0
  %38 = vst.msk [vmem:[#allocation2 + $0x58] sm:$0xff] %vm26, 0.0
  %39 = vst.msk [vmem:[#allocation2 + $0x60] sm:$0xff] %vm26, 0.0
  %40 = vst.msk [vmem:[#allocation2 + $0x68] sm:$0xff] %vm26, 0.0
  %41 = vst.msk [vmem:[#allocation2 + $0x70] sm:$0xff] %vm26, 0.0
  %42 = vst.msk [vmem:[#allocation2 + $0x78] sm:$0xff] %vm26, 0.0
  %43 = vst.msk [vmem:[#allocation2 + $0x80] sm:$0xff] %vm26, 0.0
  %44 = vst.msk [vmem:[#allocation2 + $0x88] sm:$0xff] %vm26, 0.0
  %45 = vst.msk [vmem:[#allocation2 + $0x90] sm:$0xff] %vm26, 0.0
  %46 = vst.msk [vmem:[#allocation2 + $0x98] sm:$0xff] %vm26, 0.0
  %47 = vst.msk [vmem:[#allocation2 + $0xa0] sm:$0xff] %vm26, 0.0
  %48 = vst.msk [vmem:[#allocation2 + $0xa8] sm:$0xff] %vm26, 0.0
  %49 = vst.msk [vmem:[#allocation2 + $0xb0] sm:$0xff] %vm26, 0.0
  %50 = vst.msk [vmem:[#allocation2 + $0xb8] sm:$0xff] %vm26, 0.0
  %51 = vst.msk [vmem:[#allocation2 + $0xc0] sm:$0xff] %vm26, 0.0
  %52 = vst.msk [vmem:[#allocation2 + $0xc8] sm:$0xff] %vm26, 0.0
  %53 = vst.msk [vmem:[#allocation2 + $0xd0] sm:$0xff] %vm26, 0.0
  %54 = vst.msk [vmem:[#allocation2 + $0xd8] sm:$0xff] %vm26, 0.0
  %55 = vst.msk [vmem:[#allocation2 + $0xe0] sm:$0xff] %vm26, 0.0
  %56 = vst.msk [vmem:[#allocation2 + $0xe8] sm:$0xff] %vm26, 0.0
  %57 = vst.msk [vmem:[#allocation2 + $0xf0] sm:$0xff] %vm26, 0.0
  %58 = vst.msk [vmem:[#allocation2 + $0xf8] sm:$0xff] %vm26, 0.0
  %59 = vst.msk [vmem:[#allocation2 + $0x100] sm:$0xff] %vm26, 0.0
  %60 = vst.msk [vmem:[#allocation2 + $0x108] sm:$0xff] %vm26, 0.0
  %61 = vst.msk [vmem:[#allocation2 + $0x110] sm:$0xff] %vm26, 0.0
  %62 = vst.msk [vmem:[#allocation2 + $0x118] sm:$0xff] %vm26, 0.0
  %63 = vst.msk [vmem:[#allocation2 + $0x120] sm:$0xff] %vm26, 0.0
  %64 = vst.msk [vmem:[#allocation2 + $0x128] sm:$0xff] %vm26, 0.0
  %65 = vst.msk [vmem:[#allocation2 + $0x130] sm:$0xff] %vm26, 0.0
  %66 = vst.msk [vmem:[#allocation2 + $0x138] sm:$0xff] %vm26, 0.0
  %67 = vst.msk [vmem:[#allocation2 + $0x140] sm:$0xff] %vm26, 0.0
  %68 = vst.msk [vmem:[#allocation2 + $0x148] sm:$0xff] %vm26, 0.0
  %69 = vst.msk [vmem:[#allocation2 + $0x150] sm:$0xff] %vm26, 0.0
  %70 = vst.msk [vmem:[#allocation2 + $0x158] sm:$0xff] %vm26, 0.0
  %71 = vst.msk [vmem:[#allocation2 + $0x160] sm:$0xff] %vm26, 0.0
  %72 = vst.msk [vmem:[#allocation2 + $0x168] sm:$0xff] %vm26, 0.0
  %73 = vst.msk [vmem:[#allocation2 + $0x170] sm:$0xff] %vm26, 0.0
  %74 = vst.msk [vmem:[#allocation2 + $0x178] sm:$0xff] %vm26, 0.0
  %75 = vst.msk [vmem:[#allocation2 + $0x180] sm:$0xff] %vm26, 0.0
  %76 = vst.msk [vmem:[#allocation2 + $0x188] sm:$0xff] %vm26, 0.0
  %77 = vst.msk [vmem:[#allocation2 + $0x190] sm:$0xff] %vm26, 0.0
  %78 = vst.msk [vmem:[#allocation2 + $0x198] sm:$0xff] %vm26, 0.0
  %79 = vst.msk [vmem:[#allocation2 + $0x1a0] sm:$0xff] %vm26, 0.0
  %80 = vst.msk [vmem:[#allocation2 + $0x1a8] sm:$0xff] %vm26, 0.0
  %81 = vst.msk [vmem:[#allocation2 + $0x1b0] sm:$0xff] %vm26, 0.0
  %82 = vst.msk [vmem:[#allocation2 + $0x1b8] sm:$0xff] %vm26, 0.0
  %83 = vst.msk [vmem:[#allocation2 + $0x1c0] sm:$0xff] %vm26, 0.0
  %84 = vst.msk [vmem:[#allocation2 + $0x1c8] sm:$0xff] %vm26, 0.0
  %85 = vst.msk [vmem:[#allocation2 + $0x1d0] sm:$0xff] %vm26, 0.0
  %86 = vst.msk [vmem:[#allocation2 + $0x1d8] sm:$0xff] %vm26, 0.0
  %87 = vst.msk [vmem:[#allocation2 + $0x1e0] sm:$0xff] %vm26, 0.0
  %88 = vst.msk [vmem:[#allocation2 + $0x1e8] sm:$0xff] %vm26, 0.0
  %89 = vst.msk [vmem:[#allocation2 + $0x1f0] sm:$0xff] %vm26, 0.0
  %90 = vst.msk [vmem:[#allocation2 + $0x1f8] sm:$0xff] %vm26, 0.0
  %91 = vst.msk [vmem:[#allocation2 + $0x200] sm:$0xff] %vm26, 0.0
  %92 = vst.msk [vmem:[#allocation2 + $0x208] sm:$0xff] %vm26, 0.0
  %93 = vst.msk [vmem:[#allocation2 + $0x210] sm:$0xff] %vm26, 0.0
  %94 = vst.msk [vmem:[#allocation2 + $0x218] sm:$0xff] %vm26, 0.0
  %95 = vst.msk [vmem:[#allocation2 + $0x220] sm:$0xff] %vm26, 0.0
  %96 = vst.msk [vmem:[#allocation2 + $0x228] sm:$0xff] %vm26, 0.0
  %97 = vst.msk [vmem:[#allocation2 + $0x230] sm:$0xff] %vm26, 0.0
  %98 = vst.msk [vmem:[#allocation2 + $0x238] sm:$0xff] %vm26, 0.0
  %99 = vst.msk [vmem:[#allocation2 + $0x240] sm:$0xff] %vm26, 0.0
  %100 = vst.msk [vmem:[#allocation2 + $0x248] sm:$0xff] %vm26, 0.0
  %101 = vst.msk [vmem:[#allocation2 + $0x250] sm:$0xff] %vm26, 0.0
  %102 = vst.msk [vmem:[#allocation2 + $0x258] sm:$0xff] %vm26, 0.0
  %103 = vst.msk [vmem:[#allocation2 + $0x260] sm:$0xff] %vm26, 0.0
  %104 = vst.msk [vmem:[#allocation2 + $0x268] sm:$0xff] %vm26, 0.0
  %105 = vst.msk [vmem:[#allocation2 + $0x270] sm:$0xff] %vm26, 0.0
  %106 = vst.msk [vmem:[#allocation2 + $0x278] sm:$0xff] %vm26, 0.0
  %107 = vst.msk [vmem:[#allocation2 + $0x280] sm:$0xff] %vm26, 0.0
  %108 = vst.msk [vmem:[#allocation2 + $0x288] sm:$0xff] %vm26, 0.0
  %109 = vst.msk [vmem:[#allocation2 + $0x290] sm:$0xff] %vm26, 0.0
  %110 = vst.msk [vmem:[#allocation2 + $0x298] sm:$0xff] %vm26, 0.0
  %111 = vst.msk [vmem:[#allocation2 + $0x2a0] sm:$0xff] %vm26, 0.0
  %112 = vst.msk [vmem:[#allocation2 + $0x2a8] sm:$0xff] %vm26, 0.0
  %113 = vst.msk [vmem:[#allocation2 + $0x2b0] sm:$0xff] %vm26, 0.0
  %114 = vst.msk [vmem:[#allocation2 + $0x2b8] sm:$0xff] %vm26, 0.0
  %115 = vst.msk [vmem:[#allocation2 + $0x2c0] sm:$0xff] %vm26, 0.0
  %116 = vst.msk [vmem:[#allocation2 + $0x2c8] sm:$0xff] %vm26, 0.0
  %117 = vst.msk [vmem:[#allocation2 + $0x2d0] sm:$0xff] %vm26, 0.0
  %118 = vst.msk [vmem:[#allocation2 + $0x2d8] sm:$0xff] %vm26, 0.0
  %119 = vst.msk [vmem:[#allocation2 + $0x2e0] sm:$0xff] %vm26, 0.0
  %120 = vst.msk [vmem:[#allocation2 + $0x2e8] sm:$0xff] %vm26, 0.0
  %121 = vst.msk [vmem:[#allocation2 + $0x2f0] sm:$0xff] %vm26, 0.0
  %122 = vst.msk [vmem:[#allocation2 + $0x2f8] sm:$0xff] %vm26, 0.0
  %123 = vst.msk [vmem:[#allocation2 + $0x300] sm:$0xff] %vm26, 0.0
  %124 = vst.msk [vmem:[#allocation2 + $0x308] sm:$0xff] %vm26, 0.0
  %125 = vst.msk [vmem:[#allocation2 + $0x310] sm:$0xff] %vm26, 0.0
  %126 = vst.msk [vmem:[#allocation2 + $0x318] sm:$0xff] %vm26, 0.0
  %127 = vst.msk [vmem:[#allocation2 + $0x320] sm:$0xff] %vm26, 0.0
  %128 = vst.msk [vmem:[#allocation2 + $0x328] sm:$0xff] %vm26, 0.0
  %129 = vst.msk [vmem:[#allocation2 + $0x330] sm:$0xff] %vm26, 0.0
  %130 = vst.msk [vmem:[#allocation2 + $0x338] sm:$0xff] %vm26, 0.0
  %131 = vst.msk [vmem:[#allocation2 + $0x340] sm:$0xff] %vm26, 0.0
  %132 = vst.msk [vmem:[#allocation2 + $0x348] sm:$0xff] %vm26, 0.0
  %133 = vst.msk [vmem:[#allocation2 + $0x350] sm:$0xff] %vm26, 0.0
  %134 = vst.msk [vmem:[#allocation2 + $0x358] sm:$0xff] %vm26, 0.0
  %135 = vst.msk [vmem:[#allocation2 + $0x360] sm:$0xff] %vm26, 0.0
  %136 = vst.msk [vmem:[#allocation2 + $0x368] sm:$0xff] %vm26, 0.0
  %137 = vst.msk [vmem:[#allocation2 + $0x370] sm:$0xff] %vm26, 0.0
  %138 = vst.msk [vmem:[#allocation2 + $0x378] sm:$0xff] %vm26, 0.0
  %139 = vst.msk [vmem:[#allocation2 + $0x380] sm:$0xff] %vm26, 0.0
  %140 = vst.msk [vmem:[#allocation2 + $0x388] sm:$0xff] %vm26, 0.0
  %141 = vst.msk [vmem:[#allocation2 + $0x390] sm:$0xff] %vm26, 0.0
  %142 = vst.msk [vmem:[#allocation2 + $0x398] sm:$0xff] %vm26, 0.0
  %143 = vst.msk [vmem:[#allocation2 + $0x3a0] sm:$0xff] %vm26, 0.0
  %144 = vst.msk [vmem:[#allocation2 + $0x3a8] sm:$0xff] %vm26, 0.0
  %145 = vst.msk [vmem:[#allocation2 + $0x3b0] sm:$0xff] %vm26, 0.0
  %146 = vst.msk [vmem:[#allocation2 + $0x3b8] sm:$0xff] %vm26, 0.0
  %147 = vst.msk [vmem:[#allocation2 + $0x3c0] sm:$0xff] %vm26, 0.0
  %148 = vst.msk [vmem:[#allocation2 + $0x3c8] sm:$0xff] %vm26, 0.0
  %149 = vst.msk [vmem:[#allocation2 + $0x3d0] sm:$0xff] %vm26, 0.0
  %150 = vst.msk [vmem:[#allocation2 + $0x3d8] sm:$0xff] %vm26, 0.0
  %151 = vst.msk [vmem:[#allocation2 + $0x3e0] sm:$0xff] %vm26, 0.0
  %152 = vst.msk [vmem:[#allocation2 + $0x3e8] sm:$0xff] %vm26, 0.0
  %153 = vst.msk [vmem:[#allocation2 + $0x3f0] sm:$0xff] %vm26, 0.0
  %154 = vst.msk [vmem:[#allocation2 + $0x3f8] sm:$0xff] %vm26, 0.0
  %155 = vst.msk [vmem:[#allocation2 + $0x400] sm:$0xff] %vm26, 0.0
  %156 = vst.msk [vmem:[#allocation2 + $0x408] sm:$0xff] %vm26, 0.0
  %157 = vst.msk [vmem:[#allocation2 + $0x410] sm:$0xff] %vm26, 0.0
  %158 = vst.msk [vmem:[#allocation2 + $0x418] sm:$0xff] %vm26, 0.0
  %159 = vst.msk [vmem:[#allocation2 + $0x420] sm:$0xff] %vm26, 0.0
  %160 = vst.msk [vmem:[#allocation2 + $0x428] sm:$0xff] %vm26, 0.0
  %161 = vst.msk [vmem:[#allocation2 + $0x430] sm:$0xff] %vm26, 0.0
  %162 = vst.msk [vmem:[#allocation2 + $0x438] sm:$0xff] %vm26, 0.0
  %163 = vst.msk [vmem:[#allocation2 + $0x440] sm:$0xff] %vm26, 0.0
  %164 = vst.msk [vmem:[#allocation2 + $0x448] sm:$0xff] %vm26, 0.0
  %165 = vst.msk [vmem:[#allocation2 + $0x450] sm:$0xff] %vm26, 0.0
  %166 = vst.msk [vmem:[#allocation2 + $0x458] sm:$0xff] %vm26, 0.0
  %167 = vst.msk [vmem:[#allocation2 + $0x460] sm:$0xff] %vm26, 0.0
  %168 = vst.msk [vmem:[#allocation2 + $0x468] sm:$0xff] %vm26, 0.0
  %169 = vst.msk [vmem:[#allocation2 + $0x470] sm:$0xff] %vm26, 0.0
  %170 = vst.msk [vmem:[#allocation2 + $0x478] sm:$0xff] %vm26, 0.0
  %v171 = vld [vmem:[%s0] sm:$0xff]
  %v172 = vld [vmem:[%s0 + $0x8] sm:$0xff]
  %v173 = vld [vmem:[%s0 + $0x10] sm:$0xff]
  %v174 = vld [vmem:[%s0 + $0x18] sm:$0xff]
  %v175 = vld [vmem:[%s0 + $0x20] sm:$0xff]
  %v176 = vld [vmem:[%s0 + $0x28] sm:$0xff]
  %v177 = vld [vmem:[%s0 + $0x30] sm:$0xff]
  %v178 = vld [vmem:[%s0 + $0x38] sm:$0xff]
  %v179 = vld [vmem:[%s0 + $0x40] sm:$0xff]
  %v180 = vld [vmem:[%s0 + $0x48] sm:$0xff]
  %v181 = vld [vmem:[%s0 + $0x50] sm:$0xff]
  %v182 = vld [vmem:[%s0 + $0x58] sm:$0xff]
  %v183 = vld [vmem:[%s0 + $0x60] sm:$0xff]
  %v184 = vld [vmem:[%s0 + $0x68] sm:$0xff]
  %v185 = vld [vmem:[%s0 + $0x70] sm:$0xff]
  %v186 = vld [vmem:[%s0 + $0x78] sm:$0xff]
  %v187 = vld [vmem:[%s0 + $0x80] sm:$0xff]
  %v188 = vld [vmem:[%s0 + $0x88] sm:$0xff]
  %v189 = vld [vmem:[%s0 + $0x90] sm:$0xff]
  %v190 = vld [vmem:[%s0 + $0x98] sm:$0xff]
  %v191 = vld [vmem:[%s0 + $0xa0] sm:$0xff]
  %v192 = vld [vmem:[%s0 + $0xa8] sm:$0xff]
  %v193 = vld [vmem:[%s0 + $0xb0] sm:$0xff]
  %v194 = vld [vmem:[%s0 + $0xb8] sm:$0xff]
  %v195 = vld [vmem:[%s0 + $0xc0] sm:$0xff]
  %v196 = vld [vmem:[%s0 + $0xc8] sm:$0xff]
  %v197 = vld [vmem:[%s0 + $0xd0] sm:$0xff]
  %v198 = vld [vmem:[%s0 + $0xd8] sm:$0xff]
  %v199 = vld [vmem:[%s0 + $0xe0] sm:$0xff]
  %v200 = vld [vmem:[%s0 + $0xe8] sm:$0xff]
  %v201 = vld [vmem:[%s0 + $0xf0] sm:$0xff]
  %v202 = vld [vmem:[%s0 + $0xf8] sm:$0xff]
  %v203 = vld [vmem:[%s0 + $0x100] sm:$0xff]
  %v204 = vld [vmem:[%s0 + $0x108] sm:$0xff]
  %v205 = vld [vmem:[%s0 + $0x110] sm:$0xff]
  %v206 = vld [vmem:[%s0 + $0x118] sm:$0xff]
  %v207 = vld [vmem:[%s0 + $0x120] sm:$0xff]
  %v208 = vld [vmem:[%s0 + $0x128] sm:$0xff]
  %v209 = vld [vmem:[%s0 + $0x130] sm:$0xff]
  %v210 = vld [vmem:[%s0 + $0x138] sm:$0xff]
  %v211 = vld [vmem:[%s0 + $0x140] sm:$0xff]
  %v212 = vld [vmem:[%s0 + $0x148] sm:$0xff]
  %v213 = vld [vmem:[%s0 + $0x150] sm:$0xff]
  %v214 = vld [vmem:[%s0 + $0x158] sm:$0xff]
  %v215 = vld [vmem:[%s0 + $0x160] sm:$0xff]
  %v216 = vld [vmem:[%s0 + $0x168] sm:$0xff]
  %v217 = vld [vmem:[%s0 + $0x170] sm:$0xff]
  %v218 = vld [vmem:[%s0 + $0x178] sm:$0xff]
  %v219 = vld [vmem:[%s0 + $0x180] sm:$0xff]
  %v220 = vld [vmem:[%s0 + $0x188] sm:$0xff]
  %v221 = vld [vmem:[%s0 + $0x190] sm:$0xff]
  %v222 = vld [vmem:[%s0 + $0x198] sm:$0xff]
  %v223 = vld [vmem:[%s0 + $0x1a0] sm:$0xff]
  %v224 = vld [vmem:[%s0 + $0x1a8] sm:$0xff]
  %v225 = vld [vmem:[%s0 + $0x1b0] sm:$0xff]
  %v226 = vld [vmem:[%s0 + $0x1b8] sm:$0xff]
  %v227 = vld [vmem:[%s0 + $0x1c0] sm:$0xff]
  %v228 = vld [vmem:[%s0 + $0x1c8] sm:$0xff]
  %v229 = vld [vmem:[%s0 + $0x1d0] sm:$0xff]
  %v230 = vld [vmem:[%s0 + $0x1d8] sm:$0xff]
  %v231 = vld [vmem:[%s0 + $0x1e0] sm:$0xff]
  %v232 = vld [vmem:[%s0 + $0x1e8] sm:$0xff]
  %v233 = vld [vmem:[%s0 + $0x1f0] sm:$0xff]
  %v234 = vld [vmem:[%s0 + $0x1f8] sm:$0xff]
  %s235 = scalar_lea.vmem [#allocation2], 32
  %236 = vst.msk [vmem:[%s235 + $0x8] sm:$0xff] %vm26, %v171
  %237 = vst.msk [vmem:[%s235 + $0x10] sm:$0xff] %vm26, %v172
  %238 = vst.msk [vmem:[%s235 + $0x28] sm:$0xff] %vm26, %v173
  %239 = vst.msk [vmem:[%s235 + $0x30] sm:$0xff] %vm26, %v174
  %240 = vst.msk [vmem:[%s235 + $0x48] sm:$0xff] %vm26, %v175
  %241 = vst.msk [vmem:[%s235 + $0x50] sm:$0xff] %vm26, %v176
  %242 = vst.msk [vmem:[%s235 + $0x68] sm:$0xff] %vm26, %v177
  %243 = vst.msk [vmem:[%s235 + $0x70] sm:$0xff] %vm26, %v178
  %244 = vst.msk [vmem:[%s235 + $0x88] sm:$0xff] %vm26, %v179
  %245 = vst.msk [vmem:[%s235 + $0x90] sm:$0xff] %vm26, %v180
  %246 = vst.msk [vmem:[%s235 + $0xa8] sm:$0xff] %vm26, %v181
  %247 = vst.msk [vmem:[%s235 + $0xb0] sm:$0xff] %vm26, %v182
  %248 = vst.msk [vmem:[%s235 + $0xc8] sm:$0xff] %vm26, %v183
  %249 = vst.msk [vmem:[%s235 + $0xd0] sm:$0xff] %vm26, %v184
  %250 = vst.msk [vmem:[%s235 + $0xe8] sm:$0xff] %vm26, %v185
  %251 = vst.msk [vmem:[%s235 + $0xf0] sm:$0xff] %vm26, %v186
  %252 = vst.msk [vmem:[%s235 + $0x108] sm:$0xff] %vm26, %v187
  %253 = vst.msk [vmem:[%s235 + $0x110] sm:$0xff] %vm26, %v188
  %254 = vst.msk [vmem:[%s235 + $0x128] sm:$0xff] %vm26, %v189
  %255 = vst.msk [vmem:[%s235 + $0x130] sm:$0xff] %vm26, %v190
  %256 = vst.msk [vmem:[%s235 + $0x148] sm:$0xff] %vm26, %v191
  %257 = vst.msk [vmem:[%s235 + $0x150] sm:$0xff] %vm26, %v192
  %258 = vst.msk [vmem:[%s235 + $0x168] sm:$0xff] %vm26, %v193
  %259 = vst.msk [vmem:[%s235 + $0x170] sm:$0xff] %vm26, %v194
  %260 = vst.msk [vmem:[%s235 + $0x188] sm:$0xff] %vm26, %v195
  %261 = vst.msk [vmem:[%s235 + $0x190] sm:$0xff] %vm26, %v196
  %262 = vst.msk [vmem:[%s235 + $0x1a8] sm:$0xff] %vm26, %v197
  %263 = vst.msk [vmem:[%s235 + $0x1b0] sm:$0xff] %vm26, %v198
  %264 = vst.msk [vmem:[%s235 + $0x1c8] sm:$0xff] %vm26, %v199
  %265 = vst.msk [vmem:[%s235 + $0x1d0] sm:$0xff] %vm26, %v200
  %266 = vst.msk [vmem:[%s235 + $0x1e8] sm:$0xff] %vm26, %v201
  %267 = vst.msk [vmem:[%s235 + $0x1f0] sm:$0xff] %vm26, %v202
  %268 = vst.msk [vmem:[%s235 + $0x248] sm:$0xff] %vm26, %v203
  %269 = vst.msk [vmem:[%s235 + $0x250] sm:$0xff] %vm26, %v204
  %270 = vst.msk [vmem:[%s235 + $0x268] sm:$0xff] %vm26, %v205
  %271 = vst.msk [vmem:[%s235 + $0x270] sm:$0xff] %vm26, %v206
  %272 = vst.msk [vmem:[%s235 + $0x288] sm:$0xff] %vm26, %v207
  %273 = vst.msk [vmem:[%s235 + $0x290] sm:$0xff] %vm26, %v208
  %274 = vst.msk [vmem:[%s235 + $0x2a8] sm:$0xff] %vm26, %v209
  %275 = vst.msk [vmem:[%s235 + $0x2b0] sm:$0xff] %vm26, %v210
  %276 = vst.msk [vmem:[%s235 + $0x2c8] sm:$0xff] %vm26, %v211
  %277 = vst.msk [vmem:[%s235 + $0x2d0] sm:$0xff] %vm26, %v212
  %278 = vst.msk [vmem:[%s235 + $0x2e8] sm:$0xff] %vm26, %v213
  %279 = vst.msk [vmem:[%s235 + $0x2f0] sm:$0xff] %vm26, %v214
  %280 = vst.msk [vmem:[%s235 + $0x308] sm:$0xff] %vm26, %v215
  %281 = vst.msk [vmem:[%s235 + $0x310] sm:$0xff] %vm26, %v216
  %282 = vst.msk [vmem:[%s235 + $0x328] sm:$0xff] %vm26, %v217
  %283 = vst.msk [vmem:[%s235 + $0x330] sm:$0xff] %vm26, %v218
  %284 = vst.msk [vmem:[%s235 + $0x348] sm:$0xff] %vm26, %v219
  %285 = vst.msk [vmem:[%s235 + $0x350] sm:$0xff] %vm26, %v220
  %286 = vst.msk [vmem:[%s235 + $0x368] sm:$0xff] %vm26, %v221
  %287 = vst.msk [vmem:[%s235 + $0x370] sm:$0xff] %vm26, %v222
  %288 = vst.msk [vmem:[%s235 + $0x388] sm:$0xff] %vm26, %v223
  %289 = vst.msk [vmem:[%s235 + $0x390] sm:$0xff] %vm26, %v224
  %290 = vst.msk [vmem:[%s235 + $0x3a8] sm:$0xff] %vm26, %v225
  %291 = vst.msk [vmem:[%s235 + $0x3b0] sm:$0xff] %vm26, %v226
  %292 = vst.msk [vmem:[%s235 + $0x3c8] sm:$0xff] %vm26, %v227
  %293 = vst.msk [vmem:[%s235 + $0x3d0] sm:$0xff] %vm26, %v228
  %294 = vst.msk [vmem:[%s235 + $0x3e8] sm:$0xff] %vm26, %v229
  %295 = vst.msk [vmem:[%s235 + $0x3f0] sm:$0xff] %vm26, %v230
  %296 = vst.msk [vmem:[%s235 + $0x408] sm:$0xff] %vm26, %v231
  %297 = vst.msk [vmem:[%s235 + $0x410] sm:$0xff] %vm26, %v232
  %298 = vst.msk [vmem:[%s235 + $0x428] sm:$0xff] %vm26, %v233
  %299 = vst.msk [vmem:[%s235 + $0x430] sm:$0xff] %vm26, %v234
  %v300 = vld [vmem:[#allocation2 + $0x7] sm:$0xff]
  %v301 = vld [vmem:[#allocation2 + $0xf] sm:$0xff]
  %v302 = vld [vmem:[#allocation2 + $0x27] sm:$0xff]
  %v303 = vld [vmem:[#allocation2 + $0x2f] sm:$0xff]
  %v304 = vld [vmem:[#allocation2 + $0x47] sm:$0xff]
  %v305 = vld [vmem:[#allocation2 + $0x4f] sm:$0xff]
  %v306 = vld [vmem:[#allocation2 + $0x67] sm:$0xff]
  %v307 = vld [vmem:[#allocation2 + $0x6f] sm:$0xff]
  %v308 = vld [vmem:[#allocation2 + $0x87] sm:$0xff]
  %v309 = vld [vmem:[#allocation2 + $0x8f] sm:$0xff]
  %v310 = vld [vmem:[#allocation2 + $0xa7] sm:$0xff]
  %v311 = vld [vmem:[#allocation2 + $0xaf] sm:$0xff]
  %v312 = vld [vmem:[#allocation2 + $0xc7] sm:$0xff]
  %v313 = vld [vmem:[#allocation2 + $0xcf] sm:$0xff]
  %v314 = vld [vmem:[#allocation2 + $0xe7] sm:$0xff]
  %v315 = vld [vmem:[#allocation2 + $0xef] sm:$0xff]
  %v316 = vld [vmem:[#allocation2 + $0x107] sm:$0xff]
  %v317 = vld [vmem:[#allocation2 + $0x10f] sm:$0xff]
  %v318 = vld [vmem:[#allocation2 + $0x127] sm:$0xff]
  %v319 = vld [vmem:[#allocation2 + $0x12f] sm:$0xff]
  %v320 = vld [vmem:[#allocation2 + $0x147] sm:$0xff]
  %v321 = vld [vmem:[#allocation2 + $0x14f] sm:$0xff]
  %v322 = vld [vmem:[#allocation2 + $0x167] sm:$0xff]
  %v323 = vld [vmem:[#allocation2 + $0x16f] sm:$0xff]
  %v324 = vld [vmem:[#allocation2 + $0x187] sm:$0xff]
  %v325 = vld [vmem:[#allocation2 + $0x18f] sm:$0xff]
  %v326 = vld [vmem:[#allocation2 + $0x1a7] sm:$0xff]
  %v327 = vld [vmem:[#allocation2 + $0x1af] sm:$0xff]
  %v328 = vld [vmem:[#allocation2 + $0x1c7] sm:$0xff]
  %v329 = vld [vmem:[#allocation2 + $0x1cf] sm:$0xff]
  %v330 = vld [vmem:[#allocation2 + $0x1e7] sm:$0xff]
  %v331 = vld [vmem:[#allocation2 + $0x1ef] sm:$0xff]
  %v332 = vld [vmem:[#allocation2 + $0x247] sm:$0xff]
  %v333 = vld [vmem:[#allocation2 + $0x24f] sm:$0xff]
  %v334 = vld [vmem:[#allocation2 + $0x267] sm:$0xff]
  %v335 = vld [vmem:[#allocation2 + $0x26f] sm:$0xff]
  %v336 = vld [vmem:[#allocation2 + $0x287] sm:$0xff]
  %v337 = vld [vmem:[#allocation2 + $0x28f] sm:$0xff]
  %v338 = vld [vmem:[#allocation2 + $0x2a7] sm:$0xff]
  %v339 = vld [vmem:[#allocation2 + $0x2af] sm:$0xff]
  %v340 = vld [vmem:[#allocation2 + $0x2c7] sm:$0xff]
  %v341 = vld [vmem:[#allocation2 + $0x2cf] sm:$0xff]
  %v342 = vld [vmem:[#allocation2 + $0x2e7] sm:$0xff]
  %v343 = vld [vmem:[#allocation2 + $0x2ef] sm:$0xff]
  %v344 = vld [vmem:[#allocation2 + $0x307] sm:$0xff]
  %v345 = vld [vmem:[#allocation2 + $0x30f] sm:$0xff]
  %v346 = vld [vmem:[#allocation2 + $0x327] sm:$0xff]
  %v347 = vld [vmem:[#allocation2 + $0x32f] sm:$0xff]
  %v348 = vld [vmem:[#allocation2 + $0x347] sm:$0xff]
  %v349 = vld [vmem:[#allocation2 + $0x34f] sm:$0xff]
  %v350 = vld [vmem:[#allocation2 + $0x367] sm:$0xff]
  %v351 = vld [vmem:[#allocation2 + $0x36f] sm:$0xff]
  %v352 = vld [vmem:[#allocation2 + $0x387] sm:$0xff]
  %v353 = vld [vmem:[#allocation2 + $0x38f] sm:$0xff]
  %v354 = vld [vmem:[#allocation2 + $0x3a7] sm:$0xff]
  %v355 = vld [vmem:[#allocation2 + $0x3af] sm:$0xff]
  %v356 = vld [vmem:[#allocation2 + $0x3c7] sm:$0xff]
  %v357 = vld [vmem:[#allocation2 + $0x3cf] sm:$0xff]
  %v358 = vld [vmem:[#allocation2 + $0x3e7] sm:$0xff]
  %v359 = vld [vmem:[#allocation2 + $0x3ef] sm:$0xff]
  %v360 = vld [vmem:[#allocation2 + $0x407] sm:$0xff]
  %v361 = vld [vmem:[#allocation2 + $0x40f] sm:$0xff]
  %v362 = vld [vmem:[#allocation2 + $0x427] sm:$0xff]
  %v363 = vld [vmem:[#allocation2 + $0x42f] sm:$0xff]
  %v364 = vld [vmem:[#allocation2 + $0x8] sm:$0xff]
  %v365 = vld [vmem:[#allocation2 + $0x10] sm:$0xff]
  %v366 = vld [vmem:[#allocation2 + $0x28] sm:$0xff]
  %v367 = vld [vmem:[#allocation2 + $0x30] sm:$0xff]
  %v368 = vld [vmem:[#allocation2 + $0x48] sm:$0xff]
  %v369 = vld [vmem:[#allocation2 + $0x50] sm:$0xff]
  %v370 = vld [vmem:[#allocation2 + $0x68] sm:$0xff]
  %v371 = vld [vmem:[#allocation2 + $0x70] sm:$0xff]
  %v372 = vld [vmem:[#allocation2 + $0x88] sm:$0xff]
  %v373 = vld [vmem:[#allocation2 + $0x90] sm:$0xff]
  %v374 = vld [vmem:[#allocation2 + $0xa8] sm:$0xff]
  %v375 = vld [vmem:[#allocation2 + $0xb0] sm:$0xff]
  %v376 = vld [vmem:[#allocation2 + $0xc8] sm:$0xff]
  %v377 = vld [vmem:[#allocation2 + $0xd0] sm:$0xff]
  %v378 = vld [vmem:[#allocation2 + $0xe8] sm:$0xff]
  %v379 = vld [vmem:[#allocation2 + $0xf0] sm:$0xff]
  %v380 = vld [vmem:[#allocation2 + $0x108] sm:$0xff]
  %v381 = vld [vmem:[#allocation2 + $0x110] sm:$0xff]
  %v382 = vld [vmem:[#allocation2 + $0x128] sm:$0xff]
  %v383 = vld [vmem:[#allocation2 + $0x130] sm:$0xff]
  %v384 = vld [vmem:[#allocation2 + $0x148] sm:$0xff]
  %v385 = vld [vmem:[#allocation2 + $0x150] sm:$0xff]
  %v386 = vld [vmem:[#allocation2 + $0x168] sm:$0xff]
  %v387 = vld [vmem:[#allocation2 + $0x170] sm:$0xff]
  %v388 = vld [vmem:[#allocation2 + $0x188] sm:$0xff]
  %v389 = vld [vmem:[#allocation2 + $0x190] sm:$0xff]
  %v390 = vld [vmem:[#allocation2 + $0x1a8] sm:$0xff]
  %v391 = vld [vmem:[#allocation2 + $0x1b0] sm:$0xff]
  %v392 = vld [vmem:[#allocation2 + $0x1c8] sm:$0xff]
  %v393 = vld [vmem:[#allocation2 + $0x1d0] sm:$0xff]
  %v394 = vld [vmem:[#allocation2 + $0x1e8] sm:$0xff]
  %v395 = vld [vmem:[#allocation2 + $0x1f0] sm:$0xff]
  %v396 = vld [vmem:[#allocation2 + $0x248] sm:$0xff]
  %v397 = vld [vmem:[#allocation2 + $0x250] sm:$0xff]
  %v398 = vld [vmem:[#allocation2 + $0x268] sm:$0xff]
  %v399 = vld [vmem:[#allocation2 + $0x270] sm:$0xff]
  %v400 = vld [vmem:[#allocation2 + $0x288] sm:$0xff]
  %v401 = vld [vmem:[#allocation2 + $0x290] sm:$0xff]
  %v402 = vld [vmem:[#allocation2 + $0x2a8] sm:$0xff]
  %v403 = vld [vmem:[#allocation2 + $0x2b0] sm:$0xff]
  %v404 = vld [vmem:[#allocation2 + $0x2c8] sm:$0xff]
  %v405 = vld [vmem:[#allocation2 + $0x2d0] sm:$0xff]
  %v406 = vld [vmem:[#allocation2 + $0x2e8] sm:$0xff]
  %v407 = vld [vmem:[#allocation2 + $0x2f0] sm:$0xff]
  %v408 = vld [vmem:[#allocation2 + $0x308] sm:$0xff]
  %v409 = vld [vmem:[#allocation2 + $0x310] sm:$0xff]
  %v410 = vld [vmem:[#allocation2 + $0x328] sm:$0xff]
  %v411 = vld [vmem:[#allocation2 + $0x330] sm:$0xff]
  %v412 = vld [vmem:[#allocation2 + $0x348] sm:$0xff]
  %v413 = vld [vmem:[#allocation2 + $0x350] sm:$0xff]
  %v414 = vld [vmem:[#allocation2 + $0x368] sm:$0xff]
  %v415 = vld [vmem:[#allocation2 + $0x370] sm:$0xff]
  %v416 = vld [vmem:[#allocation2 + $0x388] sm:$0xff]
  %v417 = vld [vmem:[#allocation2 + $0x390] sm:$0xff]
  %v418 = vld [vmem:[#allocation2 + $0x3a8] sm:$0xff]
  %v419 = vld [vmem:[#allocation2 + $0x3b0] sm:$0xff]
  %v420 = vld [vmem:[#allocation2 + $0x3c8] sm:$0xff]
  %v421 = vld [vmem:[#allocation2 + $0x3d0] sm:$0xff]
  %v422 = vld [vmem:[#allocation2 + $0x3e8] sm:$0xff]
  %v423 = vld [vmem:[#allocation2 + $0x3f0] sm:$0xff]
  %v424 = vld [vmem:[#allocation2 + $0x408] sm:$0xff]
  %v425 = vld [vmem:[#allocation2 + $0x410] sm:$0xff]
  %v426 = vld [vmem:[#allocation2 + $0x428] sm:$0xff]
  %v427 = vld [vmem:[#allocation2 + $0x430] sm:$0xff]
  %v428 = vld [vmem:[#allocation2 + $0x9] sm:$0xff]
  %v429 = vld [vmem:[#allocation2 + $0x11] sm:$0xff]
  %v430 = vld [vmem:[#allocation2 + $0x29] sm:$0xff]
  %v431 = vld [vmem:[#allocation2 + $0x31] sm:$0xff]
  %v432 = vld [vmem:[#allocation2 + $0x49] sm:$0xff]
  %v433 = vld [vmem:[#allocation2 + $0x51] sm:$0xff]
  %v434 = vld [vmem:[#allocation2 + $0x69] sm:$0xff]
  %v435 = vld [vmem:[#allocation2 + $0x71] sm:$0xff]
  %v436 = vld [vmem:[#allocation2 + $0x89] sm:$0xff]
  %v437 = vld [vmem:[#allocation2 + $0x91] sm:$0xff]
  %v438 = vld [vmem:[#allocation2 + $0xa9] sm:$0xff]
  %v439 = vld [vmem:[#allocation2 + $0xb1] sm:$0xff]
  %v440 = vld [vmem:[#allocation2 + $0xc9] sm:$0xff]
  %v441 = vld [vmem:[#allocation2 + $0xd1] sm:$0xff]
  %v442 = vld [vmem:[#allocation2 + $0xe9] sm:$0xff]
  %v443 = vld [vmem:[#allocation2 + $0xf1] sm:$0xff]
  %v444 = vld [vmem:[#allocation2 + $0x109] sm:$0xff]
  %v445 = vld [vmem:[#allocation2 + $0x111] sm:$0xff]
  %v446 = vld [vmem:[#allocation2 + $0x129] sm:$0xff]
  %v447 = vld [vmem:[#allocation2 + $0x131] sm:$0xff]
  %v448 = vld [vmem:[#allocation2 + $0x149] sm:$0xff]
  %v449 = vld [vmem:[#allocation2 + $0x151] sm:$0xff]
  %v450 = vld [vmem:[#allocation2 + $0x169] sm:$0xff]
  %v451 = vld [vmem:[#allocation2 + $0x171] sm:$0xff]
  %v452 = vld [vmem:[#allocation2 + $0x189] sm:$0xff]
  %v453 = vld [vmem:[#allocation2 + $0x191] sm:$0xff]
  %v454 = vld [vmem:[#allocation2 + $0x1a9] sm:$0xff]
  %v455 = vld [vmem:[#allocation2 + $0x1b1] sm:$0xff]
  %v456 = vld [vmem:[#allocation2 + $0x1c9] sm:$0xff]
  %v457 = vld [vmem:[#allocation2 + $0x1d1] sm:$0xff]
  %v458 = vld [vmem:[#allocation2 + $0x1e9] sm:$0xff]
  %v459 = vld [vmem:[#allocation2 + $0x1f1] sm:$0xff]
  %v460 = vld [vmem:[#allocation2 + $0x249] sm:$0xff]
  %v461 = vld [vmem:[#allocation2 + $0x251] sm:$0xff]
  %v462 = vld [vmem:[#allocation2 + $0x269] sm:$0xff]
  %v463 = vld [vmem:[#allocation2 + $0x271] sm:$0xff]
  %v464 = vld [vmem:[#allocation2 + $0x289] sm:$0xff]
  %v465 = vld [vmem:[#allocation2 + $0x291] sm:$0xff]
  %v466 = vld [vmem:[#allocation2 + $0x2a9] sm:$0xff]
  %v467 = vld [vmem:[#allocation2 + $0x2b1] sm:$0xff]
  %v468 = vld [vmem:[#allocation2 + $0x2c9] sm:$0xff]
  %v469 = vld [vmem:[#allocation2 + $0x2d1] sm:$0xff]
  %v470 = vld [vmem:[#allocation2 + $0x2e9] sm:$0xff]
  %v471 = vld [vmem:[#allocation2 + $0x2f1] sm:$0xff]
  %v472 = vld [vmem:[#allocation2 + $0x309] sm:$0xff]
  %v473 = vld [vmem:[#allocation2 + $0x311] sm:$0xff]
  %v474 = vld [vmem:[#allocation2 + $0x329] sm:$0xff]
  %v475 = vld [vmem:[#allocation2 + $0x331] sm:$0xff]
  %v476 = vld [vmem:[#allocation2 + $0x349] sm:$0xff]
  %v477 = vld [vmem:[#allocation2 + $0x351] sm:$0xff]
  %v478 = vld [vmem:[#allocation2 + $0x369] sm:$0xff]
  %v479 = vld [vmem:[#allocation2 + $0x371] sm:$0xff]
  %v480 = vld [vmem:[#allocation2 + $0x389] sm:$0xff]
  %v481 = vld [vmem:[#allocation2 + $0x391] sm:$0xff]
  %v482 = vld [vmem:[#allocation2 + $0x3a9] sm:$0xff]
  %v483 = vld [vmem:[#allocation2 + $0x3b1] sm:$0xff]
  %v484 = vld [vmem:[#allocation2 + $0x3c9] sm:$0xff]
  %v485 = vld [vmem:[#allocation2 + $0x3d1] sm:$0xff]
  %v486 = vld [vmem:[#allocation2 + $0x3e9] sm:$0xff]
  %v487 = vld [vmem:[#allocation2 + $0x3f1] sm:$0xff]
  %v488 = vld [vmem:[#allocation2 + $0x409] sm:$0xff]
  %v489 = vld [vmem:[#allocation2 + $0x411] sm:$0xff]
  %v490 = vld [vmem:[#allocation2 + $0x429] sm:$0xff]
  %v491 = vld [vmem:[#allocation2 + $0x431] sm:$0xff]
  %v492 = vld [vmem:[%s235 + $0x7] sm:$0xff]
  %v493 = vld [vmem:[%s235 + $0xf] sm:$0xff]
  %v494 = vld [vmem:[%s235 + $0x27] sm:$0xff]
  %v495 = vld [vmem:[%s235 + $0x2f] sm:$0xff]
  %v496 = vld [vmem:[%s235 + $0x47] sm:$0xff]
  %v497 = vld [vmem:[%s235 + $0x4f] sm:$0xff]
  %v498 = vld [vmem:[%s235 + $0x67] sm:$0xff]
  %v499 = vld [vmem:[%s235 + $0x6f] sm:$0xff]
  %v500 = vld [vmem:[%s235 + $0x87] sm:$0xff]
  %v501 = vld [vmem:[%s235 + $0x8f] sm:$0xff]
  %v502 = vld [vmem:[%s235 + $0xa7] sm:$0xff]
  %v503 = vld [vmem:[%s235 + $0xaf] sm:$0xff]
  %v504 = vld [vmem:[%s235 + $0xc7] sm:$0xff]
  %v505 = vld [vmem:[%s235 + $0xcf] sm:$0xff]
  %v506 = vld [vmem:[%s235 + $0xe7] sm:$0xff]
  %v507 = vld [vmem:[%s235 + $0xef] sm:$0xff]
  %v508 = vld [vmem:[%s235 + $0x107] sm:$0xff]
  %v509 = vld [vmem:[%s235 + $0x10f] sm:$0xff]
  %v510 = vld [vmem:[%s235 + $0x127] sm:$0xff]
  %v511 = vld [vmem:[%s235 + $0x12f] sm:$0xff]
  %v512 = vld [vmem:[%s235 + $0x147] sm:$0xff]
  %v513 = vld [vmem:[%s235 + $0x14f] sm:$0xff]
  %v514 = vld [vmem:[%s235 + $0x167] sm:$0xff]
  %v515 = vld [vmem:[%s235 + $0x16f] sm:$0xff]
  %v516 = vld [vmem:[%s235 + $0x187] sm:$0xff]
  %v517 = vld [vmem:[%s235 + $0x18f] sm:$0xff]
  %v518 = vld [vmem:[%s235 + $0x1a7] sm:$0xff]
  %v519 = vld [vmem:[%s235 + $0x1af] sm:$0xff]
  %v520 = vld [vmem:[%s235 + $0x1c7] sm:$0xff]
  %v521 = vld [vmem:[%s235 + $0x1cf] sm:$0xff]
  %v522 = vld [vmem:[%s235 + $0x1e7] sm:$0xff]
  %v523 = vld [vmem:[%s235 + $0x1ef] sm:$0xff]
  %v524 = vld [vmem:[%s235 + $0x247] sm:$0xff]
  %v525 = vld [vmem:[%s235 + $0x24f] sm:$0xff]
  %v526 = vld [vmem:[%s235 + $0x267] sm:$0xff]
  %v527 = vld [vmem:[%s235 + $0x26f] sm:$0xff]
  %v528 = vld [vmem:[%s235 + $0x287] sm:$0xff]
  %v529 = vld [vmem:[%s235 + $0x28f] sm:$0xff]
  %v530 = vld [vmem:[%s235 + $0x2a7] sm:$0xff]
  %v531 = vld [vmem:[%s235 + $0x2af] sm:$0xff]
  %v532 = vld [vmem:[%s235 + $0x2c7] sm:$0xff]
  %v533 = vld [vmem:[%s235 + $0x2cf] sm:$0xff]
  %v534 = vld [vmem:[%s235 + $0x2e7] sm:$0xff]
  %v535 = vld [vmem:[%s235 + $0x2ef] sm:$0xff]
  %v536 = vld [vmem:[%s235 + $0x307] sm:$0xff]
  %v537 = vld [vmem:[%s235 + $0x30f] sm:$0xff]
  %v538 = vld [vmem:[%s235 + $0x327] sm:$0xff]
  %v539 = vld [vmem:[%s235 + $0x32f] sm:$0xff]
  %v540 = vld [vmem:[%s235 + $0x347] sm:$0xff]
  %v541 = vld [vmem:[%s235 + $0x34f] sm:$0xff]
  %v542 = vld [vmem:[%s235 + $0x367] sm:$0xff]
  %v543 = vld [vmem:[%s235 + $0x36f] sm:$0xff]
  %v544 = vld [vmem:[%s235 + $0x387] sm:$0xff]
  %v545 = vld [vmem:[%s235 + $0x38f] sm:$0xff]
  %v546 = vld [vmem:[%s235 + $0x3a7] sm:$0xff]
  %v547 = vld [vmem:[%s235 + $0x3af] sm:$0xff]
  %v548 = vld [vmem:[%s235 + $0x3c7] sm:$0xff]
  %v549 = vld [vmem:[%s235 + $0x3cf] sm:$0xff]
  %v550 = vld [vmem:[%s235 + $0x3e7] sm:$0xff]
  %v551 = vld [vmem:[%s235 + $0x3ef] sm:$0xff]
  %v552 = vld [vmem:[%s235 + $0x407] sm:$0xff]
  %v553 = vld [vmem:[%s235 + $0x40f] sm:$0xff]
  %v554 = vld [vmem:[%s235 + $0x427] sm:$0xff]
  %v555 = vld [vmem:[%s235 + $0x42f] sm:$0xff]
  %v556 = vld [vmem:[%s235 + $0x8] sm:$0xff]
  %v557 = vld [vmem:[%s235 + $0x10] sm:$0xff]
  %v558 = vld [vmem:[%s235 + $0x28] sm:$0xff]
  %v559 = vld [vmem:[%s235 + $0x30] sm:$0xff]
  %v560 = vld [vmem:[%s235 + $0x48] sm:$0xff]
  %v561 = vld [vmem:[%s235 + $0x50] sm:$0xff]
  %v562 = vld [vmem:[%s235 + $0x68] sm:$0xff]
  %v563 = vld [vmem:[%s235 + $0x70] sm:$0xff]
  %v564 = vld [vmem:[%s235 + $0x88] sm:$0xff]
  %v565 = vld [vmem:[%s235 + $0x90] sm:$0xff]
  %v566 = vld [vmem:[%s235 + $0xa8] sm:$0xff]
  %v567 = vld [vmem:[%s235 + $0xb0] sm:$0xff]
  %v568 = vld [vmem:[%s235 + $0xc8] sm:$0xff]
  %v569 = vld [vmem:[%s235 + $0xd0] sm:$0xff]
  %v570 = vld [vmem:[%s235 + $0xe8] sm:$0xff]
  %v571 = vld [vmem:[%s235 + $0xf0] sm:$0xff]
  %v572 = vld [vmem:[%s235 + $0x108] sm:$0xff]
  %v573 = vld [vmem:[%s235 + $0x110] sm:$0xff]
  %v574 = vld [vmem:[%s235 + $0x128] sm:$0xff]
  %v575 = vld [vmem:[%s235 + $0x130] sm:$0xff]
  %v576 = vld [vmem:[%s235 + $0x148] sm:$0xff]
  %v577 = vld [vmem:[%s235 + $0x150] sm:$0xff]
  %v578 = vld [vmem:[%s235 + $0x168] sm:$0xff]
  %v579 = vld [vmem:[%s235 + $0x170] sm:$0xff]
  %v580 = vld [vmem:[%s235 + $0x188] sm:$0xff]
  %v581 = vld [vmem:[%s235 + $0x190] sm:$0xff]
  %v582 = vld [vmem:[%s235 + $0x1a8] sm:$0xff]
  %v583 = vld [vmem:[%s235 + $0x1b0] sm:$0xff]
  %v584 = vld [vmem:[%s235 + $0x1c8] sm:$0xff]
  %v585 = vld [vmem:[%s235 + $0x1d0] sm:$0xff]
  %v586 = vld [vmem:[%s235 + $0x1e8] sm:$0xff]
  %v587 = vld [vmem:[%s235 + $0x1f0] sm:$0xff]
  %v588 = vld [vmem:[%s235 + $0x248] sm:$0xff]
  %v589 = vld [vmem:[%s235 + $0x250] sm:$0xff]
  %v590 = vld [vmem:[%s235 + $0x268] sm:$0xff]
  %v591 = vld [vmem:[%s235 + $0x270] sm:$0xff]
  %v592 = vld [vmem:[%s235 + $0x288] sm:$0xff]
  %v593 = vld [vmem:[%s235 + $0x290] sm:$0xff]
  %v594 = vld [vmem:[%s235 + $0x2a8] sm:$0xff]
  %v595 = vld [vmem:[%s235 + $0x2b0] sm:$0xff]
  %v596 = vld [vmem:[%s235 + $0x2c8] sm:$0xff]
  %v597 = vld [vmem:[%s235 + $0x2d0] sm:$0xff]
  %v598 = vld [vmem:[%s235 + $0x2e8] sm:$0xff]
  %v599 = vld [vmem:[%s235 + $0x2f0] sm:$0xff]
  %v600 = vld [vmem:[%s235 + $0x308] sm:$0xff]
  %v601 = vld [vmem:[%s235 + $0x310] sm:$0xff]
  %v602 = vld [vmem:[%s235 + $0x328] sm:$0xff]
  %v603 = vld [vmem:[%s235 + $0x330] sm:$0xff]
  %v604 = vld [vmem:[%s235 + $0x348] sm:$0xff]
  %v605 = vld [vmem:[%s235 + $0x350] sm:$0xff]
  %v606 = vld [vmem:[%s235 + $0x368] sm:$0xff]
  %v607 = vld [vmem:[%s235 + $0x370] sm:$0xff]
  %v608 = vld [vmem:[%s235 + $0x388] sm:$0xff]
  %v609 = vld [vmem:[%s235 + $0x390] sm:$0xff]
  %v610 = vld [vmem:[%s235 + $0x3a8] sm:$0xff]
  %v611 = vld [vmem:[%s235 + $0x3b0] sm:$0xff]
  %v612 = vld [vmem:[%s235 + $0x3c8] sm:$0xff]
  %v613 = vld [vmem:[%s235 + $0x3d0] sm:$0xff]
  %v614 = vld [vmem:[%s235 + $0x3e8] sm:$0xff]
  %v615 = vld [vmem:[%s235 + $0x3f0] sm:$0xff]
  %v616 = vld [vmem:[%s235 + $0x408] sm:$0xff]
  %v617 = vld [vmem:[%s235 + $0x410] sm:$0xff]
  %v618 = vld [vmem:[%s235 + $0x428] sm:$0xff]
  %v619 = vld [vmem:[%s235 + $0x430] sm:$0xff]
  %v620 = vld [vmem:[%s235 + $0x9] sm:$0xff]
  %v621 = vld [vmem:[%s235 + $0x11] sm:$0xff]
  %v622 = vld [vmem:[%s235 + $0x29] sm:$0xff]
  %v623 = vld [vmem:[%s235 + $0x31] sm:$0xff]
  %v624 = vld [vmem:[%s235 + $0x49] sm:$0xff]
  %v625 = vld [vmem:[%s235 + $0x51] sm:$0xff]
  %v626 = vld [vmem:[%s235 + $0x69] sm:$0xff]
  %v627 = vld [vmem:[%s235 + $0x71] sm:$0xff]
  %v628 = vld [vmem:[%s235 + $0x89] sm:$0xff]
  %v629 = vld [vmem:[%s235 + $0x91] sm:$0xff]
  %v630 = vld [vmem:[%s235 + $0xa9] sm:$0xff]
  %v631 = vld [vmem:[%s235 + $0xb1] sm:$0xff]
  %v632 = vld [vmem:[%s235 + $0xc9] sm:$0xff]
  %v633 = vld [vmem:[%s235 + $0xd1] sm:$0xff]
  %v634 = vld [vmem:[%s235 + $0xe9] sm:$0xff]
  %v635 = vld [vmem:[%s235 + $0xf1] sm:$0xff]
  %v636 = vld [vmem:[%s235 + $0x109] sm:$0xff]
  %v637 = vld [vmem:[%s235 + $0x111] sm:$0xff]
  %v638 = vld [vmem:[%s235 + $0x129] sm:$0xff]
  %v639 = vld [vmem:[%s235 + $0x131] sm:$0xff]
  %v640 = vld [vmem:[%s235 + $0x149] sm:$0xff]
  %v641 = vld [vmem:[%s235 + $0x151] sm:$0xff]
  %v642 = vld [vmem:[%s235 + $0x169] sm:$0xff]
  %v643 = vld [vmem:[%s235 + $0x171] sm:$0xff]
  %v644 = vld [vmem:[%s235 + $0x189] sm:$0xff]
  %v645 = vld [vmem:[%s235 + $0x191] sm:$0xff]
  %v646 = vld [vmem:[%s235 + $0x1a9] sm:$0xff]
  %v647 = vld [vmem:[%s235 + $0x1b1] sm:$0xff]
  %v648 = vld [vmem:[%s235 + $0x1c9] sm:$0xff]
  %v649 = vld [vmem:[%s235 + $0x1d1] sm:$0xff]
  %v650 = vld [vmem:[%s235 + $0x1e9] sm:$0xff]
  %v651 = vld [vmem:[%s235 + $0x1f1] sm:$0xff]
  %v652 = vld [vmem:[%s235 + $0x249] sm:$0xff]
  %v653 = vld [vmem:[%s235 + $0x251] sm:$0xff]
  %v654 = vld [vmem:[%s235 + $0x269] sm:$0xff]
  %v655 = vld [vmem:[%s235 + $0x271] sm:$0xff]
  %v656 = vld [vmem:[%s235 + $0x289] sm:$0xff]
  %v657 = vld [vmem:[%s235 + $0x291] sm:$0xff]
  %v658 = vld [vmem:[%s235 + $0x2a9] sm:$0xff]
  %v659 = vld [vmem:[%s235 + $0x2b1] sm:$0xff]
  %v660 = vld [vmem:[%s235 + $0x2c9] sm:$0xff]
  %v661 = vld [vmem:[%s235 + $0x2d1] sm:$0xff]
  %v662 = vld [vmem:[%s235 + $0x2e9] sm:$0xff]
  %v663 = vld [vmem:[%s235 + $0x2f1] sm:$0xff]
  %v664 = vld [vmem:[%s235 + $0x309] sm:$0xff]
  %v665 = vld [vmem:[%s235 + $0x311] sm:$0xff]
  %v666 = vld [vmem:[%s235 + $0x329] sm:$0xff]
  %v667 = vld [vmem:[%s235 + $0x331] sm:$0xff]
  %v668 = vld [vmem:[%s235 + $0x349] sm:$0xff]
  %v669 = vld [vmem:[%s235 + $0x351] sm:$0xff]
  %v670 = vld [vmem:[%s235 + $0x369] sm:$0xff]
  %v671 = vld [vmem:[%s235 + $0x371] sm:$0xff]
  %v672 = vld [vmem:[%s235 + $0x389] sm:$0xff]
  %v673 = vld [vmem:[%s235 + $0x391] sm:$0xff]
  %v674 = vld [vmem:[%s235 + $0x3a9] sm:$0xff]
  %v675 = vld [vmem:[%s235 + $0x3b1] sm:$0xff]
  %v676 = vld [vmem:[%s235 + $0x3c9] sm:$0xff]
  %v677 = vld [vmem:[%s235 + $0x3d1] sm:$0xff]
  %v678 = vld [vmem:[%s235 + $0x3e9] sm:$0xff]
  %v679 = vld [vmem:[%s235 + $0x3f1] sm:$0xff]
  %v680 = vld [vmem:[%s235 + $0x409] sm:$0xff]
  %v681 = vld [vmem:[%s235 + $0x411] sm:$0xff]
  %v682 = vld [vmem:[%s235 + $0x429] sm:$0xff]
  %v683 = vld [vmem:[%s235 + $0x431] sm:$0xff]
  %s684 = scalar_lea.vmem [#allocation2], 64
  %v685 = vld [vmem:[%s684 + $0x7] sm:$0xff]
  %v686 = vld [vmem:[%s684 + $0xf] sm:$0xff]
  %v687 = vld [vmem:[%s684 + $0x27] sm:$0xff]
  %v688 = vld [vmem:[%s684 + $0x2f] sm:$0xff]
  %v689 = vld [vmem:[%s684 + $0x47] sm:$0xff]
  %v690 = vld [vmem:[%s684 + $0x4f] sm:$0xff]
  %v691 = vld [vmem:[%s684 + $0x67] sm:$0xff]
  %v692 = vld [vmem:[%s684 + $0x6f] sm:$0xff]
  %v693 = vld [vmem:[%s684 + $0x87] sm:$0xff]
  %v694 = vld [vmem:[%s684 + $0x8f] sm:$0xff]
  %v695 = vld [vmem:[%s684 + $0xa7] sm:$0xff]
  %v696 = vld [vmem:[%s684 + $0xaf] sm:$0xff]
  %v697 = vld [vmem:[%s684 + $0xc7] sm:$0xff]
  %v698 = vld [vmem:[%s684 + $0xcf] sm:$0xff]
  %v699 = vld [vmem:[%s684 + $0xe7] sm:$0xff]
  %v700 = vld [vmem:[%s684 + $0xef] sm:$0xff]
  %v701 = vld [vmem:[%s684 + $0x107] sm:$0xff]
  %v702 = vld [vmem:[%s684 + $0x10f] sm:$0xff]
  %v703 = vld [vmem:[%s684 + $0x127] sm:$0xff]
  %v704 = vld [vmem:[%s684 + $0x12f] sm:$0xff]
  %v705 = vld [vmem:[%s684 + $0x147] sm:$0xff]
  %v706 = vld [vmem:[%s684 + $0x14f] sm:$0xff]
  %v707 = vld [vmem:[%s684 + $0x167] sm:$0xff]
  %v708 = vld [vmem:[%s684 + $0x16f] sm:$0xff]
  %v709 = vld [vmem:[%s684 + $0x187] sm:$0xff]
  %v710 = vld [vmem:[%s684 + $0x18f] sm:$0xff]
  %v711 = vld [vmem:[%s684 + $0x1a7] sm:$0xff]
  %v712 = vld [vmem:[%s684 + $0x1af] sm:$0xff]
  %v713 = vld [vmem:[%s684 + $0x1c7] sm:$0xff]
  %v714 = vld [vmem:[%s684 + $0x1cf] sm:$0xff]
  %v715 = vld [vmem:[%s684 + $0x1e7] sm:$0xff]
  %v716 = vld [vmem:[%s684 + $0x1ef] sm:$0xff]
  %v717 = vld [vmem:[%s684 + $0x247] sm:$0xff]
  %v718 = vld [vmem:[%s684 + $0x24f] sm:$0xff]
  %v719 = vld [vmem:[%s684 + $0x267] sm:$0xff]
  %v720 = vld [vmem:[%s684 + $0x26f] sm:$0xff]
  %v721 = vld [vmem:[%s684 + $0x287] sm:$0xff]
  %v722 = vld [vmem:[%s684 + $0x28f] sm:$0xff]
  %v723 = vld [vmem:[%s684 + $0x2a7] sm:$0xff]
  %v724 = vld [vmem:[%s684 + $0x2af] sm:$0xff]
  %v725 = vld [vmem:[%s684 + $0x2c7] sm:$0xff]
  %v726 = vld [vmem:[%s684 + $0x2cf] sm:$0xff]
  %v727 = vld [vmem:[%s684 + $0x2e7] sm:$0xff]
  %v728 = vld [vmem:[%s684 + $0x2ef] sm:$0xff]
  %v729 = vld [vmem:[%s684 + $0x307] sm:$0xff]
  %v730 = vld [vmem:[%s684 + $0x30f] sm:$0xff]
  %v731 = vld [vmem:[%s684 + $0x327] sm:$0xff]
  %v732 = vld [vmem:[%s684 + $0x32f] sm:$0xff]
  %v733 = vld [vmem:[%s684 + $0x347] sm:$0xff]
  %v734 = vld [vmem:[%s684 + $0x34f] sm:$0xff]
  %v735 = vld [vmem:[%s684 + $0x367] sm:$0xff]
  %v736 = vld [vmem:[%s684 + $0x36f] sm:$0xff]
  %v737 = vld [vmem:[%s684 + $0x387] sm:$0xff]
  %v738 = vld [vmem:[%s684 + $0x38f] sm:$0xff]
  %v739 = vld [vmem:[%s684 + $0x3a7] sm:$0xff]
  %v740 = vld [vmem:[%s684 + $0x3af] sm:$0xff]
  %v741 = vld [vmem:[%s684 + $0x3c7] sm:$0xff]
  %v742 = vld [vmem:[%s684 + $0x3cf] sm:$0xff]
  %v743 = vld [vmem:[%s684 + $0x3e7] sm:$0xff]
  %v744 = vld [vmem:[%s684 + $0x3ef] sm:$0xff]
  %v745 = vld [vmem:[%s684 + $0x407] sm:$0xff]
  %v746 = vld [vmem:[%s684 + $0x40f] sm:$0xff]
  %v747 = vld [vmem:[%s684 + $0x427] sm:$0xff]
  %v748 = vld [vmem:[%s684 + $0x42f] sm:$0xff]
  %v749 = vld [vmem:[%s684 + $0x8] sm:$0xff]
  %v750 = vld [vmem:[%s684 + $0x10] sm:$0xff]
  %v751 = vld [vmem:[%s684 + $0x28] sm:$0xff]
  %v752 = vld [vmem:[%s684 + $0x30] sm:$0xff]
  %v753 = vld [vmem:[%s684 + $0x48] sm:$0xff]
  %v754 = vld [vmem:[%s684 + $0x50] sm:$0xff]
  %v755 = vld [vmem:[%s684 + $0x68] sm:$0xff]
  %v756 = vld [vmem:[%s684 + $0x70] sm:$0xff]
  %v757 = vld [vmem:[%s684 + $0x88] sm:$0xff]
  %v758 = vld [vmem:[%s684 + $0x90] sm:$0xff]
  %v759 = vld [vmem:[%s684 + $0xa8] sm:$0xff]
  %v760 = vld [vmem:[%s684 + $0xb0] sm:$0xff]
  %v761 = vld [vmem:[%s684 + $0xc8] sm:$0xff]
  %v762 = vld [vmem:[%s684 + $0xd0] sm:$0xff]
  %v763 = vld [vmem:[%s684 + $0xe8] sm:$0xff]
  %v764 = vld [vmem:[%s684 + $0xf0] sm:$0xff]
  %v765 = vld [vmem:[%s684 + $0x108] sm:$0xff]
  %v766 = vld [vmem:[%s684 + $0x110] sm:$0xff]
  %v767 = vld [vmem:[%s684 + $0x128] sm:$0xff]
  %v768 = vld [vmem:[%s684 + $0x130] sm:$0xff]
  %v769 = vld [vmem:[%s684 + $0x148] sm:$0xff]
  %v770 = vld [vmem:[%s684 + $0x150] sm:$0xff]
  %v771 = vld [vmem:[%s684 + $0x168] sm:$0xff]
  %v772 = vld [vmem:[%s684 + $0x170] sm:$0xff]
  %v773 = vld [vmem:[%s684 + $0x188] sm:$0xff]
  %v774 = vld [vmem:[%s684 + $0x190] sm:$0xff]
  %v775 = vld [vmem:[%s684 + $0x1a8] sm:$0xff]
  %v776 = vld [vmem:[%s684 + $0x1b0] sm:$0xff]
  %v777 = vld [vmem:[%s684 + $0x1c8] sm:$0xff]
  %v778 = vld [vmem:[%s684 + $0x1d0] sm:$0xff]
  %v779 = vld [vmem:[%s684 + $0x1e8] sm:$0xff]
  %v780 = vld [vmem:[%s684 + $0x1f0] sm:$0xff]
  %v781 = vld [vmem:[%s684 + $0x248] sm:$0xff]
  %v782 = vld [vmem:[%s684 + $0x250] sm:$0xff]
  %v783 = vld [vmem:[%s684 + $0x268] sm:$0xff]
  %v784 = vld [vmem:[%s684 + $0x270] sm:$0xff]
  %v785 = vld [vmem:[%s684 + $0x288] sm:$0xff]
  %v786 = vld [vmem:[%s684 + $0x290] sm:$0xff]
  %v787 = vld [vmem:[%s684 + $0x2a8] sm:$0xff]
  %v788 = vld [vmem:[%s684 + $0x2b0] sm:$0xff]
  %v789 = vld [vmem:[%s684 + $0x2c8] sm:$0xff]
  %v790 = vld [vmem:[%s684 + $0x2d0] sm:$0xff]
  %v791 = vld [vmem:[%s684 + $0x2e8] sm:$0xff]
  %v792 = vld [vmem:[%s684 + $0x2f0] sm:$0xff]
  %v793 = vld [vmem:[%s684 + $0x308] sm:$0xff]
  %v794 = vld [vmem:[%s684 + $0x310] sm:$0xff]
  %v795 = vld [vmem:[%s684 + $0x328] sm:$0xff]
  %v796 = vld [vmem:[%s684 + $0x330] sm:$0xff]
  %v797 = vld [vmem:[%s684 + $0x348] sm:$0xff]
  %v798 = vld [vmem:[%s684 + $0x350] sm:$0xff]
  %v799 = vld [vmem:[%s684 + $0x368] sm:$0xff]
  %v800 = vld [vmem:[%s684 + $0x370] sm:$0xff]
  %v801 = vld [vmem:[%s684 + $0x388] sm:$0xff]
  %v802 = vld [vmem:[%s684 + $0x390] sm:$0xff]
  %v803 = vld [vmem:[%s684 + $0x3a8] sm:$0xff]
  %v804 = vld [vmem:[%s684 + $0x3b0] sm:$0xff]
  %v805 = vld [vmem:[%s684 + $0x3c8] sm:$0xff]
  %v806 = vld [vmem:[%s684 + $0x3d0] sm:$0xff]
  %v807 = vld [vmem:[%s684 + $0x3e8] sm:$0xff]
  %v808 = vld [vmem:[%s684 + $0x3f0] sm:$0xff]
  %v809 = vld [vmem:[%s684 + $0x408] sm:$0xff]
  %v810 = vld [vmem:[%s684 + $0x410] sm:$0xff]
  %v811 = vld [vmem:[%s684 + $0x428] sm:$0xff]
  %v812 = vld [vmem:[%s684 + $0x430] sm:$0xff]
  %v813 = vld [vmem:[%s684 + $0x9] sm:$0xff]
  %v814 = vld [vmem:[%s684 + $0x11] sm:$0xff]
  %v815 = vld [vmem:[%s684 + $0x29] sm:$0xff]
  %v816 = vld [vmem:[%s684 + $0x31] sm:$0xff]
  %v817 = vld [vmem:[%s684 + $0x49] sm:$0xff]
  %v818 = vld [vmem:[%s684 + $0x51] sm:$0xff]
  %v819 = vld [vmem:[%s684 + $0x69] sm:$0xff]
  %v820 = vld [vmem:[%s684 + $0x71] sm:$0xff]
  %v821 = vld [vmem:[%s684 + $0x89] sm:$0xff]
  %v822 = vld [vmem:[%s684 + $0x91] sm:$0xff]
  %v823 = vld [vmem:[%s684 + $0xa9] sm:$0xff]
  %v824 = vld [vmem:[%s684 + $0xb1] sm:$0xff]
  %v825 = vld [vmem:[%s684 + $0xc9] sm:$0xff]
  %v826 = vld [vmem:[%s684 + $0xd1] sm:$0xff]
  %v827 = vld [vmem:[%s684 + $0xe9] sm:$0xff]
  %v828 = vld [vmem:[%s684 + $0xf1] sm:$0xff]
  %v829 = vld [vmem:[%s684 + $0x109] sm:$0xff]
  %v830 = vld [vmem:[%s684 + $0x111] sm:$0xff]
  %v831 = vld [vmem:[%s684 + $0x129] sm:$0xff]
  %v832 = vld [vmem:[%s684 + $0x131] sm:$0xff]
  %v833 = vld [vmem:[%s684 + $0x149] sm:$0xff]
  %v834 = vld [vmem:[%s684 + $0x151] sm:$0xff]
  %v835 = vld [vmem:[%s684 + $0x169] sm:$0xff]
  %v836 = vld [vmem:[%s684 + $0x171] sm:$0xff]
  %v837 = vld [vmem:[%s684 + $0x189] sm:$0xff]
  %v838 = vld [vmem:[%s684 + $0x191] sm:$0xff]
  %v839 = vld [vmem:[%s684 + $0x1a9] sm:$0xff]
  %v840 = vld [vmem:[%s684 + $0x1b1] sm:$0xff]
  %v841 = vld [vmem:[%s684 + $0x1c9] sm:$0xff]
  %v842 = vld [vmem:[%s684 + $0x1d1] sm:$0xff]
  %v843 = vld [vmem:[%s684 + $0x1e9] sm:$0xff]
  %v844 = vld [vmem:[%s684 + $0x1f1] sm:$0xff]
  %v845 = vld [vmem:[%s684 + $0x249] sm:$0xff]
  %v846 = vld [vmem:[%s684 + $0x251] sm:$0xff]
  %v847 = vld [vmem:[%s684 + $0x269] sm:$0xff]
  %v848 = vld [vmem:[%s684 + $0x271] sm:$0xff]
  %v849 = vld [vmem:[%s684 + $0x289] sm:$0xff]
  %v850 = vld [vmem:[%s684 + $0x291] sm:$0xff]
  %v851 = vld [vmem:[%s684 + $0x2a9] sm:$0xff]
  %v852 = vld [vmem:[%s684 + $0x2b1] sm:$0xff]
  %v853 = vld [vmem:[%s684 + $0x2c9] sm:$0xff]
  %v854 = vld [vmem:[%s684 + $0x2d1] sm:$0xff]
  %v855 = vld [vmem:[%s684 + $0x2e9] sm:$0xff]
  %v856 = vld [vmem:[%s684 + $0x2f1] sm:$0xff]
  %v857 = vld [vmem:[%s684 + $0x309] sm:$0xff]
  %v858 = vld [vmem:[%s684 + $0x311] sm:$0xff]
  %v859 = vld [vmem:[%s684 + $0x329] sm:$0xff]
  %v860 = vld [vmem:[%s684 + $0x331] sm:$0xff]
  %v861 = vld [vmem:[%s684 + $0x349] sm:$0xff]
  %v862 = vld [vmem:[%s684 + $0x351] sm:$0xff]
  %v863 = vld [vmem:[%s684 + $0x369] sm:$0xff]
  %v864 = vld [vmem:[%s684 + $0x371] sm:$0xff]
  %v865 = vld [vmem:[%s684 + $0x389] sm:$0xff]
  %v866 = vld [vmem:[%s684 + $0x391] sm:$0xff]
  %v867 = vld [vmem:[%s684 + $0x3a9] sm:$0xff]
  %v868 = vld [vmem:[%s684 + $0x3b1] sm:$0xff]
  %v869 = vld [vmem:[%s684 + $0x3c9] sm:$0xff]
  %v870 = vld [vmem:[%s684 + $0x3d1] sm:$0xff]
  %v871 = vld [vmem:[%s684 + $0x3e9] sm:$0xff]
  %v872 = vld [vmem:[%s684 + $0x3f1] sm:$0xff]
  %v873 = vld [vmem:[%s684 + $0x409] sm:$0xff]
  %v874 = vld [vmem:[%s684 + $0x411] sm:$0xff]
  %v875 = vld [vmem:[%s684 + $0x429] sm:$0xff]
  %v876 = vld [vmem:[%s684 + $0x431] sm:$0xff]
  %941 = vrot.lane.b32.xlu0 %v364, 8
  %v942 = vpop.permute.xlu0 %941
  %943 = vrot.lane.b32.xlu0 %v365, 8
  %v944 = vpop.permute.xlu0 %943
  %945 = vrot.lane.b32.xlu0 %v366, 8
  %v946 = vpop.permute.xlu0 %945
  %947 = vrot.lane.b32.xlu0 %v367, 8
  %v948 = vpop.permute.xlu0 %947
  %949 = vrot.lane.b32.xlu0 %v368, 8
  %v950 = vpop.permute.xlu0 %949
  %951 = vrot.lane.b32.xlu0 %v369, 8
  %v952 = vpop.permute.xlu0 %951
  %953 = vrot.lane.b32.xlu0 %v370, 8
  %v954 = vpop.permute.xlu0 %953
  %955 = vrot.lane.b32.xlu0 %v371, 8
  %v956 = vpop.permute.xlu0 %955
  %957 = vrot.lane.b32.xlu0 %v372, 8
  %v958 = vpop.permute.xlu0 %957
  %959 = vrot.lane.b32.xlu0 %v373, 8
  %v960 = vpop.permute.xlu0 %959
  %961 = vrot.lane.b32.xlu0 %v374, 8
  %v962 = vpop.permute.xlu0 %961
  %963 = vrot.lane.b32.xlu0 %v375, 8
  %v964 = vpop.permute.xlu0 %963
  %965 = vrot.lane.b32.xlu0 %v376, 8
  %v966 = vpop.permute.xlu0 %965
  %967 = vrot.lane.b32.xlu0 %v377, 8
  %v968 = vpop.permute.xlu0 %967
  %969 = vrot.lane.b32.xlu0 %v378, 8
  %v970 = vpop.permute.xlu0 %969
  %971 = vrot.lane.b32.xlu0 %v379, 8
  %v972 = vpop.permute.xlu0 %971
  %973 = vrot.lane.b32.xlu0 %v380, 8
  %v974 = vpop.permute.xlu0 %973
  %975 = vrot.lane.b32.xlu0 %v381, 8
  %v976 = vpop.permute.xlu0 %975
  %977 = vrot.lane.b32.xlu0 %v382, 8
  %v978 = vpop.permute.xlu0 %977
  %979 = vrot.lane.b32.xlu0 %v383, 8
  %v980 = vpop.permute.xlu0 %979
  %981 = vrot.lane.b32.xlu0 %v384, 8
  %v982 = vpop.permute.xlu0 %981
  %983 = vrot.lane.b32.xlu0 %v385, 8
  %v984 = vpop.permute.xlu0 %983
  %985 = vrot.lane.b32.xlu0 %v386, 8
  %v986 = vpop.permute.xlu0 %985
  %987 = vrot.lane.b32.xlu0 %v387, 8
  %v988 = vpop.permute.xlu0 %987
  %989 = vrot.lane.b32.xlu0 %v388, 8
  %v990 = vpop.permute.xlu0 %989
  %991 = vrot.lane.b32.xlu0 %v389, 8
  %v992 = vpop.permute.xlu0 %991
  %993 = vrot.lane.b32.xlu0 %v390, 8
  %v994 = vpop.permute.xlu0 %993
  %995 = vrot.lane.b32.xlu0 %v391, 8
  %v996 = vpop.permute.xlu0 %995
  %997 = vrot.lane.b32.xlu0 %v392, 8
  %v998 = vpop.permute.xlu0 %997
  %999 = vrot.lane.b32.xlu0 %v393, 8
  %v1000 = vpop.permute.xlu0 %999
  %1001 = vrot.lane.b32.xlu0 %v394, 8
  %v1002 = vpop.permute.xlu0 %1001
  %1003 = vrot.lane.b32.xlu0 %v395, 8
  %v1004 = vpop.permute.xlu0 %1003
  %1005 = vrot.lane.b32.xlu0 %v396, 8
  %v1006 = vpop.permute.xlu0 %1005
  %1007 = vrot.lane.b32.xlu0 %v397, 8
  %v1008 = vpop.permute.xlu0 %1007
  %1009 = vrot.lane.b32.xlu0 %v398, 8
  %v1010 = vpop.permute.xlu0 %1009
  %1011 = vrot.lane.b32.xlu0 %v399, 8
  %v1012 = vpop.permute.xlu0 %1011
  %1013 = vrot.lane.b32.xlu0 %v400, 8
  %v1014 = vpop.permute.xlu0 %1013
  %1015 = vrot.lane.b32.xlu0 %v401, 8
  %v1016 = vpop.permute.xlu0 %1015
  %1017 = vrot.lane.b32.xlu0 %v402, 8
  %v1018 = vpop.permute.xlu0 %1017
  %1019 = vrot.lane.b32.xlu0 %v403, 8
  %v1020 = vpop.permute.xlu0 %1019
  %1021 = vrot.lane.b32.xlu0 %v404, 8
  %v1022 = vpop.permute.xlu0 %1021
  %1023 = vrot.lane.b32.xlu0 %v405, 8
  %v1024 = vpop.permute.xlu0 %1023
  %1025 = vrot.lane.b32.xlu0 %v406, 8
  %v1026 = vpop.permute.xlu0 %1025
  %1027 = vrot.lane.b32.xlu0 %v407, 8
  %v1028 = vpop.permute.xlu0 %1027
  %1029 = vrot.lane.b32.xlu0 %v408, 8
  %v1030 = vpop.permute.xlu0 %1029
  %1031 = vrot.lane.b32.xlu0 %v409, 8
  %v1032 = vpop.permute.xlu0 %1031
  %1033 = vrot.lane.b32.xlu0 %v410, 8
  %v1034 = vpop.permute.xlu0 %1033
  %1035 = vrot.lane.b32.xlu0 %v411, 8
  %v1036 = vpop.permute.xlu0 %1035
  %1037 = vrot.lane.b32.xlu0 %v412, 8
  %v1038 = vpop.permute.xlu0 %1037
  %1039 = vrot.lane.b32.xlu0 %v413, 8
  %v1040 = vpop.permute.xlu0 %1039
  %1041 = vrot.lane.b32.xlu0 %v414, 8
  %v1042 = vpop.permute.xlu0 %1041
  %1043 = vrot.lane.b32.xlu0 %v415, 8
  %v1044 = vpop.permute.xlu0 %1043
  %1045 = vrot.lane.b32.xlu0 %v416, 8
  %v1046 = vpop.permute.xlu0 %1045
  %1047 = vrot.lane.b32.xlu0 %v417, 8
  %v1048 = vpop.permute.xlu0 %1047
  %1049 = vrot.lane.b32.xlu0 %v418, 8
  %v1050 = vpop.permute.xlu0 %1049
  %1051 = vrot.lane.b32.xlu0 %v419, 8
  %v1052 = vpop.permute.xlu0 %1051
  %1053 = vrot.lane.b32.xlu0 %v420, 8
  %v1054 = vpop.permute.xlu0 %1053
  %1055 = vrot.lane.b32.xlu0 %v421, 8
  %v1056 = vpop.permute.xlu0 %1055
  %1057 = vrot.lane.b32.xlu0 %v422, 8
  %v1058 = vpop.permute.xlu0 %1057
  %1059 = vrot.lane.b32.xlu0 %v423, 8
  %v1060 = vpop.permute.xlu0 %1059
  %1061 = vrot.lane.b32.xlu0 %v424, 8
  %v1062 = vpop.permute.xlu0 %1061
  %1063 = vrot.lane.b32.xlu0 %v425, 8
  %v1064 = vpop.permute.xlu0 %1063
  %1065 = vrot.lane.b32.xlu0 %v426, 8
  %v1066 = vpop.permute.xlu0 %1065
  %1067 = vrot.lane.b32.xlu0 %v427, 8
  %v1068 = vpop.permute.xlu0 %1067
  %1197 = vrot.lane.b32.xlu0 %v428, 16
  %v1198 = vpop.permute.xlu0 %1197
  %1199 = vrot.lane.b32.xlu0 %v429, 16
  %v1200 = vpop.permute.xlu0 %1199
  %1201 = vrot.lane.b32.xlu0 %v430, 16
  %v1202 = vpop.permute.xlu0 %1201
  %1203 = vrot.lane.b32.xlu0 %v431, 16
  %v1204 = vpop.permute.xlu0 %1203
  %1205 = vrot.lane.b32.xlu0 %v432, 16
  %v1206 = vpop.permute.xlu0 %1205
  %1207 = vrot.lane.b32.xlu0 %v433, 16
  %v1208 = vpop.permute.xlu0 %1207
  %1209 = vrot.lane.b32.xlu0 %v434, 16
  %v1210 = vpop.permute.xlu0 %1209
  %1211 = vrot.lane.b32.xlu0 %v435, 16
  %v1212 = vpop.permute.xlu0 %1211
  %1213 = vrot.lane.b32.xlu0 %v436, 16
  %v1214 = vpop.permute.xlu0 %1213
  %1215 = vrot.lane.b32.xlu0 %v437, 16
  %v1216 = vpop.permute.xlu0 %1215
  %1217 = vrot.lane.b32.xlu0 %v438, 16
  %v1218 = vpop.permute.xlu0 %1217
  %1219 = vrot.lane.b32.xlu0 %v439, 16
  %v1220 = vpop.permute.xlu0 %1219
  %1221 = vrot.lane.b32.xlu0 %v440, 16
  %v1222 = vpop.permute.xlu0 %1221
  %1223 = vrot.lane.b32.xlu0 %v441, 16
  %v1224 = vpop.permute.xlu0 %1223
  %1225 = vrot.lane.b32.xlu0 %v442, 16
  %v1226 = vpop.permute.xlu0 %1225
  %1227 = vrot.lane.b32.xlu0 %v443, 16
  %v1228 = vpop.permute.xlu0 %1227
  %1229 = vrot.lane.b32.xlu0 %v444, 16
  %v1230 = vpop.permute.xlu0 %1229
  %1231 = vrot.lane.b32.xlu0 %v445, 16
  %v1232 = vpop.permute.xlu0 %1231
  %1233 = vrot.lane.b32.xlu0 %v446, 16
  %v1234 = vpop.permute.xlu0 %1233
  %1235 = vrot.lane.b32.xlu0 %v447, 16
  %v1236 = vpop.permute.xlu0 %1235
  %1237 = vrot.lane.b32.xlu0 %v448, 16
  %v1238 = vpop.permute.xlu0 %1237
  %1239 = vrot.lane.b32.xlu0 %v449, 16
  %v1240 = vpop.permute.xlu0 %1239
  %1241 = vrot.lane.b32.xlu0 %v450, 16
  %v1242 = vpop.permute.xlu0 %1241
  %1243 = vrot.lane.b32.xlu0 %v451, 16
  %v1244 = vpop.permute.xlu0 %1243
  %1245 = vrot.lane.b32.xlu0 %v452, 16
  %v1246 = vpop.permute.xlu0 %1245
  %1247 = vrot.lane.b32.xlu0 %v453, 16
  %v1248 = vpop.permute.xlu0 %1247
  %1249 = vrot.lane.b32.xlu0 %v454, 16
  %v1250 = vpop.permute.xlu0 %1249
  %1251 = vrot.lane.b32.xlu0 %v455, 16
  %v1252 = vpop.permute.xlu0 %1251
  %1253 = vrot.lane.b32.xlu0 %v456, 16
  %v1254 = vpop.permute.xlu0 %1253
  %1255 = vrot.lane.b32.xlu0 %v457, 16
  %v1256 = vpop.permute.xlu0 %1255
  %1257 = vrot.lane.b32.xlu0 %v458, 16
  %v1258 = vpop.permute.xlu0 %1257
  %1259 = vrot.lane.b32.xlu0 %v459, 16
  %v1260 = vpop.permute.xlu0 %1259
  %1261 = vrot.lane.b32.xlu0 %v460, 16
  %v1262 = vpop.permute.xlu0 %1261
  %1263 = vrot.lane.b32.xlu0 %v461, 16
  %v1264 = vpop.permute.xlu0 %1263
  %1265 = vrot.lane.b32.xlu0 %v462, 16
  %v1266 = vpop.permute.xlu0 %1265
  %1267 = vrot.lane.b32.xlu0 %v463, 16
  %v1268 = vpop.permute.xlu0 %1267
  %1269 = vrot.lane.b32.xlu0 %v464, 16
  %v1270 = vpop.permute.xlu0 %1269
  %1271 = vrot.lane.b32.xlu0 %v465, 16
  %v1272 = vpop.permute.xlu0 %1271
  %1273 = vrot.lane.b32.xlu0 %v466, 16
  %v1274 = vpop.permute.xlu0 %1273
  %1275 = vrot.lane.b32.xlu0 %v467, 16
  %v1276 = vpop.permute.xlu0 %1275
  %1277 = vrot.lane.b32.xlu0 %v468, 16
  %v1278 = vpop.permute.xlu0 %1277
  %1279 = vrot.lane.b32.xlu0 %v469, 16
  %v1280 = vpop.permute.xlu0 %1279
  %1281 = vrot.lane.b32.xlu0 %v470, 16
  %v1282 = vpop.permute.xlu0 %1281
  %1283 = vrot.lane.b32.xlu0 %v471, 16
  %v1284 = vpop.permute.xlu0 %1283
  %1285 = vrot.lane.b32.xlu0 %v472, 16
  %v1286 = vpop.permute.xlu0 %1285
  %1287 = vrot.lane.b32.xlu0 %v473, 16
  %v1288 = vpop.permute.xlu0 %1287
  %1289 = vrot.lane.b32.xlu0 %v474, 16
  %v1290 = vpop.permute.xlu0 %1289
  %1291 = vrot.lane.b32.xlu0 %v475, 16
  %v1292 = vpop.permute.xlu0 %1291
  %1293 = vrot.lane.b32.xlu0 %v476, 16
  %v1294 = vpop.permute.xlu0 %1293
  %1295 = vrot.lane.b32.xlu0 %v477, 16
  %v1296 = vpop.permute.xlu0 %1295
  %1297 = vrot.lane.b32.xlu0 %v478, 16
  %v1298 = vpop.permute.xlu0 %1297
  %1299 = vrot.lane.b32.xlu0 %v479, 16
  %v1300 = vpop.permute.xlu0 %1299
  %1301 = vrot.lane.b32.xlu0 %v480, 16
  %v1302 = vpop.permute.xlu0 %1301
  %1303 = vrot.lane.b32.xlu0 %v481, 16
  %v1304 = vpop.permute.xlu0 %1303
  %1305 = vrot.lane.b32.xlu0 %v482, 16
  %v1306 = vpop.permute.xlu0 %1305
  %1307 = vrot.lane.b32.xlu0 %v483, 16
  %v1308 = vpop.permute.xlu0 %1307
  %1309 = vrot.lane.b32.xlu0 %v484, 16
  %v1310 = vpop.permute.xlu0 %1309
  %1311 = vrot.lane.b32.xlu0 %v485, 16
  %v1312 = vpop.permute.xlu0 %1311
  %1313 = vrot.lane.b32.xlu0 %v486, 16
  %v1314 = vpop.permute.xlu0 %1313
  %1315 = vrot.lane.b32.xlu0 %v487, 16
  %v1316 = vpop.permute.xlu0 %1315
  %1317 = vrot.lane.b32.xlu0 %v488, 16
  %v1318 = vpop.permute.xlu0 %1317
  %1319 = vrot.lane.b32.xlu0 %v489, 16
  %v1320 = vpop.permute.xlu0 %1319
  %1321 = vrot.lane.b32.xlu0 %v490, 16
  %v1322 = vpop.permute.xlu0 %1321
  %1323 = vrot.lane.b32.xlu0 %v491, 16
  %v1324 = vpop.permute.xlu0 %1323
  %1453 = vrot.lane.b32.xlu0 %v492, 24
  %v1454 = vpop.permute.xlu0 %1453
  %1455 = vrot.lane.b32.xlu0 %v493, 24
  %v1456 = vpop.permute.xlu0 %1455
  %1457 = vrot.lane.b32.xlu0 %v494, 24
  %v1458 = vpop.permute.xlu0 %1457
  %1459 = vrot.lane.b32.xlu0 %v495, 24
  %v1460 = vpop.permute.xlu0 %1459
  %1461 = vrot.lane.b32.xlu0 %v496, 24
  %v1462 = vpop.permute.xlu0 %1461
  %1463 = vrot.lane.b32.xlu0 %v497, 24
  %v1464 = vpop.permute.xlu0 %1463
  %1465 = vrot.lane.b32.xlu0 %v498, 24
  %v1466 = vpop.permute.xlu0 %1465
  %1467 = vrot.lane.b32.xlu0 %v499, 24
  %v1468 = vpop.permute.xlu0 %1467
  %1469 = vrot.lane.b32.xlu0 %v500, 24
  %v1470 = vpop.permute.xlu0 %1469
  %1471 = vrot.lane.b32.xlu0 %v501, 24
  %v1472 = vpop.permute.xlu0 %1471
  %1473 = vrot.lane.b32.xlu0 %v502, 24
  %v1474 = vpop.permute.xlu0 %1473
  %1475 = vrot.lane.b32.xlu0 %v503, 24
  %v1476 = vpop.permute.xlu0 %1475
  %1477 = vrot.lane.b32.xlu0 %v504, 24
  %v1478 = vpop.permute.xlu0 %1477
  %1479 = vrot.lane.b32.xlu0 %v505, 24
  %v1480 = vpop.permute.xlu0 %1479
  %1481 = vrot.lane.b32.xlu0 %v506, 24
  %v1482 = vpop.permute.xlu0 %1481
  %1483 = vrot.lane.b32.xlu0 %v507, 24
  %v1484 = vpop.permute.xlu0 %1483
  %1485 = vrot.lane.b32.xlu0 %v508, 24
  %v1486 = vpop.permute.xlu0 %1485
  %1487 = vrot.lane.b32.xlu0 %v509, 24
  %v1488 = vpop.permute.xlu0 %1487
  %1489 = vrot.lane.b32.xlu0 %v510, 24
  %v1490 = vpop.permute.xlu0 %1489
  %1491 = vrot.lane.b32.xlu0 %v511, 24
  %v1492 = vpop.permute.xlu0 %1491
  %1493 = vrot.lane.b32.xlu0 %v512, 24
  %v1494 = vpop.permute.xlu0 %1493
  %1495 = vrot.lane.b32.xlu0 %v513, 24
  %v1496 = vpop.permute.xlu0 %1495
  %1497 = vrot.lane.b32.xlu0 %v514, 24
  %v1498 = vpop.permute.xlu0 %1497
  %1499 = vrot.lane.b32.xlu0 %v515, 24
  %v1500 = vpop.permute.xlu0 %1499
  %1501 = vrot.lane.b32.xlu0 %v516, 24
  %v1502 = vpop.permute.xlu0 %1501
  %1503 = vrot.lane.b32.xlu0 %v517, 24
  %v1504 = vpop.permute.xlu0 %1503
  %1505 = vrot.lane.b32.xlu0 %v518, 24
  %v1506 = vpop.permute.xlu0 %1505
  %1507 = vrot.lane.b32.xlu0 %v519, 24
  %v1508 = vpop.permute.xlu0 %1507
  %1509 = vrot.lane.b32.xlu0 %v520, 24
  %v1510 = vpop.permute.xlu0 %1509
  %1511 = vrot.lane.b32.xlu0 %v521, 24
  %v1512 = vpop.permute.xlu0 %1511
  %1513 = vrot.lane.b32.xlu0 %v522, 24
  %v1514 = vpop.permute.xlu0 %1513
  %1515 = vrot.lane.b32.xlu0 %v523, 24
  %v1516 = vpop.permute.xlu0 %1515
  %1517 = vrot.lane.b32.xlu0 %v524, 24
  %v1518 = vpop.permute.xlu0 %1517
  %1519 = vrot.lane.b32.xlu0 %v525, 24
  %v1520 = vpop.permute.xlu0 %1519
  %1521 = vrot.lane.b32.xlu0 %v526, 24
  %v1522 = vpop.permute.xlu0 %1521
  %1523 = vrot.lane.b32.xlu0 %v527, 24
  %v1524 = vpop.permute.xlu0 %1523
  %1525 = vrot.lane.b32.xlu0 %v528, 24
  %v1526 = vpop.permute.xlu0 %1525
  %1527 = vrot.lane.b32.xlu0 %v529, 24
  %v1528 = vpop.permute.xlu0 %1527
  %1529 = vrot.lane.b32.xlu0 %v530, 24
  %v1530 = vpop.permute.xlu0 %1529
  %1531 = vrot.lane.b32.xlu0 %v531, 24
  %v1532 = vpop.permute.xlu0 %1531
  %1533 = vrot.lane.b32.xlu0 %v532, 24
  %v1534 = vpop.permute.xlu0 %1533
  %1535 = vrot.lane.b32.xlu0 %v533, 24
  %v1536 = vpop.permute.xlu0 %1535
  %1537 = vrot.lane.b32.xlu0 %v534, 24
  %v1538 = vpop.permute.xlu0 %1537
  %1539 = vrot.lane.b32.xlu0 %v535, 24
  %v1540 = vpop.permute.xlu0 %1539
  %1541 = vrot.lane.b32.xlu0 %v536, 24
  %v1542 = vpop.permute.xlu0 %1541
  %1543 = vrot.lane.b32.xlu0 %v537, 24
  %v1544 = vpop.permute.xlu0 %1543
  %1545 = vrot.lane.b32.xlu0 %v538, 24
  %v1546 = vpop.permute.xlu0 %1545
  %1547 = vrot.lane.b32.xlu0 %v539, 24
  %v1548 = vpop.permute.xlu0 %1547
  %1549 = vrot.lane.b32.xlu0 %v540, 24
  %v1550 = vpop.permute.xlu0 %1549
  %1551 = vrot.lane.b32.xlu0 %v541, 24
  %v1552 = vpop.permute.xlu0 %1551
  %1553 = vrot.lane.b32.xlu0 %v542, 24
  %v1554 = vpop.permute.xlu0 %1553
  %1555 = vrot.lane.b32.xlu0 %v543, 24
  %v1556 = vpop.permute.xlu0 %1555
  %1557 = vrot.lane.b32.xlu0 %v544, 24
  %v1558 = vpop.permute.xlu0 %1557
  %1559 = vrot.lane.b32.xlu0 %v545, 24
  %v1560 = vpop.permute.xlu0 %1559
  %1561 = vrot.lane.b32.xlu0 %v546, 24
  %v1562 = vpop.permute.xlu0 %1561
  %1563 = vrot.lane.b32.xlu0 %v547, 24
  %v1564 = vpop.permute.xlu0 %1563
  %1565 = vrot.lane.b32.xlu0 %v548, 24
  %v1566 = vpop.permute.xlu0 %1565
  %1567 = vrot.lane.b32.xlu0 %v549, 24
  %v1568 = vpop.permute.xlu0 %1567
  %1569 = vrot.lane.b32.xlu0 %v550, 24
  %v1570 = vpop.permute.xlu0 %1569
  %1571 = vrot.lane.b32.xlu0 %v551, 24
  %v1572 = vpop.permute.xlu0 %1571
  %1573 = vrot.lane.b32.xlu0 %v552, 24
  %v1574 = vpop.permute.xlu0 %1573
  %1575 = vrot.lane.b32.xlu0 %v553, 24
  %v1576 = vpop.permute.xlu0 %1575
  %1577 = vrot.lane.b32.xlu0 %v554, 24
  %v1578 = vpop.permute.xlu0 %1577
  %1579 = vrot.lane.b32.xlu0 %v555, 24
  %v1580 = vpop.permute.xlu0 %1579
  %1709 = vrot.lane.b32.xlu0 %v556, 32
  %v1710 = vpop.permute.xlu0 %1709
  %1711 = vrot.lane.b32.xlu0 %v557, 32
  %v1712 = vpop.permute.xlu0 %1711
  %1713 = vrot.lane.b32.xlu0 %v558, 32
  %v1714 = vpop.permute.xlu0 %1713
  %1715 = vrot.lane.b32.xlu0 %v559, 32
  %v1716 = vpop.permute.xlu0 %1715
  %1717 = vrot.lane.b32.xlu0 %v560, 32
  %v1718 = vpop.permute.xlu0 %1717
  %1719 = vrot.lane.b32.xlu0 %v561, 32
  %v1720 = vpop.permute.xlu0 %1719
  %1721 = vrot.lane.b32.xlu0 %v562, 32
  %v1722 = vpop.permute.xlu0 %1721
  %1723 = vrot.lane.b32.xlu0 %v563, 32
  %v1724 = vpop.permute.xlu0 %1723
  %1725 = vrot.lane.b32.xlu0 %v564, 32
  %v1726 = vpop.permute.xlu0 %1725
  %1727 = vrot.lane.b32.xlu0 %v565, 32
  %v1728 = vpop.permute.xlu0 %1727
  %1729 = vrot.lane.b32.xlu0 %v566, 32
  %v1730 = vpop.permute.xlu0 %1729
  %1731 = vrot.lane.b32.xlu0 %v567, 32
  %v1732 = vpop.permute.xlu0 %1731
  %1733 = vrot.lane.b32.xlu0 %v568, 32
  %v1734 = vpop.permute.xlu0 %1733
  %1735 = vrot.lane.b32.xlu0 %v569, 32
  %v1736 = vpop.permute.xlu0 %1735
  %1737 = vrot.lane.b32.xlu0 %v570, 32
  %v1738 = vpop.permute.xlu0 %1737
  %1739 = vrot.lane.b32.xlu0 %v571, 32
  %v1740 = vpop.permute.xlu0 %1739
  %1741 = vrot.lane.b32.xlu0 %v572, 32
  %v1742 = vpop.permute.xlu0 %1741
  %1743 = vrot.lane.b32.xlu0 %v573, 32
  %v1744 = vpop.permute.xlu0 %1743
  %1745 = vrot.lane.b32.xlu0 %v574, 32
  %v1746 = vpop.permute.xlu0 %1745
  %1747 = vrot.lane.b32.xlu0 %v575, 32
  %v1748 = vpop.permute.xlu0 %1747
  %1749 = vrot.lane.b32.xlu0 %v576, 32
  %v1750 = vpop.permute.xlu0 %1749
  %1751 = vrot.lane.b32.xlu0 %v577, 32
  %v1752 = vpop.permute.xlu0 %1751
  %1753 = vrot.lane.b32.xlu0 %v578, 32
  %v1754 = vpop.permute.xlu0 %1753
  %1755 = vrot.lane.b32.xlu0 %v579, 32
  %v1756 = vpop.permute.xlu0 %1755
  %1757 = vrot.lane.b32.xlu0 %v580, 32
  %v1758 = vpop.permute.xlu0 %1757
  %1759 = vrot.lane.b32.xlu0 %v581, 32
  %v1760 = vpop.permute.xlu0 %1759
  %1761 = vrot.lane.b32.xlu0 %v582, 32
  %v1762 = vpop.permute.xlu0 %1761
  %1763 = vrot.lane.b32.xlu0 %v583, 32
  %v1764 = vpop.permute.xlu0 %1763
  %1765 = vrot.lane.b32.xlu0 %v584, 32
  %v1766 = vpop.permute.xlu0 %1765
  %1767 = vrot.lane.b32.xlu0 %v585, 32
  %v1768 = vpop.permute.xlu0 %1767
  %1769 = vrot.lane.b32.xlu0 %v586, 32
  %v1770 = vpop.permute.xlu0 %1769
  %1771 = vrot.lane.b32.xlu0 %v587, 32
  %v1772 = vpop.permute.xlu0 %1771
  %1773 = vrot.lane.b32.xlu0 %v588, 32
  %v1774 = vpop.permute.xlu0 %1773
  %1775 = vrot.lane.b32.xlu0 %v589, 32
  %v1776 = vpop.permute.xlu0 %1775
  %1777 = vrot.lane.b32.xlu0 %v590, 32
  %v1778 = vpop.permute.xlu0 %1777
  %1779 = vrot.lane.b32.xlu0 %v591, 32
  %v1780 = vpop.permute.xlu0 %1779
  %1781 = vrot.lane.b32.xlu0 %v592, 32
  %v1782 = vpop.permute.xlu0 %1781
  %1783 = vrot.lane.b32.xlu0 %v593, 32
  %v1784 = vpop.permute.xlu0 %1783
  %1785 = vrot.lane.b32.xlu0 %v594, 32
  %v1786 = vpop.permute.xlu0 %1785
  %1787 = vrot.lane.b32.xlu0 %v595, 32
  %v1788 = vpop.permute.xlu0 %1787
  %1789 = vrot.lane.b32.xlu0 %v596, 32
  %v1790 = vpop.permute.xlu0 %1789
  %1791 = vrot.lane.b32.xlu0 %v597, 32
  %v1792 = vpop.permute.xlu0 %1791
  %1793 = vrot.lane.b32.xlu0 %v598, 32
  %v1794 = vpop.permute.xlu0 %1793
  %1795 = vrot.lane.b32.xlu0 %v599, 32
  %v1796 = vpop.permute.xlu0 %1795
  %1797 = vrot.lane.b32.xlu0 %v600, 32
  %v1798 = vpop.permute.xlu0 %1797
  %1799 = vrot.lane.b32.xlu0 %v601, 32
  %v1800 = vpop.permute.xlu0 %1799
  %1801 = vrot.lane.b32.xlu0 %v602, 32
  %v1802 = vpop.permute.xlu0 %1801
  %1803 = vrot.lane.b32.xlu0 %v603, 32
  %v1804 = vpop.permute.xlu0 %1803
  %1805 = vrot.lane.b32.xlu0 %v604, 32
  %v1806 = vpop.permute.xlu0 %1805
  %1807 = vrot.lane.b32.xlu0 %v605, 32
  %v1808 = vpop.permute.xlu0 %1807
  %1809 = vrot.lane.b32.xlu0 %v606, 32
  %v1810 = vpop.permute.xlu0 %1809
  %1811 = vrot.lane.b32.xlu0 %v607, 32
  %v1812 = vpop.permute.xlu0 %1811
  %1813 = vrot.lane.b32.xlu0 %v608, 32
  %v1814 = vpop.permute.xlu0 %1813
  %1815 = vrot.lane.b32.xlu0 %v609, 32
  %v1816 = vpop.permute.xlu0 %1815
  %1817 = vrot.lane.b32.xlu0 %v610, 32
  %v1818 = vpop.permute.xlu0 %1817
  %1819 = vrot.lane.b32.xlu0 %v611, 32
  %v1820 = vpop.permute.xlu0 %1819
  %1821 = vrot.lane.b32.xlu0 %v612, 32
  %v1822 = vpop.permute.xlu0 %1821
  %1823 = vrot.lane.b32.xlu0 %v613, 32
  %v1824 = vpop.permute.xlu0 %1823
  %1825 = vrot.lane.b32.xlu0 %v614, 32
  %v1826 = vpop.permute.xlu0 %1825
  %1827 = vrot.lane.b32.xlu0 %v615, 32
  %v1828 = vpop.permute.xlu0 %1827
  %1829 = vrot.lane.b32.xlu0 %v616, 32
  %v1830 = vpop.permute.xlu0 %1829
  %1831 = vrot.lane.b32.xlu0 %v617, 32
  %v1832 = vpop.permute.xlu0 %1831
  %1833 = vrot.lane.b32.xlu0 %v618, 32
  %v1834 = vpop.permute.xlu0 %1833
  %1835 = vrot.lane.b32.xlu0 %v619, 32
  %v1836 = vpop.permute.xlu0 %1835
  %1965 = vrot.lane.b32.xlu0 %v620, 40
  %v1966 = vpop.permute.xlu0 %1965
  %1967 = vrot.lane.b32.xlu0 %v621, 40
  %v1968 = vpop.permute.xlu0 %1967
  %1969 = vrot.lane.b32.xlu0 %v622, 40
  %v1970 = vpop.permute.xlu0 %1969
  %1971 = vrot.lane.b32.xlu0 %v623, 40
  %v1972 = vpop.permute.xlu0 %1971
  %1973 = vrot.lane.b32.xlu0 %v624, 40
  %v1974 = vpop.permute.xlu0 %1973
  %1975 = vrot.lane.b32.xlu0 %v625, 40
  %v1976 = vpop.permute.xlu0 %1975
  %1977 = vrot.lane.b32.xlu0 %v626, 40
  %v1978 = vpop.permute.xlu0 %1977
  %1979 = vrot.lane.b32.xlu0 %v627, 40
  %v1980 = vpop.permute.xlu0 %1979
  %1981 = vrot.lane.b32.xlu0 %v628, 40
  %v1982 = vpop.permute.xlu0 %1981
  %1983 = vrot.lane.b32.xlu0 %v629, 40
  %v1984 = vpop.permute.xlu0 %1983
  %1985 = vrot.lane.b32.xlu0 %v630, 40
  %v1986 = vpop.permute.xlu0 %1985
  %1987 = vrot.lane.b32.xlu0 %v631, 40
  %v1988 = vpop.permute.xlu0 %1987
  %1989 = vrot.lane.b32.xlu0 %v632, 40
  %v1990 = vpop.permute.xlu0 %1989
  %1991 = vrot.lane.b32.xlu0 %v633, 40
  %v1992 = vpop.permute.xlu0 %1991
  %1993 = vrot.lane.b32.xlu0 %v634, 40
  %v1994 = vpop.permute.xlu0 %1993
  %1995 = vrot.lane.b32.xlu0 %v635, 40
  %v1996 = vpop.permute.xlu0 %1995
  %1997 = vrot.lane.b32.xlu0 %v636, 40
  %v1998 = vpop.permute.xlu0 %1997
  %1999 = vrot.lane.b32.xlu0 %v637, 40
  %v2000 = vpop.permute.xlu0 %1999
  %2001 = vrot.lane.b32.xlu0 %v638, 40
  %v2002 = vpop.permute.xlu0 %2001
  %2003 = vrot.lane.b32.xlu0 %v639, 40
  %v2004 = vpop.permute.xlu0 %2003
  %2005 = vrot.lane.b32.xlu0 %v640, 40
  %v2006 = vpop.permute.xlu0 %2005
  %2007 = vrot.lane.b32.xlu0 %v641, 40
  %v2008 = vpop.permute.xlu0 %2007
  %2009 = vrot.lane.b32.xlu0 %v642, 40
  %v2010 = vpop.permute.xlu0 %2009
  %2011 = vrot.lane.b32.xlu0 %v643, 40
  %v2012 = vpop.permute.xlu0 %2011
  %2013 = vrot.lane.b32.xlu0 %v644, 40
  %v2014 = vpop.permute.xlu0 %2013
  %2015 = vrot.lane.b32.xlu0 %v645, 40
  %v2016 = vpop.permute.xlu0 %2015
  %2017 = vrot.lane.b32.xlu0 %v646, 40
  %v2018 = vpop.permute.xlu0 %2017
  %2019 = vrot.lane.b32.xlu0 %v647, 40
  %v2020 = vpop.permute.xlu0 %2019
  %2021 = vrot.lane.b32.xlu0 %v648, 40
  %v2022 = vpop.permute.xlu0 %2021
  %2023 = vrot.lane.b32.xlu0 %v649, 40
  %v2024 = vpop.permute.xlu0 %2023
  %2025 = vrot.lane.b32.xlu0 %v650, 40
  %v2026 = vpop.permute.xlu0 %2025
  %2027 = vrot.lane.b32.xlu0 %v651, 40
  %v2028 = vpop.permute.xlu0 %2027
  %2029 = vrot.lane.b32.xlu0 %v652, 40
  %v2030 = vpop.permute.xlu0 %2029
  %2031 = vrot.lane.b32.xlu0 %v653, 40
  %v2032 = vpop.permute.xlu0 %2031
  %2033 = vrot.lane.b32.xlu0 %v654, 40
  %v2034 = vpop.permute.xlu0 %2033
  %2035 = vrot.lane.b32.xlu0 %v655, 40
  %v2036 = vpop.permute.xlu0 %2035
  %2037 = vrot.lane.b32.xlu0 %v656, 40
  %v2038 = vpop.permute.xlu0 %2037
  %2039 = vrot.lane.b32.xlu0 %v657, 40
  %v2040 = vpop.permute.xlu0 %2039
  %2041 = vrot.lane.b32.xlu0 %v658, 40
  %v2042 = vpop.permute.xlu0 %2041
  %2043 = vrot.lane.b32.xlu0 %v659, 40
  %v2044 = vpop.permute.xlu0 %2043
  %2045 = vrot.lane.b32.xlu0 %v660, 40
  %v2046 = vpop.permute.xlu0 %2045
  %2047 = vrot.lane.b32.xlu0 %v661, 40
  %v2048 = vpop.permute.xlu0 %2047
  %2049 = vrot.lane.b32.xlu0 %v662, 40
  %v2050 = vpop.permute.xlu0 %2049
  %2051 = vrot.lane.b32.xlu0 %v663, 40
  %v2052 = vpop.permute.xlu0 %2051
  %2053 = vrot.lane.b32.xlu0 %v664, 40
  %v2054 = vpop.permute.xlu0 %2053
  %2055 = vrot.lane.b32.xlu0 %v665, 40
  %v2056 = vpop.permute.xlu0 %2055
  %2057 = vrot.lane.b32.xlu0 %v666, 40
  %v2058 = vpop.permute.xlu0 %2057
  %2059 = vrot.lane.b32.xlu0 %v667, 40
  %v2060 = vpop.permute.xlu0 %2059
  %2061 = vrot.lane.b32.xlu0 %v668, 40
  %v2062 = vpop.permute.xlu0 %2061
  %2063 = vrot.lane.b32.xlu0 %v669, 40
  %v2064 = vpop.permute.xlu0 %2063
  %2065 = vrot.lane.b32.xlu0 %v670, 40
  %v2066 = vpop.permute.xlu0 %2065
  %2067 = vrot.lane.b32.xlu0 %v671, 40
  %v2068 = vpop.permute.xlu0 %2067
  %2069 = vrot.lane.b32.xlu0 %v672, 40
  %v2070 = vpop.permute.xlu0 %2069
  %2071 = vrot.lane.b32.xlu0 %v673, 40
  %v2072 = vpop.permute.xlu0 %2071
  %2073 = vrot.lane.b32.xlu0 %v674, 40
  %v2074 = vpop.permute.xlu0 %2073
  %2075 = vrot.lane.b32.xlu0 %v675, 40
  %v2076 = vpop.permute.xlu0 %2075
  %2077 = vrot.lane.b32.xlu0 %v676, 40
  %v2078 = vpop.permute.xlu0 %2077
  %2079 = vrot.lane.b32.xlu0 %v677, 40
  %v2080 = vpop.permute.xlu0 %2079
  %2081 = vrot.lane.b32.xlu0 %v678, 40
  %v2082 = vpop.permute.xlu0 %2081
  %2083 = vrot.lane.b32.xlu0 %v679, 40
  %v2084 = vpop.permute.xlu0 %2083
  %2085 = vrot.lane.b32.xlu0 %v680, 40
  %v2086 = vpop.permute.xlu0 %2085
  %2087 = vrot.lane.b32.xlu0 %v681, 40
  %v2088 = vpop.permute.xlu0 %2087
  %2089 = vrot.lane.b32.xlu0 %v682, 40
  %v2090 = vpop.permute.xlu0 %2089
  %2091 = vrot.lane.b32.xlu0 %v683, 40
  %v2092 = vpop.permute.xlu0 %2091
  %2221 = vrot.lane.b32.xlu0 %v685, 48
  %v2222 = vpop.permute.xlu0 %2221
  %2223 = vrot.lane.b32.xlu0 %v686, 48
  %v2224 = vpop.permute.xlu0 %2223
  %2225 = vrot.lane.b32.xlu0 %v687, 48
  %v2226 = vpop.permute.xlu0 %2225
  %2227 = vrot.lane.b32.xlu0 %v688, 48
  %v2228 = vpop.permute.xlu0 %2227
  %2229 = vrot.lane.b32.xlu0 %v689, 48
  %v2230 = vpop.permute.xlu0 %2229
  %2231 = vrot.lane.b32.xlu0 %v690, 48
  %v2232 = vpop.permute.xlu0 %2231
  %2233 = vrot.lane.b32.xlu0 %v691, 48
  %v2234 = vpop.permute.xlu0 %2233
  %2235 = vrot.lane.b32.xlu0 %v692, 48
  %v2236 = vpop.permute.xlu0 %2235
  %2237 = vrot.lane.b32.xlu0 %v693, 48
  %v2238 = vpop.permute.xlu0 %2237
  %2239 = vrot.lane.b32.xlu0 %v694, 48
  %v2240 = vpop.permute.xlu0 %2239
  %2241 = vrot.lane.b32.xlu0 %v695, 48
  %v2242 = vpop.permute.xlu0 %2241
  %2243 = vrot.lane.b32.xlu0 %v696, 48
  %v2244 = vpop.permute.xlu0 %2243
  %2245 = vrot.lane.b32.xlu0 %v697, 48
  %v2246 = vpop.permute.xlu0 %2245
  %2247 = vrot.lane.b32.xlu0 %v698, 48
  %v2248 = vpop.permute.xlu0 %2247
  %2249 = vrot.lane.b32.xlu0 %v699, 48
  %v2250 = vpop.permute.xlu0 %2249
  %2251 = vrot.lane.b32.xlu0 %v700, 48
  %v2252 = vpop.permute.xlu0 %2251
  %2253 = vrot.lane.b32.xlu0 %v701, 48
  %v2254 = vpop.permute.xlu0 %2253
  %2255 = vrot.lane.b32.xlu0 %v702, 48
  %v2256 = vpop.permute.xlu0 %2255
  %2257 = vrot.lane.b32.xlu0 %v703, 48
  %v2258 = vpop.permute.xlu0 %2257
  %2259 = vrot.lane.b32.xlu0 %v704, 48
  %v2260 = vpop.permute.xlu0 %2259
  %2261 = vrot.lane.b32.xlu0 %v705, 48
  %v2262 = vpop.permute.xlu0 %2261
  %2263 = vrot.lane.b32.xlu0 %v706, 48
  %v2264 = vpop.permute.xlu0 %2263
  %2265 = vrot.lane.b32.xlu0 %v707, 48
  %v2266 = vpop.permute.xlu0 %2265
  %2267 = vrot.lane.b32.xlu0 %v708, 48
  %v2268 = vpop.permute.xlu0 %2267
  %2269 = vrot.lane.b32.xlu0 %v709, 48
  %v2270 = vpop.permute.xlu0 %2269
  %2271 = vrot.lane.b32.xlu0 %v710, 48
  %v2272 = vpop.permute.xlu0 %2271
  %2273 = vrot.lane.b32.xlu0 %v711, 48
  %v2274 = vpop.permute.xlu0 %2273
  %2275 = vrot.lane.b32.xlu0 %v712, 48
  %v2276 = vpop.permute.xlu0 %2275
  %2277 = vrot.lane.b32.xlu0 %v713, 48
  %v2278 = vpop.permute.xlu0 %2277
  %2279 = vrot.lane.b32.xlu0 %v714, 48
  %v2280 = vpop.permute.xlu0 %2279
  %2281 = vrot.lane.b32.xlu0 %v715, 48
  %v2282 = vpop.permute.xlu0 %2281
  %2283 = vrot.lane.b32.xlu0 %v716, 48
  %v2284 = vpop.permute.xlu0 %2283
  %2285 = vrot.lane.b32.xlu0 %v717, 48
  %v2286 = vpop.permute.xlu0 %2285
  %2287 = vrot.lane.b32.xlu0 %v718, 48
  %v2288 = vpop.permute.xlu0 %2287
  %2289 = vrot.lane.b32.xlu0 %v719, 48
  %v2290 = vpop.permute.xlu0 %2289
  %2291 = vrot.lane.b32.xlu0 %v720, 48
  %v2292 = vpop.permute.xlu0 %2291
  %2293 = vrot.lane.b32.xlu0 %v721, 48
  %v2294 = vpop.permute.xlu0 %2293
  %2295 = vrot.lane.b32.xlu0 %v722, 48
  %v2296 = vpop.permute.xlu0 %2295
  %2297 = vrot.lane.b32.xlu0 %v723, 48
  %v2298 = vpop.permute.xlu0 %2297
  %2299 = vrot.lane.b32.xlu0 %v724, 48
  %v2300 = vpop.permute.xlu0 %2299
  %2301 = vrot.lane.b32.xlu0 %v725, 48
  %v2302 = vpop.permute.xlu0 %2301
  %2303 = vrot.lane.b32.xlu0 %v726, 48
  %v2304 = vpop.permute.xlu0 %2303
  %2305 = vrot.lane.b32.xlu0 %v727, 48
  %v2306 = vpop.permute.xlu0 %2305
  %2307 = vrot.lane.b32.xlu0 %v728, 48
  %v2308 = vpop.permute.xlu0 %2307
  %2309 = vrot.lane.b32.xlu0 %v729, 48
  %v2310 = vpop.permute.xlu0 %2309
  %2311 = vrot.lane.b32.xlu0 %v730, 48
  %v2312 = vpop.permute.xlu0 %2311
  %2313 = vrot.lane.b32.xlu0 %v731, 48
  %v2314 = vpop.permute.xlu0 %2313
  %2315 = vrot.lane.b32.xlu0 %v732, 48
  %v2316 = vpop.permute.xlu0 %2315
  %2317 = vrot.lane.b32.xlu0 %v733, 48
  %v2318 = vpop.permute.xlu0 %2317
  %2319 = vrot.lane.b32.xlu0 %v734, 48
  %v2320 = vpop.permute.xlu0 %2319
  %2321 = vrot.lane.b32.xlu0 %v735, 48
  %v2322 = vpop.permute.xlu0 %2321
  %2323 = vrot.lane.b32.xlu0 %v736, 48
  %v2324 = vpop.permute.xlu0 %2323
  %2325 = vrot.lane.b32.xlu0 %v737, 48
  %v2326 = vpop.permute.xlu0 %2325
  %2327 = vrot.lane.b32.xlu0 %v738, 48
  %v2328 = vpop.permute.xlu0 %2327
  %2329 = vrot.lane.b32.xlu0 %v739, 48
  %v2330 = vpop.permute.xlu0 %2329
  %2331 = vrot.lane.b32.xlu0 %v740, 48
  %v2332 = vpop.permute.xlu0 %2331
  %2333 = vrot.lane.b32.xlu0 %v741, 48
  %v2334 = vpop.permute.xlu0 %2333
  %2335 = vrot.lane.b32.xlu0 %v742, 48
  %v2336 = vpop.permute.xlu0 %2335
  %2337 = vrot.lane.b32.xlu0 %v743, 48
  %v2338 = vpop.permute.xlu0 %2337
  %2339 = vrot.lane.b32.xlu0 %v744, 48
  %v2340 = vpop.permute.xlu0 %2339
  %2341 = vrot.lane.b32.xlu0 %v745, 48
  %v2342 = vpop.permute.xlu0 %2341
  %2343 = vrot.lane.b32.xlu0 %v746, 48
  %v2344 = vpop.permute.xlu0 %2343
  %2345 = vrot.lane.b32.xlu0 %v747, 48
  %v2346 = vpop.permute.xlu0 %2345
  %2347 = vrot.lane.b32.xlu0 %v748, 48
  %v2348 = vpop.permute.xlu0 %2347
  %2477 = vrot.lane.b32.xlu0 %v749, 56
  %v2478 = vpop.permute.xlu0 %2477
  %2479 = vrot.lane.b32.xlu0 %v750, 56
  %v2480 = vpop.permute.xlu0 %2479
  %2481 = vrot.lane.b32.xlu0 %v751, 56
  %v2482 = vpop.permute.xlu0 %2481
  %2483 = vrot.lane.b32.xlu0 %v752, 56
  %v2484 = vpop.permute.xlu0 %2483
  %2485 = vrot.lane.b32.xlu0 %v753, 56
  %v2486 = vpop.permute.xlu0 %2485
  %2487 = vrot.lane.b32.xlu0 %v754, 56
  %v2488 = vpop.permute.xlu0 %2487
  %2489 = vrot.lane.b32.xlu0 %v755, 56
  %v2490 = vpop.permute.xlu0 %2489
  %2491 = vrot.lane.b32.xlu0 %v756, 56
  %v2492 = vpop.permute.xlu0 %2491
  %2493 = vrot.lane.b32.xlu0 %v757, 56
  %v2494 = vpop.permute.xlu0 %2493
  %2495 = vrot.lane.b32.xlu0 %v758, 56
  %v2496 = vpop.permute.xlu0 %2495
  %2497 = vrot.lane.b32.xlu0 %v759, 56
  %v2498 = vpop.permute.xlu0 %2497
  %2499 = vrot.lane.b32.xlu0 %v760, 56
  %v2500 = vpop.permute.xlu0 %2499
  %2501 = vrot.lane.b32.xlu0 %v761, 56
  %v2502 = vpop.permute.xlu0 %2501
  %2503 = vrot.lane.b32.xlu0 %v762, 56
  %v2504 = vpop.permute.xlu0 %2503
  %2505 = vrot.lane.b32.xlu0 %v763, 56
  %v2506 = vpop.permute.xlu0 %2505
  %2507 = vrot.lane.b32.xlu0 %v764, 56
  %v2508 = vpop.permute.xlu0 %2507
  %2509 = vrot.lane.b32.xlu0 %v765, 56
  %v2510 = vpop.permute.xlu0 %2509
  %2511 = vrot.lane.b32.xlu0 %v766, 56
  %v2512 = vpop.permute.xlu0 %2511
  %2513 = vrot.lane.b32.xlu0 %v767, 56
  %v2514 = vpop.permute.xlu0 %2513
  %2515 = vrot.lane.b32.xlu0 %v768, 56
  %v2516 = vpop.permute.xlu0 %2515
  %2517 = vrot.lane.b32.xlu0 %v769, 56
  %v2518 = vpop.permute.xlu0 %2517
  %2519 = vrot.lane.b32.xlu0 %v770, 56
  %v2520 = vpop.permute.xlu0 %2519
  %2521 = vrot.lane.b32.xlu0 %v771, 56
  %v2522 = vpop.permute.xlu0 %2521
  %2523 = vrot.lane.b32.xlu0 %v772, 56
  %v2524 = vpop.permute.xlu0 %2523
  %2525 = vrot.lane.b32.xlu0 %v773, 56
  %v2526 = vpop.permute.xlu0 %2525
  %2527 = vrot.lane.b32.xlu0 %v774, 56
  %v2528 = vpop.permute.xlu0 %2527
  %2529 = vrot.lane.b32.xlu0 %v775, 56
  %v2530 = vpop.permute.xlu0 %2529
  %2531 = vrot.lane.b32.xlu0 %v776, 56
  %v2532 = vpop.permute.xlu0 %2531
  %2533 = vrot.lane.b32.xlu0 %v777, 56
  %v2534 = vpop.permute.xlu0 %2533
  %2535 = vrot.lane.b32.xlu0 %v778, 56
  %v2536 = vpop.permute.xlu0 %2535
  %2537 = vrot.lane.b32.xlu0 %v779, 56
  %v2538 = vpop.permute.xlu0 %2537
  %2539 = vrot.lane.b32.xlu0 %v780, 56
  %v2540 = vpop.permute.xlu0 %2539
  %2541 = vrot.lane.b32.xlu0 %v781, 56
  %v2542 = vpop.permute.xlu0 %2541
  %2543 = vrot.lane.b32.xlu0 %v782, 56
  %v2544 = vpop.permute.xlu0 %2543
  %2545 = vrot.lane.b32.xlu0 %v783, 56
  %v2546 = vpop.permute.xlu0 %2545
  %2547 = vrot.lane.b32.xlu0 %v784, 56
  %v2548 = vpop.permute.xlu0 %2547
  %2549 = vrot.lane.b32.xlu0 %v785, 56
  %v2550 = vpop.permute.xlu0 %2549
  %2551 = vrot.lane.b32.xlu0 %v786, 56
  %v2552 = vpop.permute.xlu0 %2551
  %2553 = vrot.lane.b32.xlu0 %v787, 56
  %v2554 = vpop.permute.xlu0 %2553
  %2555 = vrot.lane.b32.xlu0 %v788, 56
  %v2556 = vpop.permute.xlu0 %2555
  %2557 = vrot.lane.b32.xlu0 %v789, 56
  %v2558 = vpop.permute.xlu0 %2557
  %2559 = vrot.lane.b32.xlu0 %v790, 56
  %v2560 = vpop.permute.xlu0 %2559
  %2561 = vrot.lane.b32.xlu0 %v791, 56
  %v2562 = vpop.permute.xlu0 %2561
  %2563 = vrot.lane.b32.xlu0 %v792, 56
  %v2564 = vpop.permute.xlu0 %2563
  %2565 = vrot.lane.b32.xlu0 %v793, 56
  %v2566 = vpop.permute.xlu0 %2565
  %2567 = vrot.lane.b32.xlu0 %v794, 56
  %v2568 = vpop.permute.xlu0 %2567
  %2569 = vrot.lane.b32.xlu0 %v795, 56
  %v2570 = vpop.permute.xlu0 %2569
  %2571 = vrot.lane.b32.xlu0 %v796, 56
  %v2572 = vpop.permute.xlu0 %2571
  %2573 = vrot.lane.b32.xlu0 %v797, 56
  %v2574 = vpop.permute.xlu0 %2573
  %2575 = vrot.lane.b32.xlu0 %v798, 56
  %v2576 = vpop.permute.xlu0 %2575
  %2577 = vrot.lane.b32.xlu0 %v799, 56
  %v2578 = vpop.permute.xlu0 %2577
  %2579 = vrot.lane.b32.xlu0 %v800, 56
  %v2580 = vpop.permute.xlu0 %2579
  %2581 = vrot.lane.b32.xlu0 %v801, 56
  %v2582 = vpop.permute.xlu0 %2581
  %2583 = vrot.lane.b32.xlu0 %v802, 56
  %v2584 = vpop.permute.xlu0 %2583
  %2585 = vrot.lane.b32.xlu0 %v803, 56
  %v2586 = vpop.permute.xlu0 %2585
  %2587 = vrot.lane.b32.xlu0 %v804, 56
  %v2588 = vpop.permute.xlu0 %2587
  %2589 = vrot.lane.b32.xlu0 %v805, 56
  %v2590 = vpop.permute.xlu0 %2589
  %2591 = vrot.lane.b32.xlu0 %v806, 56
  %v2592 = vpop.permute.xlu0 %2591
  %2593 = vrot.lane.b32.xlu0 %v807, 56
  %v2594 = vpop.permute.xlu0 %2593
  %2595 = vrot.lane.b32.xlu0 %v808, 56
  %v2596 = vpop.permute.xlu0 %2595
  %2597 = vrot.lane.b32.xlu0 %v809, 56
  %v2598 = vpop.permute.xlu0 %2597
  %2599 = vrot.lane.b32.xlu0 %v810, 56
  %v2600 = vpop.permute.xlu0 %2599
  %2601 = vrot.lane.b32.xlu0 %v811, 56
  %v2602 = vpop.permute.xlu0 %2601
  %2603 = vrot.lane.b32.xlu0 %v812, 56
  %v2604 = vpop.permute.xlu0 %2603
  %2733 = vrot.lane.b32.xlu0 %v813, 64
  %v2734 = vpop.permute.xlu0 %2733
  %2735 = vrot.lane.b32.xlu0 %v814, 64
  %v2736 = vpop.permute.xlu0 %2735
  %2737 = vrot.lane.b32.xlu0 %v815, 64
  %v2738 = vpop.permute.xlu0 %2737
  %2739 = vrot.lane.b32.xlu0 %v816, 64
  %v2740 = vpop.permute.xlu0 %2739
  %2741 = vrot.lane.b32.xlu0 %v817, 64
  %v2742 = vpop.permute.xlu0 %2741
  %2743 = vrot.lane.b32.xlu0 %v818, 64
  %v2744 = vpop.permute.xlu0 %2743
  %2745 = vrot.lane.b32.xlu0 %v819, 64
  %v2746 = vpop.permute.xlu0 %2745
  %2747 = vrot.lane.b32.xlu0 %v820, 64
  %v2748 = vpop.permute.xlu0 %2747
  %2749 = vrot.lane.b32.xlu0 %v821, 64
  %v2750 = vpop.permute.xlu0 %2749
  %2751 = vrot.lane.b32.xlu0 %v822, 64
  %v2752 = vpop.permute.xlu0 %2751
  %2753 = vrot.lane.b32.xlu0 %v823, 64
  %v2754 = vpop.permute.xlu0 %2753
  %2755 = vrot.lane.b32.xlu0 %v824, 64
  %v2756 = vpop.permute.xlu0 %2755
  %2757 = vrot.lane.b32.xlu0 %v825, 64
  %v2758 = vpop.permute.xlu0 %2757
  %2759 = vrot.lane.b32.xlu0 %v826, 64
  %v2760 = vpop.permute.xlu0 %2759
  %2761 = vrot.lane.b32.xlu0 %v827, 64
  %v2762 = vpop.permute.xlu0 %2761
  %2763 = vrot.lane.b32.xlu0 %v828, 64
  %v2764 = vpop.permute.xlu0 %2763
  %2765 = vrot.lane.b32.xlu0 %v829, 64
  %v2766 = vpop.permute.xlu0 %2765
  %2767 = vrot.lane.b32.xlu0 %v830, 64
  %v2768 = vpop.permute.xlu0 %2767
  %2769 = vrot.lane.b32.xlu0 %v831, 64
  %v2770 = vpop.permute.xlu0 %2769
  %2771 = vrot.lane.b32.xlu0 %v832, 64
  %v2772 = vpop.permute.xlu0 %2771
  %2773 = vrot.lane.b32.xlu0 %v833, 64
  %v2774 = vpop.permute.xlu0 %2773
  %2775 = vrot.lane.b32.xlu0 %v834, 64
  %v2776 = vpop.permute.xlu0 %2775
  %2777 = vrot.lane.b32.xlu0 %v835, 64
  %v2778 = vpop.permute.xlu0 %2777
  %2779 = vrot.lane.b32.xlu0 %v836, 64
  %v2780 = vpop.permute.xlu0 %2779
  %2781 = vrot.lane.b32.xlu0 %v837, 64
  %v2782 = vpop.permute.xlu0 %2781
  %2783 = vrot.lane.b32.xlu0 %v838, 64
  %v2784 = vpop.permute.xlu0 %2783
  %2785 = vrot.lane.b32.xlu0 %v839, 64
  %v2786 = vpop.permute.xlu0 %2785
  %2787 = vrot.lane.b32.xlu0 %v840, 64
  %v2788 = vpop.permute.xlu0 %2787
  %2789 = vrot.lane.b32.xlu0 %v841, 64
  %v2790 = vpop.permute.xlu0 %2789
  %2791 = vrot.lane.b32.xlu0 %v842, 64
  %v2792 = vpop.permute.xlu0 %2791
  %2793 = vrot.lane.b32.xlu0 %v843, 64
  %v2794 = vpop.permute.xlu0 %2793
  %2795 = vrot.lane.b32.xlu0 %v844, 64
  %v2796 = vpop.permute.xlu0 %2795
  %2797 = vrot.lane.b32.xlu0 %v845, 64
  %v2798 = vpop.permute.xlu0 %2797
  %2799 = vrot.lane.b32.xlu0 %v846, 64
  %v2800 = vpop.permute.xlu0 %2799
  %2801 = vrot.lane.b32.xlu0 %v847, 64
  %v2802 = vpop.permute.xlu0 %2801
  %2803 = vrot.lane.b32.xlu0 %v848, 64
  %v2804 = vpop.permute.xlu0 %2803
  %2805 = vrot.lane.b32.xlu0 %v849, 64
  %v2806 = vpop.permute.xlu0 %2805
  %2807 = vrot.lane.b32.xlu0 %v850, 64
  %v2808 = vpop.permute.xlu0 %2807
  %2809 = vrot.lane.b32.xlu0 %v851, 64
  %v2810 = vpop.permute.xlu0 %2809
  %2811 = vrot.lane.b32.xlu0 %v852, 64
  %v2812 = vpop.permute.xlu0 %2811
  %2813 = vrot.lane.b32.xlu0 %v853, 64
  %v2814 = vpop.permute.xlu0 %2813
  %2815 = vrot.lane.b32.xlu0 %v854, 64
  %v2816 = vpop.permute.xlu0 %2815
  %2817 = vrot.lane.b32.xlu0 %v855, 64
  %v2818 = vpop.permute.xlu0 %2817
  %2819 = vrot.lane.b32.xlu0 %v856, 64
  %v2820 = vpop.permute.xlu0 %2819
  %2821 = vrot.lane.b32.xlu0 %v857, 64
  %v2822 = vpop.permute.xlu0 %2821
  %2823 = vrot.lane.b32.xlu0 %v858, 64
  %v2824 = vpop.permute.xlu0 %2823
  %2825 = vrot.lane.b32.xlu0 %v859, 64
  %v2826 = vpop.permute.xlu0 %2825
  %2827 = vrot.lane.b32.xlu0 %v860, 64
  %v2828 = vpop.permute.xlu0 %2827
  %2829 = vrot.lane.b32.xlu0 %v861, 64
  %v2830 = vpop.permute.xlu0 %2829
  %2831 = vrot.lane.b32.xlu0 %v862, 64
  %v2832 = vpop.permute.xlu0 %2831
  %2833 = vrot.lane.b32.xlu0 %v863, 64
  %v2834 = vpop.permute.xlu0 %2833
  %2835 = vrot.lane.b32.xlu0 %v864, 64
  %v2836 = vpop.permute.xlu0 %2835
  %2837 = vrot.lane.b32.xlu0 %v865, 64
  %v2838 = vpop.permute.xlu0 %2837
  %2839 = vrot.lane.b32.xlu0 %v866, 64
  %v2840 = vpop.permute.xlu0 %2839
  %2841 = vrot.lane.b32.xlu0 %v867, 64
  %v2842 = vpop.permute.xlu0 %2841
  %2843 = vrot.lane.b32.xlu0 %v868, 64
  %v2844 = vpop.permute.xlu0 %2843
  %2845 = vrot.lane.b32.xlu0 %v869, 64
  %v2846 = vpop.permute.xlu0 %2845
  %2847 = vrot.lane.b32.xlu0 %v870, 64
  %v2848 = vpop.permute.xlu0 %2847
  %2849 = vrot.lane.b32.xlu0 %v871, 64
  %v2850 = vpop.permute.xlu0 %2849
  %2851 = vrot.lane.b32.xlu0 %v872, 64
  %v2852 = vpop.permute.xlu0 %2851
  %2853 = vrot.lane.b32.xlu0 %v873, 64
  %v2854 = vpop.permute.xlu0 %2853
  %2855 = vrot.lane.b32.xlu0 %v874, 64
  %v2856 = vpop.permute.xlu0 %2855
  %2857 = vrot.lane.b32.xlu0 %v875, 64
  %v2858 = vpop.permute.xlu0 %2857
  %2859 = vrot.lane.b32.xlu0 %v876, 64
  %v2860 = vpop.permute.xlu0 %2859
  %v2925 = vsel %vm26, %v300, %v942
  %v2926 = vsel %vm26, %v301, %v944
  %v2927 = vsel %vm26, %v302, %v946
  %v2928 = vsel %vm26, %v303, %v948
  %v2929 = vsel %vm26, %v304, %v950
  %v2930 = vsel %vm26, %v305, %v952
  %v2931 = vsel %vm26, %v306, %v954
  %v2932 = vsel %vm26, %v307, %v956
  %v2933 = vsel %vm26, %v308, %v958
  %v2934 = vsel %vm26, %v309, %v960
  %v2935 = vsel %vm26, %v310, %v962
  %v2936 = vsel %vm26, %v311, %v964
  %v2937 = vsel %vm26, %v312, %v966
  %v2938 = vsel %vm26, %v313, %v968
  %v2939 = vsel %vm26, %v314, %v970
  %v2940 = vsel %vm26, %v315, %v972
  %v2941 = vsel %vm26, %v316, %v974
  %v2942 = vsel %vm26, %v317, %v976
  %v2943 = vsel %vm26, %v318, %v978
  %v2944 = vsel %vm26, %v319, %v980
  %v2945 = vsel %vm26, %v320, %v982
  %v2946 = vsel %vm26, %v321, %v984
  %v2947 = vsel %vm26, %v322, %v986
  %v2948 = vsel %vm26, %v323, %v988
  %v2949 = vsel %vm26, %v324, %v990
  %v2950 = vsel %vm26, %v325, %v992
  %v2951 = vsel %vm26, %v326, %v994
  %v2952 = vsel %vm26, %v327, %v996
  %v2953 = vsel %vm26, %v328, %v998
  %v2954 = vsel %vm26, %v329, %v1000
  %v2955 = vsel %vm26, %v330, %v1002
  %v2956 = vsel %vm26, %v331, %v1004
  %v2957 = vsel %vm26, %v332, %v1006
  %v2958 = vsel %vm26, %v333, %v1008
  %v2959 = vsel %vm26, %v334, %v1010
  %v2960 = vsel %vm26, %v335, %v1012
  %v2961 = vsel %vm26, %v336, %v1014
  %v2962 = vsel %vm26, %v337, %v1016
  %v2963 = vsel %vm26, %v338, %v1018
  %v2964 = vsel %vm26, %v339, %v1020
  %v2965 = vsel %vm26, %v340, %v1022
  %v2966 = vsel %vm26, %v341, %v1024
  %v2967 = vsel %vm26, %v342, %v1026
  %v2968 = vsel %vm26, %v343, %v1028
  %v2969 = vsel %vm26, %v344, %v1030
  %v2970 = vsel %vm26, %v345, %v1032
  %v2971 = vsel %vm26, %v346, %v1034
  %v2972 = vsel %vm26, %v347, %v1036
  %v2973 = vsel %vm26, %v348, %v1038
  %v2974 = vsel %vm26, %v349, %v1040
  %v2975 = vsel %vm26, %v350, %v1042
  %v2976 = vsel %vm26, %v351, %v1044
  %v2977 = vsel %vm26, %v352, %v1046
  %v2978 = vsel %vm26, %v353, %v1048
  %v2979 = vsel %vm26, %v354, %v1050
  %v2980 = vsel %vm26, %v355, %v1052
  %v2981 = vsel %vm26, %v356, %v1054
  %v2982 = vsel %vm26, %v357, %v1056
  %v2983 = vsel %vm26, %v358, %v1058
  %v2984 = vsel %vm26, %v359, %v1060
  %v2985 = vsel %vm26, %v360, %v1062
  %v2986 = vsel %vm26, %v361, %v1064
  %v2987 = vsel %vm26, %v362, %v1066
  %v2988 = vsel %vm26, %v363, %v1068
  %vm2989 = vcmask 130048
  %v2990 = vsel %vm2989, %v2925, %v1198
  %v2991 = vsel %vm2989, %v2926, %v1200
  %v2992 = vsel %vm2989, %v2927, %v1202
  %v2993 = vsel %vm2989, %v2928, %v1204
  %v2994 = vsel %vm2989, %v2929, %v1206
  %v2995 = vsel %vm2989, %v2930, %v1208
  %v2996 = vsel %vm2989, %v2931, %v1210
  %v2997 = vsel %vm2989, %v2932, %v1212
  %v2998 = vsel %vm2989, %v2933, %v1214
  %v2999 = vsel %vm2989, %v2934, %v1216
  %v3000 = vsel %vm2989, %v2935, %v1218
  %v3001 = vsel %vm2989, %v2936, %v1220
  %v3002 = vsel %vm2989, %v2937, %v1222
  %v3003 = vsel %vm2989, %v2938, %v1224
  %v3004 = vsel %vm2989, %v2939, %v1226
  %v3005 = vsel %vm2989, %v2940, %v1228
  %v3006 = vsel %vm2989, %v2941, %v1230
  %v3007 = vsel %vm2989, %v2942, %v1232
  %v3008 = vsel %vm2989, %v2943, %v1234
  %v3009 = vsel %vm2989, %v2944, %v1236
  %v3010 = vsel %vm2989, %v2945, %v1238
  %v3011 = vsel %vm2989, %v2946, %v1240
  %v3012 = vsel %vm2989, %v2947, %v1242
  %v3013 = vsel %vm2989, %v2948, %v1244
  %v3014 = vsel %vm2989, %v2949, %v1246
  %v3015 = vsel %vm2989, %v2950, %v1248
  %v3016 = vsel %vm2989, %v2951, %v1250
  %v3017 = vsel %vm2989, %v2952, %v1252
  %v3018 = vsel %vm2989, %v2953, %v1254
  %v3019 = vsel %vm2989, %v2954, %v1256
  %v3020 = vsel %vm2989, %v2955, %v1258
  %v3021 = vsel %vm2989, %v2956, %v1260
  %v3022 = vsel %vm2989, %v2957, %v1262
  %v3023 = vsel %vm2989, %v2958, %v1264
  %v3024 = vsel %vm2989, %v2959, %v1266
  %v3025 = vsel %vm2989, %v2960, %v1268
  %v3026 = vsel %vm2989, %v2961, %v1270
  %v3027 = vsel %vm2989, %v2962, %v1272
  %v3028 = vsel %vm2989, %v2963, %v1274
  %v3029 = vsel %vm2989, %v2964, %v1276
  %v3030 = vsel %vm2989, %v2965, %v1278
  %v3031 = vsel %vm2989, %v2966, %v1280
  %v3032 = vsel %vm2989, %v2967, %v1282
  %v3033 = vsel %vm2989, %v2968, %v1284
  %v3034 = vsel %vm2989, %v2969, %v1286
  %v3035 = vsel %vm2989, %v2970, %v1288
  %v3036 = vsel %vm2989, %v2971, %v1290
  %v3037 = vsel %vm2989, %v2972, %v1292
  %v3038 = vsel %vm2989, %v2973, %v1294
  %v3039 = vsel %vm2989, %v2974, %v1296
  %v3040 = vsel %vm2989, %v2975, %v1298
  %v3041 = vsel %vm2989, %v2976, %v1300
  %v3042 = vsel %vm2989, %v2977, %v1302
  %v3043 = vsel %vm2989, %v2978, %v1304
  %v3044 = vsel %vm2989, %v2979, %v1306
  %v3045 = vsel %vm2989, %v2980, %v1308
  %v3046 = vsel %vm2989, %v2981, %v1310
  %v3047 = vsel %vm2989, %v2982, %v1312
  %v3048 = vsel %vm2989, %v2983, %v1314
  %v3049 = vsel %vm2989, %v2984, %v1316
  %v3050 = vsel %vm2989, %v2985, %v1318
  %v3051 = vsel %vm2989, %v2986, %v1320
  %v3052 = vsel %vm2989, %v2987, %v1322
  %v3053 = vsel %vm2989, %v2988, %v1324
  %vm3054 = vcmask 195584
  %v3055 = vsel %vm3054, %v2990, %v1454
  %v3056 = vsel %vm3054, %v2991, %v1456
  %v3057 = vsel %vm3054, %v2992, %v1458
  %v3058 = vsel %vm3054, %v2993, %v1460
  %v3059 = vsel %vm3054, %v2994, %v1462
  %v3060 = vsel %vm3054, %v2995, %v1464
  %v3061 = vsel %vm3054, %v2996, %v1466
  %v3062 = vsel %vm3054, %v2997, %v1468
  %v3063 = vsel %vm3054, %v2998, %v1470
  %v3064 = vsel %vm3054, %v2999, %v1472
  %v3065 = vsel %vm3054, %v3000, %v1474
  %v3066 = vsel %vm3054, %v3001, %v1476
  %v3067 = vsel %vm3054, %v3002, %v1478
  %v3068 = vsel %vm3054, %v3003, %v1480
  %v3069 = vsel %vm3054, %v3004, %v1482
  %v3070 = vsel %vm3054, %v3005, %v1484
  %v3071 = vsel %vm3054, %v3006, %v1486
  %v3072 = vsel %vm3054, %v3007, %v1488
  %v3073 = vsel %vm3054, %v3008, %v1490
  %v3074 = vsel %vm3054, %v3009, %v1492
  %v3075 = vsel %vm3054, %v3010, %v1494
  %v3076 = vsel %vm3054, %v3011, %v1496
  %v3077 = vsel %vm3054, %v3012, %v1498
  %v3078 = vsel %vm3054, %v3013, %v1500
  %v3079 = vsel %vm3054, %v3014, %v1502
  %v3080 = vsel %vm3054, %v3015, %v1504
  %v3081 = vsel %vm3054, %v3016, %v1506
  %v3082 = vsel %vm3054, %v3017, %v1508
  %v3083 = vsel %vm3054, %v3018, %v1510
  %v3084 = vsel %vm3054, %v3019, %v1512
  %v3085 = vsel %vm3054, %v3020, %v1514
  %v3086 = vsel %vm3054, %v3021, %v1516
  %v3087 = vsel %vm3054, %v3022, %v1518
  %v3088 = vsel %vm3054, %v3023, %v1520
  %v3089 = vsel %vm3054, %v3024, %v1522
  %v3090 = vsel %vm3054, %v3025, %v1524
  %v3091 = vsel %vm3054, %v3026, %v1526
  %v3092 = vsel %vm3054, %v3027, %v1528
  %v3093 = vsel %vm3054, %v3028, %v1530
  %v3094 = vsel %vm3054, %v3029, %v1532
  %v3095 = vsel %vm3054, %v3030, %v1534
  %v3096 = vsel %vm3054, %v3031, %v1536
  %v3097 = vsel %vm3054, %v3032, %v1538
  %v3098 = vsel %vm3054, %v3033, %v1540
  %v3099 = vsel %vm3054, %v3034, %v1542
  %v3100 = vsel %vm3054, %v3035, %v1544
  %v3101 = vsel %vm3054, %v3036, %v1546
  %v3102 = vsel %vm3054, %v3037, %v1548
  %v3103 = vsel %vm3054, %v3038, %v1550
  %v3104 = vsel %vm3054, %v3039, %v1552
  %v3105 = vsel %vm3054, %v3040, %v1554
  %v3106 = vsel %vm3054, %v3041, %v1556
  %v3107 = vsel %vm3054, %v3042, %v1558
  %v3108 = vsel %vm3054, %v3043, %v1560
  %v3109 = vsel %vm3054, %v3044, %v1562
  %v3110 = vsel %vm3054, %v3045, %v1564
  %v3111 = vsel %vm3054, %v3046, %v1566
  %v3112 = vsel %vm3054, %v3047, %v1568
  %v3113 = vsel %vm3054, %v3048, %v1570
  %v3114 = vsel %vm3054, %v3049, %v1572
  %v3115 = vsel %vm3054, %v3050, %v1574
  %v3116 = vsel %vm3054, %v3051, %v1576
  %v3117 = vsel %vm3054, %v3052, %v1578
  %v3118 = vsel %vm3054, %v3053, %v1580
  %vm3119 = vcmask 261120
  %v3120 = vsel %vm3119, %v3055, %v1710
  %v3121 = vsel %vm3119, %v3056, %v1712
  %v3122 = vsel %vm3119, %v3057, %v1714
  %v3123 = vsel %vm3119, %v3058, %v1716
  %v3124 = vsel %vm3119, %v3059, %v1718
  %v3125 = vsel %vm3119, %v3060, %v1720
  %v3126 = vsel %vm3119, %v3061, %v1722
  %v3127 = vsel %vm3119, %v3062, %v1724
  %v3128 = vsel %vm3119, %v3063, %v1726
  %v3129 = vsel %vm3119, %v3064, %v1728
  %v3130 = vsel %vm3119, %v3065, %v1730
  %v3131 = vsel %vm3119, %v3066, %v1732
  %v3132 = vsel %vm3119, %v3067, %v1734
  %v3133 = vsel %vm3119, %v3068, %v1736
  %v3134 = vsel %vm3119, %v3069, %v1738
  %v3135 = vsel %vm3119, %v3070, %v1740
  %v3136 = vsel %vm3119, %v3071, %v1742
  %v3137 = vsel %vm3119, %v3072, %v1744
  %v3138 = vsel %vm3119, %v3073, %v1746
  %v3139 = vsel %vm3119, %v3074, %v1748
  %v3140 = vsel %vm3119, %v3075, %v1750
  %v3141 = vsel %vm3119, %v3076, %v1752
  %v3142 = vsel %vm3119, %v3077, %v1754
  %v3143 = vsel %vm3119, %v3078, %v1756
  %v3144 = vsel %vm3119, %v3079, %v1758
  %v3145 = vsel %vm3119, %v3080, %v1760
  %v3146 = vsel %vm3119, %v3081, %v1762
  %v3147 = vsel %vm3119, %v3082, %v1764
  %v3148 = vsel %vm3119, %v3083, %v1766
  %v3149 = vsel %vm3119, %v3084, %v1768
  %v3150 = vsel %vm3119, %v3085, %v1770
  %v3151 = vsel %vm3119, %v3086, %v1772
  %v3152 = vsel %vm3119, %v3087, %v1774
  %v3153 = vsel %vm3119, %v3088, %v1776
  %v3154 = vsel %vm3119, %v3089, %v1778
  %v3155 = vsel %vm3119, %v3090, %v1780
  %v3156 = vsel %vm3119, %v3091, %v1782
  %v3157 = vsel %vm3119, %v3092, %v1784
  %v3158 = vsel %vm3119, %v3093, %v1786
  %v3159 = vsel %vm3119, %v3094, %v1788
  %v3160 = vsel %vm3119, %v3095, %v1790
  %v3161 = vsel %vm3119, %v3096, %v1792
  %v3162 = vsel %vm3119, %v3097, %v1794
  %v3163 = vsel %vm3119, %v3098, %v1796
  %v3164 = vsel %vm3119, %v3099, %v1798
  %v3165 = vsel %vm3119, %v3100, %v1800
  %v3166 = vsel %vm3119, %v3101, %v1802
  %v3167 = vsel %vm3119, %v3102, %v1804
  %v3168 = vsel %vm3119, %v3103, %v1806
  %v3169 = vsel %vm3119, %v3104, %v1808
  %v3170 = vsel %vm3119, %v3105, %v1810
  %v3171 = vsel %vm3119, %v3106, %v1812
  %v3172 = vsel %vm3119, %v3107, %v1814
  %v3173 = vsel %vm3119, %v3108, %v1816
  %v3174 = vsel %vm3119, %v3109, %v1818
  %v3175 = vsel %vm3119, %v3110, %v1820
  %v3176 = vsel %vm3119, %v3111, %v1822
  %v3177 = vsel %vm3119, %v3112, %v1824
  %v3178 = vsel %vm3119, %v3113, %v1826
  %v3179 = vsel %vm3119, %v3114, %v1828
  %v3180 = vsel %vm3119, %v3115, %v1830
  %v3181 = vsel %vm3119, %v3116, %v1832
  %v3182 = vsel %vm3119, %v3117, %v1834
  %v3183 = vsel %vm3119, %v3118, %v1836
  %vm3184 = vcmask 326656
  %v3185 = vsel %vm3184, %v3120, %v1966
  %v3186 = vsel %vm3184, %v3121, %v1968
  %v3187 = vsel %vm3184, %v3122, %v1970
  %v3188 = vsel %vm3184, %v3123, %v1972
  %v3189 = vsel %vm3184, %v3124, %v1974
  %v3190 = vsel %vm3184, %v3125, %v1976
  %v3191 = vsel %vm3184, %v3126, %v1978
  %v3192 = vsel %vm3184, %v3127, %v1980
  %v3193 = vsel %vm3184, %v3128, %v1982
  %v3194 = vsel %vm3184, %v3129, %v1984
  %v3195 = vsel %vm3184, %v3130, %v1986
  %v3196 = vsel %vm3184, %v3131, %v1988
  %v3197 = vsel %vm3184, %v3132, %v1990
  %v3198 = vsel %vm3184, %v3133, %v1992
  %v3199 = vsel %vm3184, %v3134, %v1994
  %v3200 = vsel %vm3184, %v3135, %v1996
  %v3201 = vsel %vm3184, %v3136, %v1998
  %v3202 = vsel %vm3184, %v3137, %v2000
  %v3203 = vsel %vm3184, %v3138, %v2002
  %v3204 = vsel %vm3184, %v3139, %v2004
  %v3205 = vsel %vm3184, %v3140, %v2006
  %v3206 = vsel %vm3184, %v3141, %v2008
  %v3207 = vsel %vm3184, %v3142, %v2010
  %v3208 = vsel %vm3184, %v3143, %v2012
  %v3209 = vsel %vm3184, %v3144, %v2014
  %v3210 = vsel %vm3184, %v3145, %v2016
  %v3211 = vsel %vm3184, %v3146, %v2018
  %v3212 = vsel %vm3184, %v3147, %v2020
  %v3213 = vsel %vm3184, %v3148, %v2022
  %v3214 = vsel %vm3184, %v3149, %v2024
  %v3215 = vsel %vm3184, %v3150, %v2026
  %v3216 = vsel %vm3184, %v3151, %v2028
  %v3217 = vsel %vm3184, %v3152, %v2030
  %v3218 = vsel %vm3184, %v3153, %v2032
  %v3219 = vsel %vm3184, %v3154, %v2034
  %v3220 = vsel %vm3184, %v3155, %v2036
  %v3221 = vsel %vm3184, %v3156, %v2038
  %v3222 = vsel %vm3184, %v3157, %v2040
  %v3223 = vsel %vm3184, %v3158, %v2042
  %v3224 = vsel %vm3184, %v3159, %v2044
  %v3225 = vsel %vm3184, %v3160, %v2046
  %v3226 = vsel %vm3184, %v3161, %v2048
  %v3227 = vsel %vm3184, %v3162, %v2050
  %v3228 = vsel %vm3184, %v3163, %v2052
  %v3229 = vsel %vm3184, %v3164, %v2054
  %v3230 = vsel %vm3184, %v3165, %v2056
  %v3231 = vsel %vm3184, %v3166, %v2058
  %v3232 = vsel %vm3184, %v3167, %v2060
  %v3233 = vsel %vm3184, %v3168, %v2062
  %v3234 = vsel %vm3184, %v3169, %v2064
  %v3235 = vsel %vm3184, %v3170, %v2066
  %v3236 = vsel %vm3184, %v3171, %v2068
  %v3237 = vsel %vm3184, %v3172, %v2070
  %v3238 = vsel %vm3184, %v3173, %v2072
  %v3239 = vsel %vm3184, %v3174, %v2074
  %v3240 = vsel %vm3184, %v3175, %v2076
  %v3241 = vsel %vm3184, %v3176, %v2078
  %v3242 = vsel %vm3184, %v3177, %v2080
  %v3243 = vsel %vm3184, %v3178, %v2082
  %v3244 = vsel %vm3184, %v3179, %v2084
  %v3245 = vsel %vm3184, %v3180, %v2086
  %v3246 = vsel %vm3184, %v3181, %v2088
  %v3247 = vsel %vm3184, %v3182, %v2090
  %v3248 = vsel %vm3184, %v3183, %v2092
  %vm3249 = vcmask 392192
  %v3250 = vsel %vm3249, %v3185, %v2222
  %v3251 = vsel %vm3249, %v3186, %v2224
  %v3252 = vsel %vm3249, %v3187, %v2226
  %v3253 = vsel %vm3249, %v3188, %v2228
  %v3254 = vsel %vm3249, %v3189, %v2230
  %v3255 = vsel %vm3249, %v3190, %v2232
  %v3256 = vsel %vm3249, %v3191, %v2234
  %v3257 = vsel %vm3249, %v3192, %v2236
  %v3258 = vsel %vm3249, %v3193, %v2238
  %v3259 = vsel %vm3249, %v3194, %v2240
  %v3260 = vsel %vm3249, %v3195, %v2242
  %v3261 = vsel %vm3249, %v3196, %v2244
  %v3262 = vsel %vm3249, %v3197, %v2246
  %v3263 = vsel %vm3249, %v3198, %v2248
  %v3264 = vsel %vm3249, %v3199, %v2250
  %v3265 = vsel %vm3249, %v3200, %v2252
  %v3266 = vsel %vm3249, %v3201, %v2254
  %v3267 = vsel %vm3249, %v3202, %v2256
  %v3268 = vsel %vm3249, %v3203, %v2258
  %v3269 = vsel %vm3249, %v3204, %v2260
  %v3270 = vsel %vm3249, %v3205, %v2262
  %v3271 = vsel %vm3249, %v3206, %v2264
  %v3272 = vsel %vm3249, %v3207, %v2266
  %v3273 = vsel %vm3249, %v3208, %v2268
  %v3274 = vsel %vm3249, %v3209, %v2270
  %v3275 = vsel %vm3249, %v3210, %v2272
  %v3276 = vsel %vm3249, %v3211, %v2274
  %v3277 = vsel %vm3249, %v3212, %v2276
  %v3278 = vsel %vm3249, %v3213, %v2278
  %v3279 = vsel %vm3249, %v3214, %v2280
  %v3280 = vsel %vm3249, %v3215, %v2282
  %v3281 = vsel %vm3249, %v3216, %v2284
  %v3282 = vsel %vm3249, %v3217, %v2286
  %v3283 = vsel %vm3249, %v3218, %v2288
  %v3284 = vsel %vm3249, %v3219, %v2290
  %v3285 = vsel %vm3249, %v3220, %v2292
  %v3286 = vsel %vm3249, %v3221, %v2294
  %v3287 = vsel %vm3249, %v3222, %v2296
  %v3288 = vsel %vm3249, %v3223, %v2298
  %v3289 = vsel %vm3249, %v3224, %v2300
  %v3290 = vsel %vm3249, %v3225, %v2302
  %v3291 = vsel %vm3249, %v3226, %v2304
  %v3292 = vsel %vm3249, %v3227, %v2306
  %v3293 = vsel %vm3249, %v3228, %v2308
  %v3294 = vsel %vm3249, %v3229, %v2310
  %v3295 = vsel %vm3249, %v3230, %v2312
  %v3296 = vsel %vm3249, %v3231, %v2314
  %v3297 = vsel %vm3249, %v3232, %v2316
  %v3298 = vsel %vm3249, %v3233, %v2318
  %v3299 = vsel %vm3249, %v3234, %v2320
  %v3300 = vsel %vm3249, %v3235, %v2322
  %v3301 = vsel %vm3249, %v3236, %v2324
  %v3302 = vsel %vm3249, %v3237, %v2326
  %v3303 = vsel %vm3249, %v3238, %v2328
  %v3304 = vsel %vm3249, %v3239, %v2330
  %v3305 = vsel %vm3249, %v3240, %v2332
  %v3306 = vsel %vm3249, %v3241, %v2334
  %v3307 = vsel %vm3249, %v3242, %v2336
  %v3308 = vsel %vm3249, %v3243, %v2338
  %v3309 = vsel %vm3249, %v3244, %v2340
  %v3310 = vsel %vm3249, %v3245, %v2342
  %v3311 = vsel %vm3249, %v3246, %v2344
  %v3312 = vsel %vm3249, %v3247, %v2346
  %v3313 = vsel %vm3249, %v3248, %v2348
  %vm3314 = vcmask 457728
  %v3315 = vsel %vm3314, %v3250, %v2478
  %v3316 = vsel %vm3314, %v3251, %v2480
  %v3317 = vsel %vm3314, %v3252, %v2482
  %v3318 = vsel %vm3314, %v3253, %v2484
  %v3319 = vsel %vm3314, %v3254, %v2486
  %v3320 = vsel %vm3314, %v3255, %v2488
  %v3321 = vsel %vm3314, %v3256, %v2490
  %v3322 = vsel %vm3314, %v3257, %v2492
  %v3323 = vsel %vm3314, %v3258, %v2494
  %v3324 = vsel %vm3314, %v3259, %v2496
  %v3325 = vsel %vm3314, %v3260, %v2498
  %v3326 = vsel %vm3314, %v3261, %v2500
  %v3327 = vsel %vm3314, %v3262, %v2502
  %v3328 = vsel %vm3314, %v3263, %v2504
  %v3329 = vsel %vm3314, %v3264, %v2506
  %v3330 = vsel %vm3314, %v3265, %v2508
  %v3331 = vsel %vm3314, %v3266, %v2510
  %v3332 = vsel %vm3314, %v3267, %v2512
  %v3333 = vsel %vm3314, %v3268, %v2514
  %v3334 = vsel %vm3314, %v3269, %v2516
  %v3335 = vsel %vm3314, %v3270, %v2518
  %v3336 = vsel %vm3314, %v3271, %v2520
  %v3337 = vsel %vm3314, %v3272, %v2522
  %v3338 = vsel %vm3314, %v3273, %v2524
  %v3339 = vsel %vm3314, %v3274, %v2526
  %v3340 = vsel %vm3314, %v3275, %v2528
  %v3341 = vsel %vm3314, %v3276, %v2530
  %v3342 = vsel %vm3314, %v3277, %v2532
  %v3343 = vsel %vm3314, %v3278, %v2534
  %v3344 = vsel %vm3314, %v3279, %v2536
  %v3345 = vsel %vm3314, %v3280, %v2538
  %v3346 = vsel %vm3314, %v3281, %v2540
  %v3347 = vsel %vm3314, %v3282, %v2542
  %v3348 = vsel %vm3314, %v3283, %v2544
  %v3349 = vsel %vm3314, %v3284, %v2546
  %v3350 = vsel %vm3314, %v3285, %v2548
  %v3351 = vsel %vm3314, %v3286, %v2550
  %v3352 = vsel %vm3314, %v3287, %v2552
  %v3353 = vsel %vm3314, %v3288, %v2554
  %v3354 = vsel %vm3314, %v3289, %v2556
  %v3355 = vsel %vm3314, %v3290, %v2558
  %v3356 = vsel %vm3314, %v3291, %v2560
  %v3357 = vsel %vm3314, %v3292, %v2562
  %v3358 = vsel %vm3314, %v3293, %v2564
  %v3359 = vsel %vm3314, %v3294, %v2566
  %v3360 = vsel %vm3314, %v3295, %v2568
  %v3361 = vsel %vm3314, %v3296, %v2570
  %v3362 = vsel %vm3314, %v3297, %v2572
  %v3363 = vsel %vm3314, %v3298, %v2574
  %v3364 = vsel %vm3314, %v3299, %v2576
  %v3365 = vsel %vm3314, %v3300, %v2578
  %v3366 = vsel %vm3314, %v3301, %v2580
  %v3367 = vsel %vm3314, %v3302, %v2582
  %v3368 = vsel %vm3314, %v3303, %v2584
  %v3369 = vsel %vm3314, %v3304, %v2586
  %v3370 = vsel %vm3314, %v3305, %v2588
  %v3371 = vsel %vm3314, %v3306, %v2590
  %v3372 = vsel %vm3314, %v3307, %v2592
  %v3373 = vsel %vm3314, %v3308, %v2594
  %v3374 = vsel %vm3314, %v3309, %v2596
  %v3375 = vsel %vm3314, %v3310, %v2598
  %v3376 = vsel %vm3314, %v3311, %v2600
  %v3377 = vsel %vm3314, %v3312, %v2602
  %v3378 = vsel %vm3314, %v3313, %v2604
  %vm3379 = vcmask 523264
  %v3380 = vsel %vm3379, %v3315, %v2734
  %v3381 = vsel %vm3379, %v3316, %v2736
  %v3382 = vsel %vm3379, %v3317, %v2738
  %v3383 = vsel %vm3379, %v3318, %v2740
  %v3384 = vsel %vm3379, %v3319, %v2742
  %v3385 = vsel %vm3379, %v3320, %v2744
  %v3386 = vsel %vm3379, %v3321, %v2746
  %v3387 = vsel %vm3379, %v3322, %v2748
  %v3388 = vsel %vm3379, %v3323, %v2750
  %v3389 = vsel %vm3379, %v3324, %v2752
  %v3390 = vsel %vm3379, %v3325, %v2754
  %v3391 = vsel %vm3379, %v3326, %v2756
  %v3392 = vsel %vm3379, %v3327, %v2758
  %v3393 = vsel %vm3379, %v3328, %v2760
  %v3394 = vsel %vm3379, %v3329, %v2762
  %v3395 = vsel %vm3379, %v3330, %v2764
  %v3396 = vsel %vm3379, %v3331, %v2766
  %v3397 = vsel %vm3379, %v3332, %v2768
  %v3398 = vsel %vm3379, %v3333, %v2770
  %v3399 = vsel %vm3379, %v3334, %v2772
  %v3400 = vsel %vm3379, %v3335, %v2774
  %v3401 = vsel %vm3379, %v3336, %v2776
  %v3402 = vsel %vm3379, %v3337, %v2778
  %v3403 = vsel %vm3379, %v3338, %v2780
  %v3404 = vsel %vm3379, %v3339, %v2782
  %v3405 = vsel %vm3379, %v3340, %v2784
  %v3406 = vsel %vm3379, %v3341, %v2786
  %v3407 = vsel %vm3379, %v3342, %v2788
  %v3408 = vsel %vm3379, %v3343, %v2790
  %v3409 = vsel %vm3379, %v3344, %v2792
  %v3410 = vsel %vm3379, %v3345, %v2794
  %v3411 = vsel %vm3379, %v3346, %v2796
  %v3412 = vsel %vm3379, %v3347, %v2798
  %v3413 = vsel %vm3379, %v3348, %v2800
  %v3414 = vsel %vm3379, %v3349, %v2802
  %v3415 = vsel %vm3379, %v3350, %v2804
  %v3416 = vsel %vm3379, %v3351, %v2806
  %v3417 = vsel %vm3379, %v3352, %v2808
  %v3418 = vsel %vm3379, %v3353, %v2810
  %v3419 = vsel %vm3379, %v3354, %v2812
  %v3420 = vsel %vm3379, %v3355, %v2814
  %v3421 = vsel %vm3379, %v3356, %v2816
  %v3422 = vsel %vm3379, %v3357, %v2818
  %v3423 = vsel %vm3379, %v3358, %v2820
  %v3424 = vsel %vm3379, %v3359, %v2822
  %v3425 = vsel %vm3379, %v3360, %v2824
  %v3426 = vsel %vm3379, %v3361, %v2826
  %v3427 = vsel %vm3379, %v3362, %v2828
  %v3428 = vsel %vm3379, %v3363, %v2830
  %v3429 = vsel %vm3379, %v3364, %v2832
  %v3430 = vsel %vm3379, %v3365, %v2834
  %v3431 = vsel %vm3379, %v3366, %v2836
  %v3432 = vsel %vm3379, %v3367, %v2838
  %v3433 = vsel %vm3379, %v3368, %v2840
  %v3434 = vsel %vm3379, %v3369, %v2842
  %v3435 = vsel %vm3379, %v3370, %v2844
  %v3436 = vsel %vm3379, %v3371, %v2846
  %v3437 = vsel %vm3379, %v3372, %v2848
  %v3438 = vsel %vm3379, %v3373, %v2850
  %v3439 = vsel %vm3379, %v3374, %v2852
  %v3440 = vsel %vm3379, %v3375, %v2854
  %v3441 = vsel %vm3379, %v3376, %v2856
  %v3442 = vsel %vm3379, %v3377, %v2858
  %v3443 = vsel %vm3379, %v3378, %v2860
  %v3444 = vld [vmem:[%s1] sm:$0xff]
  %v3445 = vld [vmem:[%s1 + $0x8] sm:$0xff]
  %v3446 = vld [vmem:[%s1 + $0x10] sm:$0xff]
  %v3447 = vld [vmem:[%s1 + $0x18] sm:$0xff]
  %v3448 = vld [vmem:[%s1 + $0x20] sm:$0xff]
  %v3449 = vld [vmem:[%s1 + $0x28] sm:$0xff]
  %v3450 = vld [vmem:[%s1 + $0x30] sm:$0xff]
  %v3451 = vld [vmem:[%s1 + $0x38] sm:$0xff]
  %v3452 = vld [vmem:[%s1 + $0x40] sm:$0xff]
  %v3453 = vld [vmem:[%s2] sm:$0x1]
  %v3455 = vlaneseq
  %v3456 = vshrl.u32 %v3455, 7
  %v3457 = vsub.s32 0, %v3456
  %v3458 = vrot.slane %v3453, %v3457
  %vm3460 = vcmask 588800
  %v3462 = vsel %vm3460, %v3380, 0
  %v3465 = vsel %vm3460, %v3381, 0
  %v3468 = vsel %vm3460, %v3382, 0
  %v3471 = vsel %vm3460, %v3383, 0
  %v3474 = vsel %vm3460, %v3384, 0
  %v3477 = vsel %vm3460, %v3385, 0
  %v3480 = vsel %vm3460, %v3386, 0
  %v3483 = vsel %vm3460, %v3387, 0
  %v3486 = vsel %vm3460, %v3388, 0
  %v3489 = vsel %vm3460, %v3389, 0
  %v3492 = vsel %vm3460, %v3390, 0
  %v3495 = vsel %vm3460, %v3391, 0
  %v3498 = vsel %vm3460, %v3392, 0
  %v3501 = vsel %vm3460, %v3393, 0
  %v3504 = vsel %vm3460, %v3394, 0
  %v3507 = vsel %vm3460, %v3395, 0
  %v3510 = vsel %vm3460, %v3396, 0
  %v3513 = vsel %vm3460, %v3397, 0
  %v3516 = vsel %vm3460, %v3398, 0
  %v3519 = vsel %vm3460, %v3399, 0
  %v3522 = vsel %vm3460, %v3400, 0
  %v3525 = vsel %vm3460, %v3401, 0
  %v3528 = vsel %vm3460, %v3402, 0
  %v3531 = vsel %vm3460, %v3403, 0
  %v3534 = vsel %vm3460, %v3404, 0
  %v3537 = vsel %vm3460, %v3405, 0
  %v3540 = vsel %vm3460, %v3406, 0
  %v3543 = vsel %vm3460, %v3407, 0
  %v3546 = vsel %vm3460, %v3408, 0
  %v3549 = vsel %vm3460, %v3409, 0
  %v3552 = vsel %vm3460, %v3410, 0
  %v3555 = vsel %vm3460, %v3411, 0
  %v3558 = vsel %vm3460, %v3412, 0
  %v3561 = vsel %vm3460, %v3413, 0
  %v3564 = vsel %vm3460, %v3414, 0
  %v3567 = vsel %vm3460, %v3415, 0
  %v3570 = vsel %vm3460, %v3416, 0
  %v3573 = vsel %vm3460, %v3417, 0
  %v3576 = vsel %vm3460, %v3418, 0
  %v3579 = vsel %vm3460, %v3419, 0
  %v3582 = vsel %vm3460, %v3420, 0
  %v3585 = vsel %vm3460, %v3421, 0
  %v3588 = vsel %vm3460, %v3422, 0
  %v3591 = vsel %vm3460, %v3423, 0
  %v3594 = vsel %vm3460, %v3424, 0
  %v3597 = vsel %vm3460, %v3425, 0
  %v3600 = vsel %vm3460, %v3426, 0
  %v3603 = vsel %vm3460, %v3427, 0
  %v3606 = vsel %vm3460, %v3428, 0
  %v3609 = vsel %vm3460, %v3429, 0
  %v3612 = vsel %vm3460, %v3430, 0
  %v3615 = vsel %vm3460, %v3431, 0
  %v3618 = vsel %vm3460, %v3432, 0
  %v3621 = vsel %vm3460, %v3433, 0
  %v3624 = vsel %vm3460, %v3434, 0
  %v3627 = vsel %vm3460, %v3435, 0
  %v3630 = vsel %vm3460, %v3436, 0
  %v3633 = vsel %vm3460, %v3437, 0
  %v3636 = vsel %vm3460, %v3438, 0
  %v3639 = vsel %vm3460, %v3439, 0
  %v3642 = vsel %vm3460, %v3440, 0
  %v3645 = vsel %vm3460, %v3441, 0
  %v3648 = vsel %vm3460, %v3442, 0
  %v3651 = vsel %vm3460, %v3443, 0
  %3653 = vmatprep.subr.mxu0 0.0
  %3654 = vmatpush1.msra.mxu0 %v3444
  %3655 = vmatprep.subr.mxu0 0.0
  %3656 = vmatpush1.msra.mxu0 %v3445
  %3657 = vmatprep.subr.mxu0 0.0
  %3658 = vmatpush1.msra.mxu0 %v3446
  %3659 = vmatprep.subr.mxu0 0.0
  %3660 = vmatpush1.msra.mxu0 %v3447
  %3661 = vmatprep.subr.mxu0 0.0
  %3662 = vmatpush1.msra.mxu0 %v3448
  %3663 = vmatprep.subr.mxu0 0.0
  %3664 = vmatpush1.msra.mxu0 %v3449
  %3665 = vmatprep.subr.mxu0 0.0
  %3666 = vmatpush1.msra.mxu0 %v3450
  %3667 = vmatprep.subr.mxu0 0.0
  %3668 = vmatpush1.msra.mxu0 %v3451
  %3669 = vmatprep.subr.mxu0 0.0
  %3670 = vmatpush1.msra.mxu0 %v3452
  %3671 = vmatprep.subr.mxu0 0.0
  %3672 = vmatpush1.msra.mxu0 0.0
  %3673 = vmatprep.subr.mxu0 0.0
  %3674 = vmatpush1.msra.mxu0 0.0
  %3675 = vmatprep.subr.mxu0 0.0
  %3676 = vmatpush1.msra.mxu0 0.0
  %3677 = vmatprep.subr.mxu0 0.0
  %3678 = vmatpush1.msra.mxu0 0.0
  %3679 = vmatprep.subr.mxu0 0.0
  %3680 = vmatpush1.msra.mxu0 0.0
  %3681 = vmatprep.subr.mxu0 0.0
  %3682 = vmatpush1.msra.mxu0 0.0
  %3683 = vmatprep.subr.mxu0 0.0
  %3684 = vmatpush1.msra.mxu0 0.0
  %3685 = vmatprep.subr.mxu0 0.0
  %3686 = vmatpush1.msra.mxu0 0.0
  %3687 = vmatprep.subr.mxu0 0.0
  %3688 = vmatpush1.msra.mxu0 0.0
  %3689 = vmatprep.subr.mxu0 0.0
  %3690 = vmatpush1.msra.mxu0 0.0
  %3691 = vmatprep.subr.mxu0 0.0
  %3692 = vmatpush1.msra.mxu0 0.0
  %3693 = vmatprep.subr.mxu0 0.0
  %3694 = vmatpush1.msra.mxu0 0.0
  %3695 = vmatprep.subr.mxu0 0.0
  %3696 = vmatpush1.msra.mxu0 0.0
  %3697 = vmatprep.subr.mxu0 0.0
  %3698 = vmatpush1.msra.mxu0 0.0
  %3699 = vmatprep.subr.mxu0 0.0
  %3700 = vmatpush1.msra.mxu0 0.0
  %3701 = vmatprep.subr.mxu0 0.0
  %3702 = vmatpush1.msra.mxu0 0.0
  %3703 = vmatprep.subr.mxu0 0.0
  %3704 = vmatpush1.msra.mxu0 0.0
  %3705 = vmatprep.subr.mxu0 0.0
  %3706 = vmatpush1.msra.mxu0 0.0
  %3707 = vmatprep.subr.mxu0 0.0
  %3708 = vmatpush1.msra.mxu0 0.0
  %3709 = vmatprep.subr.mxu0 0.0
  %3710 = vmatpush1.msra.mxu0 0.0
  %3711 = vmatprep.subr.mxu0 0.0
  %3712 = vmatpush1.msra.mxu0 0.0
  %3713 = vmatprep.subr.mxu0 0.0
  %3714 = vmatpush1.msra.mxu0 0.0
  %3715 = vmatprep.subr.mxu0 0.0
  %3716 = vmatpush1.msra.mxu0 0.0
  %3717 = vmatprep.mubr.f32.mxu0 0.0
  %3718 = vmatmul.mubr.f32.gmra.mrb[0].mxu0 %v3462
  %v3719 = vpop.f32.mrb[0].mxu0
  %v3720 = vadd.f32 %v3458, %v3719
  %v3721 = vpop.f32.mrb[0].mxu0
  %3722 = vmatprep.mubr.f32.mxu0 0.0
  %3723 = vmatmul.mubr.f32.gmra.mrb[0].mxu0 %v3465
  %v3724 = vpop.f32.mrb[0].mxu0
  %v3725 = vadd.f32 %v3458, %v3724
  %v3726 = vpop.f32.mrb[0].mxu0
  %3727 = vmatprep.mubr.f32.mxu0 0.0
  %3728 = vmatmul.mubr.f32.gmra.mrb[0].mxu0 %v3468
  %v3729 = vpop.f32.mrb[0].mxu0
  %v3730 = vadd.f32 %v3458, %v3729
  %v3731 = vpop.f32.mrb[0].mxu0
  %3732 = vmatprep.mubr.f32.mxu0 0.0
  %3733 = vmatmul.mubr.f32.gmra.mrb[0].mxu0 %v3471
  %v3734 = vpop.f32.mrb[0].mxu0
  %v3735 = vadd.f32 %v3458, %v3734
  %v3736 = vpop.f32.mrb[0].mxu0
  %3737 = vmatprep.mubr.f32.mxu0 0.0
  %3738 = vmatmul.mubr.f32.gmra.mrb[0].mxu0 %v3474
  %v3739 = vpop.f32.mrb[0].mxu0
  %v3740 = vadd.f32 %v3458, %v3739
  %v3741 = vpop.f32.mrb[0].mxu0
  %3742 = vmatprep.mubr.f32.mxu0 0.0
  %3743 = vmatmul.mubr.f32.gmra.mrb[0].mxu0 %v3477
  %v3744 = vpop.f32.mrb[0].mxu0
  %v3745 = vadd.f32 %v3458, %v3744
  %v3746 = vpop.f32.mrb[0].mxu0
  %3747 = vmatprep.mubr.f32.mxu0 0.0
  %3748 = vmatmul.mubr.f32.gmra.mrb[0].mxu0 %v3480
  %v3749 = vpop.f32.mrb[0].mxu0
  %v3750 = vadd.f32 %v3458, %v3749
  %v3751 = vpop.f32.mrb[0].mxu0
  %3752 = vmatprep.mubr.f32.mxu0 0.0
  %3753 = vmatmul.mubr.f32.gmra.mrb[0].mxu0 %v3483
  %v3754 = vpop.f32.mrb[0].mxu0
  %v3755 = vadd.f32 %v3458, %v3754
  %v3756 = vpop.f32.mrb[0].mxu0
  %3757 = vmatprep.mubr.f32.mxu0 0.0
  %3758 = vmatmul.mubr.f32.gmra.mrb[0].mxu0 %v3486
  %v3759 = vpop.f32.mrb[0].mxu0
  %v3760 = vadd.f32 %v3458, %v3759
  %v3761 = vpop.f32.mrb[0].mxu0
  %3762 = vmatprep.mubr.f32.mxu0 0.0
  %3763 = vmatmul.mubr.f32.gmra.mrb[0].mxu0 %v3489
  %v3764 = vpop.f32.mrb[0].mxu0
  %v3765 = vadd.f32 %v3458, %v3764
  %v3766 = vpop.f32.mrb[0].mxu0
  %3767 = vmatprep.mubr.f32.mxu0 0.0
  %3768 = vmatmul.mubr.f32.gmra.mrb[0].mxu0 %v3492
  %v3769 = vpop.f32.mrb[0].mxu0
  %v3770 = vadd.f32 %v3458, %v3769
  %v3771 = vpop.f32.mrb[0].mxu0
  %3772 = vmatprep.mubr.f32.mxu0 0.0
  %3773 = vmatmul.mubr.f32.gmra.mrb[0].mxu0 %v3495
  %v3774 = vpop.f32.mrb[0].mxu0
  %v3775 = vadd.f32 %v3458, %v3774
  %v3776 = vpop.f32.mrb[0].mxu0
  %3777 = vmatprep.mubr.f32.mxu0 0.0
  %3778 = vmatmul.mubr.f32.gmra.mrb[0].mxu0 %v3498
  %v3779 = vpop.f32.mrb[0].mxu0
  %v3780 = vadd.f32 %v3458, %v3779
  %v3781 = vpop.f32.mrb[0].mxu0
  %3782 = vmatprep.mubr.f32.mxu0 0.0
  %3783 = vmatmul.mubr.f32.gmra.mrb[0].mxu0 %v3501
  %v3784 = vpop.f32.mrb[0].mxu0
  %v3785 = vadd.f32 %v3458, %v3784
  %v3786 = vpop.f32.mrb[0].mxu0
  %3787 = vmatprep.mubr.f32.mxu0 0.0
  %3788 = vmatmul.mubr.f32.gmra.mrb[0].mxu0 %v3504
  %v3789 = vpop.f32.mrb[0].mxu0
  %v3790 = vadd.f32 %v3458, %v3789
  %v3791 = vpop.f32.mrb[0].mxu0
  %3792 = vmatprep.mubr.f32.mxu0 0.0
  %3793 = vmatmul.mubr.f32.gmra.mrb[0].mxu0 %v3507
  %v3794 = vpop.f32.mrb[0].mxu0
  %v3795 = vadd.f32 %v3458, %v3794
  %v3796 = vpop.f32.mrb[0].mxu0
  %3797 = vmatprep.mubr.f32.mxu0 0.0
  %3798 = vmatmul.mubr.f32.gmra.mrb[0].mxu0 %v3510
  %v3799 = vpop.f32.mrb[0].mxu0
  %v3800 = vadd.f32 %v3458, %v3799
  %v3801 = vpop.f32.mrb[0].mxu0
  %3802 = vmatprep.mubr.f32.mxu0 0.0
  %3803 = vmatmul.mubr.f32.gmra.mrb[0].mxu0 %v3513
  %v3804 = vpop.f32.mrb[0].mxu0
  %v3805 = vadd.f32 %v3458, %v3804
  %v3806 = vpop.f32.mrb[0].mxu0
  %3807 = vmatprep.mubr.f32.mxu0 0.0
  %3808 = vmatmul.mubr.f32.gmra.mrb[0].mxu0 %v3516
  %v3809 = vpop.f32.mrb[0].mxu0
  %v3810 = vadd.f32 %v3458, %v3809
  %v3811 = vpop.f32.mrb[0].mxu0
  %3812 = vmatprep.mubr.f32.mxu0 0.0
  %3813 = vmatmul.mubr.f32.gmra.mrb[0].mxu0 %v3519
  %v3814 = vpop.f32.mrb[0].mxu0
  %v3815 = vadd.f32 %v3458, %v3814
  %v3816 = vpop.f32.mrb[0].mxu0
  %3817 = vmatprep.mubr.f32.mxu0 0.0
  %3818 = vmatmul.mubr.f32.gmra.mrb[0].mxu0 %v3522
  %v3819 = vpop.f32.mrb[0].mxu0
  %v3820 = vadd.f32 %v3458, %v3819
  %v3821 = vpop.f32.mrb[0].mxu0
  %3822 = vmatprep.mubr.f32.mxu0 0.0
  %3823 = vmatmul.mubr.f32.gmra.mrb[0].mxu0 %v3525
  %v3824 = vpop.f32.mrb[0].mxu0
  %v3825 = vadd.f32 %v3458, %v3824
  %v3826 = vpop.f32.mrb[0].mxu0
  %3827 = vmatprep.mubr.f32.mxu0 0.0
  %3828 = vmatmul.mubr.f32.gmra.mrb[0].mxu0 %v3528
  %v3829 = vpop.f32.mrb[0].mxu0
  %v3830 = vadd.f32 %v3458, %v3829
  %v3831 = vpop.f32.mrb[0].mxu0
  %3832 = vmatprep.mubr.f32.mxu0 0.0
  %3833 = vmatmul.mubr.f32.gmra.mrb[0].mxu0 %v3531
  %v3834 = vpop.f32.mrb[0].mxu0
  %v3835 = vadd.f32 %v3458, %v3834
  %v3836 = vpop.f32.mrb[0].mxu0
  %3837 = vmatprep.mubr.f32.mxu0 0.0
  %3838 = vmatmul.mubr.f32.gmra.mrb[0].mxu0 %v3534
  %v3839 = vpop.f32.mrb[0].mxu0
  %v3840 = vadd.f32 %v3458, %v3839
  %v3841 = vpop.f32.mrb[0].mxu0
  %3842 = vmatprep.mubr.f32.mxu0 0.0
  %3843 = vmatmul.mubr.f32.gmra.mrb[0].mxu0 %v3537
  %v3844 = vpop.f32.mrb[0].mxu0
  %v3845 = vadd.f32 %v3458, %v3844
  %v3846 = vpop.f32.mrb[0].mxu0
  %3847 = vmatprep.mubr.f32.mxu0 0.0
  %3848 = vmatmul.mubr.f32.gmra.mrb[0].mxu0 %v3540
  %v3849 = vpop.f32.mrb[0].mxu0
  %v3850 = vadd.f32 %v3458, %v3849
  %v3851 = vpop.f32.mrb[0].mxu0
  %3852 = vmatprep.mubr.f32.mxu0 0.0
  %3853 = vmatmul.mubr.f32.gmra.mrb[0].mxu0 %v3543
  %v3854 = vpop.f32.mrb[0].mxu0
  %v3855 = vadd.f32 %v3458, %v3854
  %v3856 = vpop.f32.mrb[0].mxu0
  %3857 = vmatprep.mubr.f32.mxu0 0.0
  %3858 = vmatmul.mubr.f32.gmra.mrb[0].mxu0 %v3546
  %v3859 = vpop.f32.mrb[0].mxu0
  %v3860 = vadd.f32 %v3458, %v3859
  %v3861 = vpop.f32.mrb[0].mxu0
  %3862 = vmatprep.mubr.f32.mxu0 0.0
  %3863 = vmatmul.mubr.f32.gmra.mrb[0].mxu0 %v3549
  %v3864 = vpop.f32.mrb[0].mxu0
  %v3865 = vadd.f32 %v3458, %v3864
  %v3866 = vpop.f32.mrb[0].mxu0
  %3867 = vmatprep.mubr.f32.mxu0 0.0
  %3868 = vmatmul.mubr.f32.gmra.mrb[0].mxu0 %v3552
  %v3869 = vpop.f32.mrb[0].mxu0
  %v3870 = vadd.f32 %v3458, %v3869
  %v3871 = vpop.f32.mrb[0].mxu0
  %3872 = vmatprep.mubr.f32.mxu0 0.0
  %3873 = vmatmul.mubr.f32.gmra.mrb[0].mxu0 %v3555
  %v3874 = vpop.f32.mrb[0].mxu0
  %v3875 = vadd.f32 %v3458, %v3874
  %v3876 = vpop.f32.mrb[0].mxu0
  %3877 = vmatprep.mubr.f32.mxu0 0.0
  %3878 = vmatmul.mubr.f32.gmra.mrb[0].mxu0 %v3558
  %v3879 = vpop.f32.mrb[0].mxu0
  %v3880 = vadd.f32 %v3458, %v3879
  %v3881 = vpop.f32.mrb[0].mxu0
  %3882 = vmatprep.mubr.f32.mxu0 0.0
  %3883 = vmatmul.mubr.f32.gmra.mrb[0].mxu0 %v3561
  %v3884 = vpop.f32.mrb[0].mxu0
  %v3885 = vadd.f32 %v3458, %v3884
  %v3886 = vpop.f32.mrb[0].mxu0
  %3887 = vmatprep.mubr.f32.mxu0 0.0
  %3888 = vmatmul.mubr.f32.gmra.mrb[0].mxu0 %v3564
  %v3889 = vpop.f32.mrb[0].mxu0
  %v3890 = vadd.f32 %v3458, %v3889
  %v3891 = vpop.f32.mrb[0].mxu0
  %3892 = vmatprep.mubr.f32.mxu0 0.0
  %3893 = vmatmul.mubr.f32.gmra.mrb[0].mxu0 %v3567
  %v3894 = vpop.f32.mrb[0].mxu0
  %v3895 = vadd.f32 %v3458, %v3894
  %v3896 = vpop.f32.mrb[0].mxu0
  %3897 = vmatprep.mubr.f32.mxu0 0.0
  %3898 = vmatmul.mubr.f32.gmra.mrb[0].mxu0 %v3570
  %v3899 = vpop.f32.mrb[0].mxu0
  %v3900 = vadd.f32 %v3458, %v3899
  %v3901 = vpop.f32.mrb[0].mxu0
  %3902 = vmatprep.mubr.f32.mxu0 0.0
  %3903 = vmatmul.mubr.f32.gmra.mrb[0].mxu0 %v3573
  %v3904 = vpop.f32.mrb[0].mxu0
  %v3905 = vadd.f32 %v3458, %v3904
  %v3906 = vpop.f32.mrb[0].mxu0
  %3907 = vmatprep.mubr.f32.mxu0 0.0
  %3908 = vmatmul.mubr.f32.gmra.mrb[0].mxu0 %v3576
  %v3909 = vpop.f32.mrb[0].mxu0
  %v3910 = vadd.f32 %v3458, %v3909
  %v3911 = vpop.f32.mrb[0].mxu0
  %3912 = vmatprep.mubr.f32.mxu0 0.0
  %3913 = vmatmul.mubr.f32.gmra.mrb[0].mxu0 %v3579
  %v3914 = vpop.f32.mrb[0].mxu0
  %v3915 = vadd.f32 %v3458, %v3914
  %v3916 = vpop.f32.mrb[0].mxu0
  %3917 = vmatprep.mubr.f32.mxu0 0.0
  %3918 = vmatmul.mubr.f32.gmra.mrb[0].mxu0 %v3582
  %v3919 = vpop.f32.mrb[0].mxu0
  %v3920 = vadd.f32 %v3458, %v3919
  %v3921 = vpop.f32.mrb[0].mxu0
  %3922 = vmatprep.mubr.f32.mxu0 0.0
  %3923 = vmatmul.mubr.f32.gmra.mrb[0].mxu0 %v3585
  %v3924 = vpop.f32.mrb[0].mxu0
  %v3925 = vadd.f32 %v3458, %v3924
  %v3926 = vpop.f32.mrb[0].mxu0
  %3927 = vmatprep.mubr.f32.mxu0 0.0
  %3928 = vmatmul.mubr.f32.gmra.mrb[0].mxu0 %v3588
  %v3929 = vpop.f32.mrb[0].mxu0
  %v3930 = vadd.f32 %v3458, %v3929
  %v3931 = vpop.f32.mrb[0].mxu0
  %3932 = vmatprep.mubr.f32.mxu0 0.0
  %3933 = vmatmul.mubr.f32.gmra.mrb[0].mxu0 %v3591
  %v3934 = vpop.f32.mrb[0].mxu0
  %v3935 = vadd.f32 %v3458, %v3934
  %v3936 = vpop.f32.mrb[0].mxu0
  %3937 = vmatprep.mubr.f32.mxu0 0.0
  %3938 = vmatmul.mubr.f32.gmra.mrb[0].mxu0 %v3594
  %v3939 = vpop.f32.mrb[0].mxu0
  %v3940 = vadd.f32 %v3458, %v3939
  %v3941 = vpop.f32.mrb[0].mxu0
  %3942 = vmatprep.mubr.f32.mxu0 0.0
  %3943 = vmatmul.mubr.f32.gmra.mrb[0].mxu0 %v3597
  %v3944 = vpop.f32.mrb[0].mxu0
  %v3945 = vadd.f32 %v3458, %v3944
  %v3946 = vpop.f32.mrb[0].mxu0
  %3947 = vmatprep.mubr.f32.mxu0 0.0
  %3948 = vmatmul.mubr.f32.gmra.mrb[0].mxu0 %v3600
  %v3949 = vpop.f32.mrb[0].mxu0
  %v3950 = vadd.f32 %v3458, %v3949
  %v3951 = vpop.f32.mrb[0].mxu0
  %3952 = vmatprep.mubr.f32.mxu0 0.0
  %3953 = vmatmul.mubr.f32.gmra.mrb[0].mxu0 %v3603
  %v3954 = vpop.f32.mrb[0].mxu0
  %v3955 = vadd.f32 %v3458, %v3954
  %v3956 = vpop.f32.mrb[0].mxu0
  %3957 = vmatprep.mubr.f32.mxu0 0.0
  %3958 = vmatmul.mubr.f32.gmra.mrb[0].mxu0 %v3606
  %v3959 = vpop.f32.mrb[0].mxu0
  %v3960 = vadd.f32 %v3458, %v3959
  %v3961 = vpop.f32.mrb[0].mxu0
  %3962 = vmatprep.mubr.f32.mxu0 0.0
  %3963 = vmatmul.mubr.f32.gmra.mrb[0].mxu0 %v3609
  %v3964 = vpop.f32.mrb[0].mxu0
  %v3965 = vadd.f32 %v3458, %v3964
  %v3966 = vpop.f32.mrb[0].mxu0
  %3967 = vmatprep.mubr.f32.mxu0 0.0
  %3968 = vmatmul.mubr.f32.gmra.mrb[0].mxu0 %v3612
  %v3969 = vpop.f32.mrb[0].mxu0
  %v3970 = vadd.f32 %v3458, %v3969
  %v3971 = vpop.f32.mrb[0].mxu0
  %3972 = vmatprep.mubr.f32.mxu0 0.0
  %3973 = vmatmul.mubr.f32.gmra.mrb[0].mxu0 %v3615
  %v3974 = vpop.f32.mrb[0].mxu0
  %v3975 = vadd.f32 %v3458, %v3974
  %v3976 = vpop.f32.mrb[0].mxu0
  %3977 = vmatprep.mubr.f32.mxu0 0.0
  %3978 = vmatmul.mubr.f32.gmra.mrb[0].mxu0 %v3618
  %v3979 = vpop.f32.mrb[0].mxu0
  %v3980 = vadd.f32 %v3458, %v3979
  %v3981 = vpop.f32.mrb[0].mxu0
  %3982 = vmatprep.mubr.f32.mxu0 0.0
  %3983 = vmatmul.mubr.f32.gmra.mrb[0].mxu0 %v3621
  %v3984 = vpop.f32.mrb[0].mxu0
  %v3985 = vadd.f32 %v3458, %v3984
  %v3986 = vpop.f32.mrb[0].mxu0
  %3987 = vmatprep.mubr.f32.mxu0 0.0
  %3988 = vmatmul.mubr.f32.gmra.mrb[0].mxu0 %v3624
  %v3989 = vpop.f32.mrb[0].mxu0
  %v3990 = vadd.f32 %v3458, %v3989
  %v3991 = vpop.f32.mrb[0].mxu0
  %3992 = vmatprep.mubr.f32.mxu0 0.0
  %3993 = vmatmul.mubr.f32.gmra.mrb[0].mxu0 %v3627
  %v3994 = vpop.f32.mrb[0].mxu0
  %v3995 = vadd.f32 %v3458, %v3994
  %v3996 = vpop.f32.mrb[0].mxu0
  %3997 = vmatprep.mubr.f32.mxu0 0.0
  %3998 = vmatmul.mubr.f32.gmra.mrb[0].mxu0 %v3630
  %v3999 = vpop.f32.mrb[0].mxu0
  %v4000 = vadd.f32 %v3458, %v3999
  %v4001 = vpop.f32.mrb[0].mxu0
  %4002 = vmatprep.mubr.f32.mxu0 0.0
  %4003 = vmatmul.mubr.f32.gmra.mrb[0].mxu0 %v3633
  %v4004 = vpop.f32.mrb[0].mxu0
  %v4005 = vadd.f32 %v3458, %v4004
  %v4006 = vpop.f32.mrb[0].mxu0
  %4007 = vmatprep.mubr.f32.mxu0 0.0
  %4008 = vmatmul.mubr.f32.gmra.mrb[0].mxu0 %v3636
  %v4009 = vpop.f32.mrb[0].mxu0
  %v4010 = vadd.f32 %v3458, %v4009
  %v4011 = vpop.f32.mrb[0].mxu0
  %4012 = vmatprep.mubr.f32.mxu0 0.0
  %4013 = vmatmul.mubr.f32.gmra.mrb[0].mxu0 %v3639
  %v4014 = vpop.f32.mrb[0].mxu0
  %v4015 = vadd.f32 %v3458, %v4014
  %v4016 = vpop.f32.mrb[0].mxu0
  %4017 = vmatprep.mubr.f32.mxu0 0.0
  %4018 = vmatmul.mubr.f32.gmra.mrb[0].mxu0 %v3642
  %v4019 = vpop.f32.mrb[0].mxu0
  %v4020 = vadd.f32 %v3458, %v4019
  %v4021 = vpop.f32.mrb[0].mxu0
  %4022 = vmatprep.mubr.f32.mxu0 0.0
  %4023 = vmatmul.mubr.f32.gmra.mrb[0].mxu0 %v3645
  %v4024 = vpop.f32.mrb[0].mxu0
  %v4025 = vadd.f32 %v3458, %v4024
  %v4026 = vpop.f32.mrb[0].mxu0
  %4027 = vmatprep.mubr.f32.mxu0 0.0
  %4028 = vmatmul.mubr.f32.gmra.mrb[0].mxu0 %v3648
  %v4029 = vpop.f32.mrb[0].mxu0
  %v4030 = vadd.f32 %v3458, %v4029
  %v4031 = vpop.f32.mrb[0].mxu0
  %4032 = vmatprep.mubr.f32.mxu0 0.0
  %4033 = vmatmul.mubr.f32.gmra.mrb[0].mxu0 %v3651
  %v4034 = vpop.f32.mrb[0].mxu0
  %v4035 = vadd.f32 %v3458, %v4034
  %v4036 = vpop.f32.mrb[0].mxu0
  %4037 = vdwg.mxu0
  %v4038 = vmax.f32 %v3720, 0.0
  %v4039 = vmax.f32 %v3725, 0.0
  %v4040 = vmax.f32 %v3730, 0.0
  %v4041 = vmax.f32 %v3735, 0.0
  %v4042 = vmax.f32 %v3740, 0.0
  %v4043 = vmax.f32 %v3745, 0.0
  %v4044 = vmax.f32 %v3750, 0.0
  %v4045 = vmax.f32 %v3755, 0.0
  %v4046 = vmax.f32 %v3760, 0.0
  %v4047 = vmax.f32 %v3765, 0.0
  %v4048 = vmax.f32 %v3770, 0.0
  %v4049 = vmax.f32 %v3775, 0.0
  %v4050 = vmax.f32 %v3780, 0.0
  %v4051 = vmax.f32 %v3785, 0.0
  %v4052 = vmax.f32 %v3790, 0.0
  %v4053 = vmax.f32 %v3795, 0.0
  %v4054 = vmax.f32 %v3800, 0.0
  %v4055 = vmax.f32 %v3805, 0.0
  %v4056 = vmax.f32 %v3810, 0.0
  %v4057 = vmax.f32 %v3815, 0.0
  %v4058 = vmax.f32 %v3820, 0.0
  %v4059 = vmax.f32 %v3825, 0.0
  %v4060 = vmax.f32 %v3830, 0.0
  %v4061 = vmax.f32 %v3835, 0.0
  %v4062 = vmax.f32 %v3840, 0.0
  %v4063 = vmax.f32 %v3845, 0.0
  %v4064 = vmax.f32 %v3850, 0.0
  %v4065 = vmax.f32 %v3855, 0.0
  %v4066 = vmax.f32 %v3860, 0.0
  %v4067 = vmax.f32 %v3865, 0.0
  %v4068 = vmax.f32 %v3870, 0.0
  %v4069 = vmax.f32 %v3875, 0.0
  %v4070 = vmax.f32 %v3880, 0.0
  %v4071 = vmax.f32 %v3885, 0.0
  %v4072 = vmax.f32 %v3890, 0.0
  %v4073 = vmax.f32 %v3895, 0.0
  %v4074 = vmax.f32 %v3900, 0.0
  %v4075 = vmax.f32 %v3905, 0.0
  %v4076 = vmax.f32 %v3910, 0.0
  %v4077 = vmax.f32 %v3915, 0.0
  %v4078 = vmax.f32 %v3920, 0.0
  %v4079 = vmax.f32 %v3925, 0.0
  %v4080 = vmax.f32 %v3930, 0.0
  %v4081 = vmax.f32 %v3935, 0.0
  %v4082 = vmax.f32 %v3940, 0.0
  %v4083 = vmax.f32 %v3945, 0.0
  %v4084 = vmax.f32 %v3950, 0.0
  %v4085 = vmax.f32 %v3955, 0.0
  %v4086 = vmax.f32 %v3960, 0.0
  %v4087 = vmax.f32 %v3965, 0.0
  %v4088 = vmax.f32 %v3970, 0.0
  %v4089 = vmax.f32 %v3975, 0.0
  %v4090 = vmax.f32 %v3980, 0.0
  %v4091 = vmax.f32 %v3985, 0.0
  %v4092 = vmax.f32 %v3990, 0.0
  %v4093 = vmax.f32 %v3995, 0.0
  %v4094 = vmax.f32 %v4000, 0.0
  %v4095 = vmax.f32 %v4005, 0.0
  %v4096 = vmax.f32 %v4010, 0.0
  %v4097 = vmax.f32 %v4015, 0.0
  %v4098 = vmax.f32 %v4020, 0.0
  %v4099 = vmax.f32 %v4025, 0.0
  %v4100 = vmax.f32 %v4030, 0.0
  %v4101 = vmax.f32 %v4035, 0.0
  %v4102 = vsel %vm26, %v4038, 0.0
  %v4103 = vsel %vm26, %v4039, 0.0
  %v4104 = vadd.f32 %v4102, %v4103
  %v4105 = vsel %vm26, %v4040, 0.0
  %v4106 = vadd.f32 %v4104, %v4105
  %v4107 = vsel %vm26, %v4041, 0.0
  %v4108 = vadd.f32 %v4106, %v4107
  %v4109 = vsel %vm26, %v4042, 0.0
  %v4110 = vadd.f32 %v4108, %v4109
  %v4111 = vsel %vm26, %v4043, 0.0
  %v4112 = vadd.f32 %v4110, %v4111
  %v4113 = vsel %vm26, %v4044, 0.0
  %v4114 = vadd.f32 %v4112, %v4113
  %v4115 = vsel %vm26, %v4045, 0.0
  %v4116 = vadd.f32 %v4114, %v4115
  %v4117 = vsel %vm26, %v4046, 0.0
  %v4118 = vadd.f32 %v4116, %v4117
  %v4119 = vsel %vm26, %v4047, 0.0
  %v4120 = vadd.f32 %v4118, %v4119
  %v4121 = vsel %vm26, %v4048, 0.0
  %v4122 = vadd.f32 %v4120, %v4121
  %v4123 = vsel %vm26, %v4049, 0.0
  %v4124 = vadd.f32 %v4122, %v4123
  %v4125 = vsel %vm26, %v4050, 0.0
  %v4126 = vadd.f32 %v4124, %v4125
  %v4127 = vsel %vm26, %v4051, 0.0
  %v4128 = vadd.f32 %v4126, %v4127
  %v4129 = vsel %vm26, %v4052, 0.0
  %v4130 = vadd.f32 %v4128, %v4129
  %v4131 = vsel %vm26, %v4053, 0.0
  %v4132 = vadd.f32 %v4130, %v4131
  %v4133 = vsel %vm26, %v4054, 0.0
  %v4134 = vadd.f32 %v4132, %v4133
  %v4135 = vsel %vm26, %v4055, 0.0
  %v4136 = vadd.f32 %v4134, %v4135
  %v4137 = vsel %vm26, %v4056, 0.0
  %v4138 = vadd.f32 %v4136, %v4137
  %v4139 = vsel %vm26, %v4057, 0.0
  %v4140 = vadd.f32 %v4138, %v4139
  %v4141 = vsel %vm26, %v4058, 0.0
  %v4142 = vadd.f32 %v4140, %v4141
  %v4143 = vsel %vm26, %v4059, 0.0
  %v4144 = vadd.f32 %v4142, %v4143
  %v4145 = vsel %vm26, %v4060, 0.0
  %v4146 = vadd.f32 %v4144, %v4145
  %v4147 = vsel %vm26, %v4061, 0.0
  %v4148 = vadd.f32 %v4146, %v4147
  %v4149 = vsel %vm26, %v4062, 0.0
  %v4150 = vadd.f32 %v4148, %v4149
  %v4151 = vsel %vm26, %v4063, 0.0
  %v4152 = vadd.f32 %v4150, %v4151
  %v4153 = vsel %vm26, %v4064, 0.0
  %v4154 = vadd.f32 %v4152, %v4153
  %v4155 = vsel %vm26, %v4065, 0.0
  %v4156 = vadd.f32 %v4154, %v4155
  %v4157 = vsel %vm26, %v4066, 0.0
  %v4158 = vadd.f32 %v4156, %v4157
  %v4159 = vsel %vm26, %v4067, 0.0
  %v4160 = vadd.f32 %v4158, %v4159
  %v4161 = vsel %vm26, %v4068, 0.0
  %v4162 = vadd.f32 %v4160, %v4161
  %v4163 = vsel %vm26, %v4069, 0.0
  %v4164 = vadd.f32 %v4162, %v4163
  %v4165 = vsel %vm26, %v4070, 0.0
  %v4166 = vadd.f32 %v4164, %v4165
  %v4167 = vsel %vm26, %v4071, 0.0
  %v4168 = vadd.f32 %v4166, %v4167
  %v4169 = vsel %vm26, %v4072, 0.0
  %v4170 = vadd.f32 %v4168, %v4169
  %v4171 = vsel %vm26, %v4073, 0.0
  %v4172 = vadd.f32 %v4170, %v4171
  %v4173 = vsel %vm26, %v4074, 0.0
  %v4174 = vadd.f32 %v4172, %v4173
  %v4175 = vsel %vm26, %v4075, 0.0
  %v4176 = vadd.f32 %v4174, %v4175
  %v4177 = vsel %vm26, %v4076, 0.0
  %v4178 = vadd.f32 %v4176, %v4177
  %v4179 = vsel %vm26, %v4077, 0.0
  %v4180 = vadd.f32 %v4178, %v4179
  %v4181 = vsel %vm26, %v4078, 0.0
  %v4182 = vadd.f32 %v4180, %v4181
  %v4183 = vsel %vm26, %v4079, 0.0
  %v4184 = vadd.f32 %v4182, %v4183
  %v4185 = vsel %vm26, %v4080, 0.0
  %v4186 = vadd.f32 %v4184, %v4185
  %v4187 = vsel %vm26, %v4081, 0.0
  %v4188 = vadd.f32 %v4186, %v4187
  %v4189 = vsel %vm26, %v4082, 0.0
  %v4190 = vadd.f32 %v4188, %v4189
  %v4191 = vsel %vm26, %v4083, 0.0
  %v4192 = vadd.f32 %v4190, %v4191
  %v4193 = vsel %vm26, %v4084, 0.0
  %v4194 = vadd.f32 %v4192, %v4193
  %v4195 = vsel %vm26, %v4085, 0.0
  %v4196 = vadd.f32 %v4194, %v4195
  %v4197 = vsel %vm26, %v4086, 0.0
  %v4198 = vadd.f32 %v4196, %v4197
  %v4199 = vsel %vm26, %v4087, 0.0
  %v4200 = vadd.f32 %v4198, %v4199
  %v4201 = vsel %vm26, %v4088, 0.0
  %v4202 = vadd.f32 %v4200, %v4201
  %v4203 = vsel %vm26, %v4089, 0.0
  %v4204 = vadd.f32 %v4202, %v4203
  %v4205 = vsel %vm26, %v4090, 0.0
  %v4206 = vadd.f32 %v4204, %v4205
  %v4207 = vsel %vm26, %v4091, 0.0
  %v4208 = vadd.f32 %v4206, %v4207
  %v4209 = vsel %vm26, %v4092, 0.0
  %v4210 = vadd.f32 %v4208, %v4209
  %v4211 = vsel %vm26, %v4093, 0.0
  %v4212 = vadd.f32 %v4210, %v4211
  %v4213 = vsel %vm26, %v4094, 0.0
  %v4214 = vadd.f32 %v4212, %v4213
  %v4215 = vsel %vm26, %v4095, 0.0
  %v4216 = vadd.f32 %v4214, %v4215
  %v4217 = vsel %vm26, %v4096, 0.0
  %v4218 = vadd.f32 %v4216, %v4217
  %v4219 = vsel %vm26, %v4097, 0.0
  %v4220 = vadd.f32 %v4218, %v4219
  %v4221 = vsel %vm26, %v4098, 0.0
  %v4222 = vadd.f32 %v4220, %v4221
  %v4223 = vsel %vm26, %v4099, 0.0
  %v4224 = vadd.f32 %v4222, %v4223
  %v4225 = vsel %vm26, %v4100, 0.0
  %v4226 = vadd.f32 %v4224, %v4225
  %v4227 = vsel %vm26, %v4101, 0.0
  %v4228 = vadd.f32 %v4226, %v4227
  %v4229 = vrot.slane %v4228, 4
  %v4230 = vadd.f32 %v4228, %v4229
  %v4231 = vrot.slane %v4230, 2
  %v4232 = vadd.f32 %v4230, %v4231
  %v4233 = vrot.slane %v4232, 1
  %v4234 = vadd.f32 %v4232, %v4233
  %v4235 = vrcp.pop 512.0
  %v4236 = vmul.f32 %v4234, %v4235
  %v4237 = vmul.f32 %v4038, %v4038
  %v4238 = vmul.f32 %v4039, %v4039
  %v4239 = vmul.f32 %v4040, %v4040
  %v4240 = vmul.f32 %v4041, %v4041
  %v4241 = vmul.f32 %v4042, %v4042
  %v4242 = vmul.f32 %v4043, %v4043
  %v4243 = vmul.f32 %v4044, %v4044
  %v4244 = vmul.f32 %v4045, %v4045
  %v4245 = vmul.f32 %v4046, %v4046
  %v4246 = vmul.f32 %v4047, %v4047
  %v4247 = vmul.f32 %v4048, %v4048
  %v4248 = vmul.f32 %v4049, %v4049
  %v4249 = vmul.f32 %v4050, %v4050
  %v4250 = vmul.f32 %v4051, %v4051
  %v4251 = vmul.f32 %v4052, %v4052
  %v4252 = vmul.f32 %v4053, %v4053
  %v4253 = vmul.f32 %v4054, %v4054
  %v4254 = vmul.f32 %v4055, %v4055
  %v4255 = vmul.f32 %v4056, %v4056
  %v4256 = vmul.f32 %v4057, %v4057
  %v4257 = vmul.f32 %v4058, %v4058
  %v4258 = vmul.f32 %v4059, %v4059
  %v4259 = vmul.f32 %v4060, %v4060
  %v4260 = vmul.f32 %v4061, %v4061
  %v4261 = vmul.f32 %v4062, %v4062
  %v4262 = vmul.f32 %v4063, %v4063
  %v4263 = vmul.f32 %v4064, %v4064
  %v4264 = vmul.f32 %v4065, %v4065
  %v4265 = vmul.f32 %v4066, %v4066
  %v4266 = vmul.f32 %v4067, %v4067
  %v4267 = vmul.f32 %v4068, %v4068
  %v4268 = vmul.f32 %v4069, %v4069
  %v4269 = vmul.f32 %v4070, %v4070
  %v4270 = vmul.f32 %v4071, %v4071
  %v4271 = vmul.f32 %v4072, %v4072
  %v4272 = vmul.f32 %v4073, %v4073
  %v4273 = vmul.f32 %v4074, %v4074
  %v4274 = vmul.f32 %v4075, %v4075
  %v4275 = vmul.f32 %v4076, %v4076
  %v4276 = vmul.f32 %v4077, %v4077
  %v4277 = vmul.f32 %v4078, %v4078
  %v4278 = vmul.f32 %v4079, %v4079
  %v4279 = vmul.f32 %v4080, %v4080
  %v4280 = vmul.f32 %v4081, %v4081
  %v4281 = vmul.f32 %v4082, %v4082
  %v4282 = vmul.f32 %v4083, %v4083
  %v4283 = vmul.f32 %v4084, %v4084
  %v4284 = vmul.f32 %v4085, %v4085
  %v4285 = vmul.f32 %v4086, %v4086
  %v4286 = vmul.f32 %v4087, %v4087
  %v4287 = vmul.f32 %v4088, %v4088
  %v4288 = vmul.f32 %v4089, %v4089
  %v4289 = vmul.f32 %v4090, %v4090
  %v4290 = vmul.f32 %v4091, %v4091
  %v4291 = vmul.f32 %v4092, %v4092
  %v4292 = vmul.f32 %v4093, %v4093
  %v4293 = vmul.f32 %v4094, %v4094
  %v4294 = vmul.f32 %v4095, %v4095
  %v4295 = vmul.f32 %v4096, %v4096
  %v4296 = vmul.f32 %v4097, %v4097
  %v4297 = vmul.f32 %v4098, %v4098
  %v4298 = vmul.f32 %v4099, %v4099
  %v4299 = vmul.f32 %v4100, %v4100
  %v4300 = vmul.f32 %v4101, %v4101
  %v4301 = vsel %vm26, %v4237, 0.0
  %v4302 = vsel %vm26, %v4238, 0.0
  %v4303 = vadd.f32 %v4301, %v4302
  %v4304 = vsel %vm26, %v4239, 0.0
  %v4305 = vadd.f32 %v4303, %v4304
  %v4306 = vsel %vm26, %v4240, 0.0
  %v4307 = vadd.f32 %v4305, %v4306
  %v4308 = vsel %vm26, %v4241, 0.0
  %v4309 = vadd.f32 %v4307, %v4308
  %v4310 = vsel %vm26, %v4242, 0.0
  %v4311 = vadd.f32 %v4309, %v4310
  %v4312 = vsel %vm26, %v4243, 0.0
  %v4313 = vadd.f32 %v4311, %v4312
  %v4314 = vsel %vm26, %v4244, 0.0
  %v4315 = vadd.f32 %v4313, %v4314
  %v4316 = vsel %vm26, %v4245, 0.0
  %v4317 = vadd.f32 %v4315, %v4316
  %v4318 = vsel %vm26, %v4246, 0.0
  %v4319 = vadd.f32 %v4317, %v4318
  %v4320 = vsel %vm26, %v4247, 0.0
  %v4321 = vadd.f32 %v4319, %v4320
  %v4322 = vsel %vm26, %v4248, 0.0
  %v4323 = vadd.f32 %v4321, %v4322
  %v4324 = vsel %vm26, %v4249, 0.0
  %v4325 = vadd.f32 %v4323, %v4324
  %v4326 = vsel %vm26, %v4250, 0.0
  %v4327 = vadd.f32 %v4325, %v4326
  %v4328 = vsel %vm26, %v4251, 0.0
  %v4329 = vadd.f32 %v4327, %v4328
  %v4330 = vsel %vm26, %v4252, 0.0
  %v4331 = vadd.f32 %v4329, %v4330
  %v4332 = vsel %vm26, %v4253, 0.0
  %v4333 = vadd.f32 %v4331, %v4332
  %v4334 = vsel %vm26, %v4254, 0.0
  %v4335 = vadd.f32 %v4333, %v4334
  %v4336 = vsel %vm26, %v4255, 0.0
  %v4337 = vadd.f32 %v4335, %v4336
  %v4338 = vsel %vm26, %v4256, 0.0
  %v4339 = vadd.f32 %v4337, %v4338
  %v4340 = vsel %vm26, %v4257, 0.0
  %v4341 = vadd.f32 %v4339, %v4340
  %v4342 = vsel %vm26, %v4258, 0.0
  %v4343 = vadd.f32 %v4341, %v4342
  %v4344 = vsel %vm26, %v4259, 0.0
  %v4345 = vadd.f32 %v4343, %v4344
  %v4346 = vsel %vm26, %v4260, 0.0
  %v4347 = vadd.f32 %v4345, %v4346
  %v4348 = vsel %vm26, %v4261, 0.0
  %v4349 = vadd.f32 %v4347, %v4348
  %v4350 = vsel %vm26, %v4262, 0.0
  %v4351 = vadd.f32 %v4349, %v4350
  %v4352 = vsel %vm26, %v4263, 0.0
  %v4353 = vadd.f32 %v4351, %v4352
  %v4354 = vsel %vm26, %v4264, 0.0
  %v4355 = vadd.f32 %v4353, %v4354
  %v4356 = vsel %vm26, %v4265, 0.0
  %v4357 = vadd.f32 %v4355, %v4356
  %v4358 = vsel %vm26, %v4266, 0.0
  %v4359 = vadd.f32 %v4357, %v4358
  %v4360 = vsel %vm26, %v4267, 0.0
  %v4361 = vadd.f32 %v4359, %v4360
  %v4362 = vsel %vm26, %v4268, 0.0
  %v4363 = vadd.f32 %v4361, %v4362
  %v4364 = vsel %vm26, %v4269, 0.0
  %v4365 = vadd.f32 %v4363, %v4364
  %v4366 = vsel %vm26, %v4270, 0.0
  %v4367 = vadd.f32 %v4365, %v4366
  %v4368 = vsel %vm26, %v4271, 0.0
  %v4369 = vadd.f32 %v4367, %v4368
  %v4370 = vsel %vm26, %v4272, 0.0
  %v4371 = vadd.f32 %v4369, %v4370
  %v4372 = vsel %vm26, %v4273, 0.0
  %v4373 = vadd.f32 %v4371, %v4372
  %v4374 = vsel %vm26, %v4274, 0.0
  %v4375 = vadd.f32 %v4373, %v4374
  %v4376 = vsel %vm26, %v4275, 0.0
  %v4377 = vadd.f32 %v4375, %v4376
  %v4378 = vsel %vm26, %v4276, 0.0
  %v4379 = vadd.f32 %v4377, %v4378
  %v4380 = vsel %vm26, %v4277, 0.0
  %v4381 = vadd.f32 %v4379, %v4380
  %v4382 = vsel %vm26, %v4278, 0.0
  %v4383 = vadd.f32 %v4381, %v4382
  %v4384 = vsel %vm26, %v4279, 0.0
  %v4385 = vadd.f32 %v4383, %v4384
  %v4386 = vsel %vm26, %v4280, 0.0
  %v4387 = vadd.f32 %v4385, %v4386
  %v4388 = vsel %vm26, %v4281, 0.0
  %v4389 = vadd.f32 %v4387, %v4388
  %v4390 = vsel %vm26, %v4282, 0.0
  %v4391 = vadd.f32 %v4389, %v4390
  %v4392 = vsel %vm26, %v4283, 0.0
  %v4393 = vadd.f32 %v4391, %v4392
  %v4394 = vsel %vm26, %v4284, 0.0
  %v4395 = vadd.f32 %v4393, %v4394
  %v4396 = vsel %vm26, %v4285, 0.0
  %v4397 = vadd.f32 %v4395, %v4396
  %v4398 = vsel %vm26, %v4286, 0.0
  %v4399 = vadd.f32 %v4397, %v4398
  %v4400 = vsel %vm26, %v4287, 0.0
  %v4401 = vadd.f32 %v4399, %v4400
  %v4402 = vsel %vm26, %v4288, 0.0
  %v4403 = vadd.f32 %v4401, %v4402
  %v4404 = vsel %vm26, %v4289, 0.0
  %v4405 = vadd.f32 %v4403, %v4404
  %v4406 = vsel %vm26, %v4290, 0.0
  %v4407 = vadd.f32 %v4405, %v4406
  %v4408 = vsel %vm26, %v4291, 0.0
  %v4409 = vadd.f32 %v4407, %v4408
  %v4410 = vsel %vm26, %v4292, 0.0
  %v4411 = vadd.f32 %v4409, %v4410
  %v4412 = vsel %vm26, %v4293, 0.0
  %v4413 = vadd.f32 %v4411, %v4412
  %v4414 = vsel %vm26, %v4294, 0.0
  %v4415 = vadd.f32 %v4413, %v4414
  %v4416 = vsel %vm26, %v4295, 0.0
  %v4417 = vadd.f32 %v4415, %v4416
  %v4418 = vsel %vm26, %v4296, 0.0
  %v4419 = vadd.f32 %v4417, %v4418
  %v4420 = vsel %vm26, %v4297, 0.0
  %v4421 = vadd.f32 %v4419, %v4420
  %v4422 = vsel %vm26, %v4298, 0.0
  %v4423 = vadd.f32 %v4421, %v4422
  %v4424 = vsel %vm26, %v4299, 0.0
  %v4425 = vadd.f32 %v4423, %v4424
  %v4426 = vsel %vm26, %v4300, 0.0
  %v4427 = vadd.f32 %v4425, %v4426
  %v4428 = vrot.slane %v4427, 4
  %v4429 = vadd.f32 %v4427, %v4428
  %v4430 = vrot.slane %v4429, 2
  %v4431 = vadd.f32 %v4429, %v4430
  %v4432 = vrot.slane %v4431, 1
  %v4433 = vadd.f32 %v4431, %v4432
  %v4434 = vmul.f32 %v4433, %v4235
  %v4435 = vmul.f32 %v4236, %v4236
  %v4436 = vsub.f32 %v4434, %v4435
  %v4437 = vadd.f32 %v4436, 1e-05
  %v4438 = vrsqrt.pop %v4437
  %v4439 = vsub.f32 %v4038, %v4236
  %v4440 = vsub.f32 %v4039, %v4236
  %v4441 = vsub.f32 %v4040, %v4236
  %v4442 = vsub.f32 %v4041, %v4236
  %v4443 = vsub.f32 %v4042, %v4236
  %v4444 = vsub.f32 %v4043, %v4236
  %v4445 = vsub.f32 %v4044, %v4236
  %v4446 = vsub.f32 %v4045, %v4236
  %v4447 = vsub.f32 %v4046, %v4236
  %v4448 = vsub.f32 %v4047, %v4236
  %v4449 = vsub.f32 %v4048, %v4236
  %v4450 = vsub.f32 %v4049, %v4236
  %v4451 = vsub.f32 %v4050, %v4236
  %v4452 = vsub.f32 %v4051, %v4236
  %v4453 = vsub.f32 %v4052, %v4236
  %v4454 = vsub.f32 %v4053, %v4236
  %v4455 = vsub.f32 %v4054, %v4236
  %v4456 = vsub.f32 %v4055, %v4236
  %v4457 = vsub.f32 %v4056, %v4236
  %v4458 = vsub.f32 %v4057, %v4236
  %v4459 = vsub.f32 %v4058, %v4236
  %v4460 = vsub.f32 %v4059, %v4236
  %v4461 = vsub.f32 %v4060, %v4236
  %v4462 = vsub.f32 %v4061, %v4236
  %v4463 = vsub.f32 %v4062, %v4236
  %v4464 = vsub.f32 %v4063, %v4236
  %v4465 = vsub.f32 %v4064, %v4236
  %v4466 = vsub.f32 %v4065, %v4236
  %v4467 = vsub.f32 %v4066, %v4236
  %v4468 = vsub.f32 %v4067, %v4236
  %v4469 = vsub.f32 %v4068, %v4236
  %v4470 = vsub.f32 %v4069, %v4236
  %v4471 = vsub.f32 %v4070, %v4236
  %v4472 = vsub.f32 %v4071, %v4236
  %v4473 = vsub.f32 %v4072, %v4236
  %v4474 = vsub.f32 %v4073, %v4236
  %v4475 = vsub.f32 %v4074, %v4236
  %v4476 = vsub.f32 %v4075, %v4236
  %v4477 = vsub.f32 %v4076, %v4236
  %v4478 = vsub.f32 %v4077, %v4236
  %v4479 = vsub.f32 %v4078, %v4236
  %v4480 = vsub.f32 %v4079, %v4236
  %v4481 = vsub.f32 %v4080, %v4236
  %v4482 = vsub.f32 %v4081, %v4236
  %v4483 = vsub.f32 %v4082, %v4236
  %v4484 = vsub.f32 %v4083, %v4236
  %v4485 = vsub.f32 %v4084, %v4236
  %v4486 = vsub.f32 %v4085, %v4236
  %v4487 = vsub.f32 %v4086, %v4236
  %v4488 = vsub.f32 %v4087, %v4236
  %v4489 = vsub.f32 %v4088, %v4236
  %v4490 = vsub.f32 %v4089, %v4236
  %v4491 = vsub.f32 %v4090, %v4236
  %v4492 = vsub.f32 %v4091, %v4236
  %v4493 = vsub.f32 %v4092, %v4236
  %v4494 = vsub.f32 %v4093, %v4236
  %v4495 = vsub.f32 %v4094, %v4236
  %v4496 = vsub.f32 %v4095, %v4236
  %v4497 = vsub.f32 %v4096, %v4236
  %v4498 = vsub.f32 %v4097, %v4236
  %v4499 = vsub.f32 %v4098, %v4236
  %v4500 = vsub.f32 %v4099, %v4236
  %v4501 = vsub.f32 %v4100, %v4236
  %v4502 = vsub.f32 %v4101, %v4236
  %v4503 = vld [vmem:[%s5] sm:$0x1]
  %v4504 = vmul.f32 %v4438, %v4503
  %v4505 = vlaneseq
  %v4506 = vshrl.u32 %v4505, 7
  %v4507 = vsub.s32 0, %v4506
  %v4508 = vrot.slane %v4504, %v4507
  %v4509 = vmul.f32 %v4439, %v4508
  %v4510 = vmul.f32 %v4440, %v4508
  %v4511 = vmul.f32 %v4441, %v4508
  %v4512 = vmul.f32 %v4442, %v4508
  %v4513 = vmul.f32 %v4443, %v4508
  %v4514 = vmul.f32 %v4444, %v4508
  %v4515 = vmul.f32 %v4445, %v4508
  %v4516 = vmul.f32 %v4446, %v4508
  %v4517 = vmul.f32 %v4447, %v4508
  %v4518 = vmul.f32 %v4448, %v4508
  %v4519 = vmul.f32 %v4449, %v4508
  %v4520 = vmul.f32 %v4450, %v4508
  %v4521 = vmul.f32 %v4451, %v4508
  %v4522 = vmul.f32 %v4452, %v4508
  %v4523 = vmul.f32 %v4453, %v4508
  %v4524 = vmul.f32 %v4454, %v4508
  %v4525 = vmul.f32 %v4455, %v4508
  %v4526 = vmul.f32 %v4456, %v4508
  %v4527 = vmul.f32 %v4457, %v4508
  %v4528 = vmul.f32 %v4458, %v4508
  %v4529 = vmul.f32 %v4459, %v4508
  %v4530 = vmul.f32 %v4460, %v4508
  %v4531 = vmul.f32 %v4461, %v4508
  %v4532 = vmul.f32 %v4462, %v4508
  %v4533 = vmul.f32 %v4463, %v4508
  %v4534 = vmul.f32 %v4464, %v4508
  %v4535 = vmul.f32 %v4465, %v4508
  %v4536 = vmul.f32 %v4466, %v4508
  %v4537 = vmul.f32 %v4467, %v4508
  %v4538 = vmul.f32 %v4468, %v4508
  %v4539 = vmul.f32 %v4469, %v4508
  %v4540 = vmul.f32 %v4470, %v4508
  %v4541 = vmul.f32 %v4471, %v4508
  %v4542 = vmul.f32 %v4472, %v4508
  %v4543 = vmul.f32 %v4473, %v4508
  %v4544 = vmul.f32 %v4474, %v4508
  %v4545 = vmul.f32 %v4475, %v4508
  %v4546 = vmul.f32 %v4476, %v4508
  %v4547 = vmul.f32 %v4477, %v4508
  %v4548 = vmul.f32 %v4478, %v4508
  %v4549 = vmul.f32 %v4479, %v4508
  %v4550 = vmul.f32 %v4480, %v4508
  %v4551 = vmul.f32 %v4481, %v4508
  %v4552 = vmul.f32 %v4482, %v4508
  %v4553 = vmul.f32 %v4483, %v4508
  %v4554 = vmul.f32 %v4484, %v4508
  %v4555 = vmul.f32 %v4485, %v4508
  %v4556 = vmul.f32 %v4486, %v4508
  %v4557 = vmul.f32 %v4487, %v4508
  %v4558 = vmul.f32 %v4488, %v4508
  %v4559 = vmul.f32 %v4489, %v4508
  %v4560 = vmul.f32 %v4490, %v4508
  %v4561 = vmul.f32 %v4491, %v4508
  %v4562 = vmul.f32 %v4492, %v4508
  %v4563 = vmul.f32 %v4493, %v4508
  %v4564 = vmul.f32 %v4494, %v4508
  %v4565 = vmul.f32 %v4495, %v4508
  %v4566 = vmul.f32 %v4496, %v4508
  %v4567 = vmul.f32 %v4497, %v4508
  %v4568 = vmul.f32 %v4498, %v4508
  %v4569 = vmul.f32 %v4499, %v4508
  %v4570 = vmul.f32 %v4500, %v4508
  %v4571 = vmul.f32 %v4501, %v4508
  %v4572 = vmul.f32 %v4502, %v4508
  %v4573 = vld [vmem:[%s6] sm:$0x1]
  %v4575 = vlaneseq
  %v4576 = vshrl.u32 %v4575, 7
  %v4577 = vsub.s32 0, %v4576
  %v4578 = vrot.slane %v4573, %v4577
  %v4580 = vadd.f32 %v4509, %v4578
  %v4581 = vadd.f32 %v4510, %v4578
  %v4582 = vadd.f32 %v4511, %v4578
  %v4583 = vadd.f32 %v4512, %v4578
  %v4584 = vadd.f32 %v4513, %v4578
  %v4585 = vadd.f32 %v4514, %v4578
  %v4586 = vadd.f32 %v4515, %v4578
  %v4587 = vadd.f32 %v4516, %v4578
  %v4588 = vadd.f32 %v4517, %v4578
  %v4589 = vadd.f32 %v4518, %v4578
  %v4590 = vadd.f32 %v4519, %v4578
  %v4591 = vadd.f32 %v4520, %v4578
  %v4592 = vadd.f32 %v4521, %v4578
  %v4593 = vadd.f32 %v4522, %v4578
  %v4594 = vadd.f32 %v4523, %v4578
  %v4595 = vadd.f32 %v4524, %v4578
  %v4596 = vadd.f32 %v4525, %v4578
  %v4597 = vadd.f32 %v4526, %v4578
  %v4598 = vadd.f32 %v4527, %v4578
  %v4599 = vadd.f32 %v4528, %v4578
  %v4600 = vadd.f32 %v4529, %v4578
  %v4601 = vadd.f32 %v4530, %v4578
  %v4602 = vadd.f32 %v4531, %v4578
  %v4603 = vadd.f32 %v4532, %v4578
  %v4604 = vadd.f32 %v4533, %v4578
  %v4605 = vadd.f32 %v4534, %v4578
  %v4606 = vadd.f32 %v4535, %v4578
  %v4607 = vadd.f32 %v4536, %v4578
  %v4608 = vadd.f32 %v4537, %v4578
  %v4609 = vadd.f32 %v4538, %v4578
  %v4610 = vadd.f32 %v4539, %v4578
  %v4611 = vadd.f32 %v4540, %v4578
  %v4612 = vadd.f32 %v4541, %v4578
  %v4613 = vadd.f32 %v4542, %v4578
  %v4614 = vadd.f32 %v4543, %v4578
  %v4615 = vadd.f32 %v4544, %v4578
  %v4616 = vadd.f32 %v4545, %v4578
  %v4617 = vadd.f32 %v4546, %v4578
  %v4618 = vadd.f32 %v4547, %v4578
  %v4619 = vadd.f32 %v4548, %v4578
  %v4620 = vadd.f32 %v4549, %v4578
  %v4621 = vadd.f32 %v4550, %v4578
  %v4622 = vadd.f32 %v4551, %v4578
  %v4623 = vadd.f32 %v4552, %v4578
  %v4624 = vadd.f32 %v4553, %v4578
  %v4625 = vadd.f32 %v4554, %v4578
  %v4626 = vadd.f32 %v4555, %v4578
  %v4627 = vadd.f32 %v4556, %v4578
  %v4628 = vadd.f32 %v4557, %v4578
  %v4629 = vadd.f32 %v4558, %v4578
  %v4630 = vadd.f32 %v4559, %v4578
  %v4631 = vadd.f32 %v4560, %v4578
  %v4632 = vadd.f32 %v4561, %v4578
  %v4633 = vadd.f32 %v4562, %v4578
  %v4634 = vadd.f32 %v4563, %v4578
  %v4635 = vadd.f32 %v4564, %v4578
  %v4636 = vadd.f32 %v4565, %v4578
  %v4637 = vadd.f32 %v4566, %v4578
  %v4638 = vadd.f32 %v4567, %v4578
  %v4639 = vadd.f32 %v4568, %v4578
  %v4640 = vadd.f32 %v4569, %v4578
  %v4641 = vadd.f32 %v4570, %v4578
  %v4642 = vadd.f32 %v4571, %v4578
  %v4643 = vadd.f32 %v4572, %v4578
  %4644 = vst.msk [vmem:[%s235 + $0x8] sm:$0xff] %vm26, %v4580
  %4645 = vst.msk [vmem:[%s235 + $0x10] sm:$0xff] %vm26, %v4581
  %4646 = vst.msk [vmem:[%s235 + $0x28] sm:$0xff] %vm26, %v4582
  %4647 = vst.msk [vmem:[%s235 + $0x30] sm:$0xff] %vm26, %v4583
  %4648 = vst.msk [vmem:[%s235 + $0x48] sm:$0xff] %vm26, %v4584
  %4649 = vst.msk [vmem:[%s235 + $0x50] sm:$0xff] %vm26, %v4585
  %4650 = vst.msk [vmem:[%s235 + $0x68] sm:$0xff] %vm26, %v4586
  %4651 = vst.msk [vmem:[%s235 + $0x70] sm:$0xff] %vm26, %v4587
  %4652 = vst.msk [vmem:[%s235 + $0x88] sm:$0xff] %vm26, %v4588
  %4653 = vst.msk [vmem:[%s235 + $0x90] sm:$0xff] %vm26, %v4589
  %4654 = vst.msk [vmem:[%s235 + $0xa8] sm:$0xff] %vm26, %v4590
  %4655 = vst.msk [vmem:[%s235 + $0xb0] sm:$0xff] %vm26, %v4591
  %4656 = vst.msk [vmem:[%s235 + $0xc8] sm:$0xff] %vm26, %v4592
  %4657 = vst.msk [vmem:[%s235 + $0xd0] sm:$0xff] %vm26, %v4593
  %4658 = vst.msk [vmem:[%s235 + $0xe8] sm:$0xff] %vm26, %v4594
  %4659 = vst.msk [vmem:[%s235 + $0xf0] sm:$0xff] %vm26, %v4595
  %4660 = vst.msk [vmem:[%s235 + $0x108] sm:$0xff] %vm26, %v4596
  %4661 = vst.msk [vmem:[%s235 + $0x110] sm:$0xff] %vm26, %v4597
  %4662 = vst.msk [vmem:[%s235 + $0x128] sm:$0xff] %vm26, %v4598
  %4663 = vst.msk [vmem:[%s235 + $0x130] sm:$0xff] %vm26, %v4599
  %4664 = vst.msk [vmem:[%s235 + $0x148] sm:$0xff] %vm26, %v4600
  %4665 = vst.msk [vmem:[%s235 + $0x150] sm:$0xff] %vm26, %v4601
  %4666 = vst.msk [vmem:[%s235 + $0x168] sm:$0xff] %vm26, %v4602
  %4667 = vst.msk [vmem:[%s235 + $0x170] sm:$0xff] %vm26, %v4603
  %4668 = vst.msk [vmem:[%s235 + $0x188] sm:$0xff] %vm26, %v4604
  %4669 = vst.msk [vmem:[%s235 + $0x190] sm:$0xff] %vm26, %v4605
  %4670 = vst.msk [vmem:[%s235 + $0x1a8] sm:$0xff] %vm26, %v4606
  %4671 = vst.msk [vmem:[%s235 + $0x1b0] sm:$0xff] %vm26, %v4607
  %4672 = vst.msk [vmem:[%s235 + $0x1c8] sm:$0xff] %vm26, %v4608
  %4673 = vst.msk [vmem:[%s235 + $0x1d0] sm:$0xff] %vm26, %v4609
  %4674 = vst.msk [vmem:[%s235 + $0x1e8] sm:$0xff] %vm26, %v4610
  %4675 = vst.msk [vmem:[%s235 + $0x1f0] sm:$0xff] %vm26, %v4611
  %4676 = vst.msk [vmem:[%s235 + $0x248] sm:$0xff] %vm26, %v4612
  %4677 = vst.msk [vmem:[%s235 + $0x250] sm:$0xff] %vm26, %v4613
  %4678 = vst.msk [vmem:[%s235 + $0x268] sm:$0xff] %vm26, %v4614
  %4679 = vst.msk [vmem:[%s235 + $0x270] sm:$0xff] %vm26, %v4615
  %4680 = vst.msk [vmem:[%s235 + $0x288] sm:$0xff] %vm26, %v4616
  %4681 = vst.msk [vmem:[%s235 + $0x290] sm:$0xff] %vm26, %v4617
  %4682 = vst.msk [vmem:[%s235 + $0x2a8] sm:$0xff] %vm26, %v4618
  %4683 = vst.msk [vmem:[%s235 + $0x2b0] sm:$0xff] %vm26, %v4619
  %4684 = vst.msk [vmem:[%s235 + $0x2c8] sm:$0xff] %vm26, %v4620
  %4685 = vst.msk [vmem:[%s235 + $0x2d0] sm:$0xff] %vm26, %v4621
  %4686 = vst.msk [vmem:[%s235 + $0x2e8] sm:$0xff] %vm26, %v4622
  %4687 = vst.msk [vmem:[%s235 + $0x2f0] sm:$0xff] %vm26, %v4623
  %4688 = vst.msk [vmem:[%s235 + $0x308] sm:$0xff] %vm26, %v4624
  %4689 = vst.msk [vmem:[%s235 + $0x310] sm:$0xff] %vm26, %v4625
  %4690 = vst.msk [vmem:[%s235 + $0x328] sm:$0xff] %vm26, %v4626
  %4691 = vst.msk [vmem:[%s235 + $0x330] sm:$0xff] %vm26, %v4627
  %4692 = vst.msk [vmem:[%s235 + $0x348] sm:$0xff] %vm26, %v4628
  %4693 = vst.msk [vmem:[%s235 + $0x350] sm:$0xff] %vm26, %v4629
  %4694 = vst.msk [vmem:[%s235 + $0x368] sm:$0xff] %vm26, %v4630
  %4695 = vst.msk [vmem:[%s235 + $0x370] sm:$0xff] %vm26, %v4631
  %4696 = vst.msk [vmem:[%s235 + $0x388] sm:$0xff] %vm26, %v4632
  %4697 = vst.msk [vmem:[%s235 + $0x390] sm:$0xff] %vm26, %v4633
  %4698 = vst.msk [vmem:[%s235 + $0x3a8] sm:$0xff] %vm26, %v4634
  %4699 = vst.msk [vmem:[%s235 + $0x3b0] sm:$0xff] %vm26, %v4635
  %4700 = vst.msk [vmem:[%s235 + $0x3c8] sm:$0xff] %vm26, %v4636
  %4701 = vst.msk [vmem:[%s235 + $0x3d0] sm:$0xff] %vm26, %v4637
  %4702 = vst.msk [vmem:[%s235 + $0x3e8] sm:$0xff] %vm26, %v4638
  %4703 = vst.msk [vmem:[%s235 + $0x3f0] sm:$0xff] %vm26, %v4639
  %4704 = vst.msk [vmem:[%s235 + $0x408] sm:$0xff] %vm26, %v4640
  %4705 = vst.msk [vmem:[%s235 + $0x410] sm:$0xff] %vm26, %v4641
  %4706 = vst.msk [vmem:[%s235 + $0x428] sm:$0xff] %vm26, %v4642
  %4707 = vst.msk [vmem:[%s235 + $0x430] sm:$0xff] %vm26, %v4643
  %v4708 = vld [vmem:[#allocation2 + $0x7] sm:$0xff]
  %v4709 = vld [vmem:[#allocation2 + $0xf] sm:$0xff]
  %v4710 = vld [vmem:[#allocation2 + $0x27] sm:$0xff]
  %v4711 = vld [vmem:[#allocation2 + $0x2f] sm:$0xff]
  %v4712 = vld [vmem:[#allocation2 + $0x47] sm:$0xff]
  %v4713 = vld [vmem:[#allocation2 + $0x4f] sm:$0xff]
  %v4714 = vld [vmem:[#allocation2 + $0x67] sm:$0xff]
  %v4715 = vld [vmem:[#allocation2 + $0x6f] sm:$0xff]
  %v4716 = vld [vmem:[#allocation2 + $0x87] sm:$0xff]
  %v4717 = vld [vmem:[#allocation2 + $0x8f] sm:$0xff]
  %v4718 = vld [vmem:[#allocation2 + $0xa7] sm:$0xff]
  %v4719 = vld [vmem:[#allocation2 + $0xaf] sm:$0xff]
  %v4720 = vld [vmem:[#allocation2 + $0xc7] sm:$0xff]
  %v4721 = vld [vmem:[#allocation2 + $0xcf] sm:$0xff]
  %v4722 = vld [vmem:[#allocation2 + $0xe7] sm:$0xff]
  %v4723 = vld [vmem:[#allocation2 + $0xef] sm:$0xff]
  %v4724 = vld [vmem:[#allocation2 + $0x107] sm:$0xff]
  %v4725 = vld [vmem:[#allocation2 + $0x10f] sm:$0xff]
  %v4726 = vld [vmem:[#allocation2 + $0x127] sm:$0xff]
  %v4727 = vld [vmem:[#allocation2 + $0x12f] sm:$0xff]
  %v4728 = vld [vmem:[#allocation2 + $0x147] sm:$0xff]
  %v4729 = vld [vmem:[#allocation2 + $0x14f] sm:$0xff]
  %v4730 = vld [vmem:[#allocation2 + $0x167] sm:$0xff]
  %v4731 = vld [vmem:[#allocation2 + $0x16f] sm:$0xff]
  %v4732 = vld [vmem:[#allocation2 + $0x187] sm:$0xff]
  %v4733 = vld [vmem:[#allocation2 + $0x18f] sm:$0xff]
  %v4734 = vld [vmem:[#allocation2 + $0x1a7] sm:$0xff]
  %v4735 = vld [vmem:[#allocation2 + $0x1af] sm:$0xff]
  %v4736 = vld [vmem:[#allocation2 + $0x1c7] sm:$0xff]
  %v4737 = vld [vmem:[#allocation2 + $0x1cf] sm:$0xff]
  %v4738 = vld [vmem:[#allocation2 + $0x1e7] sm:$0xff]
  %v4739 = vld [vmem:[#allocation2 + $0x1ef] sm:$0xff]
  %v4740 = vld [vmem:[#allocation2 + $0x247] sm:$0xff]
  %v4741 = vld [vmem:[#allocation2 + $0x24f] sm:$0xff]
  %v4742 = vld [vmem:[#allocation2 + $0x267] sm:$0xff]
  %v4743 = vld [vmem:[#allocation2 + $0x26f] sm:$0xff]
  %v4744 = vld [vmem:[#allocation2 + $0x287] sm:$0xff]
  %v4745 = vld [vmem:[#allocation2 + $0x28f] sm:$0xff]
  %v4746 = vld [vmem:[#allocation2 + $0x2a7] sm:$0xff]
  %v4747 = vld [vmem:[#allocation2 + $0x2af] sm:$0xff]
  %v4748 = vld [vmem:[#allocation2 + $0x2c7] sm:$0xff]
  %v4749 = vld [vmem:[#allocation2 + $0x2cf] sm:$0xff]
  %v4750 = vld [vmem:[#allocation2 + $0x2e7] sm:$0xff]
  %v4751 = vld [vmem:[#allocation2 + $0x2ef] sm:$0xff]
  %v4752 = vld [vmem:[#allocation2 + $0x307] sm:$0xff]
  %v4753 = vld [vmem:[#allocation2 + $0x30f] sm:$0xff]
  %v4754 = vld [vmem:[#allocation2 + $0x327] sm:$0xff]
  %v4755 = vld [vmem:[#allocation2 + $0x32f] sm:$0xff]
  %v4756 = vld [vmem:[#allocation2 + $0x347] sm:$0xff]
  %v4757 = vld [vmem:[#allocation2 + $0x34f] sm:$0xff]
  %v4758 = vld [vmem:[#allocation2 + $0x367] sm:$0xff]
  %v4759 = vld [vmem:[#allocation2 + $0x36f] sm:$0xff]
  %v4760 = vld [vmem:[#allocation2 + $0x387] sm:$0xff]
  %v4761 = vld [vmem:[#allocation2 + $0x38f] sm:$0xff]
  %v4762 = vld [vmem:[#allocation2 + $0x3a7] sm:$0xff]
  %v4763 = vld [vmem:[#allocation2 + $0x3af] sm:$0xff]
  %v4764 = vld [vmem:[#allocation2 + $0x3c7] sm:$0xff]
  %v4765 = vld [vmem:[#allocation2 + $0x3cf] sm:$0xff]
  %v4766 = vld [vmem:[#allocation2 + $0x3e7] sm:$0xff]
  %v4767 = vld [vmem:[#allocation2 + $0x3ef] sm:$0xff]
  %v4768 = vld [vmem:[#allocation2 + $0x407] sm:$0xff]
  %v4769 = vld [vmem:[#allocation2 + $0x40f] sm:$0xff]
  %v4770 = vld [vmem:[#allocation2 + $0x427] sm:$0xff]
  %v4771 = vld [vmem:[#allocation2 + $0x42f] sm:$0xff]
  %v4772 = vld [vmem:[#allocation2 + $0x8] sm:$0xff]
  %v4773 = vld [vmem:[#allocation2 + $0x10] sm:$0xff]
  %v4774 = vld [vmem:[#allocation2 + $0x28] sm:$0xff]
  %v4775 = vld [vmem:[#allocation2 + $0x30] sm:$0xff]
  %v4776 = vld [vmem:[#allocation2 + $0x48] sm:$0xff]
  %v4777 = vld [vmem:[#allocation2 + $0x50] sm:$0xff]
  %v4778 = vld [vmem:[#allocation2 + $0x68] sm:$0xff]
  %v4779 = vld [vmem:[#allocation2 + $0x70] sm:$0xff]
  %v4780 = vld [vmem:[#allocation2 + $0x88] sm:$0xff]
  %v4781 = vld [vmem:[#allocation2 + $0x90] sm:$0xff]
  %v4782 = vld [vmem:[#allocation2 + $0xa8] sm:$0xff]
  %v4783 = vld [vmem:[#allocation2 + $0xb0] sm:$0xff]
  %v4784 = vld [vmem:[#allocation2 + $0xc8] sm:$0xff]
  %v4785 = vld [vmem:[#allocation2 + $0xd0] sm:$0xff]
  %v4786 = vld [vmem:[#allocation2 + $0xe8] sm:$0xff]
  %v4787 = vld [vmem:[#allocation2 + $0xf0] sm:$0xff]
  %v4788 = vld [vmem:[#allocation2 + $0x108] sm:$0xff]
  %v4789 = vld [vmem:[#allocation2 + $0x110] sm:$0xff]
  %v4790 = vld [vmem:[#allocation2 + $0x128] sm:$0xff]
  %v4791 = vld [vmem:[#allocation2 + $0x130] sm:$0xff]
  %v4792 = vld [vmem:[#allocation2 + $0x148] sm:$0xff]
  %v4793 = vld [vmem:[#allocation2 + $0x150] sm:$0xff]
  %v4794 = vld [vmem:[#allocation2 + $0x168] sm:$0xff]
  %v4795 = vld [vmem:[#allocation2 + $0x170] sm:$0xff]
  %v4796 = vld [vmem:[#allocation2 + $0x188] sm:$0xff]
  %v4797 = vld [vmem:[#allocation2 + $0x190] sm:$0xff]
  %v4798 = vld [vmem:[#allocation2 + $0x1a8] sm:$0xff]
  %v4799 = vld [vmem:[#allocation2 + $0x1b0] sm:$0xff]
  %v4800 = vld [vmem:[#allocation2 + $0x1c8] sm:$0xff]
  %v4801 = vld [vmem:[#allocation2 + $0x1d0] sm:$0xff]
  %v4802 = vld [vmem:[#allocation2 + $0x1e8] sm:$0xff]
  %v4803 = vld [vmem:[#allocation2 + $0x1f0] sm:$0xff]
  %v4804 = vld [vmem:[#allocation2 + $0x248] sm:$0xff]
  %v4805 = vld [vmem:[#allocation2 + $0x250] sm:$0xff]
  %v4806 = vld [vmem:[#allocation2 + $0x268] sm:$0xff]
  %v4807 = vld [vmem:[#allocation2 + $0x270] sm:$0xff]
  %v4808 = vld [vmem:[#allocation2 + $0x288] sm:$0xff]
  %v4809 = vld [vmem:[#allocation2 + $0x290] sm:$0xff]
  %v4810 = vld [vmem:[#allocation2 + $0x2a8] sm:$0xff]
  %v4811 = vld [vmem:[#allocation2 + $0x2b0] sm:$0xff]
  %v4812 = vld [vmem:[#allocation2 + $0x2c8] sm:$0xff]
  %v4813 = vld [vmem:[#allocation2 + $0x2d0] sm:$0xff]
  %v4814 = vld [vmem:[#allocation2 + $0x2e8] sm:$0xff]
  %v4815 = vld [vmem:[#allocation2 + $0x2f0] sm:$0xff]
  %v4816 = vld [vmem:[#allocation2 + $0x308] sm:$0xff]
  %v4817 = vld [vmem:[#allocation2 + $0x310] sm:$0xff]
  %v4818 = vld [vmem:[#allocation2 + $0x328] sm:$0xff]
  %v4819 = vld [vmem:[#allocation2 + $0x330] sm:$0xff]
  %v4820 = vld [vmem:[#allocation2 + $0x348] sm:$0xff]
  %v4821 = vld [vmem:[#allocation2 + $0x350] sm:$0xff]
  %v4822 = vld [vmem:[#allocation2 + $0x368] sm:$0xff]
  %v4823 = vld [vmem:[#allocation2 + $0x370] sm:$0xff]
  %v4824 = vld [vmem:[#allocation2 + $0x388] sm:$0xff]
  %v4825 = vld [vmem:[#allocation2 + $0x390] sm:$0xff]
  %v4826 = vld [vmem:[#allocation2 + $0x3a8] sm:$0xff]
  %v4827 = vld [vmem:[#allocation2 + $0x3b0] sm:$0xff]
  %v4828 = vld [vmem:[#allocation2 + $0x3c8] sm:$0xff]
  %v4829 = vld [vmem:[#allocation2 + $0x3d0] sm:$0xff]
  %v4830 = vld [vmem:[#allocation2 + $0x3e8] sm:$0xff]
  %v4831 = vld [vmem:[#allocation2 + $0x3f0] sm:$0xff]
  %v4832 = vld [vmem:[#allocation2 + $0x408] sm:$0xff]
  %v4833 = vld [vmem:[#allocation2 + $0x410] sm:$0xff]
  %v4834 = vld [vmem:[#allocation2 + $0x428] sm:$0xff]
  %v4835 = vld [vmem:[#allocation2 + $0x430] sm:$0xff]
  %v4836 = vld [vmem:[#allocation2 + $0x9] sm:$0xff]
  %v4837 = vld [vmem:[#allocation2 + $0x11] sm:$0xff]
  %v4838 = vld [vmem:[#allocation2 + $0x29] sm:$0xff]
  %v4839 = vld [vmem:[#allocation2 + $0x31] sm:$0xff]
  %v4840 = vld [vmem:[#allocation2 + $0x49] sm:$0xff]
  %v4841 = vld [vmem:[#allocation2 + $0x51] sm:$0xff]
  %v4842 = vld [vmem:[#allocation2 + $0x69] sm:$0xff]
  %v4843 = vld [vmem:[#allocation2 + $0x71] sm:$0xff]
  %v4844 = vld [vmem:[#allocation2 + $0x89] sm:$0xff]
  %v4845 = vld [vmem:[#allocation2 + $0x91] sm:$0xff]
  %v4846 = vld [vmem:[#allocation2 + $0xa9] sm:$0xff]
  %v4847 = vld [vmem:[#allocation2 + $0xb1] sm:$0xff]
  %v4848 = vld [vmem:[#allocation2 + $0xc9] sm:$0xff]
  %v4849 = vld [vmem:[#allocation2 + $0xd1] sm:$0xff]
  %v4850 = vld [vmem:[#allocation2 + $0xe9] sm:$0xff]
  %v4851 = vld [vmem:[#allocation2 + $0xf1] sm:$0xff]
  %v4852 = vld [vmem:[#allocation2 + $0x109] sm:$0xff]
  %v4853 = vld [vmem:[#allocation2 + $0x111] sm:$0xff]
  %v4854 = vld [vmem:[#allocation2 + $0x129] sm:$0xff]
  %v4855 = vld [vmem:[#allocation2 + $0x131] sm:$0xff]
  %v4856 = vld [vmem:[#allocation2 + $0x149] sm:$0xff]
  %v4857 = vld [vmem:[#allocation2 + $0x151] sm:$0xff]
  %v4858 = vld [vmem:[#allocation2 + $0x169] sm:$0xff]
  %v4859 = vld [vmem:[#allocation2 + $0x171] sm:$0xff]
  %v4860 = vld [vmem:[#allocation2 + $0x189] sm:$0xff]
  %v4861 = vld [vmem:[#allocation2 + $0x191] sm:$0xff]
  %v4862 = vld [vmem:[#allocation2 + $0x1a9] sm:$0xff]
  %v4863 = vld [vmem:[#allocation2 + $0x1b1] sm:$0xff]
  %v4864 = vld [vmem:[#allocation2 + $0x1c9] sm:$0xff]
  %v4865 = vld [vmem:[#allocation2 + $0x1d1] sm:$0xff]
  %v4866 = vld [vmem:[#allocation2 + $0x1e9] sm:$0xff]
  %v4867 = vld [vmem:[#allocation2 + $0x1f1] sm:$0xff]
  %v4868 = vld [vmem:[#allocation2 + $0x249] sm:$0xff]
  %v4869 = vld [vmem:[#allocation2 + $0x251] sm:$0xff]
  %v4870 = vld [vmem:[#allocation2 + $0x269] sm:$0xff]
  %v4871 = vld [vmem:[#allocation2 + $0x271] sm:$0xff]
  %v4872 = vld [vmem:[#allocation2 + $0x289] sm:$0xff]
  %v4873 = vld [vmem:[#allocation2 + $0x291] sm:$0xff]
  %v4874 = vld [vmem:[#allocation2 + $0x2a9] sm:$0xff]
  %v4875 = vld [vmem:[#allocation2 + $0x2b1] sm:$0xff]
  %v4876 = vld [vmem:[#allocation2 + $0x2c9] sm:$0xff]
  %v4877 = vld [vmem:[#allocation2 + $0x2d1] sm:$0xff]
  %v4878 = vld [vmem:[#allocation2 + $0x2e9] sm:$0xff]
  %v4879 = vld [vmem:[#allocation2 + $0x2f1] sm:$0xff]
  %v4880 = vld [vmem:[#allocation2 + $0x309] sm:$0xff]
  %v4881 = vld [vmem:[#allocation2 + $0x311] sm:$0xff]
  %v4882 = vld [vmem:[#allocation2 + $0x329] sm:$0xff]
  %v4883 = vld [vmem:[#allocation2 + $0x331] sm:$0xff]
  %v4884 = vld [vmem:[#allocation2 + $0x349] sm:$0xff]
  %v4885 = vld [vmem:[#allocation2 + $0x351] sm:$0xff]
  %v4886 = vld [vmem:[#allocation2 + $0x369] sm:$0xff]
  %v4887 = vld [vmem:[#allocation2 + $0x371] sm:$0xff]
  %v4888 = vld [vmem:[#allocation2 + $0x389] sm:$0xff]
  %v4889 = vld [vmem:[#allocation2 + $0x391] sm:$0xff]
  %v4890 = vld [vmem:[#allocation2 + $0x3a9] sm:$0xff]
  %v4891 = vld [vmem:[#allocation2 + $0x3b1] sm:$0xff]
  %v4892 = vld [vmem:[#allocation2 + $0x3c9] sm:$0xff]
  %v4893 = vld [vmem:[#allocation2 + $0x3d1] sm:$0xff]
  %v4894 = vld [vmem:[#allocation2 + $0x3e9] sm:$0xff]
  %v4895 = vld [vmem:[#allocation2 + $0x3f1] sm:$0xff]
  %v4896 = vld [vmem:[#allocation2 + $0x409] sm:$0xff]
  %v4897 = vld [vmem:[#allocation2 + $0x411] sm:$0xff]
  %v4898 = vld [vmem:[#allocation2 + $0x429] sm:$0xff]
  %v4899 = vld [vmem:[#allocation2 + $0x431] sm:$0xff]
  %v4900 = vld [vmem:[%s235 + $0x7] sm:$0xff]
  %v4901 = vld [vmem:[%s235 + $0xf] sm:$0xff]
  %v4902 = vld [vmem:[%s235 + $0x27] sm:$0xff]
  %v4903 = vld [vmem:[%s235 + $0x2f] sm:$0xff]
  %v4904 = vld [vmem:[%s235 + $0x47] sm:$0xff]
  %v4905 = vld [vmem:[%s235 + $0x4f] sm:$0xff]
  %v4906 = vld [vmem:[%s235 + $0x67] sm:$0xff]
  %v4907 = vld [vmem:[%s235 + $0x6f] sm:$0xff]
  %v4908 = vld [vmem:[%s235 + $0x87] sm:$0xff]
  %v4909 = vld [vmem:[%s235 + $0x8f] sm:$0xff]
  %v4910 = vld [vmem:[%s235 + $0xa7] sm:$0xff]
  %v4911 = vld [vmem:[%s235 + $0xaf] sm:$0xff]
  %v4912 = vld [vmem:[%s235 + $0xc7] sm:$0xff]
  %v4913 = vld [vmem:[%s235 + $0xcf] sm:$0xff]
  %v4914 = vld [vmem:[%s235 + $0xe7] sm:$0xff]
  %v4915 = vld [vmem:[%s235 + $0xef] sm:$0xff]
  %v4916 = vld [vmem:[%s235 + $0x107] sm:$0xff]
  %v4917 = vld [vmem:[%s235 + $0x10f] sm:$0xff]
  %v4918 = vld [vmem:[%s235 + $0x127] sm:$0xff]
  %v4919 = vld [vmem:[%s235 + $0x12f] sm:$0xff]
  %v4920 = vld [vmem:[%s235 + $0x147] sm:$0xff]
  %v4921 = vld [vmem:[%s235 + $0x14f] sm:$0xff]
  %v4922 = vld [vmem:[%s235 + $0x167] sm:$0xff]
  %v4923 = vld [vmem:[%s235 + $0x16f] sm:$0xff]
  %v4924 = vld [vmem:[%s235 + $0x187] sm:$0xff]
  %v4925 = vld [vmem:[%s235 + $0x18f] sm:$0xff]
  %v4926 = vld [vmem:[%s235 + $0x1a7] sm:$0xff]
  %v4927 = vld [vmem:[%s235 + $0x1af] sm:$0xff]
  %v4928 = vld [vmem:[%s235 + $0x1c7] sm:$0xff]
  %v4929 = vld [vmem:[%s235 + $0x1cf] sm:$0xff]
  %v4930 = vld [vmem:[%s235 + $0x1e7] sm:$0xff]
  %v4931 = vld [vmem:[%s235 + $0x1ef] sm:$0xff]
  %v4932 = vld [vmem:[%s235 + $0x247] sm:$0xff]
  %v4933 = vld [vmem:[%s235 + $0x24f] sm:$0xff]
  %v4934 = vld [vmem:[%s235 + $0x267] sm:$0xff]
  %v4935 = vld [vmem:[%s235 + $0x26f] sm:$0xff]
  %v4936 = vld [vmem:[%s235 + $0x287] sm:$0xff]
  %v4937 = vld [vmem:[%s235 + $0x28f] sm:$0xff]
  %v4938 = vld [vmem:[%s235 + $0x2a7] sm:$0xff]
  %v4939 = vld [vmem:[%s235 + $0x2af] sm:$0xff]
  %v4940 = vld [vmem:[%s235 + $0x2c7] sm:$0xff]
  %v4941 = vld [vmem:[%s235 + $0x2cf] sm:$0xff]
  %v4942 = vld [vmem:[%s235 + $0x2e7] sm:$0xff]
  %v4943 = vld [vmem:[%s235 + $0x2ef] sm:$0xff]
  %v4944 = vld [vmem:[%s235 + $0x307] sm:$0xff]
  %v4945 = vld [vmem:[%s235 + $0x30f] sm:$0xff]
  %v4946 = vld [vmem:[%s235 + $0x327] sm:$0xff]
  %v4947 = vld [vmem:[%s235 + $0x32f] sm:$0xff]
  %v4948 = vld [vmem:[%s235 + $0x347] sm:$0xff]
  %v4949 = vld [vmem:[%s235 + $0x34f] sm:$0xff]
  %v4950 = vld [vmem:[%s235 + $0x367] sm:$0xff]
  %v4951 = vld [vmem:[%s235 + $0x36f] sm:$0xff]
  %v4952 = vld [vmem:[%s235 + $0x387] sm:$0xff]
  %v4953 = vld [vmem:[%s235 + $0x38f] sm:$0xff]
  %v4954 = vld [vmem:[%s235 + $0x3a7] sm:$0xff]
  %v4955 = vld [vmem:[%s235 + $0x3af] sm:$0xff]
  %v4956 = vld [vmem:[%s235 + $0x3c7] sm:$0xff]
  %v4957 = vld [vmem:[%s235 + $0x3cf] sm:$0xff]
  %v4958 = vld [vmem:[%s235 + $0x3e7] sm:$0xff]
  %v4959 = vld [vmem:[%s235 + $0x3ef] sm:$0xff]
  %v4960 = vld [vmem:[%s235 + $0x407] sm:$0xff]
  %v4961 = vld [vmem:[%s235 + $0x40f] sm:$0xff]
  %v4962 = vld [vmem:[%s235 + $0x427] sm:$0xff]
  %v4963 = vld [vmem:[%s235 + $0x42f] sm:$0xff]
  %v4964 = vld [vmem:[%s235 + $0x8] sm:$0xff]
  %v4965 = vld [vmem:[%s235 + $0x10] sm:$0xff]
  %v4966 = vld [vmem:[%s235 + $0x28] sm:$0xff]
  %v4967 = vld [vmem:[%s235 + $0x30] sm:$0xff]
  %v4968 = vld [vmem:[%s235 + $0x48] sm:$0xff]
  %v4969 = vld [vmem:[%s235 + $0x50] sm:$0xff]
  %v4970 = vld [vmem:[%s235 + $0x68] sm:$0xff]
  %v4971 = vld [vmem:[%s235 + $0x70] sm:$0xff]
  %v4972 = vld [vmem:[%s235 + $0x88] sm:$0xff]
  %v4973 = vld [vmem:[%s235 + $0x90] sm:$0xff]
  %v4974 = vld [vmem:[%s235 + $0xa8] sm:$0xff]
  %v4975 = vld [vmem:[%s235 + $0xb0] sm:$0xff]
  %v4976 = vld [vmem:[%s235 + $0xc8] sm:$0xff]
  %v4977 = vld [vmem:[%s235 + $0xd0] sm:$0xff]
  %v4978 = vld [vmem:[%s235 + $0xe8] sm:$0xff]
  %v4979 = vld [vmem:[%s235 + $0xf0] sm:$0xff]
  %v4980 = vld [vmem:[%s235 + $0x108] sm:$0xff]
  %v4981 = vld [vmem:[%s235 + $0x110] sm:$0xff]
  %v4982 = vld [vmem:[%s235 + $0x128] sm:$0xff]
  %v4983 = vld [vmem:[%s235 + $0x130] sm:$0xff]
  %v4984 = vld [vmem:[%s235 + $0x148] sm:$0xff]
  %v4985 = vld [vmem:[%s235 + $0x150] sm:$0xff]
  %v4986 = vld [vmem:[%s235 + $0x168] sm:$0xff]
  %v4987 = vld [vmem:[%s235 + $0x170] sm:$0xff]
  %v4988 = vld [vmem:[%s235 + $0x188] sm:$0xff]
  %v4989 = vld [vmem:[%s235 + $0x190] sm:$0xff]
  %v4990 = vld [vmem:[%s235 + $0x1a8] sm:$0xff]
  %v4991 = vld [vmem:[%s235 + $0x1b0] sm:$0xff]
  %v4992 = vld [vmem:[%s235 + $0x1c8] sm:$0xff]
  %v4993 = vld [vmem:[%s235 + $0x1d0] sm:$0xff]
  %v4994 = vld [vmem:[%s235 + $0x1e8] sm:$0xff]
  %v4995 = vld [vmem:[%s235 + $0x1f0] sm:$0xff]
  %v4996 = vld [vmem:[%s235 + $0x248] sm:$0xff]
  %v4997 = vld [vmem:[%s235 + $0x250] sm:$0xff]
  %v4998 = vld [vmem:[%s235 + $0x268] sm:$0xff]
  %v4999 = vld [vmem:[%s235 + $0x270] sm:$0xff]
  %v5000 = vld [vmem:[%s235 + $0x288] sm:$0xff]
  %v5001 = vld [vmem:[%s235 + $0x290] sm:$0xff]
  %v5002 = vld [vmem:[%s235 + $0x2a8] sm:$0xff]
  %v5003 = vld [vmem:[%s235 + $0x2b0] sm:$0xff]
  %v5004 = vld [vmem:[%s235 + $0x2c8] sm:$0xff]
  %v5005 = vld [vmem:[%s235 + $0x2d0] sm:$0xff]
  %v5006 = vld [vmem:[%s235 + $0x2e8] sm:$0xff]
  %v5007 = vld [vmem:[%s235 + $0x2f0] sm:$0xff]
  %v5008 = vld [vmem:[%s235 + $0x308] sm:$0xff]
  %v5009 = vld [vmem:[%s235 + $0x310] sm:$0xff]
  %v5010 = vld [vmem:[%s235 + $0x328] sm:$0xff]
  %v5011 = vld [vmem:[%s235 + $0x330] sm:$0xff]
  %v5012 = vld [vmem:[%s235 + $0x348] sm:$0xff]
  %v5013 = vld [vmem:[%s235 + $0x350] sm:$0xff]
  %v5014 = vld [vmem:[%s235 + $0x368] sm:$0xff]
  %v5015 = vld [vmem:[%s235 + $0x370] sm:$0xff]
  %v5016 = vld [vmem:[%s235 + $0x388] sm:$0xff]
  %v5017 = vld [vmem:[%s235 + $0x390] sm:$0xff]
  %v5018 = vld [vmem:[%s235 + $0x3a8] sm:$0xff]
  %v5019 = vld [vmem:[%s235 + $0x3b0] sm:$0xff]
  %v5020 = vld [vmem:[%s235 + $0x3c8] sm:$0xff]
  %v5021 = vld [vmem:[%s235 + $0x3d0] sm:$0xff]
  %v5022 = vld [vmem:[%s235 + $0x3e8] sm:$0xff]
  %v5023 = vld [vmem:[%s235 + $0x3f0] sm:$0xff]
  %v5024 = vld [vmem:[%s235 + $0x408] sm:$0xff]
  %v5025 = vld [vmem:[%s235 + $0x410] sm:$0xff]
  %v5026 = vld [vmem:[%s235 + $0x428] sm:$0xff]
  %v5027 = vld [vmem:[%s235 + $0x430] sm:$0xff]
  %v5028 = vld [vmem:[%s235 + $0x9] sm:$0xff]
  %v5029 = vld [vmem:[%s235 + $0x11] sm:$0xff]
  %v5030 = vld [vmem:[%s235 + $0x29] sm:$0xff]
  %v5031 = vld [vmem:[%s235 + $0x31] sm:$0xff]
  %v5032 = vld [vmem:[%s235 + $0x49] sm:$0xff]
  %v5033 = vld [vmem:[%s235 + $0x51] sm:$0xff]
  %v5034 = vld [vmem:[%s235 + $0x69] sm:$0xff]
  %v5035 = vld [vmem:[%s235 + $0x71] sm:$0xff]
  %v5036 = vld [vmem:[%s235 + $0x89] sm:$0xff]
  %v5037 = vld [vmem:[%s235 + $0x91] sm:$0xff]
  %v5038 = vld [vmem:[%s235 + $0xa9] sm:$0xff]
  %v5039 = vld [vmem:[%s235 + $0xb1] sm:$0xff]
  %v5040 = vld [vmem:[%s235 + $0xc9] sm:$0xff]
  %v5041 = vld [vmem:[%s235 + $0xd1] sm:$0xff]
  %v5042 = vld [vmem:[%s235 + $0xe9] sm:$0xff]
  %v5043 = vld [vmem:[%s235 + $0xf1] sm:$0xff]
  %v5044 = vld [vmem:[%s235 + $0x109] sm:$0xff]
  %v5045 = vld [vmem:[%s235 + $0x111] sm:$0xff]
  %v5046 = vld [vmem:[%s235 + $0x129] sm:$0xff]
  %v5047 = vld [vmem:[%s235 + $0x131] sm:$0xff]
  %v5048 = vld [vmem:[%s235 + $0x149] sm:$0xff]
  %v5049 = vld [vmem:[%s235 + $0x151] sm:$0xff]
  %v5050 = vld [vmem:[%s235 + $0x169] sm:$0xff]
  %v5051 = vld [vmem:[%s235 + $0x171] sm:$0xff]
  %v5052 = vld [vmem:[%s235 + $0x189] sm:$0xff]
  %v5053 = vld [vmem:[%s235 + $0x191] sm:$0xff]
  %v5054 = vld [vmem:[%s235 + $0x1a9] sm:$0xff]
  %v5055 = vld [vmem:[%s235 + $0x1b1] sm:$0xff]
  %v5056 = vld [vmem:[%s235 + $0x1c9] sm:$0xff]
  %v5057 = vld [vmem:[%s235 + $0x1d1] sm:$0xff]
  %v5058 = vld [vmem:[%s235 + $0x1e9] sm:$0xff]
  %v5059 = vld [vmem:[%s235 + $0x1f1] sm:$0xff]
  %v5060 = vld [vmem:[%s235 + $0x249] sm:$0xff]
  %v5061 = vld [vmem:[%s235 + $0x251] sm:$0xff]
  %v5062 = vld [vmem:[%s235 + $0x269] sm:$0xff]
  %v5063 = vld [vmem:[%s235 + $0x271] sm:$0xff]
  %v5064 = vld [vmem:[%s235 + $0x289] sm:$0xff]
  %v5065 = vld [vmem:[%s235 + $0x291] sm:$0xff]
  %v5066 = vld [vmem:[%s235 + $0x2a9] sm:$0xff]
  %v5067 = vld [vmem:[%s235 + $0x2b1] sm:$0xff]
  %v5068 = vld [vmem:[%s235 + $0x2c9] sm:$0xff]
  %v5069 = vld [vmem:[%s235 + $0x2d1] sm:$0xff]
  %v5070 = vld [vmem:[%s235 + $0x2e9] sm:$0xff]
  %v5071 = vld [vmem:[%s235 + $0x2f1] sm:$0xff]
  %v5072 = vld [vmem:[%s235 + $0x309] sm:$0xff]
  %v5073 = vld [vmem:[%s235 + $0x311] sm:$0xff]
  %v5074 = vld [vmem:[%s235 + $0x329] sm:$0xff]
  %v5075 = vld [vmem:[%s235 + $0x331] sm:$0xff]
  %v5076 = vld [vmem:[%s235 + $0x349] sm:$0xff]
  %v5077 = vld [vmem:[%s235 + $0x351] sm:$0xff]
  %v5078 = vld [vmem:[%s235 + $0x369] sm:$0xff]
  %v5079 = vld [vmem:[%s235 + $0x371] sm:$0xff]
  %v5080 = vld [vmem:[%s235 + $0x389] sm:$0xff]
  %v5081 = vld [vmem:[%s235 + $0x391] sm:$0xff]
  %v5082 = vld [vmem:[%s235 + $0x3a9] sm:$0xff]
  %v5083 = vld [vmem:[%s235 + $0x3b1] sm:$0xff]
  %v5084 = vld [vmem:[%s235 + $0x3c9] sm:$0xff]
  %v5085 = vld [vmem:[%s235 + $0x3d1] sm:$0xff]
  %v5086 = vld [vmem:[%s235 + $0x3e9] sm:$0xff]
  %v5087 = vld [vmem:[%s235 + $0x3f1] sm:$0xff]
  %v5088 = vld [vmem:[%s235 + $0x409] sm:$0xff]
  %v5089 = vld [vmem:[%s235 + $0x411] sm:$0xff]
  %v5090 = vld [vmem:[%s235 + $0x429] sm:$0xff]
  %v5091 = vld [vmem:[%s235 + $0x431] sm:$0xff]
  %v5092 = vld [vmem:[%s684 + $0x7] sm:$0xff]
  %v5093 = vld [vmem:[%s684 + $0xf] sm:$0xff]
  %v5094 = vld [vmem:[%s684 + $0x27] sm:$0xff]
  %v5095 = vld [vmem:[%s684 + $0x2f] sm:$0xff]
  %v5096 = vld [vmem:[%s684 + $0x47] sm:$0xff]
  %v5097 = vld [vmem:[%s684 + $0x4f] sm:$0xff]
  %v5098 = vld [vmem:[%s684 + $0x67] sm:$0xff]
  %v5099 = vld [vmem:[%s684 + $0x6f] sm:$0xff]
  %v5100 = vld [vmem:[%s684 + $0x87] sm:$0xff]
  %v5101 = vld [vmem:[%s684 + $0x8f] sm:$0xff]
  %v5102 = vld [vmem:[%s684 + $0xa7] sm:$0xff]
  %v5103 = vld [vmem:[%s684 + $0xaf] sm:$0xff]
  %v5104 = vld [vmem:[%s684 + $0xc7] sm:$0xff]
  %v5105 = vld [vmem:[%s684 + $0xcf] sm:$0xff]
  %v5106 = vld [vmem:[%s684 + $0xe7] sm:$0xff]
  %v5107 = vld [vmem:[%s684 + $0xef] sm:$0xff]
  %v5108 = vld [vmem:[%s684 + $0x107] sm:$0xff]
  %v5109 = vld [vmem:[%s684 + $0x10f] sm:$0xff]
  %v5110 = vld [vmem:[%s684 + $0x127] sm:$0xff]
  %v5111 = vld [vmem:[%s684 + $0x12f] sm:$0xff]
  %v5112 = vld [vmem:[%s684 + $0x147] sm:$0xff]
  %v5113 = vld [vmem:[%s684 + $0x14f] sm:$0xff]
  %v5114 = vld [vmem:[%s684 + $0x167] sm:$0xff]
  %v5115 = vld [vmem:[%s684 + $0x16f] sm:$0xff]
  %v5116 = vld [vmem:[%s684 + $0x187] sm:$0xff]
  %v5117 = vld [vmem:[%s684 + $0x18f] sm:$0xff]
  %v5118 = vld [vmem:[%s684 + $0x1a7] sm:$0xff]
  %v5119 = vld [vmem:[%s684 + $0x1af] sm:$0xff]
  %v5120 = vld [vmem:[%s684 + $0x1c7] sm:$0xff]
  %v5121 = vld [vmem:[%s684 + $0x1cf] sm:$0xff]
  %v5122 = vld [vmem:[%s684 + $0x1e7] sm:$0xff]
  %v5123 = vld [vmem:[%s684 + $0x1ef] sm:$0xff]
  %v5124 = vld [vmem:[%s684 + $0x247] sm:$0xff]
  %v5125 = vld [vmem:[%s684 + $0x24f] sm:$0xff]
  %v5126 = vld [vmem:[%s684 + $0x267] sm:$0xff]
  %v5127 = vld [vmem:[%s684 + $0x26f] sm:$0xff]
  %v5128 = vld [vmem:[%s684 + $0x287] sm:$0xff]
  %v5129 = vld [vmem:[%s684 + $0x28f] sm:$0xff]
  %v5130 = vld [vmem:[%s684 + $0x2a7] sm:$0xff]
  %v5131 = vld [vmem:[%s684 + $0x2af] sm:$0xff]
  %v5132 = vld [vmem:[%s684 + $0x2c7] sm:$0xff]
  %v5133 = vld [vmem:[%s684 + $0x2cf] sm:$0xff]
  %v5134 = vld [vmem:[%s684 + $0x2e7] sm:$0xff]
  %v5135 = vld [vmem:[%s684 + $0x2ef] sm:$0xff]
  %v5136 = vld [vmem:[%s684 + $0x307] sm:$0xff]
  %v5137 = vld [vmem:[%s684 + $0x30f] sm:$0xff]
  %v5138 = vld [vmem:[%s684 + $0x327] sm:$0xff]
  %v5139 = vld [vmem:[%s684 + $0x32f] sm:$0xff]
  %v5140 = vld [vmem:[%s684 + $0x347] sm:$0xff]
  %v5141 = vld [vmem:[%s684 + $0x34f] sm:$0xff]
  %v5142 = vld [vmem:[%s684 + $0x367] sm:$0xff]
  %v5143 = vld [vmem:[%s684 + $0x36f] sm:$0xff]
  %v5144 = vld [vmem:[%s684 + $0x387] sm:$0xff]
  %v5145 = vld [vmem:[%s684 + $0x38f] sm:$0xff]
  %v5146 = vld [vmem:[%s684 + $0x3a7] sm:$0xff]
  %v5147 = vld [vmem:[%s684 + $0x3af] sm:$0xff]
  %v5148 = vld [vmem:[%s684 + $0x3c7] sm:$0xff]
  %v5149 = vld [vmem:[%s684 + $0x3cf] sm:$0xff]
  %v5150 = vld [vmem:[%s684 + $0x3e7] sm:$0xff]
  %v5151 = vld [vmem:[%s684 + $0x3ef] sm:$0xff]
  %v5152 = vld [vmem:[%s684 + $0x407] sm:$0xff]
  %v5153 = vld [vmem:[%s684 + $0x40f] sm:$0xff]
  %v5154 = vld [vmem:[%s684 + $0x427] sm:$0xff]
  %v5155 = vld [vmem:[%s684 + $0x42f] sm:$0xff]
  %v5156 = vld [vmem:[%s684 + $0x8] sm:$0xff]
  %v5157 = vld [vmem:[%s684 + $0x10] sm:$0xff]
  %v5158 = vld [vmem:[%s684 + $0x28] sm:$0xff]
  %v5159 = vld [vmem:[%s684 + $0x30] sm:$0xff]
  %v5160 = vld [vmem:[%s684 + $0x48] sm:$0xff]
  %v5161 = vld [vmem:[%s684 + $0x50] sm:$0xff]
  %v5162 = vld [vmem:[%s684 + $0x68] sm:$0xff]
  %v5163 = vld [vmem:[%s684 + $0x70] sm:$0xff]
  %v5164 = vld [vmem:[%s684 + $0x88] sm:$0xff]
  %v5165 = vld [vmem:[%s684 + $0x90] sm:$0xff]
  %v5166 = vld [vmem:[%s684 + $0xa8] sm:$0xff]
  %v5167 = vld [vmem:[%s684 + $0xb0] sm:$0xff]
  %v5168 = vld [vmem:[%s684 + $0xc8] sm:$0xff]
  %v5169 = vld [vmem:[%s684 + $0xd0] sm:$0xff]
  %v5170 = vld [vmem:[%s684 + $0xe8] sm:$0xff]
  %v5171 = vld [vmem:[%s684 + $0xf0] sm:$0xff]
  %v5172 = vld [vmem:[%s684 + $0x108] sm:$0xff]
  %v5173 = vld [vmem:[%s684 + $0x110] sm:$0xff]
  %v5174 = vld [vmem:[%s684 + $0x128] sm:$0xff]
  %v5175 = vld [vmem:[%s684 + $0x130] sm:$0xff]
  %v5176 = vld [vmem:[%s684 + $0x148] sm:$0xff]
  %v5177 = vld [vmem:[%s684 + $0x150] sm:$0xff]
  %v5178 = vld [vmem:[%s684 + $0x168] sm:$0xff]
  %v5179 = vld [vmem:[%s684 + $0x170] sm:$0xff]
  %v5180 = vld [vmem:[%s684 + $0x188] sm:$0xff]
  %v5181 = vld [vmem:[%s684 + $0x190] sm:$0xff]
  %v5182 = vld [vmem:[%s684 + $0x1a8] sm:$0xff]
  %v5183 = vld [vmem:[%s684 + $0x1b0] sm:$0xff]
  %v5184 = vld [vmem:[%s684 + $0x1c8] sm:$0xff]
  %v5185 = vld [vmem:[%s684 + $0x1d0] sm:$0xff]
  %v5186 = vld [vmem:[%s684 + $0x1e8] sm:$0xff]
  %v5187 = vld [vmem:[%s684 + $0x1f0] sm:$0xff]
  %v5188 = vld [vmem:[%s684 + $0x248] sm:$0xff]
  %v5189 = vld [vmem:[%s684 + $0x250] sm:$0xff]
  %v5190 = vld [vmem:[%s684 + $0x268] sm:$0xff]
  %v5191 = vld [vmem:[%s684 + $0x270] sm:$0xff]
  %v5192 = vld [vmem:[%s684 + $0x288] sm:$0xff]
  %v5193 = vld [vmem:[%s684 + $0x290] sm:$0xff]
  %v5194 = vld [vmem:[%s684 + $0x2a8] sm:$0xff]
  %v5195 = vld [vmem:[%s684 + $0x2b0] sm:$0xff]
  %v5196 = vld [vmem:[%s684 + $0x2c8] sm:$0xff]
  %v5197 = vld [vmem:[%s684 + $0x2d0] sm:$0xff]
  %v5198 = vld [vmem:[%s684 + $0x2e8] sm:$0xff]
  %v5199 = vld [vmem:[%s684 + $0x2f0] sm:$0xff]
  %v5200 = vld [vmem:[%s684 + $0x308] sm:$0xff]
  %v5201 = vld [vmem:[%s684 + $0x310] sm:$0xff]
  %v5202 = vld [vmem:[%s684 + $0x328] sm:$0xff]
  %v5203 = vld [vmem:[%s684 + $0x330] sm:$0xff]
  %v5204 = vld [vmem:[%s684 + $0x348] sm:$0xff]
  %v5205 = vld [vmem:[%s684 + $0x350] sm:$0xff]
  %v5206 = vld [vmem:[%s684 + $0x368] sm:$0xff]
  %v5207 = vld [vmem:[%s684 + $0x370] sm:$0xff]
  %v5208 = vld [vmem:[%s684 + $0x388] sm:$0xff]
  %v5209 = vld [vmem:[%s684 + $0x390] sm:$0xff]
  %v5210 = vld [vmem:[%s684 + $0x3a8] sm:$0xff]
  %v5211 = vld [vmem:[%s684 + $0x3b0] sm:$0xff]
  %v5212 = vld [vmem:[%s684 + $0x3c8] sm:$0xff]
  %v5213 = vld [vmem:[%s684 + $0x3d0] sm:$0xff]
  %v5214 = vld [vmem:[%s684 + $0x3e8] sm:$0xff]
  %v5215 = vld [vmem:[%s684 + $0x3f0] sm:$0xff]
  %v5216 = vld [vmem:[%s684 + $0x408] sm:$0xff]
  %v5217 = vld [vmem:[%s684 + $0x410] sm:$0xff]
  %v5218 = vld [vmem:[%s684 + $0x428] sm:$0xff]
  %v5219 = vld [vmem:[%s684 + $0x430] sm:$0xff]
  %v5220 = vld [vmem:[%s684 + $0x9] sm:$0xff]
  %v5221 = vld [vmem:[%s684 + $0x11] sm:$0xff]
  %v5222 = vld [vmem:[%s684 + $0x29] sm:$0xff]
  %v5223 = vld [vmem:[%s684 + $0x31] sm:$0xff]
  %v5224 = vld [vmem:[%s684 + $0x49] sm:$0xff]
  %v5225 = vld [vmem:[%s684 + $0x51] sm:$0xff]
  %v5226 = vld [vmem:[%s684 + $0x69] sm:$0xff]
  %v5227 = vld [vmem:[%s684 + $0x71] sm:$0xff]
  %v5228 = vld [vmem:[%s684 + $0x89] sm:$0xff]
  %v5229 = vld [vmem:[%s684 + $0x91] sm:$0xff]
  %v5230 = vld [vmem:[%s684 + $0xa9] sm:$0xff]
  %v5231 = vld [vmem:[%s684 + $0xb1] sm:$0xff]
  %v5232 = vld [vmem:[%s684 + $0xc9] sm:$0xff]
  %v5233 = vld [vmem:[%s684 + $0xd1] sm:$0xff]
  %v5234 = vld [vmem:[%s684 + $0xe9] sm:$0xff]
  %v5235 = vld [vmem:[%s684 + $0xf1] sm:$0xff]
  %v5236 = vld [vmem:[%s684 + $0x109] sm:$0xff]
  %v5237 = vld [vmem:[%s684 + $0x111] sm:$0xff]
  %v5238 = vld [vmem:[%s684 + $0x129] sm:$0xff]
  %v5239 = vld [vmem:[%s684 + $0x131] sm:$0xff]
  %v5240 = vld [vmem:[%s684 + $0x149] sm:$0xff]
  %v5241 = vld [vmem:[%s684 + $0x151] sm:$0xff]
  %v5242 = vld [vmem:[%s684 + $0x169] sm:$0xff]
  %v5243 = vld [vmem:[%s684 + $0x171] sm:$0xff]
  %v5244 = vld [vmem:[%s684 + $0x189] sm:$0xff]
  %v5245 = vld [vmem:[%s684 + $0x191] sm:$0xff]
  %v5246 = vld [vmem:[%s684 + $0x1a9] sm:$0xff]
  %v5247 = vld [vmem:[%s684 + $0x1b1] sm:$0xff]
  %v5248 = vld [vmem:[%s684 + $0x1c9] sm:$0xff]
  %v5249 = vld [vmem:[%s684 + $0x1d1] sm:$0xff]
  %v5250 = vld [vmem:[%s684 + $0x1e9] sm:$0xff]
  %v5251 = vld [vmem:[%s684 + $0x1f1] sm:$0xff]
  %v5252 = vld [vmem:[%s684 + $0x249] sm:$0xff]
  %v5253 = vld [vmem:[%s684 + $0x251] sm:$0xff]
  %v5254 = vld [vmem:[%s684 + $0x269] sm:$0xff]
  %v5255 = vld [vmem:[%s684 + $0x271] sm:$0xff]
  %v5256 = vld [vmem:[%s684 + $0x289] sm:$0xff]
  %v5257 = vld [vmem:[%s684 + $0x291] sm:$0xff]
  %v5258 = vld [vmem:[%s684 + $0x2a9] sm:$0xff]
  %v5259 = vld [vmem:[%s684 + $0x2b1] sm:$0xff]
  %v5260 = vld [vmem:[%s684 + $0x2c9] sm:$0xff]
  %v5261 = vld [vmem:[%s684 + $0x2d1] sm:$0xff]
  %v5262 = vld [vmem:[%s684 + $0x2e9] sm:$0xff]
  %v5263 = vld [vmem:[%s684 + $0x2f1] sm:$0xff]
  %v5264 = vld [vmem:[%s684 + $0x309] sm:$0xff]
  %v5265 = vld [vmem:[%s684 + $0x311] sm:$0xff]
  %v5266 = vld [vmem:[%s684 + $0x329] sm:$0xff]
  %v5267 = vld [vmem:[%s684 + $0x331] sm:$0xff]
  %v5268 = vld [vmem:[%s684 + $0x349] sm:$0xff]
  %v5269 = vld [vmem:[%s684 + $0x351] sm:$0xff]
  %v5270 = vld [vmem:[%s684 + $0x369] sm:$0xff]
  %v5271 = vld [vmem:[%s684 + $0x371] sm:$0xff]
  %v5272 = vld [vmem:[%s684 + $0x389] sm:$0xff]
  %v5273 = vld [vmem:[%s684 + $0x391] sm:$0xff]
  %v5274 = vld [vmem:[%s684 + $0x3a9] sm:$0xff]
  %v5275 = vld [vmem:[%s684 + $0x3b1] sm:$0xff]
  %v5276 = vld [vmem:[%s684 + $0x3c9] sm:$0xff]
  %v5277 = vld [vmem:[%s684 + $0x3d1] sm:$0xff]
  %v5278 = vld [vmem:[%s684 + $0x3e9] sm:$0xff]
  %v5279 = vld [vmem:[%s684 + $0x3f1] sm:$0xff]
  %v5280 = vld [vmem:[%s684 + $0x409] sm:$0xff]
  %v5281 = vld [vmem:[%s684 + $0x411] sm:$0xff]
  %v5282 = vld [vmem:[%s684 + $0x429] sm:$0xff]
  %v5283 = vld [vmem:[%s684 + $0x431] sm:$0xff]
  %5348 = vrot.lane.b32.xlu0 %v4772, 8
  %v5349 = vpop.permute.xlu0 %5348
  %5350 = vrot.lane.b32.xlu0 %v4773, 8
  %v5351 = vpop.permute.xlu0 %5350
  %5352 = vrot.lane.b32.xlu0 %v4774, 8
  %v5353 = vpop.permute.xlu0 %5352
  %5354 = vrot.lane.b32.xlu0 %v4775, 8
  %v5355 = vpop.permute.xlu0 %5354
  %5356 = vrot.lane.b32.xlu0 %v4776, 8
  %v5357 = vpop.permute.xlu0 %5356
  %5358 = vrot.lane.b32.xlu0 %v4777, 8
  %v5359 = vpop.permute.xlu0 %5358
  %5360 = vrot.lane.b32.xlu0 %v4778, 8
  %v5361 = vpop.permute.xlu0 %5360
  %5362 = vrot.lane.b32.xlu0 %v4779, 8
  %v5363 = vpop.permute.xlu0 %5362
  %5364 = vrot.lane.b32.xlu0 %v4780, 8
  %v5365 = vpop.permute.xlu0 %5364
  %5366 = vrot.lane.b32.xlu0 %v4781, 8
  %v5367 = vpop.permute.xlu0 %5366
  %5368 = vrot.lane.b32.xlu0 %v4782, 8
  %v5369 = vpop.permute.xlu0 %5368
  %5370 = vrot.lane.b32.xlu0 %v4783, 8
  %v5371 = vpop.permute.xlu0 %5370
  %5372 = vrot.lane.b32.xlu0 %v4784, 8
  %v5373 = vpop.permute.xlu0 %5372
  %5374 = vrot.lane.b32.xlu0 %v4785, 8
  %v5375 = vpop.permute.xlu0 %5374
  %5376 = vrot.lane.b32.xlu0 %v4786, 8
  %v5377 = vpop.permute.xlu0 %5376
  %5378 = vrot.lane.b32.xlu0 %v4787, 8
  %v5379 = vpop.permute.xlu0 %5378
  %5380 = vrot.lane.b32.xlu0 %v4788, 8
  %v5381 = vpop.permute.xlu0 %5380
  %5382 = vrot.lane.b32.xlu0 %v4789, 8
  %v5383 = vpop.permute.xlu0 %5382
  %5384 = vrot.lane.b32.xlu0 %v4790, 8
  %v5385 = vpop.permute.xlu0 %5384
  %5386 = vrot.lane.b32.xlu0 %v4791, 8
  %v5387 = vpop.permute.xlu0 %5386
  %5388 = vrot.lane.b32.xlu0 %v4792, 8
  %v5389 = vpop.permute.xlu0 %5388
  %5390 = vrot.lane.b32.xlu0 %v4793, 8
  %v5391 = vpop.permute.xlu0 %5390
  %5392 = vrot.lane.b32.xlu0 %v4794, 8
  %v5393 = vpop.permute.xlu0 %5392
  %5394 = vrot.lane.b32.xlu0 %v4795, 8
  %v5395 = vpop.permute.xlu0 %5394
  %5396 = vrot.lane.b32.xlu0 %v4796, 8
  %v5397 = vpop.permute.xlu0 %5396
  %5398 = vrot.lane.b32.xlu0 %v4797, 8
  %v5399 = vpop.permute.xlu0 %5398
  %5400 = vrot.lane.b32.xlu0 %v4798, 8
  %v5401 = vpop.permute.xlu0 %5400
  %5402 = vrot.lane.b32.xlu0 %v4799, 8
  %v5403 = vpop.permute.xlu0 %5402
  %5404 = vrot.lane.b32.xlu0 %v4800, 8
  %v5405 = vpop.permute.xlu0 %5404
  %5406 = vrot.lane.b32.xlu0 %v4801, 8
  %v5407 = vpop.permute.xlu0 %5406
  %5408 = vrot.lane.b32.xlu0 %v4802, 8
  %v5409 = vpop.permute.xlu0 %5408
  %5410 = vrot.lane.b32.xlu0 %v4803, 8
  %v5411 = vpop.permute.xlu0 %5410
  %5412 = vrot.lane.b32.xlu0 %v4804, 8
  %v5413 = vpop.permute.xlu0 %5412
  %5414 = vrot.lane.b32.xlu0 %v4805, 8
  %v5415 = vpop.permute.xlu0 %5414
  %5416 = vrot.lane.b32.xlu0 %v4806, 8
  %v5417 = vpop.permute.xlu0 %5416
  %5418 = vrot.lane.b32.xlu0 %v4807, 8
  %v5419 = vpop.permute.xlu0 %5418
  %5420 = vrot.lane.b32.xlu0 %v4808, 8
  %v5421 = vpop.permute.xlu0 %5420
  %5422 = vrot.lane.b32.xlu0 %v4809, 8
  %v5423 = vpop.permute.xlu0 %5422
  %5424 = vrot.lane.b32.xlu0 %v4810, 8
  %v5425 = vpop.permute.xlu0 %5424
  %5426 = vrot.lane.b32.xlu0 %v4811, 8
  %v5427 = vpop.permute.xlu0 %5426
  %5428 = vrot.lane.b32.xlu0 %v4812, 8
  %v5429 = vpop.permute.xlu0 %5428
  %5430 = vrot.lane.b32.xlu0 %v4813, 8
  %v5431 = vpop.permute.xlu0 %5430
  %5432 = vrot.lane.b32.xlu0 %v4814, 8
  %v5433 = vpop.permute.xlu0 %5432
  %5434 = vrot.lane.b32.xlu0 %v4815, 8
  %v5435 = vpop.permute.xlu0 %5434
  %5436 = vrot.lane.b32.xlu0 %v4816, 8
  %v5437 = vpop.permute.xlu0 %5436
  %5438 = vrot.lane.b32.xlu0 %v4817, 8
  %v5439 = vpop.permute.xlu0 %5438
  %5440 = vrot.lane.b32.xlu0 %v4818, 8
  %v5441 = vpop.permute.xlu0 %5440
  %5442 = vrot.lane.b32.xlu0 %v4819, 8
  %v5443 = vpop.permute.xlu0 %5442
  %5444 = vrot.lane.b32.xlu0 %v4820, 8
  %v5445 = vpop.permute.xlu0 %5444
  %5446 = vrot.lane.b32.xlu0 %v4821, 8
  %v5447 = vpop.permute.xlu0 %5446
  %5448 = vrot.lane.b32.xlu0 %v4822, 8
  %v5449 = vpop.permute.xlu0 %5448
  %5450 = vrot.lane.b32.xlu0 %v4823, 8
  %v5451 = vpop.permute.xlu0 %5450
  %5452 = vrot.lane.b32.xlu0 %v4824, 8
  %v5453 = vpop.permute.xlu0 %5452
  %5454 = vrot.lane.b32.xlu0 %v4825, 8
  %v5455 = vpop.permute.xlu0 %5454
  %5456 = vrot.lane.b32.xlu0 %v4826, 8
  %v5457 = vpop.permute.xlu0 %5456
  %5458 = vrot.lane.b32.xlu0 %v4827, 8
  %v5459 = vpop.permute.xlu0 %5458
  %5460 = vrot.lane.b32.xlu0 %v4828, 8
  %v5461 = vpop.permute.xlu0 %5460
  %5462 = vrot.lane.b32.xlu0 %v4829, 8
  %v5463 = vpop.permute.xlu0 %5462
  %5464 = vrot.lane.b32.xlu0 %v4830, 8
  %v5465 = vpop.permute.xlu0 %5464
  %5466 = vrot.lane.b32.xlu0 %v4831, 8
  %v5467 = vpop.permute.xlu0 %5466
  %5468 = vrot.lane.b32.xlu0 %v4832, 8
  %v5469 = vpop.permute.xlu0 %5468
  %5470 = vrot.lane.b32.xlu0 %v4833, 8
  %v5471 = vpop.permute.xlu0 %5470
  %5472 = vrot.lane.b32.xlu0 %v4834, 8
  %v5473 = vpop.permute.xlu0 %5472
  %5474 = vrot.lane.b32.xlu0 %v4835, 8
  %v5475 = vpop.permute.xlu0 %5474
  %5604 = vrot.lane.b32.xlu0 %v4836, 16
  %v5605 = vpop.permute.xlu0 %5604
  %5606 = vrot.lane.b32.xlu0 %v4837, 16
  %v5607 = vpop.permute.xlu0 %5606
  %5608 = vrot.lane.b32.xlu0 %v4838, 16
  %v5609 = vpop.permute.xlu0 %5608
  %5610 = vrot.lane.b32.xlu0 %v4839, 16
  %v5611 = vpop.permute.xlu0 %5610
  %5612 = vrot.lane.b32.xlu0 %v4840, 16
  %v5613 = vpop.permute.xlu0 %5612
  %5614 = vrot.lane.b32.xlu0 %v4841, 16
  %v5615 = vpop.permute.xlu0 %5614
  %5616 = vrot.lane.b32.xlu0 %v4842, 16
  %v5617 = vpop.permute.xlu0 %5616
  %5618 = vrot.lane.b32.xlu0 %v4843, 16
  %v5619 = vpop.permute.xlu0 %5618
  %5620 = vrot.lane.b32.xlu0 %v4844, 16
  %v5621 = vpop.permute.xlu0 %5620
  %5622 = vrot.lane.b32.xlu0 %v4845, 16
  %v5623 = vpop.permute.xlu0 %5622
  %5624 = vrot.lane.b32.xlu0 %v4846, 16
  %v5625 = vpop.permute.xlu0 %5624
  %5626 = vrot.lane.b32.xlu0 %v4847, 16
  %v5627 = vpop.permute.xlu0 %5626
  %5628 = vrot.lane.b32.xlu0 %v4848, 16
  %v5629 = vpop.permute.xlu0 %5628
  %5630 = vrot.lane.b32.xlu0 %v4849, 16
  %v5631 = vpop.permute.xlu0 %5630
  %5632 = vrot.lane.b32.xlu0 %v4850, 16
  %v5633 = vpop.permute.xlu0 %5632
  %5634 = vrot.lane.b32.xlu0 %v4851, 16
  %v5635 = vpop.permute.xlu0 %5634
  %5636 = vrot.lane.b32.xlu0 %v4852, 16
  %v5637 = vpop.permute.xlu0 %5636
  %5638 = vrot.lane.b32.xlu0 %v4853, 16
  %v5639 = vpop.permute.xlu0 %5638
  %5640 = vrot.lane.b32.xlu0 %v4854, 16
  %v5641 = vpop.permute.xlu0 %5640
  %5642 = vrot.lane.b32.xlu0 %v4855, 16
  %v5643 = vpop.permute.xlu0 %5642
  %5644 = vrot.lane.b32.xlu0 %v4856, 16
  %v5645 = vpop.permute.xlu0 %5644
  %5646 = vrot.lane.b32.xlu0 %v4857, 16
  %v5647 = vpop.permute.xlu0 %5646
  %5648 = vrot.lane.b32.xlu0 %v4858, 16
  %v5649 = vpop.permute.xlu0 %5648
  %5650 = vrot.lane.b32.xlu0 %v4859, 16
  %v5651 = vpop.permute.xlu0 %5650
  %5652 = vrot.lane.b32.xlu0 %v4860, 16
  %v5653 = vpop.permute.xlu0 %5652
  %5654 = vrot.lane.b32.xlu0 %v4861, 16
  %v5655 = vpop.permute.xlu0 %5654
  %5656 = vrot.lane.b32.xlu0 %v4862, 16
  %v5657 = vpop.permute.xlu0 %5656
  %5658 = vrot.lane.b32.xlu0 %v4863, 16
  %v5659 = vpop.permute.xlu0 %5658
  %5660 = vrot.lane.b32.xlu0 %v4864, 16
  %v5661 = vpop.permute.xlu0 %5660
  %5662 = vrot.lane.b32.xlu0 %v4865, 16
  %v5663 = vpop.permute.xlu0 %5662
  %5664 = vrot.lane.b32.xlu0 %v4866, 16
  %v5665 = vpop.permute.xlu0 %5664
  %5666 = vrot.lane.b32.xlu0 %v4867, 16
  %v5667 = vpop.permute.xlu0 %5666
  %5668 = vrot.lane.b32.xlu0 %v4868, 16
  %v5669 = vpop.permute.xlu0 %5668
  %5670 = vrot.lane.b32.xlu0 %v4869, 16
  %v5671 = vpop.permute.xlu0 %5670
  %5672 = vrot.lane.b32.xlu0 %v4870, 16
  %v5673 = vpop.permute.xlu0 %5672
  %5674 = vrot.lane.b32.xlu0 %v4871, 16
  %v5675 = vpop.permute.xlu0 %5674
  %5676 = vrot.lane.b32.xlu0 %v4872, 16
  %v5677 = vpop.permute.xlu0 %5676
  %5678 = vrot.lane.b32.xlu0 %v4873, 16
  %v5679 = vpop.permute.xlu0 %5678
  %5680 = vrot.lane.b32.xlu0 %v4874, 16
  %v5681 = vpop.permute.xlu0 %5680
  %5682 = vrot.lane.b32.xlu0 %v4875, 16
  %v5683 = vpop.permute.xlu0 %5682
  %5684 = vrot.lane.b32.xlu0 %v4876, 16
  %v5685 = vpop.permute.xlu0 %5684
  %5686 = vrot.lane.b32.xlu0 %v4877, 16
  %v5687 = vpop.permute.xlu0 %5686
  %5688 = vrot.lane.b32.xlu0 %v4878, 16
  %v5689 = vpop.permute.xlu0 %5688
  %5690 = vrot.lane.b32.xlu0 %v4879, 16
  %v5691 = vpop.permute.xlu0 %5690
  %5692 = vrot.lane.b32.xlu0 %v4880, 16
  %v5693 = vpop.permute.xlu0 %5692
  %5694 = vrot.lane.b32.xlu0 %v4881, 16
  %v5695 = vpop.permute.xlu0 %5694
  %5696 = vrot.lane.b32.xlu0 %v4882, 16
  %v5697 = vpop.permute.xlu0 %5696
  %5698 = vrot.lane.b32.xlu0 %v4883, 16
  %v5699 = vpop.permute.xlu0 %5698
  %5700 = vrot.lane.b32.xlu0 %v4884, 16
  %v5701 = vpop.permute.xlu0 %5700
  %5702 = vrot.lane.b32.xlu0 %v4885, 16
  %v5703 = vpop.permute.xlu0 %5702
  %5704 = vrot.lane.b32.xlu0 %v4886, 16
  %v5705 = vpop.permute.xlu0 %5704
  %5706 = vrot.lane.b32.xlu0 %v4887, 16
  %v5707 = vpop.permute.xlu0 %5706
  %5708 = vrot.lane.b32.xlu0 %v4888, 16
  %v5709 = vpop.permute.xlu0 %5708
  %5710 = vrot.lane.b32.xlu0 %v4889, 16
  %v5711 = vpop.permute.xlu0 %5710
  %5712 = vrot.lane.b32.xlu0 %v4890, 16
  %v5713 = vpop.permute.xlu0 %5712
  %5714 = vrot.lane.b32.xlu0 %v4891, 16
  %v5715 = vpop.permute.xlu0 %5714
  %5716 = vrot.lane.b32.xlu0 %v4892, 16
  %v5717 = vpop.permute.xlu0 %5716
  %5718 = vrot.lane.b32.xlu0 %v4893, 16
  %v5719 = vpop.permute.xlu0 %5718
  %5720 = vrot.lane.b32.xlu0 %v4894, 16
  %v5721 = vpop.permute.xlu0 %5720
  %5722 = vrot.lane.b32.xlu0 %v4895, 16
  %v5723 = vpop.permute.xlu0 %5722
  %5724 = vrot.lane.b32.xlu0 %v4896, 16
  %v5725 = vpop.permute.xlu0 %5724
  %5726 = vrot.lane.b32.xlu0 %v4897, 16
  %v5727 = vpop.permute.xlu0 %5726
  %5728 = vrot.lane.b32.xlu0 %v4898, 16
  %v5729 = vpop.permute.xlu0 %5728
  %5730 = vrot.lane.b32.xlu0 %v4899, 16
  %v5731 = vpop.permute.xlu0 %5730
  %5860 = vrot.lane.b32.xlu0 %v4900, 24
  %v5861 = vpop.permute.xlu0 %5860
  %5862 = vrot.lane.b32.xlu0 %v4901, 24
  %v5863 = vpop.permute.xlu0 %5862
  %5864 = vrot.lane.b32.xlu0 %v4902, 24
  %v5865 = vpop.permute.xlu0 %5864
  %5866 = vrot.lane.b32.xlu0 %v4903, 24
  %v5867 = vpop.permute.xlu0 %5866
  %5868 = vrot.lane.b32.xlu0 %v4904, 24
  %v5869 = vpop.permute.xlu0 %5868
  %5870 = vrot.lane.b32.xlu0 %v4905, 24
  %v5871 = vpop.permute.xlu0 %5870
  %5872 = vrot.lane.b32.xlu0 %v4906, 24
  %v5873 = vpop.permute.xlu0 %5872
  %5874 = vrot.lane.b32.xlu0 %v4907, 24
  %v5875 = vpop.permute.xlu0 %5874
  %5876 = vrot.lane.b32.xlu0 %v4908, 24
  %v5877 = vpop.permute.xlu0 %5876
  %5878 = vrot.lane.b32.xlu0 %v4909, 24
  %v5879 = vpop.permute.xlu0 %5878
  %5880 = vrot.lane.b32.xlu0 %v4910, 24
  %v5881 = vpop.permute.xlu0 %5880
  %5882 = vrot.lane.b32.xlu0 %v4911, 24
  %v5883 = vpop.permute.xlu0 %5882
  %5884 = vrot.lane.b32.xlu0 %v4912, 24
  %v5885 = vpop.permute.xlu0 %5884
  %5886 = vrot.lane.b32.xlu0 %v4913, 24
  %v5887 = vpop.permute.xlu0 %5886
  %5888 = vrot.lane.b32.xlu0 %v4914, 24
  %v5889 = vpop.permute.xlu0 %5888
  %5890 = vrot.lane.b32.xlu0 %v4915, 24
  %v5891 = vpop.permute.xlu0 %5890
  %5892 = vrot.lane.b32.xlu0 %v4916, 24
  %v5893 = vpop.permute.xlu0 %5892
  %5894 = vrot.lane.b32.xlu0 %v4917, 24
  %v5895 = vpop.permute.xlu0 %5894
  %5896 = vrot.lane.b32.xlu0 %v4918, 24
  %v5897 = vpop.permute.xlu0 %5896
  %5898 = vrot.lane.b32.xlu0 %v4919, 24
  %v5899 = vpop.permute.xlu0 %5898
  %5900 = vrot.lane.b32.xlu0 %v4920, 24
  %v5901 = vpop.permute.xlu0 %5900
  %5902 = vrot.lane.b32.xlu0 %v4921, 24
  %v5903 = vpop.permute.xlu0 %5902
  %5904 = vrot.lane.b32.xlu0 %v4922, 24
  %v5905 = vpop.permute.xlu0 %5904
  %5906 = vrot.lane.b32.xlu0 %v4923, 24
  %v5907 = vpop.permute.xlu0 %5906
  %5908 = vrot.lane.b32.xlu0 %v4924, 24
  %v5909 = vpop.permute.xlu0 %5908
  %5910 = vrot.lane.b32.xlu0 %v4925, 24
  %v5911 = vpop.permute.xlu0 %5910
  %5912 = vrot.lane.b32.xlu0 %v4926, 24
  %v5913 = vpop.permute.xlu0 %5912
  %5914 = vrot.lane.b32.xlu0 %v4927, 24
  %v5915 = vpop.permute.xlu0 %5914
  %5916 = vrot.lane.b32.xlu0 %v4928, 24
  %v5917 = vpop.permute.xlu0 %5916
  %5918 = vrot.lane.b32.xlu0 %v4929, 24
  %v5919 = vpop.permute.xlu0 %5918
  %5920 = vrot.lane.b32.xlu0 %v4930, 24
  %v5921 = vpop.permute.xlu0 %5920
  %5922 = vrot.lane.b32.xlu0 %v4931, 24
  %v5923 = vpop.permute.xlu0 %5922
  %5924 = vrot.lane.b32.xlu0 %v4932, 24
  %v5925 = vpop.permute.xlu0 %5924
  %5926 = vrot.lane.b32.xlu0 %v4933, 24
  %v5927 = vpop.permute.xlu0 %5926
  %5928 = vrot.lane.b32.xlu0 %v4934, 24
  %v5929 = vpop.permute.xlu0 %5928
  %5930 = vrot.lane.b32.xlu0 %v4935, 24
  %v5931 = vpop.permute.xlu0 %5930
  %5932 = vrot.lane.b32.xlu0 %v4936, 24
  %v5933 = vpop.permute.xlu0 %5932
  %5934 = vrot.lane.b32.xlu0 %v4937, 24
  %v5935 = vpop.permute.xlu0 %5934
  %5936 = vrot.lane.b32.xlu0 %v4938, 24
  %v5937 = vpop.permute.xlu0 %5936
  %5938 = vrot.lane.b32.xlu0 %v4939, 24
  %v5939 = vpop.permute.xlu0 %5938
  %5940 = vrot.lane.b32.xlu0 %v4940, 24
  %v5941 = vpop.permute.xlu0 %5940
  %5942 = vrot.lane.b32.xlu0 %v4941, 24
  %v5943 = vpop.permute.xlu0 %5942
  %5944 = vrot.lane.b32.xlu0 %v4942, 24
  %v5945 = vpop.permute.xlu0 %5944
  %5946 = vrot.lane.b32.xlu0 %v4943, 24
  %v5947 = vpop.permute.xlu0 %5946
  %5948 = vrot.lane.b32.xlu0 %v4944, 24
  %v5949 = vpop.permute.xlu0 %5948
  %5950 = vrot.lane.b32.xlu0 %v4945, 24
  %v5951 = vpop.permute.xlu0 %5950
  %5952 = vrot.lane.b32.xlu0 %v4946, 24
  %v5953 = vpop.permute.xlu0 %5952
  %5954 = vrot.lane.b32.xlu0 %v4947, 24
  %v5955 = vpop.permute.xlu0 %5954
  %5956 = vrot.lane.b32.xlu0 %v4948, 24
  %v5957 = vpop.permute.xlu0 %5956
  %5958 = vrot.lane.b32.xlu0 %v4949, 24
  %v5959 = vpop.permute.xlu0 %5958
  %5960 = vrot.lane.b32.xlu0 %v4950, 24
  %v5961 = vpop.permute.xlu0 %5960
  %5962 = vrot.lane.b32.xlu0 %v4951, 24
  %v5963 = vpop.permute.xlu0 %5962
  %5964 = vrot.lane.b32.xlu0 %v4952, 24
  %v5965 = vpop.permute.xlu0 %5964
  %5966 = vrot.lane.b32.xlu0 %v4953, 24
  %v5967 = vpop.permute.xlu0 %5966
  %5968 = vrot.lane.b32.xlu0 %v4954, 24
  %v5969 = vpop.permute.xlu0 %5968
  %5970 = vrot.lane.b32.xlu0 %v4955, 24
  %v5971 = vpop.permute.xlu0 %5970
  %5972 = vrot.lane.b32.xlu0 %v4956, 24
  %v5973 = vpop.permute.xlu0 %5972
  %5974 = vrot.lane.b32.xlu0 %v4957, 24
  %v5975 = vpop.permute.xlu0 %5974
  %5976 = vrot.lane.b32.xlu0 %v4958, 24
  %v5977 = vpop.permute.xlu0 %5976
  %5978 = vrot.lane.b32.xlu0 %v4959, 24
  %v5979 = vpop.permute.xlu0 %5978
  %5980 = vrot.lane.b32.xlu0 %v4960, 24
  %v5981 = vpop.permute.xlu0 %5980
  %5982 = vrot.lane.b32.xlu0 %v4961, 24
  %v5983 = vpop.permute.xlu0 %5982
  %5984 = vrot.lane.b32.xlu0 %v4962, 24
  %v5985 = vpop.permute.xlu0 %5984
  %5986 = vrot.lane.b32.xlu0 %v4963, 24
  %v5987 = vpop.permute.xlu0 %5986
  %6116 = vrot.lane.b32.xlu0 %v4964, 32
  %v6117 = vpop.permute.xlu0 %6116
  %6118 = vrot.lane.b32.xlu0 %v4965, 32
  %v6119 = vpop.permute.xlu0 %6118
  %6120 = vrot.lane.b32.xlu0 %v4966, 32
  %v6121 = vpop.permute.xlu0 %6120
  %6122 = vrot.lane.b32.xlu0 %v4967, 32
  %v6123 = vpop.permute.xlu0 %6122
  %6124 = vrot.lane.b32.xlu0 %v4968, 32
  %v6125 = vpop.permute.xlu0 %6124
  %6126 = vrot.lane.b32.xlu0 %v4969, 32
  %v6127 = vpop.permute.xlu0 %6126
  %6128 = vrot.lane.b32.xlu0 %v4970, 32
  %v6129 = vpop.permute.xlu0 %6128
  %6130 = vrot.lane.b32.xlu0 %v4971, 32
  %v6131 = vpop.permute.xlu0 %6130
  %6132 = vrot.lane.b32.xlu0 %v4972, 32
  %v6133 = vpop.permute.xlu0 %6132
  %6134 = vrot.lane.b32.xlu0 %v4973, 32
  %v6135 = vpop.permute.xlu0 %6134
  %6136 = vrot.lane.b32.xlu0 %v4974, 32
  %v6137 = vpop.permute.xlu0 %6136
  %6138 = vrot.lane.b32.xlu0 %v4975, 32
  %v6139 = vpop.permute.xlu0 %6138
  %6140 = vrot.lane.b32.xlu0 %v4976, 32
  %v6141 = vpop.permute.xlu0 %6140
  %6142 = vrot.lane.b32.xlu0 %v4977, 32
  %v6143 = vpop.permute.xlu0 %6142
  %6144 = vrot.lane.b32.xlu0 %v4978, 32
  %v6145 = vpop.permute.xlu0 %6144
  %6146 = vrot.lane.b32.xlu0 %v4979, 32
  %v6147 = vpop.permute.xlu0 %6146
  %6148 = vrot.lane.b32.xlu0 %v4980, 32
  %v6149 = vpop.permute.xlu0 %6148
  %6150 = vrot.lane.b32.xlu0 %v4981, 32
  %v6151 = vpop.permute.xlu0 %6150
  %6152 = vrot.lane.b32.xlu0 %v4982, 32
  %v6153 = vpop.permute.xlu0 %6152
  %6154 = vrot.lane.b32.xlu0 %v4983, 32
  %v6155 = vpop.permute.xlu0 %6154
  %6156 = vrot.lane.b32.xlu0 %v4984, 32
  %v6157 = vpop.permute.xlu0 %6156
  %6158 = vrot.lane.b32.xlu0 %v4985, 32
  %v6159 = vpop.permute.xlu0 %6158
  %6160 = vrot.lane.b32.xlu0 %v4986, 32
  %v6161 = vpop.permute.xlu0 %6160
  %6162 = vrot.lane.b32.xlu0 %v4987, 32
  %v6163 = vpop.permute.xlu0 %6162
  %6164 = vrot.lane.b32.xlu0 %v4988, 32
  %v6165 = vpop.permute.xlu0 %6164
  %6166 = vrot.lane.b32.xlu0 %v4989, 32
  %v6167 = vpop.permute.xlu0 %6166
  %6168 = vrot.lane.b32.xlu0 %v4990, 32
  %v6169 = vpop.permute.xlu0 %6168
  %6170 = vrot.lane.b32.xlu0 %v4991, 32
  %v6171 = vpop.permute.xlu0 %6170
  %6172 = vrot.lane.b32.xlu0 %v4992, 32
  %v6173 = vpop.permute.xlu0 %6172
  %6174 = vrot.lane.b32.xlu0 %v4993, 32
  %v6175 = vpop.permute.xlu0 %6174
  %6176 = vrot.lane.b32.xlu0 %v4994, 32
  %v6177 = vpop.permute.xlu0 %6176
  %6178 = vrot.lane.b32.xlu0 %v4995, 32
  %v6179 = vpop.permute.xlu0 %6178
  %6180 = vrot.lane.b32.xlu0 %v4996, 32
  %v6181 = vpop.permute.xlu0 %6180
  %6182 = vrot.lane.b32.xlu0 %v4997, 32
  %v6183 = vpop.permute.xlu0 %6182
  %6184 = vrot.lane.b32.xlu0 %v4998, 32
  %v6185 = vpop.permute.xlu0 %6184
  %6186 = vrot.lane.b32.xlu0 %v4999, 32
  %v6187 = vpop.permute.xlu0 %6186
  %6188 = vrot.lane.b32.xlu0 %v5000, 32
  %v6189 = vpop.permute.xlu0 %6188
  %6190 = vrot.lane.b32.xlu0 %v5001, 32
  %v6191 = vpop.permute.xlu0 %6190
  %6192 = vrot.lane.b32.xlu0 %v5002, 32
  %v6193 = vpop.permute.xlu0 %6192
  %6194 = vrot.lane.b32.xlu0 %v5003, 32
  %v6195 = vpop.permute.xlu0 %6194
  %6196 = vrot.lane.b32.xlu0 %v5004, 32
  %v6197 = vpop.permute.xlu0 %6196
  %6198 = vrot.lane.b32.xlu0 %v5005, 32
  %v6199 = vpop.permute.xlu0 %6198
  %6200 = vrot.lane.b32.xlu0 %v5006, 32
  %v6201 = vpop.permute.xlu0 %6200
  %6202 = vrot.lane.b32.xlu0 %v5007, 32
  %v6203 = vpop.permute.xlu0 %6202
  %6204 = vrot.lane.b32.xlu0 %v5008, 32
  %v6205 = vpop.permute.xlu0 %6204
  %6206 = vrot.lane.b32.xlu0 %v5009, 32
  %v6207 = vpop.permute.xlu0 %6206
  %6208 = vrot.lane.b32.xlu0 %v5010, 32
  %v6209 = vpop.permute.xlu0 %6208
  %6210 = vrot.lane.b32.xlu0 %v5011, 32
  %v6211 = vpop.permute.xlu0 %6210
  %6212 = vrot.lane.b32.xlu0 %v5012, 32
  %v6213 = vpop.permute.xlu0 %6212
  %6214 = vrot.lane.b32.xlu0 %v5013, 32
  %v6215 = vpop.permute.xlu0 %6214
  %6216 = vrot.lane.b32.xlu0 %v5014, 32
  %v6217 = vpop.permute.xlu0 %6216
  %6218 = vrot.lane.b32.xlu0 %v5015, 32
  %v6219 = vpop.permute.xlu0 %6218
  %6220 = vrot.lane.b32.xlu0 %v5016, 32
  %v6221 = vpop.permute.xlu0 %6220
  %6222 = vrot.lane.b32.xlu0 %v5017, 32
  %v6223 = vpop.permute.xlu0 %6222
  %6224 = vrot.lane.b32.xlu0 %v5018, 32
  %v6225 = vpop.permute.xlu0 %6224
  %6226 = vrot.lane.b32.xlu0 %v5019, 32
  %v6227 = vpop.permute.xlu0 %6226
  %6228 = vrot.lane.b32.xlu0 %v5020, 32
  %v6229 = vpop.permute.xlu0 %6228
  %6230 = vrot.lane.b32.xlu0 %v5021, 32
  %v6231 = vpop.permute.xlu0 %6230
  %6232 = vrot.lane.b32.xlu0 %v5022, 32
  %v6233 = vpop.permute.xlu0 %6232
  %6234 = vrot.lane.b32.xlu0 %v5023, 32
  %v6235 = vpop.permute.xlu0 %6234
  %6236 = vrot.lane.b32.xlu0 %v5024, 32
  %v6237 = vpop.permute.xlu0 %6236
  %6238 = vrot.lane.b32.xlu0 %v5025, 32
  %v6239 = vpop.permute.xlu0 %6238
  %6240 = vrot.lane.b32.xlu0 %v5026, 32
  %v6241 = vpop.permute.xlu0 %6240
  %6242 = vrot.lane.b32.xlu0 %v5027, 32
  %v6243 = vpop.permute.xlu0 %6242
  %6372 = vrot.lane.b32.xlu0 %v5028, 40
  %v6373 = vpop.permute.xlu0 %6372
  %6374 = vrot.lane.b32.xlu0 %v5029, 40
  %v6375 = vpop.permute.xlu0 %6374
  %6376 = vrot.lane.b32.xlu0 %v5030, 40
  %v6377 = vpop.permute.xlu0 %6376
  %6378 = vrot.lane.b32.xlu0 %v5031, 40
  %v6379 = vpop.permute.xlu0 %6378
  %6380 = vrot.lane.b32.xlu0 %v5032, 40
  %v6381 = vpop.permute.xlu0 %6380
  %6382 = vrot.lane.b32.xlu0 %v5033, 40
  %v6383 = vpop.permute.xlu0 %6382
  %6384 = vrot.lane.b32.xlu0 %v5034, 40
  %v6385 = vpop.permute.xlu0 %6384
  %6386 = vrot.lane.b32.xlu0 %v5035, 40
  %v6387 = vpop.permute.xlu0 %6386
  %6388 = vrot.lane.b32.xlu0 %v5036, 40
  %v6389 = vpop.permute.xlu0 %6388
  %6390 = vrot.lane.b32.xlu0 %v5037, 40
  %v6391 = vpop.permute.xlu0 %6390
  %6392 = vrot.lane.b32.xlu0 %v5038, 40
  %v6393 = vpop.permute.xlu0 %6392
  %6394 = vrot.lane.b32.xlu0 %v5039, 40
  %v6395 = vpop.permute.xlu0 %6394
  %6396 = vrot.lane.b32.xlu0 %v5040, 40
  %v6397 = vpop.permute.xlu0 %6396
  %6398 = vrot.lane.b32.xlu0 %v5041, 40
  %v6399 = vpop.permute.xlu0 %6398
  %6400 = vrot.lane.b32.xlu0 %v5042, 40
  %v6401 = vpop.permute.xlu0 %6400
  %6402 = vrot.lane.b32.xlu0 %v5043, 40
  %v6403 = vpop.permute.xlu0 %6402
  %6404 = vrot.lane.b32.xlu0 %v5044, 40
  %v6405 = vpop.permute.xlu0 %6404
  %6406 = vrot.lane.b32.xlu0 %v5045, 40
  %v6407 = vpop.permute.xlu0 %6406
  %6408 = vrot.lane.b32.xlu0 %v5046, 40
  %v6409 = vpop.permute.xlu0 %6408
  %6410 = vrot.lane.b32.xlu0 %v5047, 40
  %v6411 = vpop.permute.xlu0 %6410
  %6412 = vrot.lane.b32.xlu0 %v5048, 40
  %v6413 = vpop.permute.xlu0 %6412
  %6414 = vrot.lane.b32.xlu0 %v5049, 40
  %v6415 = vpop.permute.xlu0 %6414
  %6416 = vrot.lane.b32.xlu0 %v5050, 40
  %v6417 = vpop.permute.xlu0 %6416
  %6418 = vrot.lane.b32.xlu0 %v5051, 40
  %v6419 = vpop.permute.xlu0 %6418
  %6420 = vrot.lane.b32.xlu0 %v5052, 40
  %v6421 = vpop.permute.xlu0 %6420
  %6422 = vrot.lane.b32.xlu0 %v5053, 40
  %v6423 = vpop.permute.xlu0 %6422
  %6424 = vrot.lane.b32.xlu0 %v5054, 40
  %v6425 = vpop.permute.xlu0 %6424
  %6426 = vrot.lane.b32.xlu0 %v5055, 40
  %v6427 = vpop.permute.xlu0 %6426
  %6428 = vrot.lane.b32.xlu0 %v5056, 40
  %v6429 = vpop.permute.xlu0 %6428
  %6430 = vrot.lane.b32.xlu0 %v5057, 40
  %v6431 = vpop.permute.xlu0 %6430
  %6432 = vrot.lane.b32.xlu0 %v5058, 40
  %v6433 = vpop.permute.xlu0 %6432
  %6434 = vrot.lane.b32.xlu0 %v5059, 40
  %v6435 = vpop.permute.xlu0 %6434
  %6436 = vrot.lane.b32.xlu0 %v5060, 40
  %v6437 = vpop.permute.xlu0 %6436
  %6438 = vrot.lane.b32.xlu0 %v5061, 40
  %v6439 = vpop.permute.xlu0 %6438
  %6440 = vrot.lane.b32.xlu0 %v5062, 40
  %v6441 = vpop.permute.xlu0 %6440
  %6442 = vrot.lane.b32.xlu0 %v5063, 40
  %v6443 = vpop.permute.xlu0 %6442
  %6444 = vrot.lane.b32.xlu0 %v5064, 40
  %v6445 = vpop.permute.xlu0 %6444
  %6446 = vrot.lane.b32.xlu0 %v5065, 40
  %v6447 = vpop.permute.xlu0 %6446
  %6448 = vrot.lane.b32.xlu0 %v5066, 40
  %v6449 = vpop.permute.xlu0 %6448
  %6450 = vrot.lane.b32.xlu0 %v5067, 40
  %v6451 = vpop.permute.xlu0 %6450
  %6452 = vrot.lane.b32.xlu0 %v5068, 40
  %v6453 = vpop.permute.xlu0 %6452
  %6454 = vrot.lane.b32.xlu0 %v5069, 40
  %v6455 = vpop.permute.xlu0 %6454
  %6456 = vrot.lane.b32.xlu0 %v5070, 40
  %v6457 = vpop.permute.xlu0 %6456
  %6458 = vrot.lane.b32.xlu0 %v5071, 40
  %v6459 = vpop.permute.xlu0 %6458
  %6460 = vrot.lane.b32.xlu0 %v5072, 40
  %v6461 = vpop.permute.xlu0 %6460
  %6462 = vrot.lane.b32.xlu0 %v5073, 40
  %v6463 = vpop.permute.xlu0 %6462
  %6464 = vrot.lane.b32.xlu0 %v5074, 40
  %v6465 = vpop.permute.xlu0 %6464
  %6466 = vrot.lane.b32.xlu0 %v5075, 40
  %v6467 = vpop.permute.xlu0 %6466
  %6468 = vrot.lane.b32.xlu0 %v5076, 40
  %v6469 = vpop.permute.xlu0 %6468
  %6470 = vrot.lane.b32.xlu0 %v5077, 40
  %v6471 = vpop.permute.xlu0 %6470
  %6472 = vrot.lane.b32.xlu0 %v5078, 40
  %v6473 = vpop.permute.xlu0 %6472
  %6474 = vrot.lane.b32.xlu0 %v5079, 40
  %v6475 = vpop.permute.xlu0 %6474
  %6476 = vrot.lane.b32.xlu0 %v5080, 40
  %v6477 = vpop.permute.xlu0 %6476
  %6478 = vrot.lane.b32.xlu0 %v5081, 40
  %v6479 = vpop.permute.xlu0 %6478
  %6480 = vrot.lane.b32.xlu0 %v5082, 40
  %v6481 = vpop.permute.xlu0 %6480
  %6482 = vrot.lane.b32.xlu0 %v5083, 40
  %v6483 = vpop.permute.xlu0 %6482
  %6484 = vrot.lane.b32.xlu0 %v5084, 40
  %v6485 = vpop.permute.xlu0 %6484
  %6486 = vrot.lane.b32.xlu0 %v5085, 40
  %v6487 = vpop.permute.xlu0 %6486
  %6488 = vrot.lane.b32.xlu0 %v5086, 40
  %v6489 = vpop.permute.xlu0 %6488
  %6490 = vrot.lane.b32.xlu0 %v5087, 40
  %v6491 = vpop.permute.xlu0 %6490
  %6492 = vrot.lane.b32.xlu0 %v5088, 40
  %v6493 = vpop.permute.xlu0 %6492
  %6494 = vrot.lane.b32.xlu0 %v5089, 40
  %v6495 = vpop.permute.xlu0 %6494
  %6496 = vrot.lane.b32.xlu0 %v5090, 40
  %v6497 = vpop.permute.xlu0 %6496
  %6498 = vrot.lane.b32.xlu0 %v5091, 40
  %v6499 = vpop.permute.xlu0 %6498
  %6628 = vrot.lane.b32.xlu0 %v5092, 48
  %v6629 = vpop.permute.xlu0 %6628
  %6630 = vrot.lane.b32.xlu0 %v5093, 48
  %v6631 = vpop.permute.xlu0 %6630
  %6632 = vrot.lane.b32.xlu0 %v5094, 48
  %v6633 = vpop.permute.xlu0 %6632
  %6634 = vrot.lane.b32.xlu0 %v5095, 48
  %v6635 = vpop.permute.xlu0 %6634
  %6636 = vrot.lane.b32.xlu0 %v5096, 48
  %v6637 = vpop.permute.xlu0 %6636
  %6638 = vrot.lane.b32.xlu0 %v5097, 48
  %v6639 = vpop.permute.xlu0 %6638
  %6640 = vrot.lane.b32.xlu0 %v5098, 48
  %v6641 = vpop.permute.xlu0 %6640
  %6642 = vrot.lane.b32.xlu0 %v5099, 48
  %v6643 = vpop.permute.xlu0 %6642
  %6644 = vrot.lane.b32.xlu0 %v5100, 48
  %v6645 = vpop.permute.xlu0 %6644
  %6646 = vrot.lane.b32.xlu0 %v5101, 48
  %v6647 = vpop.permute.xlu0 %6646
  %6648 = vrot.lane.b32.xlu0 %v5102, 48
  %v6649 = vpop.permute.xlu0 %6648
  %6650 = vrot.lane.b32.xlu0 %v5103, 48
  %v6651 = vpop.permute.xlu0 %6650
  %6652 = vrot.lane.b32.xlu0 %v5104, 48
  %v6653 = vpop.permute.xlu0 %6652
  %6654 = vrot.lane.b32.xlu0 %v5105, 48
  %v6655 = vpop.permute.xlu0 %6654
  %6656 = vrot.lane.b32.xlu0 %v5106, 48
  %v6657 = vpop.permute.xlu0 %6656
  %6658 = vrot.lane.b32.xlu0 %v5107, 48
  %v6659 = vpop.permute.xlu0 %6658
  %6660 = vrot.lane.b32.xlu0 %v5108, 48
  %v6661 = vpop.permute.xlu0 %6660
  %6662 = vrot.lane.b32.xlu0 %v5109, 48
  %v6663 = vpop.permute.xlu0 %6662
  %6664 = vrot.lane.b32.xlu0 %v5110, 48
  %v6665 = vpop.permute.xlu0 %6664
  %6666 = vrot.lane.b32.xlu0 %v5111, 48
  %v6667 = vpop.permute.xlu0 %6666
  %6668 = vrot.lane.b32.xlu0 %v5112, 48
  %v6669 = vpop.permute.xlu0 %6668
  %6670 = vrot.lane.b32.xlu0 %v5113, 48
  %v6671 = vpop.permute.xlu0 %6670
  %6672 = vrot.lane.b32.xlu0 %v5114, 48
  %v6673 = vpop.permute.xlu0 %6672
  %6674 = vrot.lane.b32.xlu0 %v5115, 48
  %v6675 = vpop.permute.xlu0 %6674
  %6676 = vrot.lane.b32.xlu0 %v5116, 48
  %v6677 = vpop.permute.xlu0 %6676
  %6678 = vrot.lane.b32.xlu0 %v5117, 48
  %v6679 = vpop.permute.xlu0 %6678
  %6680 = vrot.lane.b32.xlu0 %v5118, 48
  %v6681 = vpop.permute.xlu0 %6680
  %6682 = vrot.lane.b32.xlu0 %v5119, 48
  %v6683 = vpop.permute.xlu0 %6682
  %6684 = vrot.lane.b32.xlu0 %v5120, 48
  %v6685 = vpop.permute.xlu0 %6684
  %6686 = vrot.lane.b32.xlu0 %v5121, 48
  %v6687 = vpop.permute.xlu0 %6686
  %6688 = vrot.lane.b32.xlu0 %v5122, 48
  %v6689 = vpop.permute.xlu0 %6688
  %6690 = vrot.lane.b32.xlu0 %v5123, 48
  %v6691 = vpop.permute.xlu0 %6690
  %6692 = vrot.lane.b32.xlu0 %v5124, 48
  %v6693 = vpop.permute.xlu0 %6692
  %6694 = vrot.lane.b32.xlu0 %v5125, 48
  %v6695 = vpop.permute.xlu0 %6694
  %6696 = vrot.lane.b32.xlu0 %v5126, 48
  %v6697 = vpop.permute.xlu0 %6696
  %6698 = vrot.lane.b32.xlu0 %v5127, 48
  %v6699 = vpop.permute.xlu0 %6698
  %6700 = vrot.lane.b32.xlu0 %v5128, 48
  %v6701 = vpop.permute.xlu0 %6700
  %6702 = vrot.lane.b32.xlu0 %v5129, 48
  %v6703 = vpop.permute.xlu0 %6702
  %6704 = vrot.lane.b32.xlu0 %v5130, 48
  %v6705 = vpop.permute.xlu0 %6704
  %6706 = vrot.lane.b32.xlu0 %v5131, 48
  %v6707 = vpop.permute.xlu0 %6706
  %6708 = vrot.lane.b32.xlu0 %v5132, 48
  %v6709 = vpop.permute.xlu0 %6708
  %6710 = vrot.lane.b32.xlu0 %v5133, 48
  %v6711 = vpop.permute.xlu0 %6710
  %6712 = vrot.lane.b32.xlu0 %v5134, 48
  %v6713 = vpop.permute.xlu0 %6712
  %6714 = vrot.lane.b32.xlu0 %v5135, 48
  %v6715 = vpop.permute.xlu0 %6714
  %6716 = vrot.lane.b32.xlu0 %v5136, 48
  %v6717 = vpop.permute.xlu0 %6716
  %6718 = vrot.lane.b32.xlu0 %v5137, 48
  %v6719 = vpop.permute.xlu0 %6718
  %6720 = vrot.lane.b32.xlu0 %v5138, 48
  %v6721 = vpop.permute.xlu0 %6720
  %6722 = vrot.lane.b32.xlu0 %v5139, 48
  %v6723 = vpop.permute.xlu0 %6722
  %6724 = vrot.lane.b32.xlu0 %v5140, 48
  %v6725 = vpop.permute.xlu0 %6724
  %6726 = vrot.lane.b32.xlu0 %v5141, 48
  %v6727 = vpop.permute.xlu0 %6726
  %6728 = vrot.lane.b32.xlu0 %v5142, 48
  %v6729 = vpop.permute.xlu0 %6728
  %6730 = vrot.lane.b32.xlu0 %v5143, 48
  %v6731 = vpop.permute.xlu0 %6730
  %6732 = vrot.lane.b32.xlu0 %v5144, 48
  %v6733 = vpop.permute.xlu0 %6732
  %6734 = vrot.lane.b32.xlu0 %v5145, 48
  %v6735 = vpop.permute.xlu0 %6734
  %6736 = vrot.lane.b32.xlu0 %v5146, 48
  %v6737 = vpop.permute.xlu0 %6736
  %6738 = vrot.lane.b32.xlu0 %v5147, 48
  %v6739 = vpop.permute.xlu0 %6738
  %6740 = vrot.lane.b32.xlu0 %v5148, 48
  %v6741 = vpop.permute.xlu0 %6740
  %6742 = vrot.lane.b32.xlu0 %v5149, 48
  %v6743 = vpop.permute.xlu0 %6742
  %6744 = vrot.lane.b32.xlu0 %v5150, 48
  %v6745 = vpop.permute.xlu0 %6744
  %6746 = vrot.lane.b32.xlu0 %v5151, 48
  %v6747 = vpop.permute.xlu0 %6746
  %6748 = vrot.lane.b32.xlu0 %v5152, 48
  %v6749 = vpop.permute.xlu0 %6748
  %6750 = vrot.lane.b32.xlu0 %v5153, 48
  %v6751 = vpop.permute.xlu0 %6750
  %6752 = vrot.lane.b32.xlu0 %v5154, 48
  %v6753 = vpop.permute.xlu0 %6752
  %6754 = vrot.lane.b32.xlu0 %v5155, 48
  %v6755 = vpop.permute.xlu0 %6754
  %6884 = vrot.lane.b32.xlu0 %v5156, 56
  %v6885 = vpop.permute.xlu0 %6884
  %6886 = vrot.lane.b32.xlu0 %v5157, 56
  %v6887 = vpop.permute.xlu0 %6886
  %6888 = vrot.lane.b32.xlu0 %v5158, 56
  %v6889 = vpop.permute.xlu0 %6888
  %6890 = vrot.lane.b32.xlu0 %v5159, 56
  %v6891 = vpop.permute.xlu0 %6890
  %6892 = vrot.lane.b32.xlu0 %v5160, 56
  %v6893 = vpop.permute.xlu0 %6892
  %6894 = vrot.lane.b32.xlu0 %v5161, 56
  %v6895 = vpop.permute.xlu0 %6894
  %6896 = vrot.lane.b32.xlu0 %v5162, 56
  %v6897 = vpop.permute.xlu0 %6896
  %6898 = vrot.lane.b32.xlu0 %v5163, 56
  %v6899 = vpop.permute.xlu0 %6898
  %6900 = vrot.lane.b32.xlu0 %v5164, 56
  %v6901 = vpop.permute.xlu0 %6900
  %6902 = vrot.lane.b32.xlu0 %v5165, 56
  %v6903 = vpop.permute.xlu0 %6902
  %6904 = vrot.lane.b32.xlu0 %v5166, 56
  %v6905 = vpop.permute.xlu0 %6904
  %6906 = vrot.lane.b32.xlu0 %v5167, 56
  %v6907 = vpop.permute.xlu0 %6906
  %6908 = vrot.lane.b32.xlu0 %v5168, 56
  %v6909 = vpop.permute.xlu0 %6908
  %6910 = vrot.lane.b32.xlu0 %v5169, 56
  %v6911 = vpop.permute.xlu0 %6910
  %6912 = vrot.lane.b32.xlu0 %v5170, 56
  %v6913 = vpop.permute.xlu0 %6912
  %6914 = vrot.lane.b32.xlu0 %v5171, 56
  %v6915 = vpop.permute.xlu0 %6914
  %6916 = vrot.lane.b32.xlu0 %v5172, 56
  %v6917 = vpop.permute.xlu0 %6916
  %6918 = vrot.lane.b32.xlu0 %v5173, 56
  %v6919 = vpop.permute.xlu0 %6918
  %6920 = vrot.lane.b32.xlu0 %v5174, 56
  %v6921 = vpop.permute.xlu0 %6920
  %6922 = vrot.lane.b32.xlu0 %v5175, 56
  %v6923 = vpop.permute.xlu0 %6922
  %6924 = vrot.lane.b32.xlu0 %v5176, 56
  %v6925 = vpop.permute.xlu0 %6924
  %6926 = vrot.lane.b32.xlu0 %v5177, 56
  %v6927 = vpop.permute.xlu0 %6926
  %6928 = vrot.lane.b32.xlu0 %v5178, 56
  %v6929 = vpop.permute.xlu0 %6928
  %6930 = vrot.lane.b32.xlu0 %v5179, 56
  %v6931 = vpop.permute.xlu0 %6930
  %6932 = vrot.lane.b32.xlu0 %v5180, 56
  %v6933 = vpop.permute.xlu0 %6932
  %6934 = vrot.lane.b32.xlu0 %v5181, 56
  %v6935 = vpop.permute.xlu0 %6934
  %6936 = vrot.lane.b32.xlu0 %v5182, 56
  %v6937 = vpop.permute.xlu0 %6936
  %6938 = vrot.lane.b32.xlu0 %v5183, 56
  %v6939 = vpop.permute.xlu0 %6938
  %6940 = vrot.lane.b32.xlu0 %v5184, 56
  %v6941 = vpop.permute.xlu0 %6940
  %6942 = vrot.lane.b32.xlu0 %v5185, 56
  %v6943 = vpop.permute.xlu0 %6942
  %6944 = vrot.lane.b32.xlu0 %v5186, 56
  %v6945 = vpop.permute.xlu0 %6944
  %6946 = vrot.lane.b32.xlu0 %v5187, 56
  %v6947 = vpop.permute.xlu0 %6946
  %6948 = vrot.lane.b32.xlu0 %v5188, 56
  %v6949 = vpop.permute.xlu0 %6948
  %6950 = vrot.lane.b32.xlu0 %v5189, 56
  %v6951 = vpop.permute.xlu0 %6950
  %6952 = vrot.lane.b32.xlu0 %v5190, 56
  %v6953 = vpop.permute.xlu0 %6952
  %6954 = vrot.lane.b32.xlu0 %v5191, 56
  %v6955 = vpop.permute.xlu0 %6954
  %6956 = vrot.lane.b32.xlu0 %v5192, 56
  %v6957 = vpop.permute.xlu0 %6956
  %6958 = vrot.lane.b32.xlu0 %v5193, 56
  %v6959 = vpop.permute.xlu0 %6958
  %6960 = vrot.lane.b32.xlu0 %v5194, 56
  %v6961 = vpop.permute.xlu0 %6960
  %6962 = vrot.lane.b32.xlu0 %v5195, 56
  %v6963 = vpop.permute.xlu0 %6962
  %6964 = vrot.lane.b32.xlu0 %v5196, 56
  %v6965 = vpop.permute.xlu0 %6964
  %6966 = vrot.lane.b32.xlu0 %v5197, 56
  %v6967 = vpop.permute.xlu0 %6966
  %6968 = vrot.lane.b32.xlu0 %v5198, 56
  %v6969 = vpop.permute.xlu0 %6968
  %6970 = vrot.lane.b32.xlu0 %v5199, 56
  %v6971 = vpop.permute.xlu0 %6970
  %6972 = vrot.lane.b32.xlu0 %v5200, 56
  %v6973 = vpop.permute.xlu0 %6972
  %6974 = vrot.lane.b32.xlu0 %v5201, 56
  %v6975 = vpop.permute.xlu0 %6974
  %6976 = vrot.lane.b32.xlu0 %v5202, 56
  %v6977 = vpop.permute.xlu0 %6976
  %6978 = vrot.lane.b32.xlu0 %v5203, 56
  %v6979 = vpop.permute.xlu0 %6978
  %6980 = vrot.lane.b32.xlu0 %v5204, 56
  %v6981 = vpop.permute.xlu0 %6980
  %6982 = vrot.lane.b32.xlu0 %v5205, 56
  %v6983 = vpop.permute.xlu0 %6982
  %6984 = vrot.lane.b32.xlu0 %v5206, 56
  %v6985 = vpop.permute.xlu0 %6984
  %6986 = vrot.lane.b32.xlu0 %v5207, 56
  %v6987 = vpop.permute.xlu0 %6986
  %6988 = vrot.lane.b32.xlu0 %v5208, 56
  %v6989 = vpop.permute.xlu0 %6988
  %6990 = vrot.lane.b32.xlu0 %v5209, 56
  %v6991 = vpop.permute.xlu0 %6990
  %6992 = vrot.lane.b32.xlu0 %v5210, 56
  %v6993 = vpop.permute.xlu0 %6992
  %6994 = vrot.lane.b32.xlu0 %v5211, 56
  %v6995 = vpop.permute.xlu0 %6994
  %6996 = vrot.lane.b32.xlu0 %v5212, 56
  %v6997 = vpop.permute.xlu0 %6996
  %6998 = vrot.lane.b32.xlu0 %v5213, 56
  %v6999 = vpop.permute.xlu0 %6998
  %7000 = vrot.lane.b32.xlu0 %v5214, 56
  %v7001 = vpop.permute.xlu0 %7000
  %7002 = vrot.lane.b32.xlu0 %v5215, 56
  %v7003 = vpop.permute.xlu0 %7002
  %7004 = vrot.lane.b32.xlu0 %v5216, 56
  %v7005 = vpop.permute.xlu0 %7004
  %7006 = vrot.lane.b32.xlu0 %v5217, 56
  %v7007 = vpop.permute.xlu0 %7006
  %7008 = vrot.lane.b32.xlu0 %v5218, 56
  %v7009 = vpop.permute.xlu0 %7008
  %7010 = vrot.lane.b32.xlu0 %v5219, 56
  %v7011 = vpop.permute.xlu0 %7010
  %7140 = vrot.lane.b32.xlu0 %v5220, 64
  %v7141 = vpop.permute.xlu0 %7140
  %7142 = vrot.lane.b32.xlu0 %v5221, 64
  %v7143 = vpop.permute.xlu0 %7142
  %7144 = vrot.lane.b32.xlu0 %v5222, 64
  %v7145 = vpop.permute.xlu0 %7144
  %7146 = vrot.lane.b32.xlu0 %v5223, 64
  %v7147 = vpop.permute.xlu0 %7146
  %7148 = vrot.lane.b32.xlu0 %v5224, 64
  %v7149 = vpop.permute.xlu0 %7148
  %7150 = vrot.lane.b32.xlu0 %v5225, 64
  %v7151 = vpop.permute.xlu0 %7150
  %7152 = vrot.lane.b32.xlu0 %v5226, 64
  %v7153 = vpop.permute.xlu0 %7152
  %7154 = vrot.lane.b32.xlu0 %v5227, 64
  %v7155 = vpop.permute.xlu0 %7154
  %7156 = vrot.lane.b32.xlu0 %v5228, 64
  %v7157 = vpop.permute.xlu0 %7156
  %7158 = vrot.lane.b32.xlu0 %v5229, 64
  %v7159 = vpop.permute.xlu0 %7158
  %7160 = vrot.lane.b32.xlu0 %v5230, 64
  %v7161 = vpop.permute.xlu0 %7160
  %7162 = vrot.lane.b32.xlu0 %v5231, 64
  %v7163 = vpop.permute.xlu0 %7162
  %7164 = vrot.lane.b32.xlu0 %v5232, 64
  %v7165 = vpop.permute.xlu0 %7164
  %7166 = vrot.lane.b32.xlu0 %v5233, 64
  %v7167 = vpop.permute.xlu0 %7166
  %7168 = vrot.lane.b32.xlu0 %v5234, 64
  %v7169 = vpop.permute.xlu0 %7168
  %7170 = vrot.lane.b32.xlu0 %v5235, 64
  %v7171 = vpop.permute.xlu0 %7170
  %7172 = vrot.lane.b32.xlu0 %v5236, 64
  %v7173 = vpop.permute.xlu0 %7172
  %7174 = vrot.lane.b32.xlu0 %v5237, 64
  %v7175 = vpop.permute.xlu0 %7174
  %7176 = vrot.lane.b32.xlu0 %v5238, 64
  %v7177 = vpop.permute.xlu0 %7176
  %7178 = vrot.lane.b32.xlu0 %v5239, 64
  %v7179 = vpop.permute.xlu0 %7178
  %7180 = vrot.lane.b32.xlu0 %v5240, 64
  %v7181 = vpop.permute.xlu0 %7180
  %7182 = vrot.lane.b32.xlu0 %v5241, 64
  %v7183 = vpop.permute.xlu0 %7182
  %7184 = vrot.lane.b32.xlu0 %v5242, 64
  %v7185 = vpop.permute.xlu0 %7184
  %7186 = vrot.lane.b32.xlu0 %v5243, 64
  %v7187 = vpop.permute.xlu0 %7186
  %7188 = vrot.lane.b32.xlu0 %v5244, 64
  %v7189 = vpop.permute.xlu0 %7188
  %7190 = vrot.lane.b32.xlu0 %v5245, 64
  %v7191 = vpop.permute.xlu0 %7190
  %7192 = vrot.lane.b32.xlu0 %v5246, 64
  %v7193 = vpop.permute.xlu0 %7192
  %7194 = vrot.lane.b32.xlu0 %v5247, 64
  %v7195 = vpop.permute.xlu0 %7194
  %7196 = vrot.lane.b32.xlu0 %v5248, 64
  %v7197 = vpop.permute.xlu0 %7196
  %7198 = vrot.lane.b32.xlu0 %v5249, 64
  %v7199 = vpop.permute.xlu0 %7198
  %7200 = vrot.lane.b32.xlu0 %v5250, 64
  %v7201 = vpop.permute.xlu0 %7200
  %7202 = vrot.lane.b32.xlu0 %v5251, 64
  %v7203 = vpop.permute.xlu0 %7202
  %7204 = vrot.lane.b32.xlu0 %v5252, 64
  %v7205 = vpop.permute.xlu0 %7204
  %7206 = vrot.lane.b32.xlu0 %v5253, 64
  %v7207 = vpop.permute.xlu0 %7206
  %7208 = vrot.lane.b32.xlu0 %v5254, 64
  %v7209 = vpop.permute.xlu0 %7208
  %7210 = vrot.lane.b32.xlu0 %v5255, 64
  %v7211 = vpop.permute.xlu0 %7210
  %7212 = vrot.lane.b32.xlu0 %v5256, 64
  %v7213 = vpop.permute.xlu0 %7212
  %7214 = vrot.lane.b32.xlu0 %v5257, 64
  %v7215 = vpop.permute.xlu0 %7214
  %7216 = vrot.lane.b32.xlu0 %v5258, 64
  %v7217 = vpop.permute.xlu0 %7216
  %7218 = vrot.lane.b32.xlu0 %v5259, 64
  %v7219 = vpop.permute.xlu0 %7218
  %7220 = vrot.lane.b32.xlu0 %v5260, 64
  %v7221 = vpop.permute.xlu0 %7220
  %7222 = vrot.lane.b32.xlu0 %v5261, 64
  %v7223 = vpop.permute.xlu0 %7222
  %7224 = vrot.lane.b32.xlu0 %v5262, 64
  %v7225 = vpop.permute.xlu0 %7224
  %7226 = vrot.lane.b32.xlu0 %v5263, 64
  %v7227 = vpop.permute.xlu0 %7226
  %7228 = vrot.lane.b32.xlu0 %v5264, 64
  %v7229 = vpop.permute.xlu0 %7228
  %7230 = vrot.lane.b32.xlu0 %v5265, 64
  %v7231 = vpop.permute.xlu0 %7230
  %7232 = vrot.lane.b32.xlu0 %v5266, 64
  %v7233 = vpop.permute.xlu0 %7232
  %7234 = vrot.lane.b32.xlu0 %v5267, 64
  %v7235 = vpop.permute.xlu0 %7234
  %7236 = vrot.lane.b32.xlu0 %v5268, 64
  %v7237 = vpop.permute.xlu0 %7236
  %7238 = vrot.lane.b32.xlu0 %v5269, 64
  %v7239 = vpop.permute.xlu0 %7238
  %7240 = vrot.lane.b32.xlu0 %v5270, 64
  %v7241 = vpop.permute.xlu0 %7240
  %7242 = vrot.lane.b32.xlu0 %v5271, 64
  %v7243 = vpop.permute.xlu0 %7242
  %7244 = vrot.lane.b32.xlu0 %v5272, 64
  %v7245 = vpop.permute.xlu0 %7244
  %7246 = vrot.lane.b32.xlu0 %v5273, 64
  %v7247 = vpop.permute.xlu0 %7246
  %7248 = vrot.lane.b32.xlu0 %v5274, 64
  %v7249 = vpop.permute.xlu0 %7248
  %7250 = vrot.lane.b32.xlu0 %v5275, 64
  %v7251 = vpop.permute.xlu0 %7250
  %7252 = vrot.lane.b32.xlu0 %v5276, 64
  %v7253 = vpop.permute.xlu0 %7252
  %7254 = vrot.lane.b32.xlu0 %v5277, 64
  %v7255 = vpop.permute.xlu0 %7254
  %7256 = vrot.lane.b32.xlu0 %v5278, 64
  %v7257 = vpop.permute.xlu0 %7256
  %7258 = vrot.lane.b32.xlu0 %v5279, 64
  %v7259 = vpop.permute.xlu0 %7258
  %7260 = vrot.lane.b32.xlu0 %v5280, 64
  %v7261 = vpop.permute.xlu0 %7260
  %7262 = vrot.lane.b32.xlu0 %v5281, 64
  %v7263 = vpop.permute.xlu0 %7262
  %7264 = vrot.lane.b32.xlu0 %v5282, 64
  %v7265 = vpop.permute.xlu0 %7264
  %7266 = vrot.lane.b32.xlu0 %v5283, 64
  %v7267 = vpop.permute.xlu0 %7266
  %v7332 = vsel %vm26, %v4708, %v5349
  %v7333 = vsel %vm26, %v4709, %v5351
  %v7334 = vsel %vm26, %v4710, %v5353
  %v7335 = vsel %vm26, %v4711, %v5355
  %v7336 = vsel %vm26, %v4712, %v5357
  %v7337 = vsel %vm26, %v4713, %v5359
  %v7338 = vsel %vm26, %v4714, %v5361
  %v7339 = vsel %vm26, %v4715, %v5363
  %v7340 = vsel %vm26, %v4716, %v5365
  %v7341 = vsel %vm26, %v4717, %v5367
  %v7342 = vsel %vm26, %v4718, %v5369
  %v7343 = vsel %vm26, %v4719, %v5371
  %v7344 = vsel %vm26, %v4720, %v5373
  %v7345 = vsel %vm26, %v4721, %v5375
  %v7346 = vsel %vm26, %v4722, %v5377
  %v7347 = vsel %vm26, %v4723, %v5379
  %v7348 = vsel %vm26, %v4724, %v5381
  %v7349 = vsel %vm26, %v4725, %v5383
  %v7350 = vsel %vm26, %v4726, %v5385
  %v7351 = vsel %vm26, %v4727, %v5387
  %v7352 = vsel %vm26, %v4728, %v5389
  %v7353 = vsel %vm26, %v4729, %v5391
  %v7354 = vsel %vm26, %v4730, %v5393
  %v7355 = vsel %vm26, %v4731, %v5395
  %v7356 = vsel %vm26, %v4732, %v5397
  %v7357 = vsel %vm26, %v4733, %v5399
  %v7358 = vsel %vm26, %v4734, %v5401
  %v7359 = vsel %vm26, %v4735, %v5403
  %v7360 = vsel %vm26, %v4736, %v5405
  %v7361 = vsel %vm26, %v4737, %v5407
  %v7362 = vsel %vm26, %v4738, %v5409
  %v7363 = vsel %vm26, %v4739, %v5411
  %v7364 = vsel %vm26, %v4740, %v5413
  %v7365 = vsel %vm26, %v4741, %v5415
  %v7366 = vsel %vm26, %v4742, %v5417
  %v7367 = vsel %vm26, %v4743, %v5419
  %v7368 = vsel %vm26, %v4744, %v5421
  %v7369 = vsel %vm26, %v4745, %v5423
  %v7370 = vsel %vm26, %v4746, %v5425
  %v7371 = vsel %vm26, %v4747, %v5427
  %v7372 = vsel %vm26, %v4748, %v5429
  %v7373 = vsel %vm26, %v4749, %v5431
  %v7374 = vsel %vm26, %v4750, %v5433
  %v7375 = vsel %vm26, %v4751, %v5435
  %v7376 = vsel %vm26, %v4752, %v5437
  %v7377 = vsel %vm26, %v4753, %v5439
  %v7378 = vsel %vm26, %v4754, %v5441
  %v7379 = vsel %vm26, %v4755, %v5443
  %v7380 = vsel %vm26, %v4756, %v5445
  %v7381 = vsel %vm26, %v4757, %v5447
  %v7382 = vsel %vm26, %v4758, %v5449
  %v7383 = vsel %vm26, %v4759, %v5451
  %v7384 = vsel %vm26, %v4760, %v5453
  %v7385 = vsel %vm26, %v4761, %v5455
  %v7386 = vsel %vm26, %v4762, %v5457
  %v7387 = vsel %vm26, %v4763, %v5459
  %v7388 = vsel %vm26, %v4764, %v5461
  %v7389 = vsel %vm26, %v4765, %v5463
  %v7390 = vsel %vm26, %v4766, %v5465
  %v7391 = vsel %vm26, %v4767, %v5467
  %v7392 = vsel %vm26, %v4768, %v5469
  %v7393 = vsel %vm26, %v4769, %v5471
  %v7394 = vsel %vm26, %v4770, %v5473
  %v7395 = vsel %vm26, %v4771, %v5475
  %v7396 = vsel %vm2989, %v7332, %v5605
  %v7397 = vsel %vm2989, %v7333, %v5607
  %v7398 = vsel %vm2989, %v7334, %v5609
  %v7399 = vsel %vm2989, %v7335, %v5611
  %v7400 = vsel %vm2989, %v7336, %v5613
  %v7401 = vsel %vm2989, %v7337, %v5615
  %v7402 = vsel %vm2989, %v7338, %v5617
  %v7403 = vsel %vm2989, %v7339, %v5619
  %v7404 = vsel %vm2989, %v7340, %v5621
  %v7405 = vsel %vm2989, %v7341, %v5623
  %v7406 = vsel %vm2989, %v7342, %v5625
  %v7407 = vsel %vm2989, %v7343, %v5627
  %v7408 = vsel %vm2989, %v7344, %v5629
  %v7409 = vsel %vm2989, %v7345, %v5631
  %v7410 = vsel %vm2989, %v7346, %v5633
  %v7411 = vsel %vm2989, %v7347, %v5635
  %v7412 = vsel %vm2989, %v7348, %v5637
  %v7413 = vsel %vm2989, %v7349, %v5639
  %v7414 = vsel %vm2989, %v7350, %v5641
  %v7415 = vsel %vm2989, %v7351, %v5643
  %v7416 = vsel %vm2989, %v7352, %v5645
  %v7417 = vsel %vm2989, %v7353, %v5647
  %v7418 = vsel %vm2989, %v7354, %v5649
  %v7419 = vsel %vm2989, %v7355, %v5651
  %v7420 = vsel %vm2989, %v7356, %v5653
  %v7421 = vsel %vm2989, %v7357, %v5655
  %v7422 = vsel %vm2989, %v7358, %v5657
  %v7423 = vsel %vm2989, %v7359, %v5659
  %v7424 = vsel %vm2989, %v7360, %v5661
  %v7425 = vsel %vm2989, %v7361, %v5663
  %v7426 = vsel %vm2989, %v7362, %v5665
  %v7427 = vsel %vm2989, %v7363, %v5667
  %v7428 = vsel %vm2989, %v7364, %v5669
  %v7429 = vsel %vm2989, %v7365, %v5671
  %v7430 = vsel %vm2989, %v7366, %v5673
  %v7431 = vsel %vm2989, %v7367, %v5675
  %v7432 = vsel %vm2989, %v7368, %v5677
  %v7433 = vsel %vm2989, %v7369, %v5679
  %v7434 = vsel %vm2989, %v7370, %v5681
  %v7435 = vsel %vm2989, %v7371, %v5683
  %v7436 = vsel %vm2989, %v7372, %v5685
  %v7437 = vsel %vm2989, %v7373, %v5687
  %v7438 = vsel %vm2989, %v7374, %v5689
  %v7439 = vsel %vm2989, %v7375, %v5691
  %v7440 = vsel %vm2989, %v7376, %v5693
  %v7441 = vsel %vm2989, %v7377, %v5695
  %v7442 = vsel %vm2989, %v7378, %v5697
  %v7443 = vsel %vm2989, %v7379, %v5699
  %v7444 = vsel %vm2989, %v7380, %v5701
  %v7445 = vsel %vm2989, %v7381, %v5703
  %v7446 = vsel %vm2989, %v7382, %v5705
  %v7447 = vsel %vm2989, %v7383, %v5707
  %v7448 = vsel %vm2989, %v7384, %v5709
  %v7449 = vsel %vm2989, %v7385, %v5711
  %v7450 = vsel %vm2989, %v7386, %v5713
  %v7451 = vsel %vm2989, %v7387, %v5715
  %v7452 = vsel %vm2989, %v7388, %v5717
  %v7453 = vsel %vm2989, %v7389, %v5719
  %v7454 = vsel %vm2989, %v7390, %v5721
  %v7455 = vsel %vm2989, %v7391, %v5723
  %v7456 = vsel %vm2989, %v7392, %v5725
  %v7457 = vsel %vm2989, %v7393, %v5727
  %v7458 = vsel %vm2989, %v7394, %v5729
  %v7459 = vsel %vm2989, %v7395, %v5731
  %v7460 = vsel %vm3054, %v7396, %v5861
  %v7461 = vsel %vm3054, %v7397, %v5863
  %v7462 = vsel %vm3054, %v7398, %v5865
  %v7463 = vsel %vm3054, %v7399, %v5867
  %v7464 = vsel %vm3054, %v7400, %v5869
  %v7465 = vsel %vm3054, %v7401, %v5871
  %v7466 = vsel %vm3054, %v7402, %v5873
  %v7467 = vsel %vm3054, %v7403, %v5875
  %v7468 = vsel %vm3054, %v7404, %v5877
  %v7469 = vsel %vm3054, %v7405, %v5879
  %v7470 = vsel %vm3054, %v7406, %v5881
  %v7471 = vsel %vm3054, %v7407, %v5883
  %v7472 = vsel %vm3054, %v7408, %v5885
  %v7473 = vsel %vm3054, %v7409, %v5887
  %v7474 = vsel %vm3054, %v7410, %v5889
  %v7475 = vsel %vm3054, %v7411, %v5891
  %v7476 = vsel %vm3054, %v7412, %v5893
  %v7477 = vsel %vm3054, %v7413, %v5895
  %v7478 = vsel %vm3054, %v7414, %v5897
  %v7479 = vsel %vm3054, %v7415, %v5899
  %v7480 = vsel %vm3054, %v7416, %v5901
  %v7481 = vsel %vm3054, %v7417, %v5903
  %v7482 = vsel %vm3054, %v7418, %v5905
  %v7483 = vsel %vm3054, %v7419, %v5907
  %v7484 = vsel %vm3054, %v7420, %v5909
  %v7485 = vsel %vm3054, %v7421, %v5911
  %v7486 = vsel %vm3054, %v7422, %v5913
  %v7487 = vsel %vm3054, %v7423, %v5915
  %v7488 = vsel %vm3054, %v7424, %v5917
  %v7489 = vsel %vm3054, %v7425, %v5919
  %v7490 = vsel %vm3054, %v7426, %v5921
  %v7491 = vsel %vm3054, %v7427, %v5923
  %v7492 = vsel %vm3054, %v7428, %v5925
  %v7493 = vsel %vm3054, %v7429, %v5927
  %v7494 = vsel %vm3054, %v7430, %v5929
  %v7495 = vsel %vm3054, %v7431, %v5931
  %v7496 = vsel %vm3054, %v7432, %v5933
  %v7497 = vsel %vm3054, %v7433, %v5935
  %v7498 = vsel %vm3054, %v7434, %v5937
  %v7499 = vsel %vm3054, %v7435, %v5939
  %v7500 = vsel %vm3054, %v7436, %v5941
  %v7501 = vsel %vm3054, %v7437, %v5943
  %v7502 = vsel %vm3054, %v7438, %v5945
  %v7503 = vsel %vm3054, %v7439, %v5947
  %v7504 = vsel %vm3054, %v7440, %v5949
  %v7505 = vsel %vm3054, %v7441, %v5951
  %v7506 = vsel %vm3054, %v7442, %v5953
  %v7507 = vsel %vm3054, %v7443, %v5955
  %v7508 = vsel %vm3054, %v7444, %v5957
  %v7509 = vsel %vm3054, %v7445, %v5959
  %v7510 = vsel %vm3054, %v7446, %v5961
  %v7511 = vsel %vm3054, %v7447, %v5963
  %v7512 = vsel %vm3054, %v7448, %v5965
  %v7513 = vsel %vm3054, %v7449, %v5967
  %v7514 = vsel %vm3054, %v7450, %v5969
  %v7515 = vsel %vm3054, %v7451, %v5971
  %v7516 = vsel %vm3054, %v7452, %v5973
  %v7517 = vsel %vm3054, %v7453, %v5975
  %v7518 = vsel %vm3054, %v7454, %v5977
  %v7519 = vsel %vm3054, %v7455, %v5979
  %v7520 = vsel %vm3054, %v7456, %v5981
  %v7521 = vsel %vm3054, %v7457, %v5983
  %v7522 = vsel %vm3054, %v7458, %v5985
  %v7523 = vsel %vm3054, %v7459, %v5987
  %v7524 = vsel %vm3119, %v7460, %v6117
  %v7525 = vsel %vm3119, %v7461, %v6119
  %v7526 = vsel %vm3119, %v7462, %v6121
  %v7527 = vsel %vm3119, %v7463, %v6123
  %v7528 = vsel %vm3119, %v7464, %v6125
  %v7529 = vsel %vm3119, %v7465, %v6127
  %v7530 = vsel %vm3119, %v7466, %v6129
  %v7531 = vsel %vm3119, %v7467, %v6131
  %v7532 = vsel %vm3119, %v7468, %v6133
  %v7533 = vsel %vm3119, %v7469, %v6135
  %v7534 = vsel %vm3119, %v7470, %v6137
  %v7535 = vsel %vm3119, %v7471, %v6139
  %v7536 = vsel %vm3119, %v7472, %v6141
  %v7537 = vsel %vm3119, %v7473, %v6143
  %v7538 = vsel %vm3119, %v7474, %v6145
  %v7539 = vsel %vm3119, %v7475, %v6147
  %v7540 = vsel %vm3119, %v7476, %v6149
  %v7541 = vsel %vm3119, %v7477, %v6151
  %v7542 = vsel %vm3119, %v7478, %v6153
  %v7543 = vsel %vm3119, %v7479, %v6155
  %v7544 = vsel %vm3119, %v7480, %v6157
  %v7545 = vsel %vm3119, %v7481, %v6159
  %v7546 = vsel %vm3119, %v7482, %v6161
  %v7547 = vsel %vm3119, %v7483, %v6163
  %v7548 = vsel %vm3119, %v7484, %v6165
  %v7549 = vsel %vm3119, %v7485, %v6167
  %v7550 = vsel %vm3119, %v7486, %v6169
  %v7551 = vsel %vm3119, %v7487, %v6171
  %v7552 = vsel %vm3119, %v7488, %v6173
  %v7553 = vsel %vm3119, %v7489, %v6175
  %v7554 = vsel %vm3119, %v7490, %v6177
  %v7555 = vsel %vm3119, %v7491, %v6179
  %v7556 = vsel %vm3119, %v7492, %v6181
  %v7557 = vsel %vm3119, %v7493, %v6183
  %v7558 = vsel %vm3119, %v7494, %v6185
  %v7559 = vsel %vm3119, %v7495, %v6187
  %v7560 = vsel %vm3119, %v7496, %v6189
  %v7561 = vsel %vm3119, %v7497, %v6191
  %v7562 = vsel %vm3119, %v7498, %v6193
  %v7563 = vsel %vm3119, %v7499, %v6195
  %v7564 = vsel %vm3119, %v7500, %v6197
  %v7565 = vsel %vm3119, %v7501, %v6199
  %v7566 = vsel %vm3119, %v7502, %v6201
  %v7567 = vsel %vm3119, %v7503, %v6203
  %v7568 = vsel %vm3119, %v7504, %v6205
  %v7569 = vsel %vm3119, %v7505, %v6207
  %v7570 = vsel %vm3119, %v7506, %v6209
  %v7571 = vsel %vm3119, %v7507, %v6211
  %v7572 = vsel %vm3119, %v7508, %v6213
  %v7573 = vsel %vm3119, %v7509, %v6215
  %v7574 = vsel %vm3119, %v7510, %v6217
  %v7575 = vsel %vm3119, %v7511, %v6219
  %v7576 = vsel %vm3119, %v7512, %v6221
  %v7577 = vsel %vm3119, %v7513, %v6223
  %v7578 = vsel %vm3119, %v7514, %v6225
  %v7579 = vsel %vm3119, %v7515, %v6227
  %v7580 = vsel %vm3119, %v7516, %v6229
  %v7581 = vsel %vm3119, %v7517, %v6231
  %v7582 = vsel %vm3119, %v7518, %v6233
  %v7583 = vsel %vm3119, %v7519, %v6235
  %v7584 = vsel %vm3119, %v7520, %v6237
  %v7585 = vsel %vm3119, %v7521, %v6239
  %v7586 = vsel %vm3119, %v7522, %v6241
  %v7587 = vsel %vm3119, %v7523, %v6243
  %v7588 = vsel %vm3184, %v7524, %v6373
  %v7589 = vsel %vm3184, %v7525, %v6375
  %v7590 = vsel %vm3184, %v7526, %v6377
  %v7591 = vsel %vm3184, %v7527, %v6379
  %v7592 = vsel %vm3184, %v7528, %v6381
  %v7593 = vsel %vm3184, %v7529, %v6383
  %v7594 = vsel %vm3184, %v7530, %v6385
  %v7595 = vsel %vm3184, %v7531, %v6387
  %v7596 = vsel %vm3184, %v7532, %v6389
  %v7597 = vsel %vm3184, %v7533, %v6391
  %v7598 = vsel %vm3184, %v7534, %v6393
  %v7599 = vsel %vm3184, %v7535, %v6395
  %v7600 = vsel %vm3184, %v7536, %v6397
  %v7601 = vsel %vm3184, %v7537, %v6399
  %v7602 = vsel %vm3184, %v7538, %v6401
  %v7603 = vsel %vm3184, %v7539, %v6403
  %v7604 = vsel %vm3184, %v7540, %v6405
  %v7605 = vsel %vm3184, %v7541, %v6407
  %v7606 = vsel %vm3184, %v7542, %v6409
  %v7607 = vsel %vm3184, %v7543, %v6411
  %v7608 = vsel %vm3184, %v7544, %v6413
  %v7609 = vsel %vm3184, %v7545, %v6415
  %v7610 = vsel %vm3184, %v7546, %v6417
  %v7611 = vsel %vm3184, %v7547, %v6419
  %v7612 = vsel %vm3184, %v7548, %v6421
  %v7613 = vsel %vm3184, %v7549, %v6423
  %v7614 = vsel %vm3184, %v7550, %v6425
  %v7615 = vsel %vm3184, %v7551, %v6427
  %v7616 = vsel %vm3184, %v7552, %v6429
  %v7617 = vsel %vm3184, %v7553, %v6431
  %v7618 = vsel %vm3184, %v7554, %v6433
  %v7619 = vsel %vm3184, %v7555, %v6435
  %v7620 = vsel %vm3184, %v7556, %v6437
  %v7621 = vsel %vm3184, %v7557, %v6439
  %v7622 = vsel %vm3184, %v7558, %v6441
  %v7623 = vsel %vm3184, %v7559, %v6443
  %v7624 = vsel %vm3184, %v7560, %v6445
  %v7625 = vsel %vm3184, %v7561, %v6447
  %v7626 = vsel %vm3184, %v7562, %v6449
  %v7627 = vsel %vm3184, %v7563, %v6451
  %v7628 = vsel %vm3184, %v7564, %v6453
  %v7629 = vsel %vm3184, %v7565, %v6455
  %v7630 = vsel %vm3184, %v7566, %v6457
  %v7631 = vsel %vm3184, %v7567, %v6459
  %v7632 = vsel %vm3184, %v7568, %v6461
  %v7633 = vsel %vm3184, %v7569, %v6463
  %v7634 = vsel %vm3184, %v7570, %v6465
  %v7635 = vsel %vm3184, %v7571, %v6467
  %v7636 = vsel %vm3184, %v7572, %v6469
  %v7637 = vsel %vm3184, %v7573, %v6471
  %v7638 = vsel %vm3184, %v7574, %v6473
  %v7639 = vsel %vm3184, %v7575, %v6475
  %v7640 = vsel %vm3184, %v7576, %v6477
  %v7641 = vsel %vm3184, %v7577, %v6479
  %v7642 = vsel %vm3184, %v7578, %v6481
  %v7643 = vsel %vm3184, %v7579, %v6483
  %v7644 = vsel %vm3184, %v7580, %v6485
  %v7645 = vsel %vm3184, %v7581, %v6487
  %v7646 = vsel %vm3184, %v7582, %v6489
  %v7647 = vsel %vm3184, %v7583, %v6491
  %v7648 = vsel %vm3184, %v7584, %v6493
  %v7649 = vsel %vm3184, %v7585, %v6495
  %v7650 = vsel %vm3184, %v7586, %v6497
  %v7651 = vsel %vm3184, %v7587, %v6499
  %v7652 = vsel %vm3249, %v7588, %v6629
  %v7653 = vsel %vm3249, %v7589, %v6631
  %v7654 = vsel %vm3249, %v7590, %v6633
  %v7655 = vsel %vm3249, %v7591, %v6635
  %v7656 = vsel %vm3249, %v7592, %v6637
  %v7657 = vsel %vm3249, %v7593, %v6639
  %v7658 = vsel %vm3249, %v7594, %v6641
  %v7659 = vsel %vm3249, %v7595, %v6643
  %v7660 = vsel %vm3249, %v7596, %v6645
  %v7661 = vsel %vm3249, %v7597, %v6647
  %v7662 = vsel %vm3249, %v7598, %v6649
  %v7663 = vsel %vm3249, %v7599, %v6651
  %v7664 = vsel %vm3249, %v7600, %v6653
  %v7665 = vsel %vm3249, %v7601, %v6655
  %v7666 = vsel %vm3249, %v7602, %v6657
  %v7667 = vsel %vm3249, %v7603, %v6659
  %v7668 = vsel %vm3249, %v7604, %v6661
  %v7669 = vsel %vm3249, %v7605, %v6663
  %v7670 = vsel %vm3249, %v7606, %v6665
  %v7671 = vsel %vm3249, %v7607, %v6667
  %v7672 = vsel %vm3249, %v7608, %v6669
  %v7673 = vsel %vm3249, %v7609, %v6671
  %v7674 = vsel %vm3249, %v7610, %v6673
  %v7675 = vsel %vm3249, %v7611, %v6675
  %v7676 = vsel %vm3249, %v7612, %v6677
  %v7677 = vsel %vm3249, %v7613, %v6679
  %v7678 = vsel %vm3249, %v7614, %v6681
  %v7679 = vsel %vm3249, %v7615, %v6683
  %v7680 = vsel %vm3249, %v7616, %v6685
  %v7681 = vsel %vm3249, %v7617, %v6687
  %v7682 = vsel %vm3249, %v7618, %v6689
  %v7683 = vsel %vm3249, %v7619, %v6691
  %v7684 = vsel %vm3249, %v7620, %v6693
  %v7685 = vsel %vm3249, %v7621, %v6695
  %v7686 = vsel %vm3249, %v7622, %v6697
  %v7687 = vsel %vm3249, %v7623, %v6699
  %v7688 = vsel %vm3249, %v7624, %v6701
  %v7689 = vsel %vm3249, %v7625, %v6703
  %v7690 = vsel %vm3249, %v7626, %v6705
  %v7691 = vsel %vm3249, %v7627, %v6707
  %v7692 = vsel %vm3249, %v7628, %v6709
  %v7693 = vsel %vm3249, %v7629, %v6711
  %v7694 = vsel %vm3249, %v7630, %v6713
  %v7695 = vsel %vm3249, %v7631, %v6715
  %v7696 = vsel %vm3249, %v7632, %v6717
  %v7697 = vsel %vm3249, %v7633, %v6719
  %v7698 = vsel %vm3249, %v7634, %v6721
  %v7699 = vsel %vm3249, %v7635, %v6723
  %v7700 = vsel %vm3249, %v7636, %v6725
  %v7701 = vsel %vm3249, %v7637, %v6727
  %v7702 = vsel %vm3249, %v7638, %v6729
  %v7703 = vsel %vm3249, %v7639, %v6731
  %v7704 = vsel %vm3249, %v7640, %v6733
  %v7705 = vsel %vm3249, %v7641, %v6735
  %v7706 = vsel %vm3249, %v7642, %v6737
  %v7707 = vsel %vm3249, %v7643, %v6739
  %v7708 = vsel %vm3249, %v7644, %v6741
  %v7709 = vsel %vm3249, %v7645, %v6743
  %v7710 = vsel %vm3249, %v7646, %v6745
  %v7711 = vsel %vm3249, %v7647, %v6747
  %v7712 = vsel %vm3249, %v7648, %v6749
  %v7713 = vsel %vm3249, %v7649, %v6751
  %v7714 = vsel %vm3249, %v7650, %v6753
  %v7715 = vsel %vm3249, %v7651, %v6755
  %v7716 = vsel %vm3314, %v7652, %v6885
  %v7717 = vsel %vm3314, %v7653, %v6887
  %v7718 = vsel %vm3314, %v7654, %v6889
  %v7719 = vsel %vm3314, %v7655, %v6891
  %v7720 = vsel %vm3314, %v7656, %v6893
  %v7721 = vsel %vm3314, %v7657, %v6895
  %v7722 = vsel %vm3314, %v7658, %v6897
  %v7723 = vsel %vm3314, %v7659, %v6899
  %v7724 = vsel %vm3314, %v7660, %v6901
  %v7725 = vsel %vm3314, %v7661, %v6903
  %v7726 = vsel %vm3314, %v7662, %v6905
  %v7727 = vsel %vm3314, %v7663, %v6907
  %v7728 = vsel %vm3314, %v7664, %v6909
  %v7729 = vsel %vm3314, %v7665, %v6911
  %v7730 = vsel %vm3314, %v7666, %v6913
  %v7731 = vsel %vm3314, %v7667, %v6915
  %v7732 = vsel %vm3314, %v7668, %v6917
  %v7733 = vsel %vm3314, %v7669, %v6919
  %v7734 = vsel %vm3314, %v7670, %v6921
  %v7735 = vsel %vm3314, %v7671, %v6923
  %v7736 = vsel %vm3314, %v7672, %v6925
  %v7737 = vsel %vm3314, %v7673, %v6927
  %v7738 = vsel %vm3314, %v7674, %v6929
  %v7739 = vsel %vm3314, %v7675, %v6931
  %v7740 = vsel %vm3314, %v7676, %v6933
  %v7741 = vsel %vm3314, %v7677, %v6935
  %v7742 = vsel %vm3314, %v7678, %v6937
  %v7743 = vsel %vm3314, %v7679, %v6939
  %v7744 = vsel %vm3314, %v7680, %v6941
  %v7745 = vsel %vm3314, %v7681, %v6943
  %v7746 = vsel %vm3314, %v7682, %v6945
  %v7747 = vsel %vm3314, %v7683, %v6947
  %v7748 = vsel %vm3314, %v7684, %v6949
  %v7749 = vsel %vm3314, %v7685, %v6951
  %v7750 = vsel %vm3314, %v7686, %v6953
  %v7751 = vsel %vm3314, %v7687, %v6955
  %v7752 = vsel %vm3314, %v7688, %v6957
  %v7753 = vsel %vm3314, %v7689, %v6959
  %v7754 = vsel %vm3314, %v7690, %v6961
  %v7755 = vsel %vm3314, %v7691, %v6963
  %v7756 = vsel %vm3314, %v7692, %v6965
  %v7757 = vsel %vm3314, %v7693, %v6967
  %v7758 = vsel %vm3314, %v7694, %v6969
  %v7759 = vsel %vm3314, %v7695, %v6971
  %v7760 = vsel %vm3314, %v7696, %v6973
  %v7761 = vsel %vm3314, %v7697, %v6975
  %v7762 = vsel %vm3314, %v7698, %v6977
  %v7763 = vsel %vm3314, %v7699, %v6979
  %v7764 = vsel %vm3314, %v7700, %v6981
  %v7765 = vsel %vm3314, %v7701, %v6983
  %v7766 = vsel %vm3314, %v7702, %v6985
  %v7767 = vsel %vm3314, %v7703, %v6987
  %v7768 = vsel %vm3314, %v7704, %v6989
  %v7769 = vsel %vm3314, %v7705, %v6991
  %v7770 = vsel %vm3314, %v7706, %v6993
  %v7771 = vsel %vm3314, %v7707, %v6995
  %v7772 = vsel %vm3314, %v7708, %v6997
  %v7773 = vsel %vm3314, %v7709, %v6999
  %v7774 = vsel %vm3314, %v7710, %v7001
  %v7775 = vsel %vm3314, %v7711, %v7003
  %v7776 = vsel %vm3314, %v7712, %v7005
  %v7777 = vsel %vm3314, %v7713, %v7007
  %v7778 = vsel %vm3314, %v7714, %v7009
  %v7779 = vsel %vm3314, %v7715, %v7011
  %v7780 = vsel %vm3379, %v7716, %v7141
  %v7781 = vsel %vm3379, %v7717, %v7143
  %v7782 = vsel %vm3379, %v7718, %v7145
  %v7783 = vsel %vm3379, %v7719, %v7147
  %v7784 = vsel %vm3379, %v7720, %v7149
  %v7785 = vsel %vm3379, %v7721, %v7151
  %v7786 = vsel %vm3379, %v7722, %v7153
  %v7787 = vsel %vm3379, %v7723, %v7155
  %v7788 = vsel %vm3379, %v7724, %v7157
  %v7789 = vsel %vm3379, %v7725, %v7159
  %v7790 = vsel %vm3379, %v7726, %v7161
  %v7791 = vsel %vm3379, %v7727, %v7163
  %v7792 = vsel %vm3379, %v7728, %v7165
  %v7793 = vsel %vm3379, %v7729, %v7167
  %v7794 = vsel %vm3379, %v7730, %v7169
  %v7795 = vsel %vm3379, %v7731, %v7171
  %v7796 = vsel %vm3379, %v7732, %v7173
  %v7797 = vsel %vm3379, %v7733, %v7175
  %v7798 = vsel %vm3379, %v7734, %v7177
  %v7799 = vsel %vm3379, %v7735, %v7179
  %v7800 = vsel %vm3379, %v7736, %v7181
  %v7801 = vsel %vm3379, %v7737, %v7183
  %v7802 = vsel %vm3379, %v7738, %v7185
  %v7803 = vsel %vm3379, %v7739, %v7187
  %v7804 = vsel %vm3379, %v7740, %v7189
  %v7805 = vsel %vm3379, %v7741, %v7191
  %v7806 = vsel %vm3379, %v7742, %v7193
  %v7807 = vsel %vm3379, %v7743, %v7195
  %v7808 = vsel %vm3379, %v7744, %v7197
  %v7809 = vsel %vm3379, %v7745, %v7199
  %v7810 = vsel %vm3379, %v7746, %v7201
  %v7811 = vsel %vm3379, %v7747, %v7203
  %v7812 = vsel %vm3379, %v7748, %v7205
  %v7813 = vsel %vm3379, %v7749, %v7207
  %v7814 = vsel %vm3379, %v7750, %v7209
  %v7815 = vsel %vm3379, %v7751, %v7211
  %v7816 = vsel %vm3379, %v7752, %v7213
  %v7817 = vsel %vm3379, %v7753, %v7215
  %v7818 = vsel %vm3379, %v7754, %v7217
  %v7819 = vsel %vm3379, %v7755, %v7219
  %v7820 = vsel %vm3379, %v7756, %v7221
  %v7821 = vsel %vm3379, %v7757, %v7223
  %v7822 = vsel %vm3379, %v7758, %v7225
  %v7823 = vsel %vm3379, %v7759, %v7227
  %v7824 = vsel %vm3379, %v7760, %v7229
  %v7825 = vsel %vm3379, %v7761, %v7231
  %v7826 = vsel %vm3379, %v7762, %v7233
  %v7827 = vsel %vm3379, %v7763, %v7235
  %v7828 = vsel %vm3379, %v7764, %v7237
  %v7829 = vsel %vm3379, %v7765, %v7239
  %v7830 = vsel %vm3379, %v7766, %v7241
  %v7831 = vsel %vm3379, %v7767, %v7243
  %v7832 = vsel %vm3379, %v7768, %v7245
  %v7833 = vsel %vm3379, %v7769, %v7247
  %v7834 = vsel %vm3379, %v7770, %v7249
  %v7835 = vsel %vm3379, %v7771, %v7251
  %v7836 = vsel %vm3379, %v7772, %v7253
  %v7837 = vsel %vm3379, %v7773, %v7255
  %v7838 = vsel %vm3379, %v7774, %v7257
  %v7839 = vsel %vm3379, %v7775, %v7259
  %v7840 = vsel %vm3379, %v7776, %v7261
  %v7841 = vsel %vm3379, %v7777, %v7263
  %v7842 = vsel %vm3379, %v7778, %v7265
  %v7843 = vsel %vm3379, %v7779, %v7267
  %v7844 = vld [vmem:[%s3] sm:$0xff]
  %v7845 = vld [vmem:[%s3 + $0x8] sm:$0xff]
  %v7846 = vld [vmem:[%s3 + $0x10] sm:$0xff]
  %v7847 = vld [vmem:[%s3 + $0x18] sm:$0xff]
  %v7848 = vld [vmem:[%s3 + $0x20] sm:$0xff]
  %v7849 = vld [vmem:[%s3 + $0x28] sm:$0xff]
  %v7850 = vld [vmem:[%s3 + $0x30] sm:$0xff]
  %v7851 = vld [vmem:[%s3 + $0x38] sm:$0xff]
  %v7852 = vld [vmem:[%s3 + $0x40] sm:$0xff]
  %v7853 = vld [vmem:[%s4] sm:$0x1]
  %v7855 = vlaneseq
  %v7856 = vshrl.u32 %v7855, 7
  %v7857 = vsub.s32 0, %v7856
  %v7858 = vrot.slane %v7853, %v7857
  %v7861 = vsel %vm3460, %v7780, 0
  %v7864 = vsel %vm3460, %v7781, 0
  %v7867 = vsel %vm3460, %v7782, 0
  %v7870 = vsel %vm3460, %v7783, 0
  %v7873 = vsel %vm3460, %v7784, 0
  %v7876 = vsel %vm3460, %v7785, 0
  %v7879 = vsel %vm3460, %v7786, 0
  %v7882 = vsel %vm3460, %v7787, 0
  %v7885 = vsel %vm3460, %v7788, 0
  %v7888 = vsel %vm3460, %v7789, 0
  %v7891 = vsel %vm3460, %v7790, 0
  %v7894 = vsel %vm3460, %v7791, 0
  %v7897 = vsel %vm3460, %v7792, 0
  %v7900 = vsel %vm3460, %v7793, 0
  %v7903 = vsel %vm3460, %v7794, 0
  %v7906 = vsel %vm3460, %v7795, 0
  %v7909 = vsel %vm3460, %v7796, 0
  %v7912 = vsel %vm3460, %v7797, 0
  %v7915 = vsel %vm3460, %v7798, 0
  %v7918 = vsel %vm3460, %v7799, 0
  %v7921 = vsel %vm3460, %v7800, 0
  %v7924 = vsel %vm3460, %v7801, 0
  %v7927 = vsel %vm3460, %v7802, 0
  %v7930 = vsel %vm3460, %v7803, 0
  %v7933 = vsel %vm3460, %v7804, 0
  %v7936 = vsel %vm3460, %v7805, 0
  %v7939 = vsel %vm3460, %v7806, 0
  %v7942 = vsel %vm3460, %v7807, 0
  %v7945 = vsel %vm3460, %v7808, 0
  %v7948 = vsel %vm3460, %v7809, 0
  %v7951 = vsel %vm3460, %v7810, 0
  %v7954 = vsel %vm3460, %v7811, 0
  %v7957 = vsel %vm3460, %v7812, 0
  %v7960 = vsel %vm3460, %v7813, 0
  %v7963 = vsel %vm3460, %v7814, 0
  %v7966 = vsel %vm3460, %v7815, 0
  %v7969 = vsel %vm3460, %v7816, 0
  %v7972 = vsel %vm3460, %v7817, 0
  %v7975 = vsel %vm3460, %v7818, 0
  %v7978 = vsel %vm3460, %v7819, 0
  %v7981 = vsel %vm3460, %v7820, 0
  %v7984 = vsel %vm3460, %v7821, 0
  %v7987 = vsel %vm3460, %v7822, 0
  %v7990 = vsel %vm3460, %v7823, 0
  %v7993 = vsel %vm3460, %v7824, 0
  %v7996 = vsel %vm3460, %v7825, 0
  %v7999 = vsel %vm3460, %v7826, 0
  %v8002 = vsel %vm3460, %v7827, 0
  %v8005 = vsel %vm3460, %v7828, 0
  %v8008 = vsel %vm3460, %v7829, 0
  %v8011 = vsel %vm3460, %v7830, 0
  %v8014 = vsel %vm3460, %v7831, 0
  %v8017 = vsel %vm3460, %v7832, 0
  %v8020 = vsel %vm3460, %v7833, 0
  %v8023 = vsel %vm3460, %v7834, 0
  %v8026 = vsel %vm3460, %v7835, 0
  %v8029 = vsel %vm3460, %v7836, 0
  %v8032 = vsel %vm3460, %v7837, 0
  %v8035 = vsel %vm3460, %v7838, 0
  %v8038 = vsel %vm3460, %v7839, 0
  %v8041 = vsel %vm3460, %v7840, 0
  %v8044 = vsel %vm3460, %v7841, 0
  %v8047 = vsel %vm3460, %v7842, 0
  %v8050 = vsel %vm3460, %v7843, 0
  %8052 = vmatprep.subr.mxu0 0.0
  %8053 = vmatpush1.msra.mxu0 %v7844
  %8054 = vmatprep.subr.mxu0 0.0
  %8055 = vmatpush1.msra.mxu0 %v7845
  %8056 = vmatprep.subr.mxu0 0.0
  %8057 = vmatpush1.msra.mxu0 %v7846
  %8058 = vmatprep.subr.mxu0 0.0
  %8059 = vmatpush1.msra.mxu0 %v7847
  %8060 = vmatprep.subr.mxu0 0.0
  %8061 = vmatpush1.msra.mxu0 %v7848
  %8062 = vmatprep.subr.mxu0 0.0
  %8063 = vmatpush1.msra.mxu0 %v7849
  %8064 = vmatprep.subr.mxu0 0.0
  %8065 = vmatpush1.msra.mxu0 %v7850
  %8066 = vmatprep.subr.mxu0 0.0
  %8067 = vmatpush1.msra.mxu0 %v7851
  %8068 = vmatprep.subr.mxu0 0.0
  %8069 = vmatpush1.msra.mxu0 %v7852
  %8070 = vmatprep.subr.mxu0 0.0
  %8071 = vmatpush1.msra.mxu0 0.0
  %8072 = vmatprep.subr.mxu0 0.0
  %8073 = vmatpush1.msra.mxu0 0.0
  %8074 = vmatprep.subr.mxu0 0.0
  %8075 = vmatpush1.msra.mxu0 0.0
  %8076 = vmatprep.subr.mxu0 0.0
  %8077 = vmatpush1.msra.mxu0 0.0
  %8078 = vmatprep.subr.mxu0 0.0
  %8079 = vmatpush1.msra.mxu0 0.0
  %8080 = vmatprep.subr.mxu0 0.0
  %8081 = vmatpush1.msra.mxu0 0.0
  %8082 = vmatprep.subr.mxu0 0.0
  %8083 = vmatpush1.msra.mxu0 0.0
  %8084 = vmatprep.subr.mxu0 0.0
  %8085 = vmatpush1.msra.mxu0 0.0
  %8086 = vmatprep.subr.mxu0 0.0
  %8087 = vmatpush1.msra.mxu0 0.0
  %8088 = vmatprep.subr.mxu0 0.0
  %8089 = vmatpush1.msra.mxu0 0.0
  %8090 = vmatprep.subr.mxu0 0.0
  %8091 = vmatpush1.msra.mxu0 0.0
  %8092 = vmatprep.subr.mxu0 0.0
  %8093 = vmatpush1.msra.mxu0 0.0
  %8094 = vmatprep.subr.mxu0 0.0
  %8095 = vmatpush1.msra.mxu0 0.0
  %8096 = vmatprep.subr.mxu0 0.0
  %8097 = vmatpush1.msra.mxu0 0.0
  %8098 = vmatprep.subr.mxu0 0.0
  %8099 = vmatpush1.msra.mxu0 0.0
  %8100 = vmatprep.subr.mxu0 0.0
  %8101 = vmatpush1.msra.mxu0 0.0
  %8102 = vmatprep.subr.mxu0 0.0
  %8103 = vmatpush1.msra.mxu0 0.0
  %8104 = vmatprep.subr.mxu0 0.0
  %8105 = vmatpush1.msra.mxu0 0.0
  %8106 = vmatprep.subr.mxu0 0.0
  %8107 = vmatpush1.msra.mxu0 0.0
  %8108 = vmatprep.subr.mxu0 0.0
  %8109 = vmatpush1.msra.mxu0 0.0
  %8110 = vmatprep.subr.mxu0 0.0
  %8111 = vmatpush1.msra.mxu0 0.0
  %8112 = vmatprep.subr.mxu0 0.0
  %8113 = vmatpush1.msra.mxu0 0.0
  %8114 = vmatprep.subr.mxu0 0.0
  %8115 = vmatpush1.msra.mxu0 0.0
  %8116 = vmatprep.mubr.f32.mxu0 0.0
  %8117 = vmatmul.mubr.f32.gmra.mrb[0].mxu0 %v7861
  %v8118 = vpop.f32.mrb[0].mxu0
  %v8119 = vadd.f32 %v7858, %v8118
  %v8120 = vpop.f32.mrb[0].mxu0
  %8121 = vmatprep.mubr.f32.mxu0 0.0
  %8122 = vmatmul.mubr.f32.gmra.mrb[0].mxu0 %v7864
  %v8123 = vpop.f32.mrb[0].mxu0
  %v8124 = vadd.f32 %v7858, %v8123
  %v8125 = vpop.f32.mrb[0].mxu0
  %8126 = vmatprep.mubr.f32.mxu0 0.0
  %8127 = vmatmul.mubr.f32.gmra.mrb[0].mxu0 %v7867
  %v8128 = vpop.f32.mrb[0].mxu0
  %v8129 = vadd.f32 %v7858, %v8128
  %v8130 = vpop.f32.mrb[0].mxu0
  %8131 = vmatprep.mubr.f32.mxu0 0.0
  %8132 = vmatmul.mubr.f32.gmra.mrb[0].mxu0 %v7870
  %v8133 = vpop.f32.mrb[0].mxu0
  %v8134 = vadd.f32 %v7858, %v8133
  %v8135 = vpop.f32.mrb[0].mxu0
  %8136 = vmatprep.mubr.f32.mxu0 0.0
  %8137 = vmatmul.mubr.f32.gmra.mrb[0].mxu0 %v7873
  %v8138 = vpop.f32.mrb[0].mxu0
  %v8139 = vadd.f32 %v7858, %v8138
  %v8140 = vpop.f32.mrb[0].mxu0
  %8141 = vmatprep.mubr.f32.mxu0 0.0
  %8142 = vmatmul.mubr.f32.gmra.mrb[0].mxu0 %v7876
  %v8143 = vpop.f32.mrb[0].mxu0
  %v8144 = vadd.f32 %v7858, %v8143
  %v8145 = vpop.f32.mrb[0].mxu0
  %8146 = vmatprep.mubr.f32.mxu0 0.0
  %8147 = vmatmul.mubr.f32.gmra.mrb[0].mxu0 %v7879
  %v8148 = vpop.f32.mrb[0].mxu0
  %v8149 = vadd.f32 %v7858, %v8148
  %v8150 = vpop.f32.mrb[0].mxu0
  %8151 = vmatprep.mubr.f32.mxu0 0.0
  %8152 = vmatmul.mubr.f32.gmra.mrb[0].mxu0 %v7882
  %v8153 = vpop.f32.mrb[0].mxu0
  %v8154 = vadd.f32 %v7858, %v8153
  %v8155 = vpop.f32.mrb[0].mxu0
  %8156 = vmatprep.mubr.f32.mxu0 0.0
  %8157 = vmatmul.mubr.f32.gmra.mrb[0].mxu0 %v7885
  %v8158 = vpop.f32.mrb[0].mxu0
  %v8159 = vadd.f32 %v7858, %v8158
  %v8160 = vpop.f32.mrb[0].mxu0
  %8161 = vmatprep.mubr.f32.mxu0 0.0
  %8162 = vmatmul.mubr.f32.gmra.mrb[0].mxu0 %v7888
  %v8163 = vpop.f32.mrb[0].mxu0
  %v8164 = vadd.f32 %v7858, %v8163
  %v8165 = vpop.f32.mrb[0].mxu0
  %8166 = vmatprep.mubr.f32.mxu0 0.0
  %8167 = vmatmul.mubr.f32.gmra.mrb[0].mxu0 %v7891
  %v8168 = vpop.f32.mrb[0].mxu0
  %v8169 = vadd.f32 %v7858, %v8168
  %v8170 = vpop.f32.mrb[0].mxu0
  %8171 = vmatprep.mubr.f32.mxu0 0.0
  %8172 = vmatmul.mubr.f32.gmra.mrb[0].mxu0 %v7894
  %v8173 = vpop.f32.mrb[0].mxu0
  %v8174 = vadd.f32 %v7858, %v8173
  %v8175 = vpop.f32.mrb[0].mxu0
  %8176 = vmatprep.mubr.f32.mxu0 0.0
  %8177 = vmatmul.mubr.f32.gmra.mrb[0].mxu0 %v7897
  %v8178 = vpop.f32.mrb[0].mxu0
  %v8179 = vadd.f32 %v7858, %v8178
  %v8180 = vpop.f32.mrb[0].mxu0
  %8181 = vmatprep.mubr.f32.mxu0 0.0
  %8182 = vmatmul.mubr.f32.gmra.mrb[0].mxu0 %v7900
  %v8183 = vpop.f32.mrb[0].mxu0
  %v8184 = vadd.f32 %v7858, %v8183
  %v8185 = vpop.f32.mrb[0].mxu0
  %8186 = vmatprep.mubr.f32.mxu0 0.0
  %8187 = vmatmul.mubr.f32.gmra.mrb[0].mxu0 %v7903
  %v8188 = vpop.f32.mrb[0].mxu0
  %v8189 = vadd.f32 %v7858, %v8188
  %v8190 = vpop.f32.mrb[0].mxu0
  %8191 = vmatprep.mubr.f32.mxu0 0.0
  %8192 = vmatmul.mubr.f32.gmra.mrb[0].mxu0 %v7906
  %v8193 = vpop.f32.mrb[0].mxu0
  %v8194 = vadd.f32 %v7858, %v8193
  %v8195 = vpop.f32.mrb[0].mxu0
  %8196 = vmatprep.mubr.f32.mxu0 0.0
  %8197 = vmatmul.mubr.f32.gmra.mrb[0].mxu0 %v7909
  %v8198 = vpop.f32.mrb[0].mxu0
  %v8199 = vadd.f32 %v7858, %v8198
  %v8200 = vpop.f32.mrb[0].mxu0
  %8201 = vmatprep.mubr.f32.mxu0 0.0
  %8202 = vmatmul.mubr.f32.gmra.mrb[0].mxu0 %v7912
  %v8203 = vpop.f32.mrb[0].mxu0
  %v8204 = vadd.f32 %v7858, %v8203
  %v8205 = vpop.f32.mrb[0].mxu0
  %8206 = vmatprep.mubr.f32.mxu0 0.0
  %8207 = vmatmul.mubr.f32.gmra.mrb[0].mxu0 %v7915
  %v8208 = vpop.f32.mrb[0].mxu0
  %v8209 = vadd.f32 %v7858, %v8208
  %v8210 = vpop.f32.mrb[0].mxu0
  %8211 = vmatprep.mubr.f32.mxu0 0.0
  %8212 = vmatmul.mubr.f32.gmra.mrb[0].mxu0 %v7918
  %v8213 = vpop.f32.mrb[0].mxu0
  %v8214 = vadd.f32 %v7858, %v8213
  %v8215 = vpop.f32.mrb[0].mxu0
  %8216 = vmatprep.mubr.f32.mxu0 0.0
  %8217 = vmatmul.mubr.f32.gmra.mrb[0].mxu0 %v7921
  %v8218 = vpop.f32.mrb[0].mxu0
  %v8219 = vadd.f32 %v7858, %v8218
  %v8220 = vpop.f32.mrb[0].mxu0
  %8221 = vmatprep.mubr.f32.mxu0 0.0
  %8222 = vmatmul.mubr.f32.gmra.mrb[0].mxu0 %v7924
  %v8223 = vpop.f32.mrb[0].mxu0
  %v8224 = vadd.f32 %v7858, %v8223
  %v8225 = vpop.f32.mrb[0].mxu0
  %8226 = vmatprep.mubr.f32.mxu0 0.0
  %8227 = vmatmul.mubr.f32.gmra.mrb[0].mxu0 %v7927
  %v8228 = vpop.f32.mrb[0].mxu0
  %v8229 = vadd.f32 %v7858, %v8228
  %v8230 = vpop.f32.mrb[0].mxu0
  %8231 = vmatprep.mubr.f32.mxu0 0.0
  %8232 = vmatmul.mubr.f32.gmra.mrb[0].mxu0 %v7930
  %v8233 = vpop.f32.mrb[0].mxu0
  %v8234 = vadd.f32 %v7858, %v8233
  %v8235 = vpop.f32.mrb[0].mxu0
  %8236 = vmatprep.mubr.f32.mxu0 0.0
  %8237 = vmatmul.mubr.f32.gmra.mrb[0].mxu0 %v7933
  %v8238 = vpop.f32.mrb[0].mxu0
  %v8239 = vadd.f32 %v7858, %v8238
  %v8240 = vpop.f32.mrb[0].mxu0
  %8241 = vmatprep.mubr.f32.mxu0 0.0
  %8242 = vmatmul.mubr.f32.gmra.mrb[0].mxu0 %v7936
  %v8243 = vpop.f32.mrb[0].mxu0
  %v8244 = vadd.f32 %v7858, %v8243
  %v8245 = vpop.f32.mrb[0].mxu0
  %8246 = vmatprep.mubr.f32.mxu0 0.0
  %8247 = vmatmul.mubr.f32.gmra.mrb[0].mxu0 %v7939
  %v8248 = vpop.f32.mrb[0].mxu0
  %v8249 = vadd.f32 %v7858, %v8248
  %v8250 = vpop.f32.mrb[0].mxu0
  %8251 = vmatprep.mubr.f32.mxu0 0.0
  %8252 = vmatmul.mubr.f32.gmra.mrb[0].mxu0 %v7942
  %v8253 = vpop.f32.mrb[0].mxu0
  %v8254 = vadd.f32 %v7858, %v8253
  %v8255 = vpop.f32.mrb[0].mxu0
  %8256 = vmatprep.mubr.f32.mxu0 0.0
  %8257 = vmatmul.mubr.f32.gmra.mrb[0].mxu0 %v7945
  %v8258 = vpop.f32.mrb[0].mxu0
  %v8259 = vadd.f32 %v7858, %v8258
  %v8260 = vpop.f32.mrb[0].mxu0
  %8261 = vmatprep.mubr.f32.mxu0 0.0
  %8262 = vmatmul.mubr.f32.gmra.mrb[0].mxu0 %v7948
  %v8263 = vpop.f32.mrb[0].mxu0
  %v8264 = vadd.f32 %v7858, %v8263
  %v8265 = vpop.f32.mrb[0].mxu0
  %8266 = vmatprep.mubr.f32.mxu0 0.0
  %8267 = vmatmul.mubr.f32.gmra.mrb[0].mxu0 %v7951
  %v8268 = vpop.f32.mrb[0].mxu0
  %v8269 = vadd.f32 %v7858, %v8268
  %v8270 = vpop.f32.mrb[0].mxu0
  %8271 = vmatprep.mubr.f32.mxu0 0.0
  %8272 = vmatmul.mubr.f32.gmra.mrb[0].mxu0 %v7954
  %v8273 = vpop.f32.mrb[0].mxu0
  %v8274 = vadd.f32 %v7858, %v8273
  %v8275 = vpop.f32.mrb[0].mxu0
  %8276 = vmatprep.mubr.f32.mxu0 0.0
  %8277 = vmatmul.mubr.f32.gmra.mrb[0].mxu0 %v7957
  %v8278 = vpop.f32.mrb[0].mxu0
  %v8279 = vadd.f32 %v7858, %v8278
  %v8280 = vpop.f32.mrb[0].mxu0
  %8281 = vmatprep.mubr.f32.mxu0 0.0
  %8282 = vmatmul.mubr.f32.gmra.mrb[0].mxu0 %v7960
  %v8283 = vpop.f32.mrb[0].mxu0
  %v8284 = vadd.f32 %v7858, %v8283
  %v8285 = vpop.f32.mrb[0].mxu0
  %8286 = vmatprep.mubr.f32.mxu0 0.0
  %8287 = vmatmul.mubr.f32.gmra.mrb[0].mxu0 %v7963
  %v8288 = vpop.f32.mrb[0].mxu0
  %v8289 = vadd.f32 %v7858, %v8288
  %v8290 = vpop.f32.mrb[0].mxu0
  %8291 = vmatprep.mubr.f32.mxu0 0.0
  %8292 = vmatmul.mubr.f32.gmra.mrb[0].mxu0 %v7966
  %v8293 = vpop.f32.mrb[0].mxu0
  %v8294 = vadd.f32 %v7858, %v8293
  %v8295 = vpop.f32.mrb[0].mxu0
  %8296 = vmatprep.mubr.f32.mxu0 0.0
  %8297 = vmatmul.mubr.f32.gmra.mrb[0].mxu0 %v7969
  %v8298 = vpop.f32.mrb[0].mxu0
  %v8299 = vadd.f32 %v7858, %v8298
  %v8300 = vpop.f32.mrb[0].mxu0
  %8301 = vmatprep.mubr.f32.mxu0 0.0
  %8302 = vmatmul.mubr.f32.gmra.mrb[0].mxu0 %v7972
  %v8303 = vpop.f32.mrb[0].mxu0
  %v8304 = vadd.f32 %v7858, %v8303
  %v8305 = vpop.f32.mrb[0].mxu0
  %8306 = vmatprep.mubr.f32.mxu0 0.0
  %8307 = vmatmul.mubr.f32.gmra.mrb[0].mxu0 %v7975
  %v8308 = vpop.f32.mrb[0].mxu0
  %v8309 = vadd.f32 %v7858, %v8308
  %v8310 = vpop.f32.mrb[0].mxu0
  %8311 = vmatprep.mubr.f32.mxu0 0.0
  %8312 = vmatmul.mubr.f32.gmra.mrb[0].mxu0 %v7978
  %v8313 = vpop.f32.mrb[0].mxu0
  %v8314 = vadd.f32 %v7858, %v8313
  %v8315 = vpop.f32.mrb[0].mxu0
  %8316 = vmatprep.mubr.f32.mxu0 0.0
  %8317 = vmatmul.mubr.f32.gmra.mrb[0].mxu0 %v7981
  %v8318 = vpop.f32.mrb[0].mxu0
  %v8319 = vadd.f32 %v7858, %v8318
  %v8320 = vpop.f32.mrb[0].mxu0
  %8321 = vmatprep.mubr.f32.mxu0 0.0
  %8322 = vmatmul.mubr.f32.gmra.mrb[0].mxu0 %v7984
  %v8323 = vpop.f32.mrb[0].mxu0
  %v8324 = vadd.f32 %v7858, %v8323
  %v8325 = vpop.f32.mrb[0].mxu0
  %8326 = vmatprep.mubr.f32.mxu0 0.0
  %8327 = vmatmul.mubr.f32.gmra.mrb[0].mxu0 %v7987
  %v8328 = vpop.f32.mrb[0].mxu0
  %v8329 = vadd.f32 %v7858, %v8328
  %v8330 = vpop.f32.mrb[0].mxu0
  %8331 = vmatprep.mubr.f32.mxu0 0.0
  %8332 = vmatmul.mubr.f32.gmra.mrb[0].mxu0 %v7990
  %v8333 = vpop.f32.mrb[0].mxu0
  %v8334 = vadd.f32 %v7858, %v8333
  %v8335 = vpop.f32.mrb[0].mxu0
  %8336 = vmatprep.mubr.f32.mxu0 0.0
  %8337 = vmatmul.mubr.f32.gmra.mrb[0].mxu0 %v7993
  %v8338 = vpop.f32.mrb[0].mxu0
  %v8339 = vadd.f32 %v7858, %v8338
  %v8340 = vpop.f32.mrb[0].mxu0
  %8341 = vmatprep.mubr.f32.mxu0 0.0
  %8342 = vmatmul.mubr.f32.gmra.mrb[0].mxu0 %v7996
  %v8343 = vpop.f32.mrb[0].mxu0
  %v8344 = vadd.f32 %v7858, %v8343
  %v8345 = vpop.f32.mrb[0].mxu0
  %8346 = vmatprep.mubr.f32.mxu0 0.0
  %8347 = vmatmul.mubr.f32.gmra.mrb[0].mxu0 %v7999
  %v8348 = vpop.f32.mrb[0].mxu0
  %v8349 = vadd.f32 %v7858, %v8348
  %v8350 = vpop.f32.mrb[0].mxu0
  %8351 = vmatprep.mubr.f32.mxu0 0.0
  %8352 = vmatmul.mubr.f32.gmra.mrb[0].mxu0 %v8002
  %v8353 = vpop.f32.mrb[0].mxu0
  %v8354 = vadd.f32 %v7858, %v8353
  %v8355 = vpop.f32.mrb[0].mxu0
  %8356 = vmatprep.mubr.f32.mxu0 0.0
  %8357 = vmatmul.mubr.f32.gmra.mrb[0].mxu0 %v8005
  %v8358 = vpop.f32.mrb[0].mxu0
  %v8359 = vadd.f32 %v7858, %v8358
  %v8360 = vpop.f32.mrb[0].mxu0
  %8361 = vmatprep.mubr.f32.mxu0 0.0
  %8362 = vmatmul.mubr.f32.gmra.mrb[0].mxu0 %v8008
  %v8363 = vpop.f32.mrb[0].mxu0
  %v8364 = vadd.f32 %v7858, %v8363
  %v8365 = vpop.f32.mrb[0].mxu0
  %8366 = vmatprep.mubr.f32.mxu0 0.0
  %8367 = vmatmul.mubr.f32.gmra.mrb[0].mxu0 %v8011
  %v8368 = vpop.f32.mrb[0].mxu0
  %v8369 = vadd.f32 %v7858, %v8368
  %v8370 = vpop.f32.mrb[0].mxu0
  %8371 = vmatprep.mubr.f32.mxu0 0.0
  %8372 = vmatmul.mubr.f32.gmra.mrb[0].mxu0 %v8014
  %v8373 = vpop.f32.mrb[0].mxu0
  %v8374 = vadd.f32 %v7858, %v8373
  %v8375 = vpop.f32.mrb[0].mxu0
  %8376 = vmatprep.mubr.f32.mxu0 0.0
  %8377 = vmatmul.mubr.f32.gmra.mrb[0].mxu0 %v8017
  %v8378 = vpop.f32.mrb[0].mxu0
  %v8379 = vadd.f32 %v7858, %v8378
  %v8380 = vpop.f32.mrb[0].mxu0
  %8381 = vmatprep.mubr.f32.mxu0 0.0
  %8382 = vmatmul.mubr.f32.gmra.mrb[0].mxu0 %v8020
  %v8383 = vpop.f32.mrb[0].mxu0
  %v8384 = vadd.f32 %v7858, %v8383
  %v8385 = vpop.f32.mrb[0].mxu0
  %8386 = vmatprep.mubr.f32.mxu0 0.0
  %8387 = vmatmul.mubr.f32.gmra.mrb[0].mxu0 %v8023
  %v8388 = vpop.f32.mrb[0].mxu0
  %v8389 = vadd.f32 %v7858, %v8388
  %v8390 = vpop.f32.mrb[0].mxu0
  %8391 = vmatprep.mubr.f32.mxu0 0.0
  %8392 = vmatmul.mubr.f32.gmra.mrb[0].mxu0 %v8026
  %v8393 = vpop.f32.mrb[0].mxu0
  %v8394 = vadd.f32 %v7858, %v8393
  %v8395 = vpop.f32.mrb[0].mxu0
  %8396 = vmatprep.mubr.f32.mxu0 0.0
  %8397 = vmatmul.mubr.f32.gmra.mrb[0].mxu0 %v8029
  %v8398 = vpop.f32.mrb[0].mxu0
  %v8399 = vadd.f32 %v7858, %v8398
  %v8400 = vpop.f32.mrb[0].mxu0
  %8401 = vmatprep.mubr.f32.mxu0 0.0
  %8402 = vmatmul.mubr.f32.gmra.mrb[0].mxu0 %v8032
  %v8403 = vpop.f32.mrb[0].mxu0
  %v8404 = vadd.f32 %v7858, %v8403
  %v8405 = vpop.f32.mrb[0].mxu0
  %8406 = vmatprep.mubr.f32.mxu0 0.0
  %8407 = vmatmul.mubr.f32.gmra.mrb[0].mxu0 %v8035
  %v8408 = vpop.f32.mrb[0].mxu0
  %v8409 = vadd.f32 %v7858, %v8408
  %v8410 = vpop.f32.mrb[0].mxu0
  %8411 = vmatprep.mubr.f32.mxu0 0.0
  %8412 = vmatmul.mubr.f32.gmra.mrb[0].mxu0 %v8038
  %v8413 = vpop.f32.mrb[0].mxu0
  %v8414 = vadd.f32 %v7858, %v8413
  %v8415 = vpop.f32.mrb[0].mxu0
  %8416 = vmatprep.mubr.f32.mxu0 0.0
  %8417 = vmatmul.mubr.f32.gmra.mrb[0].mxu0 %v8041
  %v8418 = vpop.f32.mrb[0].mxu0
  %v8419 = vadd.f32 %v7858, %v8418
  %v8420 = vpop.f32.mrb[0].mxu0
  %8421 = vmatprep.mubr.f32.mxu0 0.0
  %8422 = vmatmul.mubr.f32.gmra.mrb[0].mxu0 %v8044
  %v8423 = vpop.f32.mrb[0].mxu0
  %v8424 = vadd.f32 %v7858, %v8423
  %v8425 = vpop.f32.mrb[0].mxu0
  %8426 = vmatprep.mubr.f32.mxu0 0.0
  %8427 = vmatmul.mubr.f32.gmra.mrb[0].mxu0 %v8047
  %v8428 = vpop.f32.mrb[0].mxu0
  %v8429 = vadd.f32 %v7858, %v8428
  %v8430 = vpop.f32.mrb[0].mxu0
  %8431 = vmatprep.mubr.f32.mxu0 0.0
  %8432 = vmatmul.mubr.f32.gmra.mrb[0].mxu0 %v8050
  %v8433 = vpop.f32.mrb[0].mxu0
  %v8434 = vadd.f32 %v7858, %v8433
  %v8435 = vpop.f32.mrb[0].mxu0
  %8436 = vdwg.mxu0
  %v8437 = vmax.f32 %v8119, 0.0
  %v8438 = vmax.f32 %v8124, 0.0
  %v8439 = vmax.f32 %v8129, 0.0
  %v8440 = vmax.f32 %v8134, 0.0
  %v8441 = vmax.f32 %v8139, 0.0
  %v8442 = vmax.f32 %v8144, 0.0
  %v8443 = vmax.f32 %v8149, 0.0
  %v8444 = vmax.f32 %v8154, 0.0
  %v8445 = vmax.f32 %v8159, 0.0
  %v8446 = vmax.f32 %v8164, 0.0
  %v8447 = vmax.f32 %v8169, 0.0
  %v8448 = vmax.f32 %v8174, 0.0
  %v8449 = vmax.f32 %v8179, 0.0
  %v8450 = vmax.f32 %v8184, 0.0
  %v8451 = vmax.f32 %v8189, 0.0
  %v8452 = vmax.f32 %v8194, 0.0
  %v8453 = vmax.f32 %v8199, 0.0
  %v8454 = vmax.f32 %v8204, 0.0
  %v8455 = vmax.f32 %v8209, 0.0
  %v8456 = vmax.f32 %v8214, 0.0
  %v8457 = vmax.f32 %v8219, 0.0
  %v8458 = vmax.f32 %v8224, 0.0
  %v8459 = vmax.f32 %v8229, 0.0
  %v8460 = vmax.f32 %v8234, 0.0
  %v8461 = vmax.f32 %v8239, 0.0
  %v8462 = vmax.f32 %v8244, 0.0
  %v8463 = vmax.f32 %v8249, 0.0
  %v8464 = vmax.f32 %v8254, 0.0
  %v8465 = vmax.f32 %v8259, 0.0
  %v8466 = vmax.f32 %v8264, 0.0
  %v8467 = vmax.f32 %v8269, 0.0
  %v8468 = vmax.f32 %v8274, 0.0
  %v8469 = vmax.f32 %v8279, 0.0
  %v8470 = vmax.f32 %v8284, 0.0
  %v8471 = vmax.f32 %v8289, 0.0
  %v8472 = vmax.f32 %v8294, 0.0
  %v8473 = vmax.f32 %v8299, 0.0
  %v8474 = vmax.f32 %v8304, 0.0
  %v8475 = vmax.f32 %v8309, 0.0
  %v8476 = vmax.f32 %v8314, 0.0
  %v8477 = vmax.f32 %v8319, 0.0
  %v8478 = vmax.f32 %v8324, 0.0
  %v8479 = vmax.f32 %v8329, 0.0
  %v8480 = vmax.f32 %v8334, 0.0
  %v8481 = vmax.f32 %v8339, 0.0
  %v8482 = vmax.f32 %v8344, 0.0
  %v8483 = vmax.f32 %v8349, 0.0
  %v8484 = vmax.f32 %v8354, 0.0
  %v8485 = vmax.f32 %v8359, 0.0
  %v8486 = vmax.f32 %v8364, 0.0
  %v8487 = vmax.f32 %v8369, 0.0
  %v8488 = vmax.f32 %v8374, 0.0
  %v8489 = vmax.f32 %v8379, 0.0
  %v8490 = vmax.f32 %v8384, 0.0
  %v8491 = vmax.f32 %v8389, 0.0
  %v8492 = vmax.f32 %v8394, 0.0
  %v8493 = vmax.f32 %v8399, 0.0
  %v8494 = vmax.f32 %v8404, 0.0
  %v8495 = vmax.f32 %v8409, 0.0
  %v8496 = vmax.f32 %v8414, 0.0
  %v8497 = vmax.f32 %v8419, 0.0
  %v8498 = vmax.f32 %v8424, 0.0
  %v8499 = vmax.f32 %v8429, 0.0
  %v8500 = vmax.f32 %v8434, 0.0
  %v8501 = vsel %vm26, %v8437, 0.0
  %v8502 = vsel %vm26, %v8438, 0.0
  %v8503 = vadd.f32 %v8501, %v8502
  %v8504 = vsel %vm26, %v8439, 0.0
  %v8505 = vadd.f32 %v8503, %v8504
  %v8506 = vsel %vm26, %v8440, 0.0
  %v8507 = vadd.f32 %v8505, %v8506
  %v8508 = vsel %vm26, %v8441, 0.0
  %v8509 = vadd.f32 %v8507, %v8508
  %v8510 = vsel %vm26, %v8442, 0.0
  %v8511 = vadd.f32 %v8509, %v8510
  %v8512 = vsel %vm26, %v8443, 0.0
  %v8513 = vadd.f32 %v8511, %v8512
  %v8514 = vsel %vm26, %v8444, 0.0
  %v8515 = vadd.f32 %v8513, %v8514
  %v8516 = vsel %vm26, %v8445, 0.0
  %v8517 = vadd.f32 %v8515, %v8516
  %v8518 = vsel %vm26, %v8446, 0.0
  %v8519 = vadd.f32 %v8517, %v8518
  %v8520 = vsel %vm26, %v8447, 0.0
  %v8521 = vadd.f32 %v8519, %v8520
  %v8522 = vsel %vm26, %v8448, 0.0
  %v8523 = vadd.f32 %v8521, %v8522
  %v8524 = vsel %vm26, %v8449, 0.0
  %v8525 = vadd.f32 %v8523, %v8524
  %v8526 = vsel %vm26, %v8450, 0.0
  %v8527 = vadd.f32 %v8525, %v8526
  %v8528 = vsel %vm26, %v8451, 0.0
  %v8529 = vadd.f32 %v8527, %v8528
  %v8530 = vsel %vm26, %v8452, 0.0
  %v8531 = vadd.f32 %v8529, %v8530
  %v8532 = vsel %vm26, %v8453, 0.0
  %v8533 = vadd.f32 %v8531, %v8532
  %v8534 = vsel %vm26, %v8454, 0.0
  %v8535 = vadd.f32 %v8533, %v8534
  %v8536 = vsel %vm26, %v8455, 0.0
  %v8537 = vadd.f32 %v8535, %v8536
  %v8538 = vsel %vm26, %v8456, 0.0
  %v8539 = vadd.f32 %v8537, %v8538
  %v8540 = vsel %vm26, %v8457, 0.0
  %v8541 = vadd.f32 %v8539, %v8540
  %v8542 = vsel %vm26, %v8458, 0.0
  %v8543 = vadd.f32 %v8541, %v8542
  %v8544 = vsel %vm26, %v8459, 0.0
  %v8545 = vadd.f32 %v8543, %v8544
  %v8546 = vsel %vm26, %v8460, 0.0
  %v8547 = vadd.f32 %v8545, %v8546
  %v8548 = vsel %vm26, %v8461, 0.0
  %v8549 = vadd.f32 %v8547, %v8548
  %v8550 = vsel %vm26, %v8462, 0.0
  %v8551 = vadd.f32 %v8549, %v8550
  %v8552 = vsel %vm26, %v8463, 0.0
  %v8553 = vadd.f32 %v8551, %v8552
  %v8554 = vsel %vm26, %v8464, 0.0
  %v8555 = vadd.f32 %v8553, %v8554
  %v8556 = vsel %vm26, %v8465, 0.0
  %v8557 = vadd.f32 %v8555, %v8556
  %v8558 = vsel %vm26, %v8466, 0.0
  %v8559 = vadd.f32 %v8557, %v8558
  %v8560 = vsel %vm26, %v8467, 0.0
  %v8561 = vadd.f32 %v8559, %v8560
  %v8562 = vsel %vm26, %v8468, 0.0
  %v8563 = vadd.f32 %v8561, %v8562
  %v8564 = vsel %vm26, %v8469, 0.0
  %v8565 = vadd.f32 %v8563, %v8564
  %v8566 = vsel %vm26, %v8470, 0.0
  %v8567 = vadd.f32 %v8565, %v8566
  %v8568 = vsel %vm26, %v8471, 0.0
  %v8569 = vadd.f32 %v8567, %v8568
  %v8570 = vsel %vm26, %v8472, 0.0
  %v8571 = vadd.f32 %v8569, %v8570
  %v8572 = vsel %vm26, %v8473, 0.0
  %v8573 = vadd.f32 %v8571, %v8572
  %v8574 = vsel %vm26, %v8474, 0.0
  %v8575 = vadd.f32 %v8573, %v8574
  %v8576 = vsel %vm26, %v8475, 0.0
  %v8577 = vadd.f32 %v8575, %v8576
  %v8578 = vsel %vm26, %v8476, 0.0
  %v8579 = vadd.f32 %v8577, %v8578
  %v8580 = vsel %vm26, %v8477, 0.0
  %v8581 = vadd.f32 %v8579, %v8580
  %v8582 = vsel %vm26, %v8478, 0.0
  %v8583 = vadd.f32 %v8581, %v8582
  %v8584 = vsel %vm26, %v8479, 0.0
  %v8585 = vadd.f32 %v8583, %v8584
  %v8586 = vsel %vm26, %v8480, 0.0
  %v8587 = vadd.f32 %v8585, %v8586
  %v8588 = vsel %vm26, %v8481, 0.0
  %v8589 = vadd.f32 %v8587, %v8588
  %v8590 = vsel %vm26, %v8482, 0.0
  %v8591 = vadd.f32 %v8589, %v8590
  %v8592 = vsel %vm26, %v8483, 0.0
  %v8593 = vadd.f32 %v8591, %v8592
  %v8594 = vsel %vm26, %v8484, 0.0
  %v8595 = vadd.f32 %v8593, %v8594
  %v8596 = vsel %vm26, %v8485, 0.0
  %v8597 = vadd.f32 %v8595, %v8596
  %v8598 = vsel %vm26, %v8486, 0.0
  %v8599 = vadd.f32 %v8597, %v8598
  %v8600 = vsel %vm26, %v8487, 0.0
  %v8601 = vadd.f32 %v8599, %v8600
  %v8602 = vsel %vm26, %v8488, 0.0
  %v8603 = vadd.f32 %v8601, %v8602
  %v8604 = vsel %vm26, %v8489, 0.0
  %v8605 = vadd.f32 %v8603, %v8604
  %v8606 = vsel %vm26, %v8490, 0.0
  %v8607 = vadd.f32 %v8605, %v8606
  %v8608 = vsel %vm26, %v8491, 0.0
  %v8609 = vadd.f32 %v8607, %v8608
  %v8610 = vsel %vm26, %v8492, 0.0
  %v8611 = vadd.f32 %v8609, %v8610
  %v8612 = vsel %vm26, %v8493, 0.0
  %v8613 = vadd.f32 %v8611, %v8612
  %v8614 = vsel %vm26, %v8494, 0.0
  %v8615 = vadd.f32 %v8613, %v8614
  %v8616 = vsel %vm26, %v8495, 0.0
  %v8617 = vadd.f32 %v8615, %v8616
  %v8618 = vsel %vm26, %v8496, 0.0
  %v8619 = vadd.f32 %v8617, %v8618
  %v8620 = vsel %vm26, %v8497, 0.0
  %v8621 = vadd.f32 %v8619, %v8620
  %v8622 = vsel %vm26, %v8498, 0.0
  %v8623 = vadd.f32 %v8621, %v8622
  %v8624 = vsel %vm26, %v8499, 0.0
  %v8625 = vadd.f32 %v8623, %v8624
  %v8626 = vsel %vm26, %v8500, 0.0
  %v8627 = vadd.f32 %v8625, %v8626
  %v8628 = vrot.slane %v8627, 4
  %v8629 = vadd.f32 %v8627, %v8628
  %v8630 = vrot.slane %v8629, 2
  %v8631 = vadd.f32 %v8629, %v8630
  %v8632 = vrot.slane %v8631, 1
  %v8633 = vadd.f32 %v8631, %v8632
  %v8634 = vmul.f32 %v8633, %v4235
  %v8635 = vmul.f32 %v8437, %v8437
  %v8636 = vmul.f32 %v8438, %v8438
  %v8637 = vmul.f32 %v8439, %v8439
  %v8638 = vmul.f32 %v8440, %v8440
  %v8639 = vmul.f32 %v8441, %v8441
  %v8640 = vmul.f32 %v8442, %v8442
  %v8641 = vmul.f32 %v8443, %v8443
  %v8642 = vmul.f32 %v8444, %v8444
  %v8643 = vmul.f32 %v8445, %v8445
  %v8644 = vmul.f32 %v8446, %v8446
  %v8645 = vmul.f32 %v8447, %v8447
  %v8646 = vmul.f32 %v8448, %v8448
  %v8647 = vmul.f32 %v8449, %v8449
  %v8648 = vmul.f32 %v8450, %v8450
  %v8649 = vmul.f32 %v8451, %v8451
  %v8650 = vmul.f32 %v8452, %v8452
  %v8651 = vmul.f32 %v8453, %v8453
  %v8652 = vmul.f32 %v8454, %v8454
  %v8653 = vmul.f32 %v8455, %v8455
  %v8654 = vmul.f32 %v8456, %v8456
  %v8655 = vmul.f32 %v8457, %v8457
  %v8656 = vmul.f32 %v8458, %v8458
  %v8657 = vmul.f32 %v8459, %v8459
  %v8658 = vmul.f32 %v8460, %v8460
  %v8659 = vmul.f32 %v8461, %v8461
  %v8660 = vmul.f32 %v8462, %v8462
  %v8661 = vmul.f32 %v8463, %v8463
  %v8662 = vmul.f32 %v8464, %v8464
  %v8663 = vmul.f32 %v8465, %v8465
  %v8664 = vmul.f32 %v8466, %v8466
  %v8665 = vmul.f32 %v8467, %v8467
  %v8666 = vmul.f32 %v8468, %v8468
  %v8667 = vmul.f32 %v8469, %v8469
  %v8668 = vmul.f32 %v8470, %v8470
  %v8669 = vmul.f32 %v8471, %v8471
  %v8670 = vmul.f32 %v8472, %v8472
  %v8671 = vmul.f32 %v8473, %v8473
  %v8672 = vmul.f32 %v8474, %v8474
  %v8673 = vmul.f32 %v8475, %v8475
  %v8674 = vmul.f32 %v8476, %v8476
  %v8675 = vmul.f32 %v8477, %v8477
  %v8676 = vmul.f32 %v8478, %v8478
  %v8677 = vmul.f32 %v8479, %v8479
  %v8678 = vmul.f32 %v8480, %v8480
  %v8679 = vmul.f32 %v8481, %v8481
  %v8680 = vmul.f32 %v8482, %v8482
  %v8681 = vmul.f32 %v8483, %v8483
  %v8682 = vmul.f32 %v8484, %v8484
  %v8683 = vmul.f32 %v8485, %v8485
  %v8684 = vmul.f32 %v8486, %v8486
  %v8685 = vmul.f32 %v8487, %v8487
  %v8686 = vmul.f32 %v8488, %v8488
  %v8687 = vmul.f32 %v8489, %v8489
  %v8688 = vmul.f32 %v8490, %v8490
  %v8689 = vmul.f32 %v8491, %v8491
  %v8690 = vmul.f32 %v8492, %v8492
  %v8691 = vmul.f32 %v8493, %v8493
  %v8692 = vmul.f32 %v8494, %v8494
  %v8693 = vmul.f32 %v8495, %v8495
  %v8694 = vmul.f32 %v8496, %v8496
  %v8695 = vmul.f32 %v8497, %v8497
  %v8696 = vmul.f32 %v8498, %v8498
  %v8697 = vmul.f32 %v8499, %v8499
  %v8698 = vmul.f32 %v8500, %v8500
  %v8699 = vsel %vm26, %v8635, 0.0
  %v8700 = vsel %vm26, %v8636, 0.0
  %v8701 = vadd.f32 %v8699, %v8700
  %v8702 = vsel %vm26, %v8637, 0.0
  %v8703 = vadd.f32 %v8701, %v8702
  %v8704 = vsel %vm26, %v8638, 0.0
  %v8705 = vadd.f32 %v8703, %v8704
  %v8706 = vsel %vm26, %v8639, 0.0
  %v8707 = vadd.f32 %v8705, %v8706
  %v8708 = vsel %vm26, %v8640, 0.0
  %v8709 = vadd.f32 %v8707, %v8708
  %v8710 = vsel %vm26, %v8641, 0.0
  %v8711 = vadd.f32 %v8709, %v8710
  %v8712 = vsel %vm26, %v8642, 0.0
  %v8713 = vadd.f32 %v8711, %v8712
  %v8714 = vsel %vm26, %v8643, 0.0
  %v8715 = vadd.f32 %v8713, %v8714
  %v8716 = vsel %vm26, %v8644, 0.0
  %v8717 = vadd.f32 %v8715, %v8716
  %v8718 = vsel %vm26, %v8645, 0.0
  %v8719 = vadd.f32 %v8717, %v8718
  %v8720 = vsel %vm26, %v8646, 0.0
  %v8721 = vadd.f32 %v8719, %v8720
  %v8722 = vsel %vm26, %v8647, 0.0
  %v8723 = vadd.f32 %v8721, %v8722
  %v8724 = vsel %vm26, %v8648, 0.0
  %v8725 = vadd.f32 %v8723, %v8724
  %v8726 = vsel %vm26, %v8649, 0.0
  %v8727 = vadd.f32 %v8725, %v8726
  %v8728 = vsel %vm26, %v8650, 0.0
  %v8729 = vadd.f32 %v8727, %v8728
  %v8730 = vsel %vm26, %v8651, 0.0
  %v8731 = vadd.f32 %v8729, %v8730
  %v8732 = vsel %vm26, %v8652, 0.0
  %v8733 = vadd.f32 %v8731, %v8732
  %v8734 = vsel %vm26, %v8653, 0.0
  %v8735 = vadd.f32 %v8733, %v8734
  %v8736 = vsel %vm26, %v8654, 0.0
  %v8737 = vadd.f32 %v8735, %v8736
  %v8738 = vsel %vm26, %v8655, 0.0
  %v8739 = vadd.f32 %v8737, %v8738
  %v8740 = vsel %vm26, %v8656, 0.0
  %v8741 = vadd.f32 %v8739, %v8740
  %v8742 = vsel %vm26, %v8657, 0.0
  %v8743 = vadd.f32 %v8741, %v8742
  %v8744 = vsel %vm26, %v8658, 0.0
  %v8745 = vadd.f32 %v8743, %v8744
  %v8746 = vsel %vm26, %v8659, 0.0
  %v8747 = vadd.f32 %v8745, %v8746
  %v8748 = vsel %vm26, %v8660, 0.0
  %v8749 = vadd.f32 %v8747, %v8748
  %v8750 = vsel %vm26, %v8661, 0.0
  %v8751 = vadd.f32 %v8749, %v8750
  %v8752 = vsel %vm26, %v8662, 0.0
  %v8753 = vadd.f32 %v8751, %v8752
  %v8754 = vsel %vm26, %v8663, 0.0
  %v8755 = vadd.f32 %v8753, %v8754
  %v8756 = vsel %vm26, %v8664, 0.0
  %v8757 = vadd.f32 %v8755, %v8756
  %v8758 = vsel %vm26, %v8665, 0.0
  %v8759 = vadd.f32 %v8757, %v8758
  %v8760 = vsel %vm26, %v8666, 0.0
  %v8761 = vadd.f32 %v8759, %v8760
  %v8762 = vsel %vm26, %v8667, 0.0
  %v8763 = vadd.f32 %v8761, %v8762
  %v8764 = vsel %vm26, %v8668, 0.0
  %v8765 = vadd.f32 %v8763, %v8764
  %v8766 = vsel %vm26, %v8669, 0.0
  %v8767 = vadd.f32 %v8765, %v8766
  %v8768 = vsel %vm26, %v8670, 0.0
  %v8769 = vadd.f32 %v8767, %v8768
  %v8770 = vsel %vm26, %v8671, 0.0
  %v8771 = vadd.f32 %v8769, %v8770
  %v8772 = vsel %vm26, %v8672, 0.0
  %v8773 = vadd.f32 %v8771, %v8772
  %v8774 = vsel %vm26, %v8673, 0.0
  %v8775 = vadd.f32 %v8773, %v8774
  %v8776 = vsel %vm26, %v8674, 0.0
  %v8777 = vadd.f32 %v8775, %v8776
  %v8778 = vsel %vm26, %v8675, 0.0
  %v8779 = vadd.f32 %v8777, %v8778
  %v8780 = vsel %vm26, %v8676, 0.0
  %v8781 = vadd.f32 %v8779, %v8780
  %v8782 = vsel %vm26, %v8677, 0.0
  %v8783 = vadd.f32 %v8781, %v8782
  %v8784 = vsel %vm26, %v8678, 0.0
  %v8785 = vadd.f32 %v8783, %v8784
  %v8786 = vsel %vm26, %v8679, 0.0
  %v8787 = vadd.f32 %v8785, %v8786
  %v8788 = vsel %vm26, %v8680, 0.0
  %v8789 = vadd.f32 %v8787, %v8788
  %v8790 = vsel %vm26, %v8681, 0.0
  %v8791 = vadd.f32 %v8789, %v8790
  %v8792 = vsel %vm26, %v8682, 0.0
  %v8793 = vadd.f32 %v8791, %v8792
  %v8794 = vsel %vm26, %v8683, 0.0
  %v8795 = vadd.f32 %v8793, %v8794
  %v8796 = vsel %vm26, %v8684, 0.0
  %v8797 = vadd.f32 %v8795, %v8796
  %v8798 = vsel %vm26, %v8685, 0.0
  %v8799 = vadd.f32 %v8797, %v8798
  %v8800 = vsel %vm26, %v8686, 0.0
  %v8801 = vadd.f32 %v8799, %v8800
  %v8802 = vsel %vm26, %v8687, 0.0
  %v8803 = vadd.f32 %v8801, %v8802
  %v8804 = vsel %vm26, %v8688, 0.0
  %v8805 = vadd.f32 %v8803, %v8804
  %v8806 = vsel %vm26, %v8689, 0.0
  %v8807 = vadd.f32 %v8805, %v8806
  %v8808 = vsel %vm26, %v8690, 0.0
  %v8809 = vadd.f32 %v8807, %v8808
  %v8810 = vsel %vm26, %v8691, 0.0
  %v8811 = vadd.f32 %v8809, %v8810
  %v8812 = vsel %vm26, %v8692, 0.0
  %v8813 = vadd.f32 %v8811, %v8812
  %v8814 = vsel %vm26, %v8693, 0.0
  %v8815 = vadd.f32 %v8813, %v8814
  %v8816 = vsel %vm26, %v8694, 0.0
  %v8817 = vadd.f32 %v8815, %v8816
  %v8818 = vsel %vm26, %v8695, 0.0
  %v8819 = vadd.f32 %v8817, %v8818
  %v8820 = vsel %vm26, %v8696, 0.0
  %v8821 = vadd.f32 %v8819, %v8820
  %v8822 = vsel %vm26, %v8697, 0.0
  %v8823 = vadd.f32 %v8821, %v8822
  %v8824 = vsel %vm26, %v8698, 0.0
  %v8825 = vadd.f32 %v8823, %v8824
  %v8826 = vrot.slane %v8825, 4
  %v8827 = vadd.f32 %v8825, %v8826
  %v8828 = vrot.slane %v8827, 2
  %v8829 = vadd.f32 %v8827, %v8828
  %v8830 = vrot.slane %v8829, 1
  %v8831 = vadd.f32 %v8829, %v8830
  %v8832 = vmul.f32 %v8831, %v4235
  %v8833 = vmul.f32 %v8634, %v8634
  %v8834 = vsub.f32 %v8832, %v8833
  %v8835 = vadd.f32 %v8834, 1e-05
  %v8836 = vrsqrt.pop %v8835
  %v8837 = vsub.f32 %v8437, %v8634
  %v8838 = vsub.f32 %v8438, %v8634
  %v8839 = vsub.f32 %v8439, %v8634
  %v8840 = vsub.f32 %v8440, %v8634
  %v8841 = vsub.f32 %v8441, %v8634
  %v8842 = vsub.f32 %v8442, %v8634
  %v8843 = vsub.f32 %v8443, %v8634
  %v8844 = vsub.f32 %v8444, %v8634
  %v8845 = vsub.f32 %v8445, %v8634
  %v8846 = vsub.f32 %v8446, %v8634
  %v8847 = vsub.f32 %v8447, %v8634
  %v8848 = vsub.f32 %v8448, %v8634
  %v8849 = vsub.f32 %v8449, %v8634
  %v8850 = vsub.f32 %v8450, %v8634
  %v8851 = vsub.f32 %v8451, %v8634
  %v8852 = vsub.f32 %v8452, %v8634
  %v8853 = vsub.f32 %v8453, %v8634
  %v8854 = vsub.f32 %v8454, %v8634
  %v8855 = vsub.f32 %v8455, %v8634
  %v8856 = vsub.f32 %v8456, %v8634
  %v8857 = vsub.f32 %v8457, %v8634
  %v8858 = vsub.f32 %v8458, %v8634
  %v8859 = vsub.f32 %v8459, %v8634
  %v8860 = vsub.f32 %v8460, %v8634
  %v8861 = vsub.f32 %v8461, %v8634
  %v8862 = vsub.f32 %v8462, %v8634
  %v8863 = vsub.f32 %v8463, %v8634
  %v8864 = vsub.f32 %v8464, %v8634
  %v8865 = vsub.f32 %v8465, %v8634
  %v8866 = vsub.f32 %v8466, %v8634
  %v8867 = vsub.f32 %v8467, %v8634
  %v8868 = vsub.f32 %v8468, %v8634
  %v8869 = vsub.f32 %v8469, %v8634
  %v8870 = vsub.f32 %v8470, %v8634
  %v8871 = vsub.f32 %v8471, %v8634
  %v8872 = vsub.f32 %v8472, %v8634
  %v8873 = vsub.f32 %v8473, %v8634
  %v8874 = vsub.f32 %v8474, %v8634
  %v8875 = vsub.f32 %v8475, %v8634
  %v8876 = vsub.f32 %v8476, %v8634
  %v8877 = vsub.f32 %v8477, %v8634
  %v8878 = vsub.f32 %v8478, %v8634
  %v8879 = vsub.f32 %v8479, %v8634
  %v8880 = vsub.f32 %v8480, %v8634
  %v8881 = vsub.f32 %v8481, %v8634
  %v8882 = vsub.f32 %v8482, %v8634
  %v8883 = vsub.f32 %v8483, %v8634
  %v8884 = vsub.f32 %v8484, %v8634
  %v8885 = vsub.f32 %v8485, %v8634
  %v8886 = vsub.f32 %v8486, %v8634
  %v8887 = vsub.f32 %v8487, %v8634
  %v8888 = vsub.f32 %v8488, %v8634
  %v8889 = vsub.f32 %v8489, %v8634
  %v8890 = vsub.f32 %v8490, %v8634
  %v8891 = vsub.f32 %v8491, %v8634
  %v8892 = vsub.f32 %v8492, %v8634
  %v8893 = vsub.f32 %v8493, %v8634
  %v8894 = vsub.f32 %v8494, %v8634
  %v8895 = vsub.f32 %v8495, %v8634
  %v8896 = vsub.f32 %v8496, %v8634
  %v8897 = vsub.f32 %v8497, %v8634
  %v8898 = vsub.f32 %v8498, %v8634
  %v8899 = vsub.f32 %v8499, %v8634
  %v8900 = vsub.f32 %v8500, %v8634
  %v8901 = vld [vmem:[%s5] sm:$0x1]
  %v8902 = vmul.f32 %v8836, %v8901
  %v8903 = vlaneseq
  %v8904 = vshrl.u32 %v8903, 7
  %v8905 = vsub.s32 0, %v8904
  %v8906 = vrot.slane %v8902, %v8905
  %v8907 = vmul.f32 %v8837, %v8906
  %v8908 = vmul.f32 %v8838, %v8906
  %v8909 = vmul.f32 %v8839, %v8906
  %v8910 = vmul.f32 %v8840, %v8906
  %v8911 = vmul.f32 %v8841, %v8906
  %v8912 = vmul.f32 %v8842, %v8906
  %v8913 = vmul.f32 %v8843, %v8906
  %v8914 = vmul.f32 %v8844, %v8906
  %v8915 = vmul.f32 %v8845, %v8906
  %v8916 = vmul.f32 %v8846, %v8906
  %v8917 = vmul.f32 %v8847, %v8906
  %v8918 = vmul.f32 %v8848, %v8906
  %v8919 = vmul.f32 %v8849, %v8906
  %v8920 = vmul.f32 %v8850, %v8906
  %v8921 = vmul.f32 %v8851, %v8906
  %v8922 = vmul.f32 %v8852, %v8906
  %v8923 = vmul.f32 %v8853, %v8906
  %v8924 = vmul.f32 %v8854, %v8906
  %v8925 = vmul.f32 %v8855, %v8906
  %v8926 = vmul.f32 %v8856, %v8906
  %v8927 = vmul.f32 %v8857, %v8906
  %v8928 = vmul.f32 %v8858, %v8906
  %v8929 = vmul.f32 %v8859, %v8906
  %v8930 = vmul.f32 %v8860, %v8906
  %v8931 = vmul.f32 %v8861, %v8906
  %v8932 = vmul.f32 %v8862, %v8906
  %v8933 = vmul.f32 %v8863, %v8906
  %v8934 = vmul.f32 %v8864, %v8906
  %v8935 = vmul.f32 %v8865, %v8906
  %v8936 = vmul.f32 %v8866, %v8906
  %v8937 = vmul.f32 %v8867, %v8906
  %v8938 = vmul.f32 %v8868, %v8906
  %v8939 = vmul.f32 %v8869, %v8906
  %v8940 = vmul.f32 %v8870, %v8906
  %v8941 = vmul.f32 %v8871, %v8906
  %v8942 = vmul.f32 %v8872, %v8906
  %v8943 = vmul.f32 %v8873, %v8906
  %v8944 = vmul.f32 %v8874, %v8906
  %v8945 = vmul.f32 %v8875, %v8906
  %v8946 = vmul.f32 %v8876, %v8906
  %v8947 = vmul.f32 %v8877, %v8906
  %v8948 = vmul.f32 %v8878, %v8906
  %v8949 = vmul.f32 %v8879, %v8906
  %v8950 = vmul.f32 %v8880, %v8906
  %v8951 = vmul.f32 %v8881, %v8906
  %v8952 = vmul.f32 %v8882, %v8906
  %v8953 = vmul.f32 %v8883, %v8906
  %v8954 = vmul.f32 %v8884, %v8906
  %v8955 = vmul.f32 %v8885, %v8906
  %v8956 = vmul.f32 %v8886, %v8906
  %v8957 = vmul.f32 %v8887, %v8906
  %v8958 = vmul.f32 %v8888, %v8906
  %v8959 = vmul.f32 %v8889, %v8906
  %v8960 = vmul.f32 %v8890, %v8906
  %v8961 = vmul.f32 %v8891, %v8906
  %v8962 = vmul.f32 %v8892, %v8906
  %v8963 = vmul.f32 %v8893, %v8906
  %v8964 = vmul.f32 %v8894, %v8906
  %v8965 = vmul.f32 %v8895, %v8906
  %v8966 = vmul.f32 %v8896, %v8906
  %v8967 = vmul.f32 %v8897, %v8906
  %v8968 = vmul.f32 %v8898, %v8906
  %v8969 = vmul.f32 %v8899, %v8906
  %v8970 = vmul.f32 %v8900, %v8906
  %v8971 = vld [vmem:[%s6] sm:$0x1]
  %v8973 = vlaneseq
  %v8974 = vshrl.u32 %v8973, 7
  %v8975 = vsub.s32 0, %v8974
  %v8976 = vrot.slane %v8971, %v8975
  %v8978 = vadd.f32 %v8907, %v8976
  %v8979 = vadd.f32 %v8908, %v8976
  %v8980 = vadd.f32 %v8909, %v8976
  %v8981 = vadd.f32 %v8910, %v8976
  %v8982 = vadd.f32 %v8911, %v8976
  %v8983 = vadd.f32 %v8912, %v8976
  %v8984 = vadd.f32 %v8913, %v8976
  %v8985 = vadd.f32 %v8914, %v8976
  %v8986 = vadd.f32 %v8915, %v8976
  %v8987 = vadd.f32 %v8916, %v8976
  %v8988 = vadd.f32 %v8917, %v8976
  %v8989 = vadd.f32 %v8918, %v8976
  %v8990 = vadd.f32 %v8919, %v8976
  %v8991 = vadd.f32 %v8920, %v8976
  %v8992 = vadd.f32 %v8921, %v8976
  %v8993 = vadd.f32 %v8922, %v8976
  %v8994 = vadd.f32 %v8923, %v8976
  %v8995 = vadd.f32 %v8924, %v8976
  %v8996 = vadd.f32 %v8925, %v8976
  %v8997 = vadd.f32 %v8926, %v8976
  %v8998 = vadd.f32 %v8927, %v8976
  %v8999 = vadd.f32 %v8928, %v8976
  %v9000 = vadd.f32 %v8929, %v8976
  %v9001 = vadd.f32 %v8930, %v8976
  %v9002 = vadd.f32 %v8931, %v8976
  %v9003 = vadd.f32 %v8932, %v8976
  %v9004 = vadd.f32 %v8933, %v8976
  %v9005 = vadd.f32 %v8934, %v8976
  %v9006 = vadd.f32 %v8935, %v8976
  %v9007 = vadd.f32 %v8936, %v8976
  %v9008 = vadd.f32 %v8937, %v8976
  %v9009 = vadd.f32 %v8938, %v8976
  %v9010 = vadd.f32 %v8939, %v8976
  %v9011 = vadd.f32 %v8940, %v8976
  %v9012 = vadd.f32 %v8941, %v8976
  %v9013 = vadd.f32 %v8942, %v8976
  %v9014 = vadd.f32 %v8943, %v8976
  %v9015 = vadd.f32 %v8944, %v8976
  %v9016 = vadd.f32 %v8945, %v8976
  %v9017 = vadd.f32 %v8946, %v8976
  %v9018 = vadd.f32 %v8947, %v8976
  %v9019 = vadd.f32 %v8948, %v8976
  %v9020 = vadd.f32 %v8949, %v8976
  %v9021 = vadd.f32 %v8950, %v8976
  %v9022 = vadd.f32 %v8951, %v8976
  %v9023 = vadd.f32 %v8952, %v8976
  %v9024 = vadd.f32 %v8953, %v8976
  %v9025 = vadd.f32 %v8954, %v8976
  %v9026 = vadd.f32 %v8955, %v8976
  %v9027 = vadd.f32 %v8956, %v8976
  %v9028 = vadd.f32 %v8957, %v8976
  %v9029 = vadd.f32 %v8958, %v8976
  %v9030 = vadd.f32 %v8959, %v8976
  %v9031 = vadd.f32 %v8960, %v8976
  %v9032 = vadd.f32 %v8961, %v8976
  %v9033 = vadd.f32 %v8962, %v8976
  %v9034 = vadd.f32 %v8963, %v8976
  %v9035 = vadd.f32 %v8964, %v8976
  %v9036 = vadd.f32 %v8965, %v8976
  %v9037 = vadd.f32 %v8966, %v8976
  %v9038 = vadd.f32 %v8967, %v8976
  %v9039 = vadd.f32 %v8968, %v8976
  %v9040 = vadd.f32 %v8969, %v8976
  %v9041 = vadd.f32 %v8970, %v8976
  %9042 = vst.msk [vmem:[%s7] sm:$0xff] %vm26, %v8978
  %9043 = vst.msk [vmem:[%s7 + $0x8] sm:$0xff] %vm26, %v8979
  %9044 = vst.msk [vmem:[%s7 + $0x10] sm:$0xff] %vm26, %v8980
  %9045 = vst.msk [vmem:[%s7 + $0x18] sm:$0xff] %vm26, %v8981
  %9046 = vst.msk [vmem:[%s7 + $0x20] sm:$0xff] %vm26, %v8982
  %9047 = vst.msk [vmem:[%s7 + $0x28] sm:$0xff] %vm26, %v8983
  %9048 = vst.msk [vmem:[%s7 + $0x30] sm:$0xff] %vm26, %v8984
  %9049 = vst.msk [vmem:[%s7 + $0x38] sm:$0xff] %vm26, %v8985
  %9050 = vst.msk [vmem:[%s7 + $0x40] sm:$0xff] %vm26, %v8986
  %9051 = vst.msk [vmem:[%s7 + $0x48] sm:$0xff] %vm26, %v8987
  %9052 = vst.msk [vmem:[%s7 + $0x50] sm:$0xff] %vm26, %v8988
  %9053 = vst.msk [vmem:[%s7 + $0x58] sm:$0xff] %vm26, %v8989
  %9054 = vst.msk [vmem:[%s7 + $0x60] sm:$0xff] %vm26, %v8990
  %9055 = vst.msk [vmem:[%s7 + $0x68] sm:$0xff] %vm26, %v8991
  %9056 = vst.msk [vmem:[%s7 + $0x70] sm:$0xff] %vm26, %v8992
  %9057 = vst.msk [vmem:[%s7 + $0x78] sm:$0xff] %vm26, %v8993
  %9058 = vst.msk [vmem:[%s7 + $0x80] sm:$0xff] %vm26, %v8994
  %9059 = vst.msk [vmem:[%s7 + $0x88] sm:$0xff] %vm26, %v8995
  %9060 = vst.msk [vmem:[%s7 + $0x90] sm:$0xff] %vm26, %v8996
  %9061 = vst.msk [vmem:[%s7 + $0x98] sm:$0xff] %vm26, %v8997
  %9062 = vst.msk [vmem:[%s7 + $0xa0] sm:$0xff] %vm26, %v8998
  %9063 = vst.msk [vmem:[%s7 + $0xa8] sm:$0xff] %vm26, %v8999
  %9064 = vst.msk [vmem:[%s7 + $0xb0] sm:$0xff] %vm26, %v9000
  %9065 = vst.msk [vmem:[%s7 + $0xb8] sm:$0xff] %vm26, %v9001
  %9066 = vst.msk [vmem:[%s7 + $0xc0] sm:$0xff] %vm26, %v9002
  %9067 = vst.msk [vmem:[%s7 + $0xc8] sm:$0xff] %vm26, %v9003
  %9068 = vst.msk [vmem:[%s7 + $0xd0] sm:$0xff] %vm26, %v9004
  %9069 = vst.msk [vmem:[%s7 + $0xd8] sm:$0xff] %vm26, %v9005
  %9070 = vst.msk [vmem:[%s7 + $0xe0] sm:$0xff] %vm26, %v9006
  %9071 = vst.msk [vmem:[%s7 + $0xe8] sm:$0xff] %vm26, %v9007
  %9072 = vst.msk [vmem:[%s7 + $0xf0] sm:$0xff] %vm26, %v9008
  %9073 = vst.msk [vmem:[%s7 + $0xf8] sm:$0xff] %vm26, %v9009
  %9074 = vst.msk [vmem:[%s7 + $0x100] sm:$0xff] %vm26, %v9010
  %9075 = vst.msk [vmem:[%s7 + $0x108] sm:$0xff] %vm26, %v9011
  %9076 = vst.msk [vmem:[%s7 + $0x110] sm:$0xff] %vm26, %v9012
  %9077 = vst.msk [vmem:[%s7 + $0x118] sm:$0xff] %vm26, %v9013
  %9078 = vst.msk [vmem:[%s7 + $0x120] sm:$0xff] %vm26, %v9014
  %9079 = vst.msk [vmem:[%s7 + $0x128] sm:$0xff] %vm26, %v9015
  %9080 = vst.msk [vmem:[%s7 + $0x130] sm:$0xff] %vm26, %v9016
  %9081 = vst.msk [vmem:[%s7 + $0x138] sm:$0xff] %vm26, %v9017
  %9082 = vst.msk [vmem:[%s7 + $0x140] sm:$0xff] %vm26, %v9018
  %9083 = vst.msk [vmem:[%s7 + $0x148] sm:$0xff] %vm26, %v9019
  %9084 = vst.msk [vmem:[%s7 + $0x150] sm:$0xff] %vm26, %v9020
  %9085 = vst.msk [vmem:[%s7 + $0x158] sm:$0xff] %vm26, %v9021
  %9086 = vst.msk [vmem:[%s7 + $0x160] sm:$0xff] %vm26, %v9022
  %9087 = vst.msk [vmem:[%s7 + $0x168] sm:$0xff] %vm26, %v9023
  %9088 = vst.msk [vmem:[%s7 + $0x170] sm:$0xff] %vm26, %v9024
  %9089 = vst.msk [vmem:[%s7 + $0x178] sm:$0xff] %vm26, %v9025
  %9090 = vst.msk [vmem:[%s7 + $0x180] sm:$0xff] %vm26, %v9026
  %9091 = vst.msk [vmem:[%s7 + $0x188] sm:$0xff] %vm26, %v9027
  %9092 = vst.msk [vmem:[%s7 + $0x190] sm:$0xff] %vm26, %v9028
  %9093 = vst.msk [vmem:[%s7 + $0x198] sm:$0xff] %vm26, %v9029
  %9094 = vst.msk [vmem:[%s7 + $0x1a0] sm:$0xff] %vm26, %v9030
  %9095 = vst.msk [vmem:[%s7 + $0x1a8] sm:$0xff] %vm26, %v9031
  %9096 = vst.msk [vmem:[%s7 + $0x1b0] sm:$0xff] %vm26, %v9032
  %9097 = vst.msk [vmem:[%s7 + $0x1b8] sm:$0xff] %vm26, %v9033
  %9098 = vst.msk [vmem:[%s7 + $0x1c0] sm:$0xff] %vm26, %v9034
  %9099 = vst.msk [vmem:[%s7 + $0x1c8] sm:$0xff] %vm26, %v9035
  %9100 = vst.msk [vmem:[%s7 + $0x1d0] sm:$0xff] %vm26, %v9036
  %9101 = vst.msk [vmem:[%s7 + $0x1d8] sm:$0xff] %vm26, %v9037
  %9102 = vst.msk [vmem:[%s7 + $0x1e0] sm:$0xff] %vm26, %v9038
  %9103 = vst.msk [vmem:[%s7 + $0x1e8] sm:$0xff] %vm26, %v9039
  %9104 = vst.msk [vmem:[%s7 + $0x1f0] sm:$0xff] %vm26, %v9040
  %9105 = vst.msk [vmem:[%s7 + $0x1f8] sm:$0xff] %vm26, %v9041
  // Predicated region
  $region30: #{tpu_custom_call.1} parent=0 // pred_check
    _
  $region31: #{tpu_custom_call.1} parent=0 // pred_check_branch
    %9107 = sbr.rel (0) target = $region33
  $region32: #{tpu_custom_call.1} parent=0 // pred_region
    _
  $region33: #{tpu_custom_call.1} parent=0 // pred_fallthru
    _
  // Predicated region
  $region34: #{tpu_custom_call.1} parent=0 // pred_check
    _
  $region35: #{tpu_custom_call.1} parent=0 // pred_check_branch
    %9109 = sbr.rel (0) target = $region37
  $region36: #{tpu_custom_call.1} parent=0 // pred_region
    _
  $region37: #{tpu_custom_call.1} parent=0 // pred_fallthru
    _

</llo_original>
